<compile_context>
chip_gen: v5e
topology: v5e:2x2
jax: 0.10.0
libtpu: 0.0.40
codegen_flags: <defaults>
</compile_context>

<pallas_src>
import functools
import math
import types

import jax
import jax.numpy as jnp
from jax.experimental import pallas as pl
from jax.experimental.pallas import tpu as pltpu

NEG_INF = -1e9
LN_EPS = 1e-5
# Set False for an exact (non-approximate) softmax normalization if bitwise
# closeness to a fp32 reference matters more than the free EUP reciprocal.
APPROX_RECIPROCAL = True

LAYER_PARAM_NAMES = (
    "wqkv", "bqkv", "wo", "bo", "ln1_g", "ln1_b",
    "xwq", "xbq", "xwkv", "xbkv", "xwo", "xbo", "ln2_g", "ln2_b",
    "w1", "b1", "w2", "b2", "ln3_g", "ln3_b",
)
HEAD_PARAM_NAMES = ("hw1", "hb1", "hw2", "hb2")


# ----------------------------------------------------------------------------
# In-kernel helpers
# ----------------------------------------------------------------------------
def _layernorm(x, gamma, beta, eps):
    mean = jnp.mean(x, axis=-1, keepdims=True)
    var = jnp.mean((x - mean) ** 2, axis=-1, keepdims=True)
    return (x - mean) * jax.lax.rsqrt(var + eps) * gamma + beta


# ----------------------------------------------------------------------------
# Single fused kernel: all decoder layers + prediction heads, one batch element
# ----------------------------------------------------------------------------
def fused_decoder_kernel(x_ref, mem_ref, kbias_ref, *rest,
                         num_layers, num_heads, num_pred_heads, eps, approx):
    o_ref = rest[-1]
    names = LAYER_PARAM_NAMES + HEAD_PARAM_NAMES
    w = dict(zip(names, rest[:len(names)]))

    x = x_ref[0].astype(jnp.float32)              # (T, D)
    mem = mem_ref[0].astype(jnp.float32)          # (S, D)
    key_bias = kbias_ref[0]                       # (1, S) additive fp32 bias
    t, d = x.shape
    dh = d // num_heads
    scale = 1.0 / math.sqrt(dh)

    # Causal additive bias over the flattened (t, agent, type) axis, built once.
    row = jax.lax.broadcasted_iota(jnp.int32, (t, t), 0)
    col = jax.lax.broadcasted_iota(jnp.int32, (t, t), 1)
    causal_bias = jnp.where(col > row, NEG_INF, 0.0).astype(jnp.float32)

    def mha(q, k, v, wo_b, bias):
        """q:(T,D) k/v:(S_,D) fp32; wo_b:(D,D) bf16 -> out-projected (T,D) fp32."""
        qb = q.astype(jnp.bfloat16)               # cast once, not per head
        kb = k.astype(jnp.bfloat16)
        vb = v.astype(jnp.bfloat16)
        ctx = []
        for h in range(num_heads):                # static unroll (H small)
            sl = slice(h * dh, (h + 1) * dh)
            # contract the last dims directly -> no k.T (no XLU transpose)
            scores = jax.lax.dot_general(
                qb[:, sl], kb[:, sl], (((1,), (1,)), ((), ())),
                preferred_element_type=jnp.float32) * scale
            scores = scores + bias
            m = jnp.max(scores, axis=-1, keepdims=True)
            p = jnp.exp(scores - m)
            denom = jnp.sum(p, axis=-1, keepdims=True)
            if approx:
                p = p * pl.reciprocal(denom, approx=True)   # EUP slot
            else:
                p = p / denom
            ctx.append(jnp.dot(p.astype(jnp.bfloat16), vb[:, sl],
                               preferred_element_type=jnp.float32))
        # merge heads along lanes, then ONE K=D output projection (MXU)
        ctx = jnp.concatenate(ctx, axis=-1).astype(jnp.bfloat16)   # (T, D)
        return jnp.dot(ctx, wo_b, preferred_element_type=jnp.float32)

    for l in range(num_layers):                   # static unroll over layers
        # ---- self-attention + residual + LN1 (post-norm) ----
        qkv = jnp.dot(x.astype(jnp.bfloat16), w["wqkv"][l],
                      preferred_element_type=jnp.float32) + w["bqkv"][l]
        attn = mha(qkv[:, :d], qkv[:, d:2 * d], qkv[:, 2 * d:],
                   w["wo"][l], causal_bias)
        x = _layernorm(x + attn + w["bo"][l], w["ln1_g"][l], w["ln1_b"][l], eps)

        # ---- cross-attention + residual + LN2 ----
        q = jnp.dot(x.astype(jnp.bfloat16), w["xwq"][l],
                    preferred_element_type=jnp.float32) + w["xbq"][l]
        kv = jnp.dot(mem.astype(jnp.bfloat16), w["xwkv"][l],
                     preferred_element_type=jnp.float32) + w["xbkv"][l]
        attn = mha(q, kv[:, :d], kv[:, d:], w["xwo"][l], key_bias)
        x = _layernorm(x + attn + w["xbo"][l], w["ln2_g"][l], w["ln2_b"][l], eps)

        # ---- FFN + residual + LN3 ----
        h = jnp.dot(x.astype(jnp.bfloat16), w["w1"][l],
                    preferred_element_type=jnp.float32) + w["b1"][l]
        h = jnp.maximum(h, 0.0)
        f = jnp.dot(h.astype(jnp.bfloat16), w["w2"][l],
                    preferred_element_type=jnp.float32) + w["b2"][l]
        x = _layernorm(x + f, w["ln3_g"][l], w["ln3_b"][l], eps)

    # ---- fused prediction heads ----
    # Each head's dense (D,D) W1 is applied to every token row (no structural
    # zeros); per-type row selection is done by the wrapper.  The W2/logit slab
    # is 128-lane padded so the only HBM store below is a full, unmasked vst.
    xb = x.astype(jnp.bfloat16)
    hid = []
    for i in range(num_pred_heads):               # static unroll (<=3 heads)
        hi = jnp.dot(xb, w["hw1"][i],
                     preferred_element_type=jnp.float32) + w["hb1"][i]
        hid.append(jnp.maximum(hi, 0.0))
    hcat = jnp.concatenate(hid, axis=-1).astype(jnp.bfloat16)   # (T, n_heads*D)
    logits = jnp.dot(hcat, w["hw2"][...],
                     preferred_element_type=jnp.float32) + w["hb2"][...]
    o_ref[0] = logits.astype(o_ref.dtype)


# ----------------------------------------------------------------------------
# Parameter init / packing (deterministic, synthetic)
# ----------------------------------------------------------------------------
def _dense(key, din, dout, scale=0.02):
    k1, k2 = jax.random.split(key)
    wgt = jax.random.normal(k1, (din, dout), jnp.float32) * scale
    b = jax.random.normal(k2, (dout,), jnp.float32) * scale
    return wgt, b


def init_decoder_layer(key, d, ff):
    keys = jax.random.split(key, 10)
    wq, bq = _dense(keys[0], d, d)
    wk, bk = _dense(keys[1], d, d)
    wv, bv = _dense(keys[2], d, d)
    wo, bo = _dense(keys[3], d, d)
    xwq, xbq = _dense(keys[4], d, d)
    xwk, xbk = _dense(keys[5], d, d)
    xwv, xbv = _dense(keys[6], d, d)
    xwo, xbo = _dense(keys[7], d, d)
    w1, b1 = _dense(keys[8], d, ff)
    w2, b2 = _dense(keys[9], ff, d)
    p = {
        # packed bf16 MXU weights; biases & LN params stay fp32
        "wqkv": jnp.concatenate([wq, wk, wv], axis=1).astype(jnp.bfloat16),
        "bqkv": jnp.concatenate([bq, bk, bv]).reshape(1, 3 * d),
        "wo": wo.astype(jnp.bfloat16),
        "bo": bo.reshape(1, d),
        "xwq": xwq.astype(jnp.bfloat16),
        "xbq": xbq.reshape(1, d),
        "xwkv": jnp.concatenate([xwk, xwv], axis=1).astype(jnp.bfloat16),
        "xbkv": jnp.concatenate([xbk, xbv]).reshape(1, 2 * d),
        "xwo": xwo.astype(jnp.bfloat16),
        "xbo": xbo.reshape(1, d),
        "w1": w1.astype(jnp.bfloat16),
        "b1": b1.reshape(1, ff),
        "w2": w2.astype(jnp.bfloat16),
        "b2": b2.reshape(1, d),
    }
    for name in ("ln1", "ln2", "ln3"):
        p[name + "_g"] = jnp.ones((1, d), jnp.float32)
        p[name + "_b"] = jnp.zeros((1, d), jnp.float32)
    return p


def stack_layers(layer_params):
    return {name: jnp.stack([lp[name] for lp in layer_params], axis=0)
            for name in LAYER_PARAM_NAMES}


def init_heads(key, d, heads_cfg):
    """heads_cfg: list of (name, type_idx, out_dim); each MLPLayer is d->d->out."""
    n = len(heads_cfg)
    out_total = sum(o for _, _, o in heads_cfg)
    p_out = max(128, ((out_total + 127) // 128) * 128)   # lane-dense logit slab
    hw1 = jnp.zeros((n, d, d), jnp.float32)
    hb1 = jnp.zeros((n, 1, d), jnp.float32)
    hw2 = jnp.zeros((n * d, p_out), jnp.float32)
    hb2 = jnp.zeros((1, p_out), jnp.float32)
    meta = []
    off = 0
    keys = jax.random.split(key, n)
    for i, (name, t_idx, out_dim) in enumerate(heads_cfg):
        k1, k2 = jax.random.split(keys[i])
        w1, b1 = _dense(k1, d, d)
        w2, b2 = _dense(k2, d, out_dim)
        hw1 = hw1.at[i].set(w1)
        hb1 = hb1.at[i, 0].set(b1)
        hw2 = hw2.at[i * d:(i + 1) * d, off:off + out_dim].set(w2)
        hb2 = hb2.at[0, off:off + out_dim].set(b2)
        meta.append((name, t_idx, off, out_dim))
        off += out_dim
    return {"hw1": hw1.astype(jnp.bfloat16), "hb1": hb1,
            "hw2": hw2.astype(jnp.bfloat16), "hb2": hb2, "meta": meta}


# ----------------------------------------------------------------------------
# pallas_call wrapper (the whole decoder is ONE call)
# ----------------------------------------------------------------------------
def _bcast(arr):
    """Full-array block reused by every grid step (weights / biases / LN params)."""
    nd = arr.ndim
    return pl.BlockSpec(arr.shape, lambda i, _nd=nd: (0,) * _nd)


def decoder_forward(params, cfg, stacked_embeddings, encoder_embeddings,
                    src_key_padding_mask, agent_states):
    cm, crw = cfg.model, cfg.dataset.waymo
    batch_size = agent_states.shape[0]
    seq_len = agent_states.shape[2]
    d = cm.hidden_dim
    if not (cm.trajeglish or cm.il):
        num_types = 3
    elif cm.trajeglish:
        num_types = 1
    else:
        num_types = 2

    b, t, _ = stacked_embeddings.shape
    s = encoder_embeddings.shape[1]
    heads = params["heads"]
    p_out = heads["hw2"].shape[1]
    n_pred = heads["hw1"].shape[0]
    num_layers = params["layers"]["wqkv"].shape[0]

    # memory key-padding additive bias, (B, 1, S); causal mask is built in-kernel.
    mem_key_bias = jnp.where(src_key_padding_mask, NEG_INF, 0.0)
    mem_key_bias = mem_key_bias.astype(jnp.float32).reshape(b, 1, s)

    x = stacked_embeddings.astype(jnp.float32)
    mem = encoder_embeddings.astype(jnp.float32)

    layer_arrays = [params["layers"][n] for n in LAYER_PARAM_NAMES]
    head_arrays = [heads[n] for n in HEAD_PARAM_NAMES]

    kernel = functools.partial(
        fused_decoder_kernel, num_layers=num_layers, num_heads=cm.num_heads,
        num_pred_heads=n_pred, eps=LN_EPS, approx=APPROX_RECIPROCAL)

    # Working set per grid step is well under 1 MiB (weights <1 MiB total,
    # x ~12 KiB), so the default scoped VMEM limit is fine on v5e/v6e/v7x.
    # TODO(synk): once D/T/S grow, set vmem_limit_bytes and switch the
    # attention to flash-style query-row tiling.
    logits = pl.pallas_call(
        kernel,
        out_shape=jax.ShapeDtypeStruct((b, t, p_out), jnp.float32),
        grid=(b,),
        in_specs=[pl.BlockSpec((1, t, d), lambda i: (i, 0, 0)),
                  pl.BlockSpec((1, s, d), lambda i: (i, 0, 0)),
                  pl.BlockSpec((1, 1, s), lambda i: (i, 0, 0))]
                 + [_bcast(a) for a in layer_arrays + head_arrays],
        out_specs=pl.BlockSpec((1, t, p_out), lambda i: (i, 0, 0)),
        compiler_params=pltpu.CompilerParams(
            dimension_semantics=("parallel",)),
    )(x, mem, mem_key_bias, *layer_arrays, *head_arrays)

    n_tok = seq_len * crw.max_num_agents
    assert t == n_tok * num_types, "stacked_embeddings length != seq*agents*types"
    # (B, T, P) with T = (tok, type), type fastest-varying -> pick type rows.
    logits4 = logits.reshape(batch_size, n_tok, num_types, p_out)

    def take(name):
        for nm, t_idx, off, dim in heads["meta"]:
            if nm == name:
                y = logits4[:, :, t_idx, off:off + dim]
                return (y.reshape(batch_size, seq_len, crw.max_num_agents, dim)
                         .transpose(0, 2, 1, 3))
        raise KeyError(name)

    preds = {"action_preds": take("action")}
    if cm.predict_future_states:
        preds["state_preds"] = take("state")
    if cm.predict_rtg:
        preds["rtg_preds"] = take("rtg")
    return preds


# ----------------------------------------------------------------------------
# Driver
# ----------------------------------------------------------------------------
if __name__ == "__main__":
    cfg = types.SimpleNamespace(
        model=types.SimpleNamespace(
            hidden_dim=32, dim_feedforward=64, num_heads=4, num_decoder_layers=2,
            predict_rtg=True, predict_future_states=True,
            trajeglish=False, il=False, num_reward_components=1),
        dataset=types.SimpleNamespace(waymo=types.SimpleNamespace(
            accel_discretization=4, steer_discretization=4,
            rtg_discretization=8, train_context_length=8, max_num_agents=2)),
    )
    cm, crw = cfg.model, cfg.dataset.waymo
    num_types = 3
    batch = 2
    seq_len = crw.train_context_length                     # 8
    tgt_len = seq_len * crw.max_num_agents * num_types      # 48
    src_len = 16
    d = cm.hidden_dim
    action_dim = crw.accel_discretization * crw.steer_discretization

    key = jax.random.PRNGKey(0)
    k_params, k_heads, k_data = jax.random.split(key, 3)

    layer_keys = jax.random.split(k_params, cm.num_decoder_layers)
    action_type_idx = 1 if not (cm.trajeglish or cm.il) else 0
    heads_cfg = [("action", action_type_idx, action_dim)]
    if cm.predict_future_states:
        heads_cfg.append(("state", 2, crw.train_context_length * 2))
    if cm.predict_rtg:
        heads_cfg.append(("rtg", 0,
                          crw.rtg_discretization * cm.num_reward_components))

    params = {
        "layers": stack_layers([init_decoder_layer(lk, d, cm.dim_feedforward)
                                for lk in layer_keys]),
        "heads": init_heads(k_heads, d, heads_cfg),
    }

    dk = jax.random.split(k_data, 3)
    agent_states = jax.random.normal(
        dk[0], (batch, crw.max_num_agents, seq_len, 4), jnp.float32)
    stacked_embeddings = jax.random.normal(dk[1], (batch, tgt_len, d), jnp.float32)
    encoder_embeddings = jax.random.normal(dk[2], (batch, src_len, d), jnp.float32)
    # mask out the last 3 memory tokens of each batch element
    src_key_padding_mask = jnp.arange(src_len)[None, :] >= (src_len - 3)
    src_key_padding_mask = jnp.broadcast_to(src_key_padding_mask, (batch, src_len))

    preds = decoder_forward(params, cfg, stacked_embeddings, encoder_embeddings,
                            src_key_padding_mask, agent_states)
    jax.block_until_ready(preds)

    assert preds["action_preds"].shape == (batch, crw.max_num_agents, seq_len,
                                           action_dim)
    assert preds["state_preds"].shape == (batch, crw.max_num_agents, seq_len,
                                          crw.train_context_length * 2)
    assert preds["rtg_preds"].shape == (batch, crw.max_num_agents, seq_len,
                                        crw.rtg_discretization * cm.num_reward_components)
    assert bool(jnp.all(jnp.isfinite(preds["action_preds"])))
    assert bool(jnp.all(jnp.isfinite(preds["state_preds"])))
    assert bool(jnp.all(jnp.isfinite(preds["rtg_preds"])))
    print("KERNEL_OK")
</pallas_src>

<mosaic_0001>
module attributes {stable_mosaic.version = 11 : i64} {
  func.func @fused_decoder_kernel(%arg0: i32, %arg1: memref<1x48x32xf32, #tpu.memory_space<vmem>>, %arg2: memref<1x16x32xf32, #tpu.memory_space<vmem>>, %arg3: memref<1x1x16xf32, #tpu.memory_space<vmem>>, %arg4: memref<2x32x96xbf16, #tpu.memory_space<vmem>>, %arg5: memref<2x1x96xf32, #tpu.memory_space<vmem>>, %arg6: memref<2x32x32xbf16, #tpu.memory_space<vmem>>, %arg7: memref<2x1x32xf32, #tpu.memory_space<vmem>>, %arg8: memref<2x1x32xf32, #tpu.memory_space<vmem>>, %arg9: memref<2x1x32xf32, #tpu.memory_space<vmem>>, %arg10: memref<2x32x32xbf16, #tpu.memory_space<vmem>>, %arg11: memref<2x1x32xf32, #tpu.memory_space<vmem>>, %arg12: memref<2x32x64xbf16, #tpu.memory_space<vmem>>, %arg13: memref<2x1x64xf32, #tpu.memory_space<vmem>>, %arg14: memref<2x32x32xbf16, #tpu.memory_space<vmem>>, %arg15: memref<2x1x32xf32, #tpu.memory_space<vmem>>, %arg16: memref<2x1x32xf32, #tpu.memory_space<vmem>>, %arg17: memref<2x1x32xf32, #tpu.memory_space<vmem>>, %arg18: memref<2x32x64xbf16, #tpu.memory_space<vmem>>, %arg19: memref<2x1x64xf32, #tpu.memory_space<vmem>>, %arg20: memref<2x64x32xbf16, #tpu.memory_space<vmem>>, %arg21: memref<2x1x32xf32, #tpu.memory_space<vmem>>, %arg22: memref<2x1x32xf32, #tpu.memory_space<vmem>>, %arg23: memref<2x1x32xf32, #tpu.memory_space<vmem>>, %arg24: memref<3x32x32xbf16, #tpu.memory_space<vmem>>, %arg25: memref<3x1x32xf32, #tpu.memory_space<vmem>>, %arg26: memref<96x128xbf16, #tpu.memory_space<vmem>>, %arg27: memref<1x128xf32, #tpu.memory_space<vmem>>, %arg28: memref<1x48x128xf32, #tpu.memory_space<vmem>>) attributes {dimension_semantics = [#tpu.dimension_semantics<parallel>], iteration_bounds = array<i64: 2>, scalar_prefetch = 0 : i64, scratch_operands = 0 : i64, tpu.core_type = #tpu.core_type<tc>, window_params = [{transform_indices = @transform_0, window_bounds = array<i64: 1, 48, 32>}, {transform_indices = @transform_1, window_bounds = array<i64: 1, 16, 32>}, {transform_indices = @transform_2, window_bounds = array<i64: 1, 1, 16>}, {pipeline_mode = #tpu.pipeline_mode<synchronous>, transform_indices = @transform_3, window_bounds = array<i64: 2, 32, 96>}, {pipeline_mode = #tpu.pipeline_mode<synchronous>, transform_indices = @transform_4, window_bounds = array<i64: 2, 1, 96>}, {pipeline_mode = #tpu.pipeline_mode<synchronous>, transform_indices = @transform_5, window_bounds = array<i64: 2, 32, 32>}, {pipeline_mode = #tpu.pipeline_mode<synchronous>, transform_indices = @transform_6, window_bounds = array<i64: 2, 1, 32>}, {pipeline_mode = #tpu.pipeline_mode<synchronous>, transform_indices = @transform_7, window_bounds = array<i64: 2, 1, 32>}, {pipeline_mode = #tpu.pipeline_mode<synchronous>, transform_indices = @transform_8, window_bounds = array<i64: 2, 1, 32>}, {pipeline_mode = #tpu.pipeline_mode<synchronous>, transform_indices = @transform_9, window_bounds = array<i64: 2, 32, 32>}, {pipeline_mode = #tpu.pipeline_mode<synchronous>, transform_indices = @transform_10, window_bounds = array<i64: 2, 1, 32>}, {pipeline_mode = #tpu.pipeline_mode<synchronous>, transform_indices = @transform_11, window_bounds = array<i64: 2, 32, 64>}, {pipeline_mode = #tpu.pipeline_mode<synchronous>, transform_indices = @transform_12, window_bounds = array<i64: 2, 1, 64>}, {pipeline_mode = #tpu.pipeline_mode<synchronous>, transform_indices = @transform_13, window_bounds = array<i64: 2, 32, 32>}, {pipeline_mode = #tpu.pipeline_mode<synchronous>, transform_indices = @transform_14, window_bounds = array<i64: 2, 1, 32>}, {pipeline_mode = #tpu.pipeline_mode<synchronous>, transform_indices = @transform_15, window_bounds = array<i64: 2, 1, 32>}, {pipeline_mode = #tpu.pipeline_mode<synchronous>, transform_indices = @transform_16, window_bounds = array<i64: 2, 1, 32>}, {pipeline_mode = #tpu.pipeline_mode<synchronous>, transform_indices = @transform_17, window_bounds = array<i64: 2, 32, 64>}, {pipeline_mode = #tpu.pipeline_mode<synchronous>, transform_indices = @transform_18, window_bounds = array<i64: 2, 1, 64>}, {pipeline_mode = #tpu.pipeline_mode<synchronous>, transform_indices = @transform_19, window_bounds = array<i64: 2, 64, 32>}, {pipeline_mode = #tpu.pipeline_mode<synchronous>, transform_indices = @transform_20, window_bounds = array<i64: 2, 1, 32>}, {pipeline_mode = #tpu.pipeline_mode<synchronous>, transform_indices = @transform_21, window_bounds = array<i64: 2, 1, 32>}, {pipeline_mode = #tpu.pipeline_mode<synchronous>, transform_indices = @transform_22, window_bounds = array<i64: 2, 1, 32>}, {pipeline_mode = #tpu.pipeline_mode<synchronous>, transform_indices = @transform_23, window_bounds = array<i64: 3, 32, 32>}, {pipeline_mode = #tpu.pipeline_mode<synchronous>, transform_indices = @transform_24, window_bounds = array<i64: 3, 1, 32>}, {pipeline_mode = #tpu.pipeline_mode<synchronous>, transform_indices = @transform_25, window_bounds = array<i64: 96, 128>}, {pipeline_mode = #tpu.pipeline_mode<synchronous>, transform_indices = @transform_26, window_bounds = array<i64: 1, 128>}, {transform_indices = @transform_27, window_bounds = array<i64: 1, 48, 128>}]} {
    %c0 = arith.constant 0 : index
    %c0_0 = arith.constant 0 : index
    %c0_1 = arith.constant 0 : index
    %0 = vector.load %arg1[%c0, %c0_0, %c0_1] : memref<1x48x32xf32, #tpu.memory_space<vmem>>, vector<1x48x32xf32>
    %1 = vector.shape_cast %0 : vector<1x48x32xf32> to vector<48x32xf32>
    %c0_2 = arith.constant 0 : index
    %c0_3 = arith.constant 0 : index
    %c0_4 = arith.constant 0 : index
    %2 = vector.load %arg2[%c0_2, %c0_3, %c0_4] : memref<1x16x32xf32, #tpu.memory_space<vmem>>, vector<1x16x32xf32>
    %3 = vector.shape_cast %2 : vector<1x16x32xf32> to vector<16x32xf32>
    %c0_5 = arith.constant 0 : index
    %c0_6 = arith.constant 0 : index
    %c0_7 = arith.constant 0 : index
    %4 = vector.load %arg3[%c0_5, %c0_6, %c0_7] : memref<1x1x16xf32, #tpu.memory_space<vmem>>, vector<1x1x16xf32>
    %5 = vector.shape_cast %4 : vector<1x1x16xf32> to vector<1x16xf32>
    %6 = tpu.iota {dimensions = array<i32: 0>} : vector<48x48xi32>
    %7 = tpu.iota {dimensions = array<i32: 1>} : vector<48x48xi32>
    %8 = arith.cmpi sgt, %7, %6 : vector<48x48xi32>
    %cst = arith.constant -1.000000e+09 : f32
    %cst_8 = arith.constant 0.000000e+00 : f32
    %9 = vector.broadcast %cst : f32 to vector<48x48xf32>
    %10 = vector.broadcast %cst_8 : f32 to vector<48x48xf32>
    %11 = arith.select %8, %9, %10 : vector<48x48xi1>, vector<48x48xf32>
    %12 = arith.truncf %1 : vector<48x32xf32> to vector<48x32xbf16>
    %c0_9 = arith.constant 0 : index
    %c0_10 = arith.constant 0 : index
    %c0_11 = arith.constant 0 : index
    %13 = vector.load %arg4[%c0_9, %c0_10, %c0_11] : memref<2x32x96xbf16, #tpu.memory_space<vmem>>, vector<1x32x96xbf16>
    %14 = vector.shape_cast %13 : vector<1x32x96xbf16> to vector<32x96xbf16>
    %cst_12 = arith.constant dense<0.000000e+00> : vector<48x96xf32>
    %15 = tpu.matmul %12, %14, %cst_12 {dimension_numbers = #tpu.dot_dimension_numbers<[1], [0], [0], [1], [0, 0, 1, 1], [], []>} : vector<48x32xbf16>, vector<32x96xbf16>, vector<48x96xf32> -> vector<48x96xf32>
    %c0_13 = arith.constant 0 : index
    %c0_14 = arith.constant 0 : index
    %c0_15 = arith.constant 0 : index
    %16 = vector.load %arg5[%c0_13, %c0_14, %c0_15] : memref<2x1x96xf32, #tpu.memory_space<vmem>>, vector<1x1x96xf32>
    %17 = vector.shape_cast %16 : vector<1x1x96xf32> to vector<1x96xf32>
    %18 = vector.broadcast %17 : vector<1x96xf32> to vector<48x96xf32>
    %19 = arith.addf %15, %18 : vector<48x96xf32>
    %20 = vector.extract_strided_slice %19 {offsets = [0, 0], sizes = [48, 32], strides = [1, 1]} : vector<48x96xf32> to vector<48x32xf32>
    %21 = vector.extract_strided_slice %19 {offsets = [0, 32], sizes = [48, 32], strides = [1, 1]} : vector<48x96xf32> to vector<48x32xf32>
    %22 = vector.extract_strided_slice %19 {offsets = [0, 64], sizes = [48, 32], strides = [1, 1]} : vector<48x96xf32> to vector<48x32xf32>
    %c0_16 = arith.constant 0 : index
    %c0_17 = arith.constant 0 : index
    %c0_18 = arith.constant 0 : index
    %23 = vector.load %arg6[%c0_16, %c0_17, %c0_18] : memref<2x32x32xbf16, #tpu.memory_space<vmem>>, vector<1x32x32xbf16>
    %24 = vector.shape_cast %23 : vector<1x32x32xbf16> to vector<32x32xbf16>
    %25 = arith.truncf %20 : vector<48x32xf32> to vector<48x32xbf16>
    %26 = arith.truncf %21 : vector<48x32xf32> to vector<48x32xbf16>
    %27 = arith.truncf %22 : vector<48x32xf32> to vector<48x32xbf16>
    %28 = vector.extract_strided_slice %25 {offsets = [0, 0], sizes = [48, 8], strides = [1, 1]} : vector<48x32xbf16> to vector<48x8xbf16>
    %29 = vector.extract_strided_slice %26 {offsets = [0, 0], sizes = [48, 8], strides = [1, 1]} : vector<48x32xbf16> to vector<48x8xbf16>
    %cst_19 = arith.constant dense<0.000000e+00> : vector<48x48xf32>
    %30 = tpu.matmul %28, %29, %cst_19 {dimension_numbers = #tpu.dot_dimension_numbers<[1], [1], [0], [0], [0, 0, 1, 0], [], []>} : vector<48x8xbf16>, vector<48x8xbf16>, vector<48x48xf32> -> vector<48x48xf32>
    %cst_20 = arith.constant 0.353553385 : f32
    %31 = vector.broadcast %cst_20 : f32 to vector<48x48xf32>
    %32 = arith.mulf %30, %31 : vector<48x48xf32>
    %33 = arith.addf %32, %11 : vector<48x48xf32>
    %cst_21 = arith.constant dense<0xFF800000> : vector<48xf32>
    %34 = vector.multi_reduction <maximumf>, %33, %cst_21 [1] : vector<48x48xf32> to vector<48xf32>
    %35 = vector.shape_cast %34 : vector<48xf32> to vector<48x1xf32>
    %36 = vector.broadcast %35 : vector<48x1xf32> to vector<48x48xf32>
    %37 = arith.subf %33, %36 : vector<48x48xf32>
    %38 = math.exp %37 : vector<48x48xf32>
    %cst_22 = arith.constant dense<0.000000e+00> : vector<48xf32>
    %39 = vector.multi_reduction <add>, %38, %cst_22 [1] : vector<48x48xf32> to vector<48xf32>
    %40 = vector.shape_cast %39 : vector<48xf32> to vector<48x1xf32>
    %41 = tpu.reciprocal %40 {approx = true} : vector<48x1xf32> -> vector<48x1xf32>
    %42 = vector.broadcast %41 : vector<48x1xf32> to vector<48x48xf32>
    %43 = arith.mulf %38, %42 : vector<48x48xf32>
    %44 = arith.truncf %43 : vector<48x48xf32> to vector<48x48xbf16>
    %45 = vector.extract_strided_slice %27 {offsets = [0, 0], sizes = [48, 8], strides = [1, 1]} : vector<48x32xbf16> to vector<48x8xbf16>
    %cst_23 = arith.constant dense<0.000000e+00> : vector<48x8xf32>
    %46 = tpu.matmul %44, %45, %cst_23 {dimension_numbers = #tpu.dot_dimension_numbers<[1], [0], [0], [1], [0, 0, 1, 1], [], []>} : vector<48x48xbf16>, vector<48x8xbf16>, vector<48x8xf32> -> vector<48x8xf32>
    %47 = vector.extract_strided_slice %25 {offsets = [0, 8], sizes = [48, 8], strides = [1, 1]} : vector<48x32xbf16> to vector<48x8xbf16>
    %48 = vector.extract_strided_slice %26 {offsets = [0, 8], sizes = [48, 8], strides = [1, 1]} : vector<48x32xbf16> to vector<48x8xbf16>
    %cst_24 = arith.constant dense<0.000000e+00> : vector<48x48xf32>
    %49 = tpu.matmul %47, %48, %cst_24 {dimension_numbers = #tpu.dot_dimension_numbers<[1], [1], [0], [0], [0, 0, 1, 0], [], []>} : vector<48x8xbf16>, vector<48x8xbf16>, vector<48x48xf32> -> vector<48x48xf32>
    %cst_25 = arith.constant 0.353553385 : f32
    %50 = vector.broadcast %cst_25 : f32 to vector<48x48xf32>
    %51 = arith.mulf %49, %50 : vector<48x48xf32>
    %52 = arith.addf %51, %11 : vector<48x48xf32>
    %cst_26 = arith.constant dense<0xFF800000> : vector<48xf32>
    %53 = vector.multi_reduction <maximumf>, %52, %cst_26 [1] : vector<48x48xf32> to vector<48xf32>
    %54 = vector.shape_cast %53 : vector<48xf32> to vector<48x1xf32>
    %55 = vector.broadcast %54 : vector<48x1xf32> to vector<48x48xf32>
    %56 = arith.subf %52, %55 : vector<48x48xf32>
    %57 = math.exp %56 : vector<48x48xf32>
    %cst_27 = arith.constant dense<0.000000e+00> : vector<48xf32>
    %58 = vector.multi_reduction <add>, %57, %cst_27 [1] : vector<48x48xf32> to vector<48xf32>
    %59 = vector.shape_cast %58 : vector<48xf32> to vector<48x1xf32>
    %60 = tpu.reciprocal %59 {approx = true} : vector<48x1xf32> -> vector<48x1xf32>
    %61 = vector.broadcast %60 : vector<48x1xf32> to vector<48x48xf32>
    %62 = arith.mulf %57, %61 : vector<48x48xf32>
    %63 = arith.truncf %62 : vector<48x48xf32> to vector<48x48xbf16>
    %64 = vector.extract_strided_slice %27 {offsets = [0, 8], sizes = [48, 8], strides = [1, 1]} : vector<48x32xbf16> to vector<48x8xbf16>
    %cst_28 = arith.constant dense<0.000000e+00> : vector<48x8xf32>
    %65 = tpu.matmul %63, %64, %cst_28 {dimension_numbers = #tpu.dot_dimension_numbers<[1], [0], [0], [1], [0, 0, 1, 1], [], []>} : vector<48x48xbf16>, vector<48x8xbf16>, vector<48x8xf32> -> vector<48x8xf32>
    %66 = vector.extract_strided_slice %25 {offsets = [0, 16], sizes = [48, 8], strides = [1, 1]} : vector<48x32xbf16> to vector<48x8xbf16>
    %67 = vector.extract_strided_slice %26 {offsets = [0, 16], sizes = [48, 8], strides = [1, 1]} : vector<48x32xbf16> to vector<48x8xbf16>
    %cst_29 = arith.constant dense<0.000000e+00> : vector<48x48xf32>
    %68 = tpu.matmul %66, %67, %cst_29 {dimension_numbers = #tpu.dot_dimension_numbers<[1], [1], [0], [0], [0, 0, 1, 0], [], []>} : vector<48x8xbf16>, vector<48x8xbf16>, vector<48x48xf32> -> vector<48x48xf32>
    %cst_30 = arith.constant 0.353553385 : f32
    %69 = vector.broadcast %cst_30 : f32 to vector<48x48xf32>
    %70 = arith.mulf %68, %69 : vector<48x48xf32>
    %71 = arith.addf %70, %11 : vector<48x48xf32>
    %cst_31 = arith.constant dense<0xFF800000> : vector<48xf32>
    %72 = vector.multi_reduction <maximumf>, %71, %cst_31 [1] : vector<48x48xf32> to vector<48xf32>
    %73 = vector.shape_cast %72 : vector<48xf32> to vector<48x1xf32>
    %74 = vector.broadcast %73 : vector<48x1xf32> to vector<48x48xf32>
    %75 = arith.subf %71, %74 : vector<48x48xf32>
    %76 = math.exp %75 : vector<48x48xf32>
    %cst_32 = arith.constant dense<0.000000e+00> : vector<48xf32>
    %77 = vector.multi_reduction <add>, %76, %cst_32 [1] : vector<48x48xf32> to vector<48xf32>
    %78 = vector.shape_cast %77 : vector<48xf32> to vector<48x1xf32>
    %79 = tpu.reciprocal %78 {approx = true} : vector<48x1xf32> -> vector<48x1xf32>
    %80 = vector.broadcast %79 : vector<48x1xf32> to vector<48x48xf32>
    %81 = arith.mulf %76, %80 : vector<48x48xf32>
    %82 = arith.truncf %81 : vector<48x48xf32> to vector<48x48xbf16>
    %83 = vector.extract_strided_slice %27 {offsets = [0, 16], sizes = [48, 8], strides = [1, 1]} : vector<48x32xbf16> to vector<48x8xbf16>
    %cst_33 = arith.constant dense<0.000000e+00> : vector<48x8xf32>
    %84 = tpu.matmul %82, %83, %cst_33 {dimension_numbers = #tpu.dot_dimension_numbers<[1], [0], [0], [1], [0, 0, 1, 1], [], []>} : vector<48x48xbf16>, vector<48x8xbf16>, vector<48x8xf32> -> vector<48x8xf32>
    %85 = vector.extract_strided_slice %25 {offsets = [0, 24], sizes = [48, 8], strides = [1, 1]} : vector<48x32xbf16> to vector<48x8xbf16>
    %86 = vector.extract_strided_slice %26 {offsets = [0, 24], sizes = [48, 8], strides = [1, 1]} : vector<48x32xbf16> to vector<48x8xbf16>
    %cst_34 = arith.constant dense<0.000000e+00> : vector<48x48xf32>
    %87 = tpu.matmul %85, %86, %cst_34 {dimension_numbers = #tpu.dot_dimension_numbers<[1], [1], [0], [0], [0, 0, 1, 0], [], []>} : vector<48x8xbf16>, vector<48x8xbf16>, vector<48x48xf32> -> vector<48x48xf32>
    %cst_35 = arith.constant 0.353553385 : f32
    %88 = vector.broadcast %cst_35 : f32 to vector<48x48xf32>
    %89 = arith.mulf %87, %88 : vector<48x48xf32>
    %90 = arith.addf %89, %11 : vector<48x48xf32>
    %cst_36 = arith.constant dense<0xFF800000> : vector<48xf32>
    %91 = vector.multi_reduction <maximumf>, %90, %cst_36 [1] : vector<48x48xf32> to vector<48xf32>
    %92 = vector.shape_cast %91 : vector<48xf32> to vector<48x1xf32>
    %93 = vector.broadcast %92 : vector<48x1xf32> to vector<48x48xf32>
    %94 = arith.subf %90, %93 : vector<48x48xf32>
    %95 = math.exp %94 : vector<48x48xf32>
    %cst_37 = arith.constant dense<0.000000e+00> : vector<48xf32>
    %96 = vector.multi_reduction <add>, %95, %cst_37 [1] : vector<48x48xf32> to vector<48xf32>
    %97 = vector.shape_cast %96 : vector<48xf32> to vector<48x1xf32>
    %98 = tpu.reciprocal %97 {approx = true} : vector<48x1xf32> -> vector<48x1xf32>
    %99 = vector.broadcast %98 : vector<48x1xf32> to vector<48x48xf32>
    %100 = arith.mulf %95, %99 : vector<48x48xf32>
    %101 = arith.truncf %100 : vector<48x48xf32> to vector<48x48xbf16>
    %102 = vector.extract_strided_slice %27 {offsets = [0, 24], sizes = [48, 8], strides = [1, 1]} : vector<48x32xbf16> to vector<48x8xbf16>
    %cst_38 = arith.constant dense<0.000000e+00> : vector<48x8xf32>
    %103 = tpu.matmul %101, %102, %cst_38 {dimension_numbers = #tpu.dot_dimension_numbers<[1], [0], [0], [1], [0, 0, 1, 1], [], []>} : vector<48x48xbf16>, vector<48x8xbf16>, vector<48x8xf32> -> vector<48x8xf32>
    %104 = tpu.concatenate %46, %65, %84, %103 in 1 : vector<48x8xf32>, vector<48x8xf32>, vector<48x8xf32>, vector<48x8xf32> -> vector<48x32xf32>
    %105 = arith.truncf %104 : vector<48x32xf32> to vector<48x32xbf16>
    %cst_39 = arith.constant dense<0.000000e+00> : vector<48x32xf32>
    %106 = tpu.matmul %105, %24, %cst_39 {dimension_numbers = #tpu.dot_dimension_numbers<[1], [0], [0], [1], [0, 0, 1, 1], [], []>} : vector<48x32xbf16>, vector<32x32xbf16>, vector<48x32xf32> -> vector<48x32xf32>
    %107 = arith.addf %1, %106 : vector<48x32xf32>
    %c0_40 = arith.constant 0 : index
    %c0_41 = arith.constant 0 : index
    %c0_42 = arith.constant 0 : index
    %108 = vector.load %arg7[%c0_40, %c0_41, %c0_42] : memref<2x1x32xf32, #tpu.memory_space<vmem>>, vector<1x1x32xf32>
    %109 = vector.shape_cast %108 : vector<1x1x32xf32> to vector<1x32xf32>
    %110 = vector.broadcast %109 : vector<1x32xf32> to vector<48x32xf32>
    %111 = arith.addf %107, %110 : vector<48x32xf32>
    %c0_43 = arith.constant 0 : index
    %c0_44 = arith.constant 0 : index
    %c0_45 = arith.constant 0 : index
    %112 = vector.load %arg8[%c0_43, %c0_44, %c0_45] : memref<2x1x32xf32, #tpu.memory_space<vmem>>, vector<1x1x32xf32>
    %113 = vector.shape_cast %112 : vector<1x1x32xf32> to vector<1x32xf32>
    %c0_46 = arith.constant 0 : index
    %c0_47 = arith.constant 0 : index
    %c0_48 = arith.constant 0 : index
    %114 = vector.load %arg9[%c0_46, %c0_47, %c0_48] : memref<2x1x32xf32, #tpu.memory_space<vmem>>, vector<1x1x32xf32>
    %115 = vector.shape_cast %114 : vector<1x1x32xf32> to vector<1x32xf32>
    %cst_49 = arith.constant dense<0.000000e+00> : vector<48xf32>
    %116 = vector.multi_reduction <add>, %111, %cst_49 [1] : vector<48x32xf32> to vector<48xf32>
    %117 = vector.shape_cast %116 : vector<48xf32> to vector<48x1xf32>
    %cst_50 = arith.constant 3.200000e+01 : f32
    %118 = vector.broadcast %cst_50 : f32 to vector<48x1xf32>
    %119 = arith.divf %117, %118 : vector<48x1xf32>
    %120 = vector.broadcast %119 : vector<48x1xf32> to vector<48x32xf32>
    %121 = arith.subf %111, %120 : vector<48x32xf32>
    %122 = arith.mulf %121, %121 : vector<48x32xf32>
    %cst_51 = arith.constant dense<0.000000e+00> : vector<48xf32>
    %123 = vector.multi_reduction <add>, %122, %cst_51 [1] : vector<48x32xf32> to vector<48xf32>
    %124 = vector.shape_cast %123 : vector<48xf32> to vector<48x1xf32>
    %cst_52 = arith.constant 3.200000e+01 : f32
    %125 = vector.broadcast %cst_52 : f32 to vector<48x1xf32>
    %126 = arith.divf %124, %125 : vector<48x1xf32>
    %127 = vector.broadcast %119 : vector<48x1xf32> to vector<48x32xf32>
    %128 = arith.subf %111, %127 : vector<48x32xf32>
    %cst_53 = arith.constant 9.99999974E-6 : f32
    %129 = vector.broadcast %cst_53 : f32 to vector<48x1xf32>
    %130 = arith.addf %126, %129 : vector<48x1xf32>
    %131 = math.rsqrt %130 : vector<48x1xf32>
    %132 = vector.broadcast %131 : vector<48x1xf32> to vector<48x32xf32>
    %133 = arith.mulf %128, %132 : vector<48x32xf32>
    %134 = vector.broadcast %113 : vector<1x32xf32> to vector<48x32xf32>
    %135 = arith.mulf %133, %134 : vector<48x32xf32>
    %136 = vector.broadcast %115 : vector<1x32xf32> to vector<48x32xf32>
    %137 = arith.addf %135, %136 : vector<48x32xf32>
    %138 = arith.truncf %137 : vector<48x32xf32> to vector<48x32xbf16>
    %c0_54 = arith.constant 0 : index
    %c0_55 = arith.constant 0 : index
    %c0_56 = arith.constant 0 : index
    %139 = vector.load %arg10[%c0_54, %c0_55, %c0_56] : memref<2x32x32xbf16, #tpu.memory_space<vmem>>, vector<1x32x32xbf16>
    %140 = vector.shape_cast %139 : vector<1x32x32xbf16> to vector<32x32xbf16>
    %cst_57 = arith.constant dense<0.000000e+00> : vector<48x32xf32>
    %141 = tpu.matmul %138, %140, %cst_57 {dimension_numbers = #tpu.dot_dimension_numbers<[1], [0], [0], [1], [0, 0, 1, 1], [], []>} : vector<48x32xbf16>, vector<32x32xbf16>, vector<48x32xf32> -> vector<48x32xf32>
    %c0_58 = arith.constant 0 : index
    %c0_59 = arith.constant 0 : index
    %c0_60 = arith.constant 0 : index
    %142 = vector.load %arg11[%c0_58, %c0_59, %c0_60] : memref<2x1x32xf32, #tpu.memory_space<vmem>>, vector<1x1x32xf32>
    %143 = vector.shape_cast %142 : vector<1x1x32xf32> to vector<1x32xf32>
    %144 = vector.broadcast %143 : vector<1x32xf32> to vector<48x32xf32>
    %145 = arith.addf %141, %144 : vector<48x32xf32>
    %146 = arith.truncf %3 : vector<16x32xf32> to vector<16x32xbf16>
    %c0_61 = arith.constant 0 : index
    %c0_62 = arith.constant 0 : index
    %c0_63 = arith.constant 0 : index
    %147 = vector.load %arg12[%c0_61, %c0_62, %c0_63] : memref<2x32x64xbf16, #tpu.memory_space<vmem>>, vector<1x32x64xbf16>
    %148 = vector.shape_cast %147 : vector<1x32x64xbf16> to vector<32x64xbf16>
    %cst_64 = arith.constant dense<0.000000e+00> : vector<16x64xf32>
    %149 = tpu.matmul %146, %148, %cst_64 {dimension_numbers = #tpu.dot_dimension_numbers<[1], [0], [0], [1], [0, 0, 1, 1], [], []>} : vector<16x32xbf16>, vector<32x64xbf16>, vector<16x64xf32> -> vector<16x64xf32>
    %c0_65 = arith.constant 0 : index
    %c0_66 = arith.constant 0 : index
    %c0_67 = arith.constant 0 : index
    %150 = vector.load %arg13[%c0_65, %c0_66, %c0_67] : memref<2x1x64xf32, #tpu.memory_space<vmem>>, vector<1x1x64xf32>
    %151 = vector.shape_cast %150 : vector<1x1x64xf32> to vector<1x64xf32>
    %152 = vector.broadcast %151 : vector<1x64xf32> to vector<16x64xf32>
    %153 = arith.addf %149, %152 : vector<16x64xf32>
    %154 = vector.extract_strided_slice %153 {offsets = [0, 0], sizes = [16, 32], strides = [1, 1]} : vector<16x64xf32> to vector<16x32xf32>
    %155 = vector.extract_strided_slice %153 {offsets = [0, 32], sizes = [16, 32], strides = [1, 1]} : vector<16x64xf32> to vector<16x32xf32>
    %c0_68 = arith.constant 0 : index
    %c0_69 = arith.constant 0 : index
    %c0_70 = arith.constant 0 : index
    %156 = vector.load %arg14[%c0_68, %c0_69, %c0_70] : memref<2x32x32xbf16, #tpu.memory_space<vmem>>, vector<1x32x32xbf16>
    %157 = vector.shape_cast %156 : vector<1x32x32xbf16> to vector<32x32xbf16>
    %158 = arith.truncf %145 : vector<48x32xf32> to vector<48x32xbf16>
    %159 = arith.truncf %154 : vector<16x32xf32> to vector<16x32xbf16>
    %160 = arith.truncf %155 : vector<16x32xf32> to vector<16x32xbf16>
    %161 = vector.extract_strided_slice %158 {offsets = [0, 0], sizes = [48, 8], strides = [1, 1]} : vector<48x32xbf16> to vector<48x8xbf16>
    %162 = vector.extract_strided_slice %159 {offsets = [0, 0], sizes = [16, 8], strides = [1, 1]} : vector<16x32xbf16> to vector<16x8xbf16>
    %cst_71 = arith.constant dense<0.000000e+00> : vector<48x16xf32>
    %163 = tpu.matmul %161, %162, %cst_71 {dimension_numbers = #tpu.dot_dimension_numbers<[1], [1], [0], [0], [0, 0, 1, 0], [], []>} : vector<48x8xbf16>, vector<16x8xbf16>, vector<48x16xf32> -> vector<48x16xf32>
    %cst_72 = arith.constant 0.353553385 : f32
    %164 = vector.broadcast %cst_72 : f32 to vector<48x16xf32>
    %165 = arith.mulf %163, %164 : vector<48x16xf32>
    %166 = vector.broadcast %5 : vector<1x16xf32> to vector<48x16xf32>
    %167 = arith.addf %165, %166 : vector<48x16xf32>
    %cst_73 = arith.constant dense<0xFF800000> : vector<48xf32>
    %168 = vector.multi_reduction <maximumf>, %167, %cst_73 [1] : vector<48x16xf32> to vector<48xf32>
    %169 = vector.shape_cast %168 : vector<48xf32> to vector<48x1xf32>
    %170 = vector.broadcast %169 : vector<48x1xf32> to vector<48x16xf32>
    %171 = arith.subf %167, %170 : vector<48x16xf32>
    %172 = math.exp %171 : vector<48x16xf32>
    %cst_74 = arith.constant dense<0.000000e+00> : vector<48xf32>
    %173 = vector.multi_reduction <add>, %172, %cst_74 [1] : vector<48x16xf32> to vector<48xf32>
    %174 = vector.shape_cast %173 : vector<48xf32> to vector<48x1xf32>
    %175 = tpu.reciprocal %174 {approx = true} : vector<48x1xf32> -> vector<48x1xf32>
    %176 = vector.broadcast %175 : vector<48x1xf32> to vector<48x16xf32>
    %177 = arith.mulf %172, %176 : vector<48x16xf32>
    %178 = arith.truncf %177 : vector<48x16xf32> to vector<48x16xbf16>
    %179 = vector.extract_strided_slice %160 {offsets = [0, 0], sizes = [16, 8], strides = [1, 1]} : vector<16x32xbf16> to vector<16x8xbf16>
    %cst_75 = arith.constant dense<0.000000e+00> : vector<48x8xf32>
    %180 = tpu.matmul %178, %179, %cst_75 {dimension_numbers = #tpu.dot_dimension_numbers<[1], [0], [0], [1], [0, 0, 1, 1], [], []>} : vector<48x16xbf16>, vector<16x8xbf16>, vector<48x8xf32> -> vector<48x8xf32>
    %181 = vector.extract_strided_slice %158 {offsets = [0, 8], sizes = [48, 8], strides = [1, 1]} : vector<48x32xbf16> to vector<48x8xbf16>
    %182 = vector.extract_strided_slice %159 {offsets = [0, 8], sizes = [16, 8], strides = [1, 1]} : vector<16x32xbf16> to vector<16x8xbf16>
    %cst_76 = arith.constant dense<0.000000e+00> : vector<48x16xf32>
    %183 = tpu.matmul %181, %182, %cst_76 {dimension_numbers = #tpu.dot_dimension_numbers<[1], [1], [0], [0], [0, 0, 1, 0], [], []>} : vector<48x8xbf16>, vector<16x8xbf16>, vector<48x16xf32> -> vector<48x16xf32>
    %cst_77 = arith.constant 0.353553385 : f32
    %184 = vector.broadcast %cst_77 : f32 to vector<48x16xf32>
    %185 = arith.mulf %183, %184 : vector<48x16xf32>
    %186 = vector.broadcast %5 : vector<1x16xf32> to vector<48x16xf32>
    %187 = arith.addf %185, %186 : vector<48x16xf32>
    %cst_78 = arith.constant dense<0xFF800000> : vector<48xf32>
    %188 = vector.multi_reduction <maximumf>, %187, %cst_78 [1] : vector<48x16xf32> to vector<48xf32>
    %189 = vector.shape_cast %188 : vector<48xf32> to vector<48x1xf32>
    %190 = vector.broadcast %189 : vector<48x1xf32> to vector<48x16xf32>
    %191 = arith.subf %187, %190 : vector<48x16xf32>
    %192 = math.exp %191 : vector<48x16xf32>
    %cst_79 = arith.constant dense<0.000000e+00> : vector<48xf32>
    %193 = vector.multi_reduction <add>, %192, %cst_79 [1] : vector<48x16xf32> to vector<48xf32>
    %194 = vector.shape_cast %193 : vector<48xf32> to vector<48x1xf32>
    %195 = tpu.reciprocal %194 {approx = true} : vector<48x1xf32> -> vector<48x1xf32>
    %196 = vector.broadcast %195 : vector<48x1xf32> to vector<48x16xf32>
    %197 = arith.mulf %192, %196 : vector<48x16xf32>
    %198 = arith.truncf %197 : vector<48x16xf32> to vector<48x16xbf16>
    %199 = vector.extract_strided_slice %160 {offsets = [0, 8], sizes = [16, 8], strides = [1, 1]} : vector<16x32xbf16> to vector<16x8xbf16>
    %cst_80 = arith.constant dense<0.000000e+00> : vector<48x8xf32>
    %200 = tpu.matmul %198, %199, %cst_80 {dimension_numbers = #tpu.dot_dimension_numbers<[1], [0], [0], [1], [0, 0, 1, 1], [], []>} : vector<48x16xbf16>, vector<16x8xbf16>, vector<48x8xf32> -> vector<48x8xf32>
    %201 = vector.extract_strided_slice %158 {offsets = [0, 16], sizes = [48, 8], strides = [1, 1]} : vector<48x32xbf16> to vector<48x8xbf16>
    %202 = vector.extract_strided_slice %159 {offsets = [0, 16], sizes = [16, 8], strides = [1, 1]} : vector<16x32xbf16> to vector<16x8xbf16>
    %cst_81 = arith.constant dense<0.000000e+00> : vector<48x16xf32>
    %203 = tpu.matmul %201, %202, %cst_81 {dimension_numbers = #tpu.dot_dimension_numbers<[1], [1], [0], [0], [0, 0, 1, 0], [], []>} : vector<48x8xbf16>, vector<16x8xbf16>, vector<48x16xf32> -> vector<48x16xf32>
    %cst_82 = arith.constant 0.353553385 : f32
    %204 = vector.broadcast %cst_82 : f32 to vector<48x16xf32>
    %205 = arith.mulf %203, %204 : vector<48x16xf32>
    %206 = vector.broadcast %5 : vector<1x16xf32> to vector<48x16xf32>
    %207 = arith.addf %205, %206 : vector<48x16xf32>
    %cst_83 = arith.constant dense<0xFF800000> : vector<48xf32>
    %208 = vector.multi_reduction <maximumf>, %207, %cst_83 [1] : vector<48x16xf32> to vector<48xf32>
    %209 = vector.shape_cast %208 : vector<48xf32> to vector<48x1xf32>
    %210 = vector.broadcast %209 : vector<48x1xf32> to vector<48x16xf32>
    %211 = arith.subf %207, %210 : vector<48x16xf32>
    %212 = math.exp %211 : vector<48x16xf32>
    %cst_84 = arith.constant dense<0.000000e+00> : vector<48xf32>
    %213 = vector.multi_reduction <add>, %212, %cst_84 [1] : vector<48x16xf32> to vector<48xf32>
    %214 = vector.shape_cast %213 : vector<48xf32> to vector<48x1xf32>
    %215 = tpu.reciprocal %214 {approx = true} : vector<48x1xf32> -> vector<48x1xf32>
    %216 = vector.broadcast %215 : vector<48x1xf32> to vector<48x16xf32>
    %217 = arith.mulf %212, %216 : vector<48x16xf32>
    %218 = arith.truncf %217 : vector<48x16xf32> to vector<48x16xbf16>
    %219 = vector.extract_strided_slice %160 {offsets = [0, 16], sizes = [16, 8], strides = [1, 1]} : vector<16x32xbf16> to vector<16x8xbf16>
    %cst_85 = arith.constant dense<0.000000e+00> : vector<48x8xf32>
    %220 = tpu.matmul %218, %219, %cst_85 {dimension_numbers = #tpu.dot_dimension_numbers<[1], [0], [0], [1], [0, 0, 1, 1], [], []>} : vector<48x16xbf16>, vector<16x8xbf16>, vector<48x8xf32> -> vector<48x8xf32>
    %221 = vector.extract_strided_slice %158 {offsets = [0, 24], sizes = [48, 8], strides = [1, 1]} : vector<48x32xbf16> to vector<48x8xbf16>
    %222 = vector.extract_strided_slice %159 {offsets = [0, 24], sizes = [16, 8], strides = [1, 1]} : vector<16x32xbf16> to vector<16x8xbf16>
    %cst_86 = arith.constant dense<0.000000e+00> : vector<48x16xf32>
    %223 = tpu.matmul %221, %222, %cst_86 {dimension_numbers = #tpu.dot_dimension_numbers<[1], [1], [0], [0], [0, 0, 1, 0], [], []>} : vector<48x8xbf16>, vector<16x8xbf16>, vector<48x16xf32> -> vector<48x16xf32>
    %cst_87 = arith.constant 0.353553385 : f32
    %224 = vector.broadcast %cst_87 : f32 to vector<48x16xf32>
    %225 = arith.mulf %223, %224 : vector<48x16xf32>
    %226 = vector.broadcast %5 : vector<1x16xf32> to vector<48x16xf32>
    %227 = arith.addf %225, %226 : vector<48x16xf32>
    %cst_88 = arith.constant dense<0xFF800000> : vector<48xf32>
    %228 = vector.multi_reduction <maximumf>, %227, %cst_88 [1] : vector<48x16xf32> to vector<48xf32>
    %229 = vector.shape_cast %228 : vector<48xf32> to vector<48x1xf32>
    %230 = vector.broadcast %229 : vector<48x1xf32> to vector<48x16xf32>
    %231 = arith.subf %227, %230 : vector<48x16xf32>
    %232 = math.exp %231 : vector<48x16xf32>
    %cst_89 = arith.constant dense<0.000000e+00> : vector<48xf32>
    %233 = vector.multi_reduction <add>, %232, %cst_89 [1] : vector<48x16xf32> to vector<48xf32>
    %234 = vector.shape_cast %233 : vector<48xf32> to vector<48x1xf32>
    %235 = tpu.reciprocal %234 {approx = true} : vector<48x1xf32> -> vector<48x1xf32>
    %236 = vector.broadcast %235 : vector<48x1xf32> to vector<48x16xf32>
    %237 = arith.mulf %232, %236 : vector<48x16xf32>
    %238 = arith.truncf %237 : vector<48x16xf32> to vector<48x16xbf16>
    %239 = vector.extract_strided_slice %160 {offsets = [0, 24], sizes = [16, 8], strides = [1, 1]} : vector<16x32xbf16> to vector<16x8xbf16>
    %cst_90 = arith.constant dense<0.000000e+00> : vector<48x8xf32>
    %240 = tpu.matmul %238, %239, %cst_90 {dimension_numbers = #tpu.dot_dimension_numbers<[1], [0], [0], [1], [0, 0, 1, 1], [], []>} : vector<48x16xbf16>, vector<16x8xbf16>, vector<48x8xf32> -> vector<48x8xf32>
    %241 = tpu.concatenate %180, %200, %220, %240 in 1 : vector<48x8xf32>, vector<48x8xf32>, vector<48x8xf32>, vector<48x8xf32> -> vector<48x32xf32>
    %242 = arith.truncf %241 : vector<48x32xf32> to vector<48x32xbf16>
    %cst_91 = arith.constant dense<0.000000e+00> : vector<48x32xf32>
    %243 = tpu.matmul %242, %157, %cst_91 {dimension_numbers = #tpu.dot_dimension_numbers<[1], [0], [0], [1], [0, 0, 1, 1], [], []>} : vector<48x32xbf16>, vector<32x32xbf16>, vector<48x32xf32> -> vector<48x32xf32>
    %244 = arith.addf %137, %243 : vector<48x32xf32>
    %c0_92 = arith.constant 0 : index
    %c0_93 = arith.constant 0 : index
    %c0_94 = arith.constant 0 : index
    %245 = vector.load %arg15[%c0_92, %c0_93, %c0_94] : memref<2x1x32xf32, #tpu.memory_space<vmem>>, vector<1x1x32xf32>
    %246 = vector.shape_cast %245 : vector<1x1x32xf32> to vector<1x32xf32>
    %247 = vector.broadcast %246 : vector<1x32xf32> to vector<48x32xf32>
    %248 = arith.addf %244, %247 : vector<48x32xf32>
    %c0_95 = arith.constant 0 : index
    %c0_96 = arith.constant 0 : index
    %c0_97 = arith.constant 0 : index
    %249 = vector.load %arg16[%c0_95, %c0_96, %c0_97] : memref<2x1x32xf32, #tpu.memory_space<vmem>>, vector<1x1x32xf32>
    %250 = vector.shape_cast %249 : vector<1x1x32xf32> to vector<1x32xf32>
    %c0_98 = arith.constant 0 : index
    %c0_99 = arith.constant 0 : index
    %c0_100 = arith.constant 0 : index
    %251 = vector.load %arg17[%c0_98, %c0_99, %c0_100] : memref<2x1x32xf32, #tpu.memory_space<vmem>>, vector<1x1x32xf32>
    %252 = vector.shape_cast %251 : vector<1x1x32xf32> to vector<1x32xf32>
    %cst_101 = arith.constant dense<0.000000e+00> : vector<48xf32>
    %253 = vector.multi_reduction <add>, %248, %cst_101 [1] : vector<48x32xf32> to vector<48xf32>
    %254 = vector.shape_cast %253 : vector<48xf32> to vector<48x1xf32>
    %cst_102 = arith.constant 3.200000e+01 : f32
    %255 = vector.broadcast %cst_102 : f32 to vector<48x1xf32>
    %256 = arith.divf %254, %255 : vector<48x1xf32>
    %257 = vector.broadcast %256 : vector<48x1xf32> to vector<48x32xf32>
    %258 = arith.subf %248, %257 : vector<48x32xf32>
    %259 = arith.mulf %258, %258 : vector<48x32xf32>
    %cst_103 = arith.constant dense<0.000000e+00> : vector<48xf32>
    %260 = vector.multi_reduction <add>, %259, %cst_103 [1] : vector<48x32xf32> to vector<48xf32>
    %261 = vector.shape_cast %260 : vector<48xf32> to vector<48x1xf32>
    %cst_104 = arith.constant 3.200000e+01 : f32
    %262 = vector.broadcast %cst_104 : f32 to vector<48x1xf32>
    %263 = arith.divf %261, %262 : vector<48x1xf32>
    %264 = vector.broadcast %256 : vector<48x1xf32> to vector<48x32xf32>
    %265 = arith.subf %248, %264 : vector<48x32xf32>
    %cst_105 = arith.constant 9.99999974E-6 : f32
    %266 = vector.broadcast %cst_105 : f32 to vector<48x1xf32>
    %267 = arith.addf %263, %266 : vector<48x1xf32>
    %268 = math.rsqrt %267 : vector<48x1xf32>
    %269 = vector.broadcast %268 : vector<48x1xf32> to vector<48x32xf32>
    %270 = arith.mulf %265, %269 : vector<48x32xf32>
    %271 = vector.broadcast %250 : vector<1x32xf32> to vector<48x32xf32>
    %272 = arith.mulf %270, %271 : vector<48x32xf32>
    %273 = vector.broadcast %252 : vector<1x32xf32> to vector<48x32xf32>
    %274 = arith.addf %272, %273 : vector<48x32xf32>
    %275 = arith.truncf %274 : vector<48x32xf32> to vector<48x32xbf16>
    %c0_106 = arith.constant 0 : index
    %c0_107 = arith.constant 0 : index
    %c0_108 = arith.constant 0 : index
    %276 = vector.load %arg18[%c0_106, %c0_107, %c0_108] : memref<2x32x64xbf16, #tpu.memory_space<vmem>>, vector<1x32x64xbf16>
    %277 = vector.shape_cast %276 : vector<1x32x64xbf16> to vector<32x64xbf16>
    %cst_109 = arith.constant dense<0.000000e+00> : vector<48x64xf32>
    %278 = tpu.matmul %275, %277, %cst_109 {dimension_numbers = #tpu.dot_dimension_numbers<[1], [0], [0], [1], [0, 0, 1, 1], [], []>} : vector<48x32xbf16>, vector<32x64xbf16>, vector<48x64xf32> -> vector<48x64xf32>
    %c0_110 = arith.constant 0 : index
    %c0_111 = arith.constant 0 : index
    %c0_112 = arith.constant 0 : index
    %279 = vector.load %arg19[%c0_110, %c0_111, %c0_112] : memref<2x1x64xf32, #tpu.memory_space<vmem>>, vector<1x1x64xf32>
    %280 = vector.shape_cast %279 : vector<1x1x64xf32> to vector<1x64xf32>
    %281 = vector.broadcast %280 : vector<1x64xf32> to vector<48x64xf32>
    %282 = arith.addf %278, %281 : vector<48x64xf32>
    %cst_113 = arith.constant 0.000000e+00 : f32
    %283 = vector.broadcast %cst_113 : f32 to vector<48x64xf32>
    %284 = arith.maximumf %282, %283 : vector<48x64xf32>
    %285 = arith.truncf %284 : vector<48x64xf32> to vector<48x64xbf16>
    %c0_114 = arith.constant 0 : index
    %c0_115 = arith.constant 0 : index
    %c0_116 = arith.constant 0 : index
    %286 = vector.load %arg20[%c0_114, %c0_115, %c0_116] : memref<2x64x32xbf16, #tpu.memory_space<vmem>>, vector<1x64x32xbf16>
    %287 = vector.shape_cast %286 : vector<1x64x32xbf16> to vector<64x32xbf16>
    %cst_117 = arith.constant dense<0.000000e+00> : vector<48x32xf32>
    %288 = tpu.matmul %285, %287, %cst_117 {dimension_numbers = #tpu.dot_dimension_numbers<[1], [0], [0], [1], [0, 0, 1, 1], [], []>} : vector<48x64xbf16>, vector<64x32xbf16>, vector<48x32xf32> -> vector<48x32xf32>
    %c0_118 = arith.constant 0 : index
    %c0_119 = arith.constant 0 : index
    %c0_120 = arith.constant 0 : index
    %289 = vector.load %arg21[%c0_118, %c0_119, %c0_120] : memref<2x1x32xf32, #tpu.memory_space<vmem>>, vector<1x1x32xf32>
    %290 = vector.shape_cast %289 : vector<1x1x32xf32> to vector<1x32xf32>
    %291 = vector.broadcast %290 : vector<1x32xf32> to vector<48x32xf32>
    %292 = arith.addf %288, %291 : vector<48x32xf32>
    %293 = arith.addf %274, %292 : vector<48x32xf32>
    %c0_121 = arith.constant 0 : index
    %c0_122 = arith.constant 0 : index
    %c0_123 = arith.constant 0 : index
    %294 = vector.load %arg22[%c0_121, %c0_122, %c0_123] : memref<2x1x32xf32, #tpu.memory_space<vmem>>, vector<1x1x32xf32>
    %295 = vector.shape_cast %294 : vector<1x1x32xf32> to vector<1x32xf32>
    %c0_124 = arith.constant 0 : index
    %c0_125 = arith.constant 0 : index
    %c0_126 = arith.constant 0 : index
    %296 = vector.load %arg23[%c0_124, %c0_125, %c0_126] : memref<2x1x32xf32, #tpu.memory_space<vmem>>, vector<1x1x32xf32>
    %297 = vector.shape_cast %296 : vector<1x1x32xf32> to vector<1x32xf32>
    %cst_127 = arith.constant dense<0.000000e+00> : vector<48xf32>
    %298 = vector.multi_reduction <add>, %293, %cst_127 [1] : vector<48x32xf32> to vector<48xf32>
    %299 = vector.shape_cast %298 : vector<48xf32> to vector<48x1xf32>
    %cst_128 = arith.constant 3.200000e+01 : f32
    %300 = vector.broadcast %cst_128 : f32 to vector<48x1xf32>
    %301 = arith.divf %299, %300 : vector<48x1xf32>
    %302 = vector.broadcast %301 : vector<48x1xf32> to vector<48x32xf32>
    %303 = arith.subf %293, %302 : vector<48x32xf32>
    %304 = arith.mulf %303, %303 : vector<48x32xf32>
    %cst_129 = arith.constant dense<0.000000e+00> : vector<48xf32>
    %305 = vector.multi_reduction <add>, %304, %cst_129 [1] : vector<48x32xf32> to vector<48xf32>
    %306 = vector.shape_cast %305 : vector<48xf32> to vector<48x1xf32>
    %cst_130 = arith.constant 3.200000e+01 : f32
    %307 = vector.broadcast %cst_130 : f32 to vector<48x1xf32>
    %308 = arith.divf %306, %307 : vector<48x1xf32>
    %309 = vector.broadcast %301 : vector<48x1xf32> to vector<48x32xf32>
    %310 = arith.subf %293, %309 : vector<48x32xf32>
    %cst_131 = arith.constant 9.99999974E-6 : f32
    %311 = vector.broadcast %cst_131 : f32 to vector<48x1xf32>
    %312 = arith.addf %308, %311 : vector<48x1xf32>
    %313 = math.rsqrt %312 : vector<48x1xf32>
    %314 = vector.broadcast %313 : vector<48x1xf32> to vector<48x32xf32>
    %315 = arith.mulf %310, %314 : vector<48x32xf32>
    %316 = vector.broadcast %295 : vector<1x32xf32> to vector<48x32xf32>
    %317 = arith.mulf %315, %316 : vector<48x32xf32>
    %318 = vector.broadcast %297 : vector<1x32xf32> to vector<48x32xf32>
    %319 = arith.addf %317, %318 : vector<48x32xf32>
    %320 = arith.truncf %319 : vector<48x32xf32> to vector<48x32xbf16>
    %c1 = arith.constant 1 : index
    %c0_132 = arith.constant 0 : index
    %c0_133 = arith.constant 0 : index
    %321 = vector.load %arg4[%c1, %c0_132, %c0_133] : memref<2x32x96xbf16, #tpu.memory_space<vmem>>, vector<1x32x96xbf16>
    %322 = vector.shape_cast %321 : vector<1x32x96xbf16> to vector<32x96xbf16>
    %cst_134 = arith.constant dense<0.000000e+00> : vector<48x96xf32>
    %323 = tpu.matmul %320, %322, %cst_134 {dimension_numbers = #tpu.dot_dimension_numbers<[1], [0], [0], [1], [0, 0, 1, 1], [], []>} : vector<48x32xbf16>, vector<32x96xbf16>, vector<48x96xf32> -> vector<48x96xf32>
    %c1_135 = arith.constant 1 : index
    %c0_136 = arith.constant 0 : index
    %c0_137 = arith.constant 0 : index
    %324 = vector.load %arg5[%c1_135, %c0_136, %c0_137] : memref<2x1x96xf32, #tpu.memory_space<vmem>>, vector<1x1x96xf32>
    %325 = vector.shape_cast %324 : vector<1x1x96xf32> to vector<1x96xf32>
    %326 = vector.broadcast %325 : vector<1x96xf32> to vector<48x96xf32>
    %327 = arith.addf %323, %326 : vector<48x96xf32>
    %328 = vector.extract_strided_slice %327 {offsets = [0, 0], sizes = [48, 32], strides = [1, 1]} : vector<48x96xf32> to vector<48x32xf32>
    %329 = vector.extract_strided_slice %327 {offsets = [0, 32], sizes = [48, 32], strides = [1, 1]} : vector<48x96xf32> to vector<48x32xf32>
    %330 = vector.extract_strided_slice %327 {offsets = [0, 64], sizes = [48, 32], strides = [1, 1]} : vector<48x96xf32> to vector<48x32xf32>
    %c1_138 = arith.constant 1 : index
    %c0_139 = arith.constant 0 : index
    %c0_140 = arith.constant 0 : index
    %331 = vector.load %arg6[%c1_138, %c0_139, %c0_140] : memref<2x32x32xbf16, #tpu.memory_space<vmem>>, vector<1x32x32xbf16>
    %332 = vector.shape_cast %331 : vector<1x32x32xbf16> to vector<32x32xbf16>
    %333 = arith.truncf %328 : vector<48x32xf32> to vector<48x32xbf16>
    %334 = arith.truncf %329 : vector<48x32xf32> to vector<48x32xbf16>
    %335 = arith.truncf %330 : vector<48x32xf32> to vector<48x32xbf16>
    %336 = vector.extract_strided_slice %333 {offsets = [0, 0], sizes = [48, 8], strides = [1, 1]} : vector<48x32xbf16> to vector<48x8xbf16>
    %337 = vector.extract_strided_slice %334 {offsets = [0, 0], sizes = [48, 8], strides = [1, 1]} : vector<48x32xbf16> to vector<48x8xbf16>
    %cst_141 = arith.constant dense<0.000000e+00> : vector<48x48xf32>
    %338 = tpu.matmul %336, %337, %cst_141 {dimension_numbers = #tpu.dot_dimension_numbers<[1], [1], [0], [0], [0, 0, 1, 0], [], []>} : vector<48x8xbf16>, vector<48x8xbf16>, vector<48x48xf32> -> vector<48x48xf32>
    %cst_142 = arith.constant 0.353553385 : f32
    %339 = vector.broadcast %cst_142 : f32 to vector<48x48xf32>
    %340 = arith.mulf %338, %339 : vector<48x48xf32>
    %341 = arith.addf %340, %11 : vector<48x48xf32>
    %cst_143 = arith.constant dense<0xFF800000> : vector<48xf32>
    %342 = vector.multi_reduction <maximumf>, %341, %cst_143 [1] : vector<48x48xf32> to vector<48xf32>
    %343 = vector.shape_cast %342 : vector<48xf32> to vector<48x1xf32>
    %344 = vector.broadcast %343 : vector<48x1xf32> to vector<48x48xf32>
    %345 = arith.subf %341, %344 : vector<48x48xf32>
    %346 = math.exp %345 : vector<48x48xf32>
    %cst_144 = arith.constant dense<0.000000e+00> : vector<48xf32>
    %347 = vector.multi_reduction <add>, %346, %cst_144 [1] : vector<48x48xf32> to vector<48xf32>
    %348 = vector.shape_cast %347 : vector<48xf32> to vector<48x1xf32>
    %349 = tpu.reciprocal %348 {approx = true} : vector<48x1xf32> -> vector<48x1xf32>
    %350 = vector.broadcast %349 : vector<48x1xf32> to vector<48x48xf32>
    %351 = arith.mulf %346, %350 : vector<48x48xf32>
    %352 = arith.truncf %351 : vector<48x48xf32> to vector<48x48xbf16>
    %353 = vector.extract_strided_slice %335 {offsets = [0, 0], sizes = [48, 8], strides = [1, 1]} : vector<48x32xbf16> to vector<48x8xbf16>
    %cst_145 = arith.constant dense<0.000000e+00> : vector<48x8xf32>
    %354 = tpu.matmul %352, %353, %cst_145 {dimension_numbers = #tpu.dot_dimension_numbers<[1], [0], [0], [1], [0, 0, 1, 1], [], []>} : vector<48x48xbf16>, vector<48x8xbf16>, vector<48x8xf32> -> vector<48x8xf32>
    %355 = vector.extract_strided_slice %333 {offsets = [0, 8], sizes = [48, 8], strides = [1, 1]} : vector<48x32xbf16> to vector<48x8xbf16>
    %356 = vector.extract_strided_slice %334 {offsets = [0, 8], sizes = [48, 8], strides = [1, 1]} : vector<48x32xbf16> to vector<48x8xbf16>
    %cst_146 = arith.constant dense<0.000000e+00> : vector<48x48xf32>
    %357 = tpu.matmul %355, %356, %cst_146 {dimension_numbers = #tpu.dot_dimension_numbers<[1], [1], [0], [0], [0, 0, 1, 0], [], []>} : vector<48x8xbf16>, vector<48x8xbf16>, vector<48x48xf32> -> vector<48x48xf32>
    %cst_147 = arith.constant 0.353553385 : f32
    %358 = vector.broadcast %cst_147 : f32 to vector<48x48xf32>
    %359 = arith.mulf %357, %358 : vector<48x48xf32>
    %360 = arith.addf %359, %11 : vector<48x48xf32>
    %cst_148 = arith.constant dense<0xFF800000> : vector<48xf32>
    %361 = vector.multi_reduction <maximumf>, %360, %cst_148 [1] : vector<48x48xf32> to vector<48xf32>
    %362 = vector.shape_cast %361 : vector<48xf32> to vector<48x1xf32>
    %363 = vector.broadcast %362 : vector<48x1xf32> to vector<48x48xf32>
    %364 = arith.subf %360, %363 : vector<48x48xf32>
    %365 = math.exp %364 : vector<48x48xf32>
    %cst_149 = arith.constant dense<0.000000e+00> : vector<48xf32>
    %366 = vector.multi_reduction <add>, %365, %cst_149 [1] : vector<48x48xf32> to vector<48xf32>
    %367 = vector.shape_cast %366 : vector<48xf32> to vector<48x1xf32>
    %368 = tpu.reciprocal %367 {approx = true} : vector<48x1xf32> -> vector<48x1xf32>
    %369 = vector.broadcast %368 : vector<48x1xf32> to vector<48x48xf32>
    %370 = arith.mulf %365, %369 : vector<48x48xf32>
    %371 = arith.truncf %370 : vector<48x48xf32> to vector<48x48xbf16>
    %372 = vector.extract_strided_slice %335 {offsets = [0, 8], sizes = [48, 8], strides = [1, 1]} : vector<48x32xbf16> to vector<48x8xbf16>
    %cst_150 = arith.constant dense<0.000000e+00> : vector<48x8xf32>
    %373 = tpu.matmul %371, %372, %cst_150 {dimension_numbers = #tpu.dot_dimension_numbers<[1], [0], [0], [1], [0, 0, 1, 1], [], []>} : vector<48x48xbf16>, vector<48x8xbf16>, vector<48x8xf32> -> vector<48x8xf32>
    %374 = vector.extract_strided_slice %333 {offsets = [0, 16], sizes = [48, 8], strides = [1, 1]} : vector<48x32xbf16> to vector<48x8xbf16>
    %375 = vector.extract_strided_slice %334 {offsets = [0, 16], sizes = [48, 8], strides = [1, 1]} : vector<48x32xbf16> to vector<48x8xbf16>
    %cst_151 = arith.constant dense<0.000000e+00> : vector<48x48xf32>
    %376 = tpu.matmul %374, %375, %cst_151 {dimension_numbers = #tpu.dot_dimension_numbers<[1], [1], [0], [0], [0, 0, 1, 0], [], []>} : vector<48x8xbf16>, vector<48x8xbf16>, vector<48x48xf32> -> vector<48x48xf32>
    %cst_152 = arith.constant 0.353553385 : f32
    %377 = vector.broadcast %cst_152 : f32 to vector<48x48xf32>
    %378 = arith.mulf %376, %377 : vector<48x48xf32>
    %379 = arith.addf %378, %11 : vector<48x48xf32>
    %cst_153 = arith.constant dense<0xFF800000> : vector<48xf32>
    %380 = vector.multi_reduction <maximumf>, %379, %cst_153 [1] : vector<48x48xf32> to vector<48xf32>
    %381 = vector.shape_cast %380 : vector<48xf32> to vector<48x1xf32>
    %382 = vector.broadcast %381 : vector<48x1xf32> to vector<48x48xf32>
    %383 = arith.subf %379, %382 : vector<48x48xf32>
    %384 = math.exp %383 : vector<48x48xf32>
    %cst_154 = arith.constant dense<0.000000e+00> : vector<48xf32>
    %385 = vector.multi_reduction <add>, %384, %cst_154 [1] : vector<48x48xf32> to vector<48xf32>
    %386 = vector.shape_cast %385 : vector<48xf32> to vector<48x1xf32>
    %387 = tpu.reciprocal %386 {approx = true} : vector<48x1xf32> -> vector<48x1xf32>
    %388 = vector.broadcast %387 : vector<48x1xf32> to vector<48x48xf32>
    %389 = arith.mulf %384, %388 : vector<48x48xf32>
    %390 = arith.truncf %389 : vector<48x48xf32> to vector<48x48xbf16>
    %391 = vector.extract_strided_slice %335 {offsets = [0, 16], sizes = [48, 8], strides = [1, 1]} : vector<48x32xbf16> to vector<48x8xbf16>
    %cst_155 = arith.constant dense<0.000000e+00> : vector<48x8xf32>
    %392 = tpu.matmul %390, %391, %cst_155 {dimension_numbers = #tpu.dot_dimension_numbers<[1], [0], [0], [1], [0, 0, 1, 1], [], []>} : vector<48x48xbf16>, vector<48x8xbf16>, vector<48x8xf32> -> vector<48x8xf32>
    %393 = vector.extract_strided_slice %333 {offsets = [0, 24], sizes = [48, 8], strides = [1, 1]} : vector<48x32xbf16> to vector<48x8xbf16>
    %394 = vector.extract_strided_slice %334 {offsets = [0, 24], sizes = [48, 8], strides = [1, 1]} : vector<48x32xbf16> to vector<48x8xbf16>
    %cst_156 = arith.constant dense<0.000000e+00> : vector<48x48xf32>
    %395 = tpu.matmul %393, %394, %cst_156 {dimension_numbers = #tpu.dot_dimension_numbers<[1], [1], [0], [0], [0, 0, 1, 0], [], []>} : vector<48x8xbf16>, vector<48x8xbf16>, vector<48x48xf32> -> vector<48x48xf32>
    %cst_157 = arith.constant 0.353553385 : f32
    %396 = vector.broadcast %cst_157 : f32 to vector<48x48xf32>
    %397 = arith.mulf %395, %396 : vector<48x48xf32>
    %398 = arith.addf %397, %11 : vector<48x48xf32>
    %cst_158 = arith.constant dense<0xFF800000> : vector<48xf32>
    %399 = vector.multi_reduction <maximumf>, %398, %cst_158 [1] : vector<48x48xf32> to vector<48xf32>
    %400 = vector.shape_cast %399 : vector<48xf32> to vector<48x1xf32>
    %401 = vector.broadcast %400 : vector<48x1xf32> to vector<48x48xf32>
    %402 = arith.subf %398, %401 : vector<48x48xf32>
    %403 = math.exp %402 : vector<48x48xf32>
    %cst_159 = arith.constant dense<0.000000e+00> : vector<48xf32>
    %404 = vector.multi_reduction <add>, %403, %cst_159 [1] : vector<48x48xf32> to vector<48xf32>
    %405 = vector.shape_cast %404 : vector<48xf32> to vector<48x1xf32>
    %406 = tpu.reciprocal %405 {approx = true} : vector<48x1xf32> -> vector<48x1xf32>
    %407 = vector.broadcast %406 : vector<48x1xf32> to vector<48x48xf32>
    %408 = arith.mulf %403, %407 : vector<48x48xf32>
    %409 = arith.truncf %408 : vector<48x48xf32> to vector<48x48xbf16>
    %410 = vector.extract_strided_slice %335 {offsets = [0, 24], sizes = [48, 8], strides = [1, 1]} : vector<48x32xbf16> to vector<48x8xbf16>
    %cst_160 = arith.constant dense<0.000000e+00> : vector<48x8xf32>
    %411 = tpu.matmul %409, %410, %cst_160 {dimension_numbers = #tpu.dot_dimension_numbers<[1], [0], [0], [1], [0, 0, 1, 1], [], []>} : vector<48x48xbf16>, vector<48x8xbf16>, vector<48x8xf32> -> vector<48x8xf32>
    %412 = tpu.concatenate %354, %373, %392, %411 in 1 : vector<48x8xf32>, vector<48x8xf32>, vector<48x8xf32>, vector<48x8xf32> -> vector<48x32xf32>
    %413 = arith.truncf %412 : vector<48x32xf32> to vector<48x32xbf16>
    %cst_161 = arith.constant dense<0.000000e+00> : vector<48x32xf32>
    %414 = tpu.matmul %413, %332, %cst_161 {dimension_numbers = #tpu.dot_dimension_numbers<[1], [0], [0], [1], [0, 0, 1, 1], [], []>} : vector<48x32xbf16>, vector<32x32xbf16>, vector<48x32xf32> -> vector<48x32xf32>
    %415 = arith.addf %319, %414 : vector<48x32xf32>
    %c1_162 = arith.constant 1 : index
    %c0_163 = arith.constant 0 : index
    %c0_164 = arith.constant 0 : index
    %416 = vector.load %arg7[%c1_162, %c0_163, %c0_164] : memref<2x1x32xf32, #tpu.memory_space<vmem>>, vector<1x1x32xf32>
    %417 = vector.shape_cast %416 : vector<1x1x32xf32> to vector<1x32xf32>
    %418 = vector.broadcast %417 : vector<1x32xf32> to vector<48x32xf32>
    %419 = arith.addf %415, %418 : vector<48x32xf32>
    %c1_165 = arith.constant 1 : index
    %c0_166 = arith.constant 0 : index
    %c0_167 = arith.constant 0 : index
    %420 = vector.load %arg8[%c1_165, %c0_166, %c0_167] : memref<2x1x32xf32, #tpu.memory_space<vmem>>, vector<1x1x32xf32>
    %421 = vector.shape_cast %420 : vector<1x1x32xf32> to vector<1x32xf32>
    %c1_168 = arith.constant 1 : index
    %c0_169 = arith.constant 0 : index
    %c0_170 = arith.constant 0 : index
    %422 = vector.load %arg9[%c1_168, %c0_169, %c0_170] : memref<2x1x32xf32, #tpu.memory_space<vmem>>, vector<1x1x32xf32>
    %423 = vector.shape_cast %422 : vector<1x1x32xf32> to vector<1x32xf32>
    %cst_171 = arith.constant dense<0.000000e+00> : vector<48xf32>
    %424 = vector.multi_reduction <add>, %419, %cst_171 [1] : vector<48x32xf32> to vector<48xf32>
    %425 = vector.shape_cast %424 : vector<48xf32> to vector<48x1xf32>
    %cst_172 = arith.constant 3.200000e+01 : f32
    %426 = vector.broadcast %cst_172 : f32 to vector<48x1xf32>
    %427 = arith.divf %425, %426 : vector<48x1xf32>
    %428 = vector.broadcast %427 : vector<48x1xf32> to vector<48x32xf32>
    %429 = arith.subf %419, %428 : vector<48x32xf32>
    %430 = arith.mulf %429, %429 : vector<48x32xf32>
    %cst_173 = arith.constant dense<0.000000e+00> : vector<48xf32>
    %431 = vector.multi_reduction <add>, %430, %cst_173 [1] : vector<48x32xf32> to vector<48xf32>
    %432 = vector.shape_cast %431 : vector<48xf32> to vector<48x1xf32>
    %cst_174 = arith.constant 3.200000e+01 : f32
    %433 = vector.broadcast %cst_174 : f32 to vector<48x1xf32>
    %434 = arith.divf %432, %433 : vector<48x1xf32>
    %435 = vector.broadcast %427 : vector<48x1xf32> to vector<48x32xf32>
    %436 = arith.subf %419, %435 : vector<48x32xf32>
    %cst_175 = arith.constant 9.99999974E-6 : f32
    %437 = vector.broadcast %cst_175 : f32 to vector<48x1xf32>
    %438 = arith.addf %434, %437 : vector<48x1xf32>
    %439 = math.rsqrt %438 : vector<48x1xf32>
    %440 = vector.broadcast %439 : vector<48x1xf32> to vector<48x32xf32>
    %441 = arith.mulf %436, %440 : vector<48x32xf32>
    %442 = vector.broadcast %421 : vector<1x32xf32> to vector<48x32xf32>
    %443 = arith.mulf %441, %442 : vector<48x32xf32>
    %444 = vector.broadcast %423 : vector<1x32xf32> to vector<48x32xf32>
    %445 = arith.addf %443, %444 : vector<48x32xf32>
    %446 = arith.truncf %445 : vector<48x32xf32> to vector<48x32xbf16>
    %c1_176 = arith.constant 1 : index
    %c0_177 = arith.constant 0 : index
    %c0_178 = arith.constant 0 : index
    %447 = vector.load %arg10[%c1_176, %c0_177, %c0_178] : memref<2x32x32xbf16, #tpu.memory_space<vmem>>, vector<1x32x32xbf16>
    %448 = vector.shape_cast %447 : vector<1x32x32xbf16> to vector<32x32xbf16>
    %cst_179 = arith.constant dense<0.000000e+00> : vector<48x32xf32>
    %449 = tpu.matmul %446, %448, %cst_179 {dimension_numbers = #tpu.dot_dimension_numbers<[1], [0], [0], [1], [0, 0, 1, 1], [], []>} : vector<48x32xbf16>, vector<32x32xbf16>, vector<48x32xf32> -> vector<48x32xf32>
    %c1_180 = arith.constant 1 : index
    %c0_181 = arith.constant 0 : index
    %c0_182 = arith.constant 0 : index
    %450 = vector.load %arg11[%c1_180, %c0_181, %c0_182] : memref<2x1x32xf32, #tpu.memory_space<vmem>>, vector<1x1x32xf32>
    %451 = vector.shape_cast %450 : vector<1x1x32xf32> to vector<1x32xf32>
    %452 = vector.broadcast %451 : vector<1x32xf32> to vector<48x32xf32>
    %453 = arith.addf %449, %452 : vector<48x32xf32>
    %454 = arith.truncf %3 : vector<16x32xf32> to vector<16x32xbf16>
    %c1_183 = arith.constant 1 : index
    %c0_184 = arith.constant 0 : index
    %c0_185 = arith.constant 0 : index
    %455 = vector.load %arg12[%c1_183, %c0_184, %c0_185] : memref<2x32x64xbf16, #tpu.memory_space<vmem>>, vector<1x32x64xbf16>
    %456 = vector.shape_cast %455 : vector<1x32x64xbf16> to vector<32x64xbf16>
    %cst_186 = arith.constant dense<0.000000e+00> : vector<16x64xf32>
    %457 = tpu.matmul %454, %456, %cst_186 {dimension_numbers = #tpu.dot_dimension_numbers<[1], [0], [0], [1], [0, 0, 1, 1], [], []>} : vector<16x32xbf16>, vector<32x64xbf16>, vector<16x64xf32> -> vector<16x64xf32>
    %c1_187 = arith.constant 1 : index
    %c0_188 = arith.constant 0 : index
    %c0_189 = arith.constant 0 : index
    %458 = vector.load %arg13[%c1_187, %c0_188, %c0_189] : memref<2x1x64xf32, #tpu.memory_space<vmem>>, vector<1x1x64xf32>
    %459 = vector.shape_cast %458 : vector<1x1x64xf32> to vector<1x64xf32>
    %460 = vector.broadcast %459 : vector<1x64xf32> to vector<16x64xf32>
    %461 = arith.addf %457, %460 : vector<16x64xf32>
    %462 = vector.extract_strided_slice %461 {offsets = [0, 0], sizes = [16, 32], strides = [1, 1]} : vector<16x64xf32> to vector<16x32xf32>
    %463 = vector.extract_strided_slice %461 {offsets = [0, 32], sizes = [16, 32], strides = [1, 1]} : vector<16x64xf32> to vector<16x32xf32>
    %c1_190 = arith.constant 1 : index
    %c0_191 = arith.constant 0 : index
    %c0_192 = arith.constant 0 : index
    %464 = vector.load %arg14[%c1_190, %c0_191, %c0_192] : memref<2x32x32xbf16, #tpu.memory_space<vmem>>, vector<1x32x32xbf16>
    %465 = vector.shape_cast %464 : vector<1x32x32xbf16> to vector<32x32xbf16>
    %466 = arith.truncf %453 : vector<48x32xf32> to vector<48x32xbf16>
    %467 = arith.truncf %462 : vector<16x32xf32> to vector<16x32xbf16>
    %468 = arith.truncf %463 : vector<16x32xf32> to vector<16x32xbf16>
    %469 = vector.extract_strided_slice %466 {offsets = [0, 0], sizes = [48, 8], strides = [1, 1]} : vector<48x32xbf16> to vector<48x8xbf16>
    %470 = vector.extract_strided_slice %467 {offsets = [0, 0], sizes = [16, 8], strides = [1, 1]} : vector<16x32xbf16> to vector<16x8xbf16>
    %cst_193 = arith.constant dense<0.000000e+00> : vector<48x16xf32>
    %471 = tpu.matmul %469, %470, %cst_193 {dimension_numbers = #tpu.dot_dimension_numbers<[1], [1], [0], [0], [0, 0, 1, 0], [], []>} : vector<48x8xbf16>, vector<16x8xbf16>, vector<48x16xf32> -> vector<48x16xf32>
    %cst_194 = arith.constant 0.353553385 : f32
    %472 = vector.broadcast %cst_194 : f32 to vector<48x16xf32>
    %473 = arith.mulf %471, %472 : vector<48x16xf32>
    %474 = vector.broadcast %5 : vector<1x16xf32> to vector<48x16xf32>
    %475 = arith.addf %473, %474 : vector<48x16xf32>
    %cst_195 = arith.constant dense<0xFF800000> : vector<48xf32>
    %476 = vector.multi_reduction <maximumf>, %475, %cst_195 [1] : vector<48x16xf32> to vector<48xf32>
    %477 = vector.shape_cast %476 : vector<48xf32> to vector<48x1xf32>
    %478 = vector.broadcast %477 : vector<48x1xf32> to vector<48x16xf32>
    %479 = arith.subf %475, %478 : vector<48x16xf32>
    %480 = math.exp %479 : vector<48x16xf32>
    %cst_196 = arith.constant dense<0.000000e+00> : vector<48xf32>
    %481 = vector.multi_reduction <add>, %480, %cst_196 [1] : vector<48x16xf32> to vector<48xf32>
    %482 = vector.shape_cast %481 : vector<48xf32> to vector<48x1xf32>
    %483 = tpu.reciprocal %482 {approx = true} : vector<48x1xf32> -> vector<48x1xf32>
    %484 = vector.broadcast %483 : vector<48x1xf32> to vector<48x16xf32>
    %485 = arith.mulf %480, %484 : vector<48x16xf32>
    %486 = arith.truncf %485 : vector<48x16xf32> to vector<48x16xbf16>
    %487 = vector.extract_strided_slice %468 {offsets = [0, 0], sizes = [16, 8], strides = [1, 1]} : vector<16x32xbf16> to vector<16x8xbf16>
    %cst_197 = arith.constant dense<0.000000e+00> : vector<48x8xf32>
    %488 = tpu.matmul %486, %487, %cst_197 {dimension_numbers = #tpu.dot_dimension_numbers<[1], [0], [0], [1], [0, 0, 1, 1], [], []>} : vector<48x16xbf16>, vector<16x8xbf16>, vector<48x8xf32> -> vector<48x8xf32>
    %489 = vector.extract_strided_slice %466 {offsets = [0, 8], sizes = [48, 8], strides = [1, 1]} : vector<48x32xbf16> to vector<48x8xbf16>
    %490 = vector.extract_strided_slice %467 {offsets = [0, 8], sizes = [16, 8], strides = [1, 1]} : vector<16x32xbf16> to vector<16x8xbf16>
    %cst_198 = arith.constant dense<0.000000e+00> : vector<48x16xf32>
    %491 = tpu.matmul %489, %490, %cst_198 {dimension_numbers = #tpu.dot_dimension_numbers<[1], [1], [0], [0], [0, 0, 1, 0], [], []>} : vector<48x8xbf16>, vector<16x8xbf16>, vector<48x16xf32> -> vector<48x16xf32>
    %cst_199 = arith.constant 0.353553385 : f32
    %492 = vector.broadcast %cst_199 : f32 to vector<48x16xf32>
    %493 = arith.mulf %491, %492 : vector<48x16xf32>
    %494 = vector.broadcast %5 : vector<1x16xf32> to vector<48x16xf32>
    %495 = arith.addf %493, %494 : vector<48x16xf32>
    %cst_200 = arith.constant dense<0xFF800000> : vector<48xf32>
    %496 = vector.multi_reduction <maximumf>, %495, %cst_200 [1] : vector<48x16xf32> to vector<48xf32>
    %497 = vector.shape_cast %496 : vector<48xf32> to vector<48x1xf32>
    %498 = vector.broadcast %497 : vector<48x1xf32> to vector<48x16xf32>
    %499 = arith.subf %495, %498 : vector<48x16xf32>
    %500 = math.exp %499 : vector<48x16xf32>
    %cst_201 = arith.constant dense<0.000000e+00> : vector<48xf32>
    %501 = vector.multi_reduction <add>, %500, %cst_201 [1] : vector<48x16xf32> to vector<48xf32>
    %502 = vector.shape_cast %501 : vector<48xf32> to vector<48x1xf32>
    %503 = tpu.reciprocal %502 {approx = true} : vector<48x1xf32> -> vector<48x1xf32>
    %504 = vector.broadcast %503 : vector<48x1xf32> to vector<48x16xf32>
    %505 = arith.mulf %500, %504 : vector<48x16xf32>
    %506 = arith.truncf %505 : vector<48x16xf32> to vector<48x16xbf16>
    %507 = vector.extract_strided_slice %468 {offsets = [0, 8], sizes = [16, 8], strides = [1, 1]} : vector<16x32xbf16> to vector<16x8xbf16>
    %cst_202 = arith.constant dense<0.000000e+00> : vector<48x8xf32>
    %508 = tpu.matmul %506, %507, %cst_202 {dimension_numbers = #tpu.dot_dimension_numbers<[1], [0], [0], [1], [0, 0, 1, 1], [], []>} : vector<48x16xbf16>, vector<16x8xbf16>, vector<48x8xf32> -> vector<48x8xf32>
    %509 = vector.extract_strided_slice %466 {offsets = [0, 16], sizes = [48, 8], strides = [1, 1]} : vector<48x32xbf16> to vector<48x8xbf16>
    %510 = vector.extract_strided_slice %467 {offsets = [0, 16], sizes = [16, 8], strides = [1, 1]} : vector<16x32xbf16> to vector<16x8xbf16>
    %cst_203 = arith.constant dense<0.000000e+00> : vector<48x16xf32>
    %511 = tpu.matmul %509, %510, %cst_203 {dimension_numbers = #tpu.dot_dimension_numbers<[1], [1], [0], [0], [0, 0, 1, 0], [], []>} : vector<48x8xbf16>, vector<16x8xbf16>, vector<48x16xf32> -> vector<48x16xf32>
    %cst_204 = arith.constant 0.353553385 : f32
    %512 = vector.broadcast %cst_204 : f32 to vector<48x16xf32>
    %513 = arith.mulf %511, %512 : vector<48x16xf32>
    %514 = vector.broadcast %5 : vector<1x16xf32> to vector<48x16xf32>
    %515 = arith.addf %513, %514 : vector<48x16xf32>
    %cst_205 = arith.constant dense<0xFF800000> : vector<48xf32>
    %516 = vector.multi_reduction <maximumf>, %515, %cst_205 [1] : vector<48x16xf32> to vector<48xf32>
    %517 = vector.shape_cast %516 : vector<48xf32> to vector<48x1xf32>
    %518 = vector.broadcast %517 : vector<48x1xf32> to vector<48x16xf32>
    %519 = arith.subf %515, %518 : vector<48x16xf32>
    %520 = math.exp %519 : vector<48x16xf32>
    %cst_206 = arith.constant dense<0.000000e+00> : vector<48xf32>
    %521 = vector.multi_reduction <add>, %520, %cst_206 [1] : vector<48x16xf32> to vector<48xf32>
    %522 = vector.shape_cast %521 : vector<48xf32> to vector<48x1xf32>
    %523 = tpu.reciprocal %522 {approx = true} : vector<48x1xf32> -> vector<48x1xf32>
    %524 = vector.broadcast %523 : vector<48x1xf32> to vector<48x16xf32>
    %525 = arith.mulf %520, %524 : vector<48x16xf32>
    %526 = arith.truncf %525 : vector<48x16xf32> to vector<48x16xbf16>
    %527 = vector.extract_strided_slice %468 {offsets = [0, 16], sizes = [16, 8], strides = [1, 1]} : vector<16x32xbf16> to vector<16x8xbf16>
    %cst_207 = arith.constant dense<0.000000e+00> : vector<48x8xf32>
    %528 = tpu.matmul %526, %527, %cst_207 {dimension_numbers = #tpu.dot_dimension_numbers<[1], [0], [0], [1], [0, 0, 1, 1], [], []>} : vector<48x16xbf16>, vector<16x8xbf16>, vector<48x8xf32> -> vector<48x8xf32>
    %529 = vector.extract_strided_slice %466 {offsets = [0, 24], sizes = [48, 8], strides = [1, 1]} : vector<48x32xbf16> to vector<48x8xbf16>
    %530 = vector.extract_strided_slice %467 {offsets = [0, 24], sizes = [16, 8], strides = [1, 1]} : vector<16x32xbf16> to vector<16x8xbf16>
    %cst_208 = arith.constant dense<0.000000e+00> : vector<48x16xf32>
    %531 = tpu.matmul %529, %530, %cst_208 {dimension_numbers = #tpu.dot_dimension_numbers<[1], [1], [0], [0], [0, 0, 1, 0], [], []>} : vector<48x8xbf16>, vector<16x8xbf16>, vector<48x16xf32> -> vector<48x16xf32>
    %cst_209 = arith.constant 0.353553385 : f32
    %532 = vector.broadcast %cst_209 : f32 to vector<48x16xf32>
    %533 = arith.mulf %531, %532 : vector<48x16xf32>
    %534 = vector.broadcast %5 : vector<1x16xf32> to vector<48x16xf32>
    %535 = arith.addf %533, %534 : vector<48x16xf32>
    %cst_210 = arith.constant dense<0xFF800000> : vector<48xf32>
    %536 = vector.multi_reduction <maximumf>, %535, %cst_210 [1] : vector<48x16xf32> to vector<48xf32>
    %537 = vector.shape_cast %536 : vector<48xf32> to vector<48x1xf32>
    %538 = vector.broadcast %537 : vector<48x1xf32> to vector<48x16xf32>
    %539 = arith.subf %535, %538 : vector<48x16xf32>
    %540 = math.exp %539 : vector<48x16xf32>
    %cst_211 = arith.constant dense<0.000000e+00> : vector<48xf32>
    %541 = vector.multi_reduction <add>, %540, %cst_211 [1] : vector<48x16xf32> to vector<48xf32>
    %542 = vector.shape_cast %541 : vector<48xf32> to vector<48x1xf32>
    %543 = tpu.reciprocal %542 {approx = true} : vector<48x1xf32> -> vector<48x1xf32>
    %544 = vector.broadcast %543 : vector<48x1xf32> to vector<48x16xf32>
    %545 = arith.mulf %540, %544 : vector<48x16xf32>
    %546 = arith.truncf %545 : vector<48x16xf32> to vector<48x16xbf16>
    %547 = vector.extract_strided_slice %468 {offsets = [0, 24], sizes = [16, 8], strides = [1, 1]} : vector<16x32xbf16> to vector<16x8xbf16>
    %cst_212 = arith.constant dense<0.000000e+00> : vector<48x8xf32>
    %548 = tpu.matmul %546, %547, %cst_212 {dimension_numbers = #tpu.dot_dimension_numbers<[1], [0], [0], [1], [0, 0, 1, 1], [], []>} : vector<48x16xbf16>, vector<16x8xbf16>, vector<48x8xf32> -> vector<48x8xf32>
    %549 = tpu.concatenate %488, %508, %528, %548 in 1 : vector<48x8xf32>, vector<48x8xf32>, vector<48x8xf32>, vector<48x8xf32> -> vector<48x32xf32>
    %550 = arith.truncf %549 : vector<48x32xf32> to vector<48x32xbf16>
    %cst_213 = arith.constant dense<0.000000e+00> : vector<48x32xf32>
    %551 = tpu.matmul %550, %465, %cst_213 {dimension_numbers = #tpu.dot_dimension_numbers<[1], [0], [0], [1], [0, 0, 1, 1], [], []>} : vector<48x32xbf16>, vector<32x32xbf16>, vector<48x32xf32> -> vector<48x32xf32>
    %552 = arith.addf %445, %551 : vector<48x32xf32>
    %c1_214 = arith.constant 1 : index
    %c0_215 = arith.constant 0 : index
    %c0_216 = arith.constant 0 : index
    %553 = vector.load %arg15[%c1_214, %c0_215, %c0_216] : memref<2x1x32xf32, #tpu.memory_space<vmem>>, vector<1x1x32xf32>
    %554 = vector.shape_cast %553 : vector<1x1x32xf32> to vector<1x32xf32>
    %555 = vector.broadcast %554 : vector<1x32xf32> to vector<48x32xf32>
    %556 = arith.addf %552, %555 : vector<48x32xf32>
    %c1_217 = arith.constant 1 : index
    %c0_218 = arith.constant 0 : index
    %c0_219 = arith.constant 0 : index
    %557 = vector.load %arg16[%c1_217, %c0_218, %c0_219] : memref<2x1x32xf32, #tpu.memory_space<vmem>>, vector<1x1x32xf32>
    %558 = vector.shape_cast %557 : vector<1x1x32xf32> to vector<1x32xf32>
    %c1_220 = arith.constant 1 : index
    %c0_221 = arith.constant 0 : index
    %c0_222 = arith.constant 0 : index
    %559 = vector.load %arg17[%c1_220, %c0_221, %c0_222] : memref<2x1x32xf32, #tpu.memory_space<vmem>>, vector<1x1x32xf32>
    %560 = vector.shape_cast %559 : vector<1x1x32xf32> to vector<1x32xf32>
    %cst_223 = arith.constant dense<0.000000e+00> : vector<48xf32>
    %561 = vector.multi_reduction <add>, %556, %cst_223 [1] : vector<48x32xf32> to vector<48xf32>
    %562 = vector.shape_cast %561 : vector<48xf32> to vector<48x1xf32>
    %cst_224 = arith.constant 3.200000e+01 : f32
    %563 = vector.broadcast %cst_224 : f32 to vector<48x1xf32>
    %564 = arith.divf %562, %563 : vector<48x1xf32>
    %565 = vector.broadcast %564 : vector<48x1xf32> to vector<48x32xf32>
    %566 = arith.subf %556, %565 : vector<48x32xf32>
    %567 = arith.mulf %566, %566 : vector<48x32xf32>
    %cst_225 = arith.constant dense<0.000000e+00> : vector<48xf32>
    %568 = vector.multi_reduction <add>, %567, %cst_225 [1] : vector<48x32xf32> to vector<48xf32>
    %569 = vector.shape_cast %568 : vector<48xf32> to vector<48x1xf32>
    %cst_226 = arith.constant 3.200000e+01 : f32
    %570 = vector.broadcast %cst_226 : f32 to vector<48x1xf32>
    %571 = arith.divf %569, %570 : vector<48x1xf32>
    %572 = vector.broadcast %564 : vector<48x1xf32> to vector<48x32xf32>
    %573 = arith.subf %556, %572 : vector<48x32xf32>
    %cst_227 = arith.constant 9.99999974E-6 : f32
    %574 = vector.broadcast %cst_227 : f32 to vector<48x1xf32>
    %575 = arith.addf %571, %574 : vector<48x1xf32>
    %576 = math.rsqrt %575 : vector<48x1xf32>
    %577 = vector.broadcast %576 : vector<48x1xf32> to vector<48x32xf32>
    %578 = arith.mulf %573, %577 : vector<48x32xf32>
    %579 = vector.broadcast %558 : vector<1x32xf32> to vector<48x32xf32>
    %580 = arith.mulf %578, %579 : vector<48x32xf32>
    %581 = vector.broadcast %560 : vector<1x32xf32> to vector<48x32xf32>
    %582 = arith.addf %580, %581 : vector<48x32xf32>
    %583 = arith.truncf %582 : vector<48x32xf32> to vector<48x32xbf16>
    %c1_228 = arith.constant 1 : index
    %c0_229 = arith.constant 0 : index
    %c0_230 = arith.constant 0 : index
    %584 = vector.load %arg18[%c1_228, %c0_229, %c0_230] : memref<2x32x64xbf16, #tpu.memory_space<vmem>>, vector<1x32x64xbf16>
    %585 = vector.shape_cast %584 : vector<1x32x64xbf16> to vector<32x64xbf16>
    %cst_231 = arith.constant dense<0.000000e+00> : vector<48x64xf32>
    %586 = tpu.matmul %583, %585, %cst_231 {dimension_numbers = #tpu.dot_dimension_numbers<[1], [0], [0], [1], [0, 0, 1, 1], [], []>} : vector<48x32xbf16>, vector<32x64xbf16>, vector<48x64xf32> -> vector<48x64xf32>
    %c1_232 = arith.constant 1 : index
    %c0_233 = arith.constant 0 : index
    %c0_234 = arith.constant 0 : index
    %587 = vector.load %arg19[%c1_232, %c0_233, %c0_234] : memref<2x1x64xf32, #tpu.memory_space<vmem>>, vector<1x1x64xf32>
    %588 = vector.shape_cast %587 : vector<1x1x64xf32> to vector<1x64xf32>
    %589 = vector.broadcast %588 : vector<1x64xf32> to vector<48x64xf32>
    %590 = arith.addf %586, %589 : vector<48x64xf32>
    %cst_235 = arith.constant 0.000000e+00 : f32
    %591 = vector.broadcast %cst_235 : f32 to vector<48x64xf32>
    %592 = arith.maximumf %590, %591 : vector<48x64xf32>
    %593 = arith.truncf %592 : vector<48x64xf32> to vector<48x64xbf16>
    %c1_236 = arith.constant 1 : index
    %c0_237 = arith.constant 0 : index
    %c0_238 = arith.constant 0 : index
    %594 = vector.load %arg20[%c1_236, %c0_237, %c0_238] : memref<2x64x32xbf16, #tpu.memory_space<vmem>>, vector<1x64x32xbf16>
    %595 = vector.shape_cast %594 : vector<1x64x32xbf16> to vector<64x32xbf16>
    %cst_239 = arith.constant dense<0.000000e+00> : vector<48x32xf32>
    %596 = tpu.matmul %593, %595, %cst_239 {dimension_numbers = #tpu.dot_dimension_numbers<[1], [0], [0], [1], [0, 0, 1, 1], [], []>} : vector<48x64xbf16>, vector<64x32xbf16>, vector<48x32xf32> -> vector<48x32xf32>
    %c1_240 = arith.constant 1 : index
    %c0_241 = arith.constant 0 : index
    %c0_242 = arith.constant 0 : index
    %597 = vector.load %arg21[%c1_240, %c0_241, %c0_242] : memref<2x1x32xf32, #tpu.memory_space<vmem>>, vector<1x1x32xf32>
    %598 = vector.shape_cast %597 : vector<1x1x32xf32> to vector<1x32xf32>
    %599 = vector.broadcast %598 : vector<1x32xf32> to vector<48x32xf32>
    %600 = arith.addf %596, %599 : vector<48x32xf32>
    %601 = arith.addf %582, %600 : vector<48x32xf32>
    %c1_243 = arith.constant 1 : index
    %c0_244 = arith.constant 0 : index
    %c0_245 = arith.constant 0 : index
    %602 = vector.load %arg22[%c1_243, %c0_244, %c0_245] : memref<2x1x32xf32, #tpu.memory_space<vmem>>, vector<1x1x32xf32>
    %603 = vector.shape_cast %602 : vector<1x1x32xf32> to vector<1x32xf32>
    %c1_246 = arith.constant 1 : index
    %c0_247 = arith.constant 0 : index
    %c0_248 = arith.constant 0 : index
    %604 = vector.load %arg23[%c1_246, %c0_247, %c0_248] : memref<2x1x32xf32, #tpu.memory_space<vmem>>, vector<1x1x32xf32>
    %605 = vector.shape_cast %604 : vector<1x1x32xf32> to vector<1x32xf32>
    %cst_249 = arith.constant dense<0.000000e+00> : vector<48xf32>
    %606 = vector.multi_reduction <add>, %601, %cst_249 [1] : vector<48x32xf32> to vector<48xf32>
    %607 = vector.shape_cast %606 : vector<48xf32> to vector<48x1xf32>
    %cst_250 = arith.constant 3.200000e+01 : f32
    %608 = vector.broadcast %cst_250 : f32 to vector<48x1xf32>
    %609 = arith.divf %607, %608 : vector<48x1xf32>
    %610 = vector.broadcast %609 : vector<48x1xf32> to vector<48x32xf32>
    %611 = arith.subf %601, %610 : vector<48x32xf32>
    %612 = arith.mulf %611, %611 : vector<48x32xf32>
    %cst_251 = arith.constant dense<0.000000e+00> : vector<48xf32>
    %613 = vector.multi_reduction <add>, %612, %cst_251 [1] : vector<48x32xf32> to vector<48xf32>
    %614 = vector.shape_cast %613 : vector<48xf32> to vector<48x1xf32>
    %cst_252 = arith.constant 3.200000e+01 : f32
    %615 = vector.broadcast %cst_252 : f32 to vector<48x1xf32>
    %616 = arith.divf %614, %615 : vector<48x1xf32>
    %617 = vector.broadcast %609 : vector<48x1xf32> to vector<48x32xf32>
    %618 = arith.subf %601, %617 : vector<48x32xf32>
    %cst_253 = arith.constant 9.99999974E-6 : f32
    %619 = vector.broadcast %cst_253 : f32 to vector<48x1xf32>
    %620 = arith.addf %616, %619 : vector<48x1xf32>
    %621 = math.rsqrt %620 : vector<48x1xf32>
    %622 = vector.broadcast %621 : vector<48x1xf32> to vector<48x32xf32>
    %623 = arith.mulf %618, %622 : vector<48x32xf32>
    %624 = vector.broadcast %603 : vector<1x32xf32> to vector<48x32xf32>
    %625 = arith.mulf %623, %624 : vector<48x32xf32>
    %626 = vector.broadcast %605 : vector<1x32xf32> to vector<48x32xf32>
    %627 = arith.addf %625, %626 : vector<48x32xf32>
    %628 = arith.truncf %627 : vector<48x32xf32> to vector<48x32xbf16>
    %c0_254 = arith.constant 0 : index
    %c0_255 = arith.constant 0 : index
    %c0_256 = arith.constant 0 : index
    %629 = vector.load %arg24[%c0_254, %c0_255, %c0_256] : memref<3x32x32xbf16, #tpu.memory_space<vmem>>, vector<1x32x32xbf16>
    %630 = vector.shape_cast %629 : vector<1x32x32xbf16> to vector<32x32xbf16>
    %cst_257 = arith.constant dense<0.000000e+00> : vector<48x32xf32>
    %631 = tpu.matmul %628, %630, %cst_257 {dimension_numbers = #tpu.dot_dimension_numbers<[1], [0], [0], [1], [0, 0, 1, 1], [], []>} : vector<48x32xbf16>, vector<32x32xbf16>, vector<48x32xf32> -> vector<48x32xf32>
    %c0_258 = arith.constant 0 : index
    %c0_259 = arith.constant 0 : index
    %c0_260 = arith.constant 0 : index
    %632 = vector.load %arg25[%c0_258, %c0_259, %c0_260] : memref<3x1x32xf32, #tpu.memory_space<vmem>>, vector<1x1x32xf32>
    %633 = vector.shape_cast %632 : vector<1x1x32xf32> to vector<1x32xf32>
    %634 = vector.broadcast %633 : vector<1x32xf32> to vector<48x32xf32>
    %635 = arith.addf %631, %634 : vector<48x32xf32>
    %cst_261 = arith.constant 0.000000e+00 : f32
    %636 = vector.broadcast %cst_261 : f32 to vector<48x32xf32>
    %637 = arith.maximumf %635, %636 : vector<48x32xf32>
    %c1_262 = arith.constant 1 : index
    %c0_263 = arith.constant 0 : index
    %c0_264 = arith.constant 0 : index
    %638 = vector.load %arg24[%c1_262, %c0_263, %c0_264] : memref<3x32x32xbf16, #tpu.memory_space<vmem>>, vector<1x32x32xbf16>
    %639 = vector.shape_cast %638 : vector<1x32x32xbf16> to vector<32x32xbf16>
    %cst_265 = arith.constant dense<0.000000e+00> : vector<48x32xf32>
    %640 = tpu.matmul %628, %639, %cst_265 {dimension_numbers = #tpu.dot_dimension_numbers<[1], [0], [0], [1], [0, 0, 1, 1], [], []>} : vector<48x32xbf16>, vector<32x32xbf16>, vector<48x32xf32> -> vector<48x32xf32>
    %c1_266 = arith.constant 1 : index
    %c0_267 = arith.constant 0 : index
    %c0_268 = arith.constant 0 : index
    %641 = vector.load %arg25[%c1_266, %c0_267, %c0_268] : memref<3x1x32xf32, #tpu.memory_space<vmem>>, vector<1x1x32xf32>
    %642 = vector.shape_cast %641 : vector<1x1x32xf32> to vector<1x32xf32>
    %643 = vector.broadcast %642 : vector<1x32xf32> to vector<48x32xf32>
    %644 = arith.addf %640, %643 : vector<48x32xf32>
    %cst_269 = arith.constant 0.000000e+00 : f32
    %645 = vector.broadcast %cst_269 : f32 to vector<48x32xf32>
    %646 = arith.maximumf %644, %645 : vector<48x32xf32>
    %c2 = arith.constant 2 : index
    %c0_270 = arith.constant 0 : index
    %c0_271 = arith.constant 0 : index
    %647 = vector.load %arg24[%c2, %c0_270, %c0_271] : memref<3x32x32xbf16, #tpu.memory_space<vmem>>, vector<1x32x32xbf16>
    %648 = vector.shape_cast %647 : vector<1x32x32xbf16> to vector<32x32xbf16>
    %cst_272 = arith.constant dense<0.000000e+00> : vector<48x32xf32>
    %649 = tpu.matmul %628, %648, %cst_272 {dimension_numbers = #tpu.dot_dimension_numbers<[1], [0], [0], [1], [0, 0, 1, 1], [], []>} : vector<48x32xbf16>, vector<32x32xbf16>, vector<48x32xf32> -> vector<48x32xf32>
    %c2_273 = arith.constant 2 : index
    %c0_274 = arith.constant 0 : index
    %c0_275 = arith.constant 0 : index
    %650 = vector.load %arg25[%c2_273, %c0_274, %c0_275] : memref<3x1x32xf32, #tpu.memory_space<vmem>>, vector<1x1x32xf32>
    %651 = vector.shape_cast %650 : vector<1x1x32xf32> to vector<1x32xf32>
    %652 = vector.broadcast %651 : vector<1x32xf32> to vector<48x32xf32>
    %653 = arith.addf %649, %652 : vector<48x32xf32>
    %cst_276 = arith.constant 0.000000e+00 : f32
    %654 = vector.broadcast %cst_276 : f32 to vector<48x32xf32>
    %655 = arith.maximumf %653, %654 : vector<48x32xf32>
    %656 = tpu.concatenate %637, %646, %655 in 1 : vector<48x32xf32>, vector<48x32xf32>, vector<48x32xf32> -> vector<48x96xf32>
    %657 = arith.truncf %656 : vector<48x96xf32> to vector<48x96xbf16>
    %c0_277 = arith.constant 0 : index
    %c0_278 = arith.constant 0 : index
    %658 = vector.load %arg26[%c0_277, %c0_278] : memref<96x128xbf16, #tpu.memory_space<vmem>>, vector<96x128xbf16>
    %cst_279 = arith.constant dense<0.000000e+00> : vector<48x128xf32>
    %659 = tpu.matmul %657, %658, %cst_279 {dimension_numbers = #tpu.dot_dimension_numbers<[1], [0], [0], [1], [0, 0, 1, 1], [], []>} : vector<48x96xbf16>, vector<96x128xbf16>, vector<48x128xf32> -> vector<48x128xf32>
    %c0_280 = arith.constant 0 : index
    %c0_281 = arith.constant 0 : index
    %660 = vector.load %arg27[%c0_280, %c0_281] : memref<1x128xf32, #tpu.memory_space<vmem>>, vector<1x128xf32>
    %661 = vector.broadcast %660 : vector<1x128xf32> to vector<48x128xf32>
    %662 = arith.addf %659, %661 : vector<48x128xf32>
    %c0_282 = arith.constant 0 : index
    %c0_283 = arith.constant 0 : index
    %c0_284 = arith.constant 0 : index
    %663 = vector.load %arg28[%c0_282, %c0_283, %c0_284] : memref<1x48x128xf32, #tpu.memory_space<vmem>>, vector<1x48x128xf32>
    %664 = vector.shape_cast %663 : vector<1x48x128xf32> to vector<48x128xf32>
    %665 = vector.shape_cast %662 : vector<48x128xf32> to vector<1x48x128xf32>
    tpu.vector_store %arg28[%c0_282, %c0_283, %c0_284], %665 {strides = array<i32>} : memref<1x48x128xf32, #tpu.memory_space<vmem>>, vector<1x48x128xf32>,
    return
  }
  func.func @transform_0(%arg0: i32) -> (i32, i32, i32) {
    %c0_i32 = arith.constant 0 : i32
    %c0_i32_0 = arith.constant 0 : i32
    %c0_i32_1 = arith.constant 0 : i32
    return %arg0, %c0_i32, %c0_i32_0 : i32, i32, i32
  }
  func.func @transform_1(%arg0: i32) -> (i32, i32, i32) {
    %c0_i32 = arith.constant 0 : i32
    %c0_i32_0 = arith.constant 0 : i32
    %c0_i32_1 = arith.constant 0 : i32
    return %arg0, %c0_i32, %c0_i32_0 : i32, i32, i32
  }
  func.func @transform_2(%arg0: i32) -> (i32, i32, i32) {
    %c0_i32 = arith.constant 0 : i32
    %c0_i32_0 = arith.constant 0 : i32
    %c0_i32_1 = arith.constant 0 : i32
    return %arg0, %c0_i32, %c0_i32_0 : i32, i32, i32
  }
  func.func @transform_3(%arg0: i32) -> (i32, i32, i32) {
    %c0_i32 = arith.constant 0 : i32
    %c0_i32_0 = arith.constant 0 : i32
    %c0_i32_1 = arith.constant 0 : i32
    %c0_i32_2 = arith.constant 0 : i32
    return %c0_i32, %c0_i32_0, %c0_i32_1 : i32, i32, i32
  }
  func.func @transform_4(%arg0: i32) -> (i32, i32, i32) {
    %c0_i32 = arith.constant 0 : i32
    %c0_i32_0 = arith.constant 0 : i32
    %c0_i32_1 = arith.constant 0 : i32
    %c0_i32_2 = arith.constant 0 : i32
    return %c0_i32, %c0_i32_0, %c0_i32_1 : i32, i32, i32
  }
  func.func @transform_5(%arg0: i32) -> (i32, i32, i32) {
    %c0_i32 = arith.constant 0 : i32
    %c0_i32_0 = arith.constant 0 : i32
    %c0_i32_1 = arith.constant 0 : i32
    %c0_i32_2 = arith.constant 0 : i32
    return %c0_i32, %c0_i32_0, %c0_i32_1 : i32, i32, i32
  }
  func.func @transform_6(%arg0: i32) -> (i32, i32, i32) {
    %c0_i32 = arith.constant 0 : i32
    %c0_i32_0 = arith.constant 0 : i32
    %c0_i32_1 = arith.constant 0 : i32
    %c0_i32_2 = arith.constant 0 : i32
    return %c0_i32, %c0_i32_0, %c0_i32_1 : i32, i32, i32
  }
  func.func @transform_7(%arg0: i32) -> (i32, i32, i32) {
    %c0_i32 = arith.constant 0 : i32
    %c0_i32_0 = arith.constant 0 : i32
    %c0_i32_1 = arith.constant 0 : i32
    %c0_i32_2 = arith.constant 0 : i32
    return %c0_i32, %c0_i32_0, %c0_i32_1 : i32, i32, i32
  }
  func.func @transform_8(%arg0: i32) -> (i32, i32, i32) {
    %c0_i32 = arith.constant 0 : i32
    %c0_i32_0 = arith.constant 0 : i32
    %c0_i32_1 = arith.constant 0 : i32
    %c0_i32_2 = arith.constant 0 : i32
    return %c0_i32, %c0_i32_0, %c0_i32_1 : i32, i32, i32
  }
  func.func @transform_9(%arg0: i32) -> (i32, i32, i32) {
    %c0_i32 = arith.constant 0 : i32
    %c0_i32_0 = arith.constant 0 : i32
    %c0_i32_1 = arith.constant 0 : i32
    %c0_i32_2 = arith.constant 0 : i32
    return %c0_i32, %c0_i32_0, %c0_i32_1 : i32, i32, i32
  }
  func.func @transform_10(%arg0: i32) -> (i32, i32, i32) {
    %c0_i32 = arith.constant 0 : i32
    %c0_i32_0 = arith.constant 0 : i32
    %c0_i32_1 = arith.constant 0 : i32
    %c0_i32_2 = arith.constant 0 : i32
    return %c0_i32, %c0_i32_0, %c0_i32_1 : i32, i32, i32
  }
  func.func @transform_11(%arg0: i32) -> (i32, i32, i32) {
    %c0_i32 = arith.constant 0 : i32
    %c0_i32_0 = arith.constant 0 : i32
    %c0_i32_1 = arith.constant 0 : i32
    %c0_i32_2 = arith.constant 0 : i32
    return %c0_i32, %c0_i32_0, %c0_i32_1 : i32, i32, i32
  }
  func.func @transform_12(%arg0: i32) -> (i32, i32, i32) {
    %c0_i32 = arith.constant 0 : i32
    %c0_i32_0 = arith.constant 0 : i32
    %c0_i32_1 = arith.constant 0 : i32
    %c0_i32_2 = arith.constant 0 : i32
    return %c0_i32, %c0_i32_0, %c0_i32_1 : i32, i32, i32
  }
  func.func @transform_13(%arg0: i32) -> (i32, i32, i32) {
    %c0_i32 = arith.constant 0 : i32
    %c0_i32_0 = arith.constant 0 : i32
    %c0_i32_1 = arith.constant 0 : i32
    %c0_i32_2 = arith.constant 0 : i32
    return %c0_i32, %c0_i32_0, %c0_i32_1 : i32, i32, i32
  }
  func.func @transform_14(%arg0: i32) -> (i32, i32, i32) {
    %c0_i32 = arith.constant 0 : i32
    %c0_i32_0 = arith.constant 0 : i32
    %c0_i32_1 = arith.constant 0 : i32
    %c0_i32_2 = arith.constant 0 : i32
    return %c0_i32, %c0_i32_0, %c0_i32_1 : i32, i32, i32
  }
  func.func @transform_15(%arg0: i32) -> (i32, i32, i32) {
    %c0_i32 = arith.constant 0 : i32
    %c0_i32_0 = arith.constant 0 : i32
    %c0_i32_1 = arith.constant 0 : i32
    %c0_i32_2 = arith.constant 0 : i32
    return %c0_i32, %c0_i32_0, %c0_i32_1 : i32, i32, i32
  }
  func.func @transform_16(%arg0: i32) -> (i32, i32, i32) {
    %c0_i32 = arith.constant 0 : i32
    %c0_i32_0 = arith.constant 0 : i32
    %c0_i32_1 = arith.constant 0 : i32
    %c0_i32_2 = arith.constant 0 : i32
    return %c0_i32, %c0_i32_0, %c0_i32_1 : i32, i32, i32
  }
  func.func @transform_17(%arg0: i32) -> (i32, i32, i32) {
    %c0_i32 = arith.constant 0 : i32
    %c0_i32_0 = arith.constant 0 : i32
    %c0_i32_1 = arith.constant 0 : i32
    %c0_i32_2 = arith.constant 0 : i32
    return %c0_i32, %c0_i32_0, %c0_i32_1 : i32, i32, i32
  }
  func.func @transform_18(%arg0: i32) -> (i32, i32, i32) {
    %c0_i32 = arith.constant 0 : i32
    %c0_i32_0 = arith.constant 0 : i32
    %c0_i32_1 = arith.constant 0 : i32
    %c0_i32_2 = arith.constant 0 : i32
    return %c0_i32, %c0_i32_0, %c0_i32_1 : i32, i32, i32
  }
  func.func @transform_19(%arg0: i32) -> (i32, i32, i32) {
    %c0_i32 = arith.constant 0 : i32
    %c0_i32_0 = arith.constant 0 : i32
    %c0_i32_1 = arith.constant 0 : i32
    %c0_i32_2 = arith.constant 0 : i32
    return %c0_i32, %c0_i32_0, %c0_i32_1 : i32, i32, i32
  }
  func.func @transform_20(%arg0: i32) -> (i32, i32, i32) {
    %c0_i32 = arith.constant 0 : i32
    %c0_i32_0 = arith.constant 0 : i32
    %c0_i32_1 = arith.constant 0 : i32
    %c0_i32_2 = arith.constant 0 : i32
    return %c0_i32, %c0_i32_0, %c0_i32_1 : i32, i32, i32
  }
  func.func @transform_21(%arg0: i32) -> (i32, i32, i32) {
    %c0_i32 = arith.constant 0 : i32
    %c0_i32_0 = arith.constant 0 : i32
    %c0_i32_1 = arith.constant 0 : i32
    %c0_i32_2 = arith.constant 0 : i32
    return %c0_i32, %c0_i32_0, %c0_i32_1 : i32, i32, i32
  }
  func.func @transform_22(%arg0: i32) -> (i32, i32, i32) {
    %c0_i32 = arith.constant 0 : i32
    %c0_i32_0 = arith.constant 0 : i32
    %c0_i32_1 = arith.constant 0 : i32
    %c0_i32_2 = arith.constant 0 : i32
    return %c0_i32, %c0_i32_0, %c0_i32_1 : i32, i32, i32
  }
  func.func @transform_23(%arg0: i32) -> (i32, i32, i32) {
    %c0_i32 = arith.constant 0 : i32
    %c0_i32_0 = arith.constant 0 : i32
    %c0_i32_1 = arith.constant 0 : i32
    %c0_i32_2 = arith.constant 0 : i32
    return %c0_i32, %c0_i32_0, %c0_i32_1 : i32, i32, i32
  }
  func.func @transform_24(%arg0: i32) -> (i32, i32, i32) {
    %c0_i32 = arith.constant 0 : i32
    %c0_i32_0 = arith.constant 0 : i32
    %c0_i32_1 = arith.constant 0 : i32
    %c0_i32_2 = arith.constant 0 : i32
    return %c0_i32, %c0_i32_0, %c0_i32_1 : i32, i32, i32
  }
  func.func @transform_25(%arg0: i32) -> (i32, i32) {
    %c0_i32 = arith.constant 0 : i32
    %c0_i32_0 = arith.constant 0 : i32
    %c0_i32_1 = arith.constant 0 : i32
    return %c0_i32, %c0_i32_0 : i32, i32
  }
  func.func @transform_26(%arg0: i32) -> (i32, i32) {
    %c0_i32 = arith.constant 0 : i32
    %c0_i32_0 = arith.constant 0 : i32
    %c0_i32_1 = arith.constant 0 : i32
    return %c0_i32, %c0_i32_0 : i32, i32
  }
  func.func @transform_27(%arg0: i32) -> (i32, i32, i32) {
    %c0_i32 = arith.constant 0 : i32
    %c0_i32_0 = arith.constant 0 : i32
    %c0_i32_1 = arith.constant 0 : i32
    return %arg0, %c0_i32, %c0_i32_0 : i32, i32, i32
  }
}

</mosaic_0001>

<llo_original>
// kernel: tpu_custom_call.1
$region0: #{tpu_custom_call.1}
  #allocation0 [shape = 'u32[]', space=smem, size = 0x4, offset = 0x4, fixed_abs, tag = 'smem constant byte address 0x4 - core index']
  #allocation1 [shape = 'u32[72,128]{1,0:T(1,128)}', space=vmem, size = 0x9000, scoped, tag = 'internal scratch']
  %s0 = inlined_call_operand.vmem [shape: f32[2,48,32], index: 0, kind: input, shape index: {}]
  %s1 = inlined_call_operand.vmem [shape: f32[2,16,32], index: 1, kind: input, shape index: {}]
  %s2 = inlined_call_operand.hbm [shape: f32[2,1,16], index: 2, kind: input, shape index: {}]
  %s3 = inlined_call_operand.vmem [shape: bf16[2,32,96], index: 3, kind: input, shape index: {}]
  %s4 = inlined_call_operand.vmem [shape: f32[2,1,96], index: 4, kind: input, shape index: {}]
  %s5 = inlined_call_operand.vmem [shape: bf16[2,32,32], index: 5, kind: input, shape index: {}]
  %s6 = inlined_call_operand.hbm [shape: f32[2,1,32], index: 6, kind: input, shape index: {}]
  %s7 = inlined_call_operand.hbm [shape: f32[2,1,32], index: 7, kind: input, shape index: {}]
  %s8 = inlined_call_operand.hbm [shape: f32[2,1,32], index: 8, kind: input, shape index: {}]
  %s9 = inlined_call_operand.hbm [shape: bf16[2,32,32], index: 9, kind: input, shape index: {}]
  %s10 = inlined_call_operand.vmem [shape: f32[2,1,32], index: 10, kind: input, shape index: {}]
  %s11 = inlined_call_operand.hbm [shape: bf16[2,32,64], index: 11, kind: input, shape index: {}]
  %s12 = inlined_call_operand.vmem [shape: f32[2,1,64], index: 12, kind: input, shape index: {}]
  %s13 = inlined_call_operand.hbm [shape: bf16[2,32,32], index: 13, kind: input, shape index: {}]
  %s14 = inlined_call_operand.vmem [shape: f32[2,1,32], index: 14, kind: input, shape index: {}]
  %s15 = inlined_call_operand.vmem [shape: f32[2,1,32], index: 15, kind: input, shape index: {}]
  %s16 = inlined_call_operand.hbm [shape: f32[2,1,32], index: 16, kind: input, shape index: {}]
  %s17 = inlined_call_operand.hbm [shape: bf16[2,32,64], index: 17, kind: input, shape index: {}]
  %s18 = inlined_call_operand.vmem [shape: f32[2,1,64], index: 18, kind: input, shape index: {}]
  %s19 = inlined_call_operand.vmem [shape: bf16[2,64,32], index: 19, kind: input, shape index: {}]
  %s20 = inlined_call_operand.vmem [shape: f32[2,1,32], index: 20, kind: input, shape index: {}]
  %s21 = inlined_call_operand.vmem [shape: f32[2,1,32], index: 21, kind: input, shape index: {}]
  %s22 = inlined_call_operand.hbm [shape: f32[2,1,32], index: 22, kind: input, shape index: {}]
  %s23 = inlined_call_operand.vmem [shape: bf16[3,32,32], index: 23, kind: input, shape index: {}]
  %s24 = inlined_call_operand.vmem [shape: f32[3,1,32], index: 24, kind: input, shape index: {}]
  %s25 = inlined_call_operand.vmem [shape: bf16[96,128], index: 25, kind: input, shape index: {}]
  %s26 = inlined_call_operand.vmem [shape: f32[1,128], index: 26, kind: input, shape index: {}]
  %s27 = inlined_call_operand.hbm [shape: f32[2,48,128], index: 27, kind: output, shape index: {}]
  %s28 = sld [smem:[#allocation0]]
  $region181: #{tpu_custom_call.1} parent=0
    _
  %s30 = ssub.s32 1, %s28
  %s31 = scalar_select 0, %s30, %s28
  $region1: #{tpu_custom_call.1} parent=0
    #allocation2 [shape = 'u8[1024]{0}', space=vmem, size = 0x400, scoped, tag = 'input window, operand 2']
    #allocation3 [shape = 's32[2]{0}', space=sflag, size = 0x8, scoped, tag = 'scoped memory for tpu_custom_call.1']
    #allocation4 [shape = 's32[2]{0}', space=sflag, size = 0x8, scoped, tag = 'scoped memory for tpu_custom_call.1']
    #allocation5 [shape = 'u8[1024]{0}', space=vmem, size = 0x400, scoped, tag = 'input window, operand 6, single buffered']
    #allocation6 [shape = 's32[1]{0}', space=sflag, size = 0x4, scoped, tag = 'scoped memory for tpu_custom_call.1']
    #allocation7 [shape = 'u8[1024]{0}', space=vmem, size = 0x400, scoped, tag = 'input window, operand 7, single buffered']
    #allocation8 [shape = 'u8[1024]{0}', space=vmem, size = 0x400, scoped, tag = 'input window, operand 8, single buffered']
    #allocation9 [shape = 's32[1]{0}', space=sflag, size = 0x4, scoped, tag = 'scoped memory for tpu_custom_call.1']
    #allocation10 [shape = 'u8[16384]{0}', space=vmem, size = 0x4000, scoped, tag = 'input window, operand 9, single buffered']
    #allocation11 [shape = 'u8[16384]{0}', space=vmem, size = 0x4000, scoped, tag = 'input window, operand 11, single buffered']
    #allocation12 [shape = 's32[1]{0}', space=sflag, size = 0x4, scoped, tag = 'scoped memory for tpu_custom_call.1']
    #allocation13 [shape = 'u8[16384]{0}', space=vmem, size = 0x4000, scoped, tag = 'input window, operand 13, single buffered']
    #allocation14 [shape = 'u8[1024]{0}', space=vmem, size = 0x400, scoped, tag = 'input window, operand 16, single buffered']
    #allocation15 [shape = 's32[1]{0}', space=sflag, size = 0x4, scoped, tag = 'scoped memory for tpu_custom_call.1']
    #allocation16 [shape = 'u8[16384]{0}', space=vmem, size = 0x4000, scoped, tag = 'input window, operand 17, single buffered']
    #allocation17 [shape = 'u8[1024]{0}', space=vmem, size = 0x400, scoped, tag = 'input window, operand 22, single buffered']
    #allocation18 [shape = 's32[1]{0}', space=sflag, size = 0x4, scoped, tag = 'scoped memory for tpu_custom_call.1']
    #allocation19 [shape = 'u8[49152]{0}', space=vmem, size = 0xc000, scoped, tag = 'output window, operand 0']
    %32 = vsyncpa [#allocation3], 0
    %s33 = scalar_lea.sflag [#allocation3], 1
    %34 = vsyncpa %s33, 0
    %35 = vsyncpa [#allocation6], 0
    %36 = vsyncpa [#allocation9], 0
    %37 = vsyncpa [#allocation12], 0
    %38 = vsyncpa [#allocation15], 0
    %39 = vsyncpa [#allocation18], 0
    %40 = vsyncpa [#allocation4], 0
    %s41 = scalar_lea.sflag [#allocation4], 1
    %42 = vsyncpa %s41, 0
    loop: start=0, step=1, limit=4
    $region2: #{tpu_custom_call.1} parent=1 // loop_pre_header
      _
    $region3: #{tpu_custom_call.1} parent=1 // loop_header
      %s44 = sphi 0, %s48
      %p45 = scmp.ge.s32.totalorder %s44, 4
      %s54 = sphi 0, %s56
      %s57 = sphi 0, %s54
      %s58 = sphi 0, %s57
      %s74 = sphi 0, %s58
      %s80 = sphi 0, %s82
      %s83 = sphi 0, %s80
      %s84 = sphi 0, %s83
      %s100 = sphi 0, %s84
      %s106 = sphi 0, %s108
      %s109 = sphi 0, %s106
      %s110 = sphi 0, %s109
      %s126 = sphi 0, %s110
      %s130 = sphi 0, %s130
      %s132 = sphi 0, %s130
      %s133 = sphi 0, %s132
      %s147 = sphi 0, %s133
      %s151 = sphi 0, %s151
      %s153 = sphi 0, %s151
      %s154 = sphi 0, %s153
      %s168 = sphi 0, %s154
      %s172 = sphi 0, %s172
      %s174 = sphi 0, %s172
      %s175 = sphi 0, %s174
      %s189 = sphi 0, %s175
      %s193 = sphi 0, %s193
      %s195 = sphi 0, %s193
      %s196 = sphi 0, %s195
      %s210 = sphi 0, %s196
      %s214 = sphi 0, %s214
      %s216 = sphi 0, %s214
      %s217 = sphi 0, %s216
      %s231 = sphi 0, %s217
      %s235 = sphi 0, %s235
      %s237 = sphi 0, %s235
      %s238 = sphi 0, %s237
      %s252 = sphi 0, %s238
      %s256 = sphi 0, %s256
      %s258 = sphi 0, %s256
      %s259 = sphi 0, %s258
      %s273 = sphi 0, %s259
      %s277 = sphi 0, %s277
      %s279 = sphi 0, %s277
      %s280 = sphi 0, %s279
      %s294 = sphi 0, %s280
      %s298 = sphi 0, %s298
      %s300 = sphi 0, %s298
      %s301 = sphi 0, %s300
      %s315 = sphi 0, %s301
      %s319 = sphi 0, %s319
      %s321 = sphi 0, %s319
      %s322 = sphi 0, %s321
      %s336 = sphi 0, %s322
      %s340 = sphi 0, %s340
      %s342 = sphi 0, %s340
      %s343 = sphi 0, %s342
      %s357 = sphi 0, %s343
      %s361 = sphi 0, %s361
      %s363 = sphi 0, %s361
      %s364 = sphi 0, %s363
      %s378 = sphi 0, %s364
      %s382 = sphi 0, %s382
      %s384 = sphi 0, %s382
      %s385 = sphi 0, %s384
      %s399 = sphi 0, %s385
      %s403 = sphi 0, %s403
      %s405 = sphi 0, %s403
      %s406 = sphi 0, %s405
      %s420 = sphi 0, %s406
      %s424 = sphi 0, %s424
      %s426 = sphi 0, %s424
      %s427 = sphi 0, %s426
      %s441 = sphi 0, %s427
      %s445 = sphi 0, %s445
      %s447 = sphi 0, %s445
      %s448 = sphi 0, %s447
      %s462 = sphi 0, %s448
      %s466 = sphi 0, %s466
      %s468 = sphi 0, %s466
      %s469 = sphi 0, %s468
      %s483 = sphi 0, %s469
      %s487 = sphi 0, %s487
      %s489 = sphi 0, %s487
      %s490 = sphi 0, %s489
      %s504 = sphi 0, %s490
      %s508 = sphi 0, %s508
      %s510 = sphi 0, %s508
      %s511 = sphi 0, %s510
      %s525 = sphi 0, %s511
      %s529 = sphi 0, %s529
      %s531 = sphi 0, %s529
      %s532 = sphi 0, %s531
      %s546 = sphi 0, %s532
      %s550 = sphi 0, %s550
      %s552 = sphi 0, %s550
      %s553 = sphi 0, %s552
      %s567 = sphi 0, %s553
      %s571 = sphi 0, %s571
      %s573 = sphi 0, %s571
      %s574 = sphi 0, %s573
      %s588 = sphi 0, %s574
      %s592 = sphi 0, %s592
      %s594 = sphi 0, %s592
      %s595 = sphi 0, %s594
      %s609 = sphi 0, %s595
      %s613 = sphi 0, %s613
      %s615 = sphi 0, %s613
      %s616 = sphi 0, %s615
      %s630 = sphi 0, %s616
      %s636 = sphi 0, %s638
      %s639 = sphi 0, %s636
      %s640 = sphi 0, %s639
      %s656 = sphi 0, %s640
    $region4: #{tpu_custom_call.1} parent=1 // loop_header_branch
      %47 = sbr.rel (%p45) target = $region8
    $region5: #{tpu_custom_call.1} parent=1 // loop_body
      %s49 = ssub.s32 %s44, 1
      %s50 = ssub.s32 %s44, 2
      %s51 = sadd.s32 %s44, 1
      %s52 = ssub.s32 %s44, %s51
      %p53 = scmp.eq.s32.totalorder %s52, 0
      %s55 = sadd.s32 %s54, 1
      %s56 = scalar_select %p53, %s54, %s55
      %p59 = pneg %p53
      %p60 = scmp.eq.s32.totalorder %s44, 1
      %p61 = por %p59, %p60
      %p62 = scmp.ne.s32.totalorder %s54, %s57
      %p63 = scmp.eq.s32.totalorder %s44, 0
      %p64 = por %p62, %p63
      %p65 = scmp.ne.s32.totalorder %s54, %s57
      %p66 = scmp.eq.s32.totalorder %s49, 1
      %p67 = por %p65, %p66
      %p68 = scmp.ne.s32.totalorder %s57, %s58
      %p69 = scmp.eq.s32.totalorder %s49, 0
      %p70 = por %p68, %p69
      %p71 = scmp.ne.s32.totalorder %s57, %s58
      %p72 = scmp.eq.s32.totalorder %s50, 1
      %p73 = por %p71, %p72
      %p75 = scmp.ne.s32.totalorder %s58, %s74
      %p76 = scmp.eq.s32.totalorder %s50, 0
      %p77 = por %p75, %p76
      %s78 = ssub.s32 %s44, %s51
      %p79 = scmp.eq.s32.totalorder %s78, 0
      %s81 = sadd.s32 %s80, 1
      %s82 = scalar_select %p79, %s80, %s81
      %p85 = pneg %p79
      %p86 = scmp.eq.s32.totalorder %s44, 1
      %p87 = por %p85, %p86
      %p88 = scmp.ne.s32.totalorder %s80, %s83
      %p89 = scmp.eq.s32.totalorder %s44, 0
      %p90 = por %p88, %p89
      %p91 = scmp.ne.s32.totalorder %s80, %s83
      %p92 = scmp.eq.s32.totalorder %s49, 1
      %p93 = por %p91, %p92
      %p94 = scmp.ne.s32.totalorder %s83, %s84
      %p95 = scmp.eq.s32.totalorder %s49, 0
      %p96 = por %p94, %p95
      %p97 = scmp.ne.s32.totalorder %s83, %s84
      %p98 = scmp.eq.s32.totalorder %s50, 1
      %p99 = por %p97, %p98
      %p101 = scmp.ne.s32.totalorder %s84, %s100
      %p102 = scmp.eq.s32.totalorder %s50, 0
      %p103 = por %p101, %p102
      %s104 = ssub.s32 %s44, %s51
      %p105 = scmp.eq.s32.totalorder %s104, 0
      %s107 = sadd.s32 %s106, 1
      %s108 = scalar_select %p105, %s106, %s107
      %p111 = pneg %p105
      %p112 = scmp.eq.s32.totalorder %s44, 1
      %p113 = por %p111, %p112
      %p114 = scmp.ne.s32.totalorder %s106, %s109
      %p115 = scmp.eq.s32.totalorder %s44, 0
      %p116 = por %p114, %p115
      %p117 = scmp.ne.s32.totalorder %s106, %s109
      %p118 = scmp.eq.s32.totalorder %s49, 1
      %p119 = por %p117, %p118
      %p120 = scmp.ne.s32.totalorder %s109, %s110
      %p121 = scmp.eq.s32.totalorder %s49, 0
      %p122 = por %p120, %p121
      %p123 = scmp.ne.s32.totalorder %s109, %s110
      %p124 = scmp.eq.s32.totalorder %s50, 1
      %p125 = por %p123, %p124
      %p127 = scmp.ne.s32.totalorder %s110, %s126
      %p128 = scmp.eq.s32.totalorder %s50, 0
      %p129 = por %p127, %p128
      %s131 = sadd.s32 %s130, 1
      %p134 = scmp.eq.s32.totalorder %s44, 1
      %p135 = scmp.ne.s32.totalorder %s130, %s132
      %p136 = scmp.eq.s32.totalorder %s44, 0
      %p137 = por %p135, %p136
      %p138 = scmp.ne.s32.totalorder %s130, %s132
      %p139 = scmp.eq.s32.totalorder %s49, 1
      %p140 = por %p138, %p139
      %p141 = scmp.ne.s32.totalorder %s132, %s133
      %p142 = scmp.eq.s32.totalorder %s49, 0
      %p143 = por %p141, %p142
      %p144 = scmp.ne.s32.totalorder %s132, %s133
      %p145 = scmp.eq.s32.totalorder %s50, 1
      %p146 = por %p144, %p145
      %p148 = scmp.ne.s32.totalorder %s133, %s147
      %p149 = scmp.eq.s32.totalorder %s50, 0
      %p150 = por %p148, %p149
      %s152 = sadd.s32 %s151, 1
      %p155 = scmp.eq.s32.totalorder %s44, 1
      %p156 = scmp.ne.s32.totalorder %s151, %s153
      %p157 = scmp.eq.s32.totalorder %s44, 0
      %p158 = por %p156, %p157
      %p159 = scmp.ne.s32.totalorder %s151, %s153
      %p160 = scmp.eq.s32.totalorder %s49, 1
      %p161 = por %p159, %p160
      %p162 = scmp.ne.s32.totalorder %s153, %s154
      %p163 = scmp.eq.s32.totalorder %s49, 0
      %p164 = por %p162, %p163
      %p165 = scmp.ne.s32.totalorder %s153, %s154
      %p166 = scmp.eq.s32.totalorder %s50, 1
      %p167 = por %p165, %p166
      %p169 = scmp.ne.s32.totalorder %s154, %s168
      %p170 = scmp.eq.s32.totalorder %s50, 0
      %p171 = por %p169, %p170
      %s173 = sadd.s32 %s172, 1
      %p176 = scmp.eq.s32.totalorder %s44, 1
      %p177 = scmp.ne.s32.totalorder %s172, %s174
      %p178 = scmp.eq.s32.totalorder %s44, 0
      %p179 = por %p177, %p178
      %p180 = scmp.ne.s32.totalorder %s172, %s174
      %p181 = scmp.eq.s32.totalorder %s49, 1
      %p182 = por %p180, %p181
      %p183 = scmp.ne.s32.totalorder %s174, %s175
      %p184 = scmp.eq.s32.totalorder %s49, 0
      %p185 = por %p183, %p184
      %p186 = scmp.ne.s32.totalorder %s174, %s175
      %p187 = scmp.eq.s32.totalorder %s50, 1
      %p188 = por %p186, %p187
      %p190 = scmp.ne.s32.totalorder %s175, %s189
      %p191 = scmp.eq.s32.totalorder %s50, 0
      %p192 = por %p190, %p191
      %s194 = sadd.s32 %s193, 1
      %p197 = scmp.eq.s32.totalorder %s44, 1
      %p198 = scmp.ne.s32.totalorder %s193, %s195
      %p199 = scmp.eq.s32.totalorder %s44, 0
      %p200 = por %p198, %p199
      %p201 = scmp.ne.s32.totalorder %s193, %s195
      %p202 = scmp.eq.s32.totalorder %s49, 1
      %p203 = por %p201, %p202
      %p204 = scmp.ne.s32.totalorder %s195, %s196
      %p205 = scmp.eq.s32.totalorder %s49, 0
      %p206 = por %p204, %p205
      %p207 = scmp.ne.s32.totalorder %s195, %s196
      %p208 = scmp.eq.s32.totalorder %s50, 1
      %p209 = por %p207, %p208
      %p211 = scmp.ne.s32.totalorder %s196, %s210
      %p212 = scmp.eq.s32.totalorder %s50, 0
      %p213 = por %p211, %p212
      %s215 = sadd.s32 %s214, 1
      %p218 = scmp.eq.s32.totalorder %s44, 1
      %p219 = scmp.ne.s32.totalorder %s214, %s216
      %p220 = scmp.eq.s32.totalorder %s44, 0
      %p221 = por %p219, %p220
      %p222 = scmp.ne.s32.totalorder %s214, %s216
      %p223 = scmp.eq.s32.totalorder %s49, 1
      %p224 = por %p222, %p223
      %p225 = scmp.ne.s32.totalorder %s216, %s217
      %p226 = scmp.eq.s32.totalorder %s49, 0
      %p227 = por %p225, %p226
      %p228 = scmp.ne.s32.totalorder %s216, %s217
      %p229 = scmp.eq.s32.totalorder %s50, 1
      %p230 = por %p228, %p229
      %p232 = scmp.ne.s32.totalorder %s217, %s231
      %p233 = scmp.eq.s32.totalorder %s50, 0
      %p234 = por %p232, %p233
      %s236 = sadd.s32 %s235, 1
      %p239 = scmp.eq.s32.totalorder %s44, 1
      %p240 = scmp.ne.s32.totalorder %s235, %s237
      %p241 = scmp.eq.s32.totalorder %s44, 0
      %p242 = por %p240, %p241
      %p243 = scmp.ne.s32.totalorder %s235, %s237
      %p244 = scmp.eq.s32.totalorder %s49, 1
      %p245 = por %p243, %p244
      %p246 = scmp.ne.s32.totalorder %s237, %s238
      %p247 = scmp.eq.s32.totalorder %s49, 0
      %p248 = por %p246, %p247
      %p249 = scmp.ne.s32.totalorder %s237, %s238
      %p250 = scmp.eq.s32.totalorder %s50, 1
      %p251 = por %p249, %p250
      %p253 = scmp.ne.s32.totalorder %s238, %s252
      %p254 = scmp.eq.s32.totalorder %s50, 0
      %p255 = por %p253, %p254
      %s257 = sadd.s32 %s256, 1
      %p260 = scmp.eq.s32.totalorder %s44, 1
      %p261 = scmp.ne.s32.totalorder %s256, %s258
      %p262 = scmp.eq.s32.totalorder %s44, 0
      %p263 = por %p261, %p262
      %p264 = scmp.ne.s32.totalorder %s256, %s258
      %p265 = scmp.eq.s32.totalorder %s49, 1
      %p266 = por %p264, %p265
      %p267 = scmp.ne.s32.totalorder %s258, %s259
      %p268 = scmp.eq.s32.totalorder %s49, 0
      %p269 = por %p267, %p268
      %p270 = scmp.ne.s32.totalorder %s258, %s259
      %p271 = scmp.eq.s32.totalorder %s50, 1
      %p272 = por %p270, %p271
      %p274 = scmp.ne.s32.totalorder %s259, %s273
      %p275 = scmp.eq.s32.totalorder %s50, 0
      %p276 = por %p274, %p275
      %s278 = sadd.s32 %s277, 1
      %p281 = scmp.eq.s32.totalorder %s44, 1
      %p282 = scmp.ne.s32.totalorder %s277, %s279
      %p283 = scmp.eq.s32.totalorder %s44, 0
      %p284 = por %p282, %p283
      %p285 = scmp.ne.s32.totalorder %s277, %s279
      %p286 = scmp.eq.s32.totalorder %s49, 1
      %p287 = por %p285, %p286
      %p288 = scmp.ne.s32.totalorder %s279, %s280
      %p289 = scmp.eq.s32.totalorder %s49, 0
      %p290 = por %p288, %p289
      %p291 = scmp.ne.s32.totalorder %s279, %s280
      %p292 = scmp.eq.s32.totalorder %s50, 1
      %p293 = por %p291, %p292
      %p295 = scmp.ne.s32.totalorder %s280, %s294
      %p296 = scmp.eq.s32.totalorder %s50, 0
      %p297 = por %p295, %p296
      %s299 = sadd.s32 %s298, 1
      %p302 = scmp.eq.s32.totalorder %s44, 1
      %p303 = scmp.ne.s32.totalorder %s298, %s300
      %p304 = scmp.eq.s32.totalorder %s44, 0
      %p305 = por %p303, %p304
      %p306 = scmp.ne.s32.totalorder %s298, %s300
      %p307 = scmp.eq.s32.totalorder %s49, 1
      %p308 = por %p306, %p307
      %p309 = scmp.ne.s32.totalorder %s300, %s301
      %p310 = scmp.eq.s32.totalorder %s49, 0
      %p311 = por %p309, %p310
      %p312 = scmp.ne.s32.totalorder %s300, %s301
      %p313 = scmp.eq.s32.totalorder %s50, 1
      %p314 = por %p312, %p313
      %p316 = scmp.ne.s32.totalorder %s301, %s315
      %p317 = scmp.eq.s32.totalorder %s50, 0
      %p318 = por %p316, %p317
      %s320 = sadd.s32 %s319, 1
      %p323 = scmp.eq.s32.totalorder %s44, 1
      %p324 = scmp.ne.s32.totalorder %s319, %s321
      %p325 = scmp.eq.s32.totalorder %s44, 0
      %p326 = por %p324, %p325
      %p327 = scmp.ne.s32.totalorder %s319, %s321
      %p328 = scmp.eq.s32.totalorder %s49, 1
      %p329 = por %p327, %p328
      %p330 = scmp.ne.s32.totalorder %s321, %s322
      %p331 = scmp.eq.s32.totalorder %s49, 0
      %p332 = por %p330, %p331
      %p333 = scmp.ne.s32.totalorder %s321, %s322
      %p334 = scmp.eq.s32.totalorder %s50, 1
      %p335 = por %p333, %p334
      %p337 = scmp.ne.s32.totalorder %s322, %s336
      %p338 = scmp.eq.s32.totalorder %s50, 0
      %p339 = por %p337, %p338
      %s341 = sadd.s32 %s340, 1
      %p344 = scmp.eq.s32.totalorder %s44, 1
      %p345 = scmp.ne.s32.totalorder %s340, %s342
      %p346 = scmp.eq.s32.totalorder %s44, 0
      %p347 = por %p345, %p346
      %p348 = scmp.ne.s32.totalorder %s340, %s342
      %p349 = scmp.eq.s32.totalorder %s49, 1
      %p350 = por %p348, %p349
      %p351 = scmp.ne.s32.totalorder %s342, %s343
      %p352 = scmp.eq.s32.totalorder %s49, 0
      %p353 = por %p351, %p352
      %p354 = scmp.ne.s32.totalorder %s342, %s343
      %p355 = scmp.eq.s32.totalorder %s50, 1
      %p356 = por %p354, %p355
      %p358 = scmp.ne.s32.totalorder %s343, %s357
      %p359 = scmp.eq.s32.totalorder %s50, 0
      %p360 = por %p358, %p359
      %s362 = sadd.s32 %s361, 1
      %p365 = scmp.eq.s32.totalorder %s44, 1
      %p366 = scmp.ne.s32.totalorder %s361, %s363
      %p367 = scmp.eq.s32.totalorder %s44, 0
      %p368 = por %p366, %p367
      %p369 = scmp.ne.s32.totalorder %s361, %s363
      %p370 = scmp.eq.s32.totalorder %s49, 1
      %p371 = por %p369, %p370
      %p372 = scmp.ne.s32.totalorder %s363, %s364
      %p373 = scmp.eq.s32.totalorder %s49, 0
      %p374 = por %p372, %p373
      %p375 = scmp.ne.s32.totalorder %s363, %s364
      %p376 = scmp.eq.s32.totalorder %s50, 1
      %p377 = por %p375, %p376
      %p379 = scmp.ne.s32.totalorder %s364, %s378
      %p380 = scmp.eq.s32.totalorder %s50, 0
      %p381 = por %p379, %p380
      %s383 = sadd.s32 %s382, 1
      %p386 = scmp.eq.s32.totalorder %s44, 1
      %p387 = scmp.ne.s32.totalorder %s382, %s384
      %p388 = scmp.eq.s32.totalorder %s44, 0
      %p389 = por %p387, %p388
      %p390 = scmp.ne.s32.totalorder %s382, %s384
      %p391 = scmp.eq.s32.totalorder %s49, 1
      %p392 = por %p390, %p391
      %p393 = scmp.ne.s32.totalorder %s384, %s385
      %p394 = scmp.eq.s32.totalorder %s49, 0
      %p395 = por %p393, %p394
      %p396 = scmp.ne.s32.totalorder %s384, %s385
      %p397 = scmp.eq.s32.totalorder %s50, 1
      %p398 = por %p396, %p397
      %p400 = scmp.ne.s32.totalorder %s385, %s399
      %p401 = scmp.eq.s32.totalorder %s50, 0
      %p402 = por %p400, %p401
      %s404 = sadd.s32 %s403, 1
      %p407 = scmp.eq.s32.totalorder %s44, 1
      %p408 = scmp.ne.s32.totalorder %s403, %s405
      %p409 = scmp.eq.s32.totalorder %s44, 0
      %p410 = por %p408, %p409
      %p411 = scmp.ne.s32.totalorder %s403, %s405
      %p412 = scmp.eq.s32.totalorder %s49, 1
      %p413 = por %p411, %p412
      %p414 = scmp.ne.s32.totalorder %s405, %s406
      %p415 = scmp.eq.s32.totalorder %s49, 0
      %p416 = por %p414, %p415
      %p417 = scmp.ne.s32.totalorder %s405, %s406
      %p418 = scmp.eq.s32.totalorder %s50, 1
      %p419 = por %p417, %p418
      %p421 = scmp.ne.s32.totalorder %s406, %s420
      %p422 = scmp.eq.s32.totalorder %s50, 0
      %p423 = por %p421, %p422
      %s425 = sadd.s32 %s424, 1
      %p428 = scmp.eq.s32.totalorder %s44, 1
      %p429 = scmp.ne.s32.totalorder %s424, %s426
      %p430 = scmp.eq.s32.totalorder %s44, 0
      %p431 = por %p429, %p430
      %p432 = scmp.ne.s32.totalorder %s424, %s426
      %p433 = scmp.eq.s32.totalorder %s49, 1
      %p434 = por %p432, %p433
      %p435 = scmp.ne.s32.totalorder %s426, %s427
      %p436 = scmp.eq.s32.totalorder %s49, 0
      %p437 = por %p435, %p436
      %p438 = scmp.ne.s32.totalorder %s426, %s427
      %p439 = scmp.eq.s32.totalorder %s50, 1
      %p440 = por %p438, %p439
      %p442 = scmp.ne.s32.totalorder %s427, %s441
      %p443 = scmp.eq.s32.totalorder %s50, 0
      %p444 = por %p442, %p443
      %s446 = sadd.s32 %s445, 1
      %p449 = scmp.eq.s32.totalorder %s44, 1
      %p450 = scmp.ne.s32.totalorder %s445, %s447
      %p451 = scmp.eq.s32.totalorder %s44, 0
      %p452 = por %p450, %p451
      %p453 = scmp.ne.s32.totalorder %s445, %s447
      %p454 = scmp.eq.s32.totalorder %s49, 1
      %p455 = por %p453, %p454
      %p456 = scmp.ne.s32.totalorder %s447, %s448
      %p457 = scmp.eq.s32.totalorder %s49, 0
      %p458 = por %p456, %p457
      %p459 = scmp.ne.s32.totalorder %s447, %s448
      %p460 = scmp.eq.s32.totalorder %s50, 1
      %p461 = por %p459, %p460
      %p463 = scmp.ne.s32.totalorder %s448, %s462
      %p464 = scmp.eq.s32.totalorder %s50, 0
      %p465 = por %p463, %p464
      %s467 = sadd.s32 %s466, 1
      %p470 = scmp.eq.s32.totalorder %s44, 1
      %p471 = scmp.ne.s32.totalorder %s466, %s468
      %p472 = scmp.eq.s32.totalorder %s44, 0
      %p473 = por %p471, %p472
      %p474 = scmp.ne.s32.totalorder %s466, %s468
      %p475 = scmp.eq.s32.totalorder %s49, 1
      %p476 = por %p474, %p475
      %p477 = scmp.ne.s32.totalorder %s468, %s469
      %p478 = scmp.eq.s32.totalorder %s49, 0
      %p479 = por %p477, %p478
      %p480 = scmp.ne.s32.totalorder %s468, %s469
      %p481 = scmp.eq.s32.totalorder %s50, 1
      %p482 = por %p480, %p481
      %p484 = scmp.ne.s32.totalorder %s469, %s483
      %p485 = scmp.eq.s32.totalorder %s50, 0
      %p486 = por %p484, %p485
      %s488 = sadd.s32 %s487, 1
      %p491 = scmp.eq.s32.totalorder %s44, 1
      %p492 = scmp.ne.s32.totalorder %s487, %s489
      %p493 = scmp.eq.s32.totalorder %s44, 0
      %p494 = por %p492, %p493
      %p495 = scmp.ne.s32.totalorder %s487, %s489
      %p496 = scmp.eq.s32.totalorder %s49, 1
      %p497 = por %p495, %p496
      %p498 = scmp.ne.s32.totalorder %s489, %s490
      %p499 = scmp.eq.s32.totalorder %s49, 0
      %p500 = por %p498, %p499
      %p501 = scmp.ne.s32.totalorder %s489, %s490
      %p502 = scmp.eq.s32.totalorder %s50, 1
      %p503 = por %p501, %p502
      %p505 = scmp.ne.s32.totalorder %s490, %s504
      %p506 = scmp.eq.s32.totalorder %s50, 0
      %p507 = por %p505, %p506
      %s509 = sadd.s32 %s508, 1
      %p512 = scmp.eq.s32.totalorder %s44, 1
      %p513 = scmp.ne.s32.totalorder %s508, %s510
      %p514 = scmp.eq.s32.totalorder %s44, 0
      %p515 = por %p513, %p514
      %p516 = scmp.ne.s32.totalorder %s508, %s510
      %p517 = scmp.eq.s32.totalorder %s49, 1
      %p518 = por %p516, %p517
      %p519 = scmp.ne.s32.totalorder %s510, %s511
      %p520 = scmp.eq.s32.totalorder %s49, 0
      %p521 = por %p519, %p520
      %p522 = scmp.ne.s32.totalorder %s510, %s511
      %p523 = scmp.eq.s32.totalorder %s50, 1
      %p524 = por %p522, %p523
      %p526 = scmp.ne.s32.totalorder %s511, %s525
      %p527 = scmp.eq.s32.totalorder %s50, 0
      %p528 = por %p526, %p527
      %s530 = sadd.s32 %s529, 1
      %p533 = scmp.eq.s32.totalorder %s44, 1
      %p534 = scmp.ne.s32.totalorder %s529, %s531
      %p535 = scmp.eq.s32.totalorder %s44, 0
      %p536 = por %p534, %p535
      %p537 = scmp.ne.s32.totalorder %s529, %s531
      %p538 = scmp.eq.s32.totalorder %s49, 1
      %p539 = por %p537, %p538
      %p540 = scmp.ne.s32.totalorder %s531, %s532
      %p541 = scmp.eq.s32.totalorder %s49, 0
      %p542 = por %p540, %p541
      %p543 = scmp.ne.s32.totalorder %s531, %s532
      %p544 = scmp.eq.s32.totalorder %s50, 1
      %p545 = por %p543, %p544
      %p547 = scmp.ne.s32.totalorder %s532, %s546
      %p548 = scmp.eq.s32.totalorder %s50, 0
      %p549 = por %p547, %p548
      %s551 = sadd.s32 %s550, 1
      %p554 = scmp.eq.s32.totalorder %s44, 1
      %p555 = scmp.ne.s32.totalorder %s550, %s552
      %p556 = scmp.eq.s32.totalorder %s44, 0
      %p557 = por %p555, %p556
      %p558 = scmp.ne.s32.totalorder %s550, %s552
      %p559 = scmp.eq.s32.totalorder %s49, 1
      %p560 = por %p558, %p559
      %p561 = scmp.ne.s32.totalorder %s552, %s553
      %p562 = scmp.eq.s32.totalorder %s49, 0
      %p563 = por %p561, %p562
      %p564 = scmp.ne.s32.totalorder %s552, %s553
      %p565 = scmp.eq.s32.totalorder %s50, 1
      %p566 = por %p564, %p565
      %p568 = scmp.ne.s32.totalorder %s553, %s567
      %p569 = scmp.eq.s32.totalorder %s50, 0
      %p570 = por %p568, %p569
      %s572 = sadd.s32 %s571, 1
      %p575 = scmp.eq.s32.totalorder %s44, 1
      %p576 = scmp.ne.s32.totalorder %s571, %s573
      %p577 = scmp.eq.s32.totalorder %s44, 0
      %p578 = por %p576, %p577
      %p579 = scmp.ne.s32.totalorder %s571, %s573
      %p580 = scmp.eq.s32.totalorder %s49, 1
      %p581 = por %p579, %p580
      %p582 = scmp.ne.s32.totalorder %s573, %s574
      %p583 = scmp.eq.s32.totalorder %s49, 0
      %p584 = por %p582, %p583
      %p585 = scmp.ne.s32.totalorder %s573, %s574
      %p586 = scmp.eq.s32.totalorder %s50, 1
      %p587 = por %p585, %p586
      %p589 = scmp.ne.s32.totalorder %s574, %s588
      %p590 = scmp.eq.s32.totalorder %s50, 0
      %p591 = por %p589, %p590
      %s593 = sadd.s32 %s592, 1
      %p596 = scmp.eq.s32.totalorder %s44, 1
      %p597 = scmp.ne.s32.totalorder %s592, %s594
      %p598 = scmp.eq.s32.totalorder %s44, 0
      %p599 = por %p597, %p598
      %p600 = scmp.ne.s32.totalorder %s592, %s594
      %p601 = scmp.eq.s32.totalorder %s49, 1
      %p602 = por %p600, %p601
      %p603 = scmp.ne.s32.totalorder %s594, %s595
      %p604 = scmp.eq.s32.totalorder %s49, 0
      %p605 = por %p603, %p604
      %p606 = scmp.ne.s32.totalorder %s594, %s595
      %p607 = scmp.eq.s32.totalorder %s50, 1
      %p608 = por %p606, %p607
      %p610 = scmp.ne.s32.totalorder %s595, %s609
      %p611 = scmp.eq.s32.totalorder %s50, 0
      %p612 = por %p610, %p611
      %s614 = sadd.s32 %s613, 1
      %p617 = scmp.eq.s32.totalorder %s44, 1
      %p618 = scmp.ne.s32.totalorder %s613, %s615
      %p619 = scmp.eq.s32.totalorder %s44, 0
      %p620 = por %p618, %p619
      %p621 = scmp.ne.s32.totalorder %s613, %s615
      %p622 = scmp.eq.s32.totalorder %s49, 1
      %p623 = por %p621, %p622
      %p624 = scmp.ne.s32.totalorder %s615, %s616
      %p625 = scmp.eq.s32.totalorder %s49, 0
      %p626 = por %p624, %p625
      %p627 = scmp.ne.s32.totalorder %s615, %s616
      %p628 = scmp.eq.s32.totalorder %s50, 1
      %p629 = por %p627, %p628
      %p631 = scmp.ne.s32.totalorder %s616, %s630
      %p632 = scmp.eq.s32.totalorder %s50, 0
      %p633 = por %p631, %p632
      %s634 = ssub.s32 %s44, %s51
      %p635 = scmp.eq.s32.totalorder %s634, 0
      %s637 = sadd.s32 %s636, 1
      %s638 = scalar_select %p635, %s636, %s637
      %p641 = pneg %p635
      %p642 = scmp.eq.s32.totalorder %s44, 1
      %p643 = por %p641, %p642
      %p644 = scmp.ne.s32.totalorder %s636, %s639
      %p645 = scmp.eq.s32.totalorder %s44, 0
      %p646 = por %p644, %p645
      %p647 = scmp.ne.s32.totalorder %s636, %s639
      %p648 = scmp.eq.s32.totalorder %s49, 1
      %p649 = por %p647, %p648
      %p650 = scmp.ne.s32.totalorder %s639, %s640
      %p651 = scmp.eq.s32.totalorder %s49, 0
      %p652 = por %p650, %p651
      %p653 = scmp.ne.s32.totalorder %s639, %s640
      %p654 = scmp.eq.s32.totalorder %s50, 1
      %p655 = por %p653, %p654
      %p657 = scmp.ne.s32.totalorder %s640, %s656
      %p658 = scmp.eq.s32.totalorder %s50, 0
      %p659 = por %p657, %p658
      %p660 = scmp.le.s32.totalorder 1, %s44
      %p661 = scmp.lt.s32.totalorder %s44, 3
      %p662 = pnand %p660, %p661
      %p663 = pneg %p662
      // Predicated region
      $region9: #{tpu_custom_call.1} parent=5 // pred_check
        _
      $region10: #{tpu_custom_call.1} parent=5 // pred_check_branch
        %665 = sbr.rel (%p662) target = $region12
      $region11: #{tpu_custom_call.1} parent=5 // pred_region
        %s666 = ssub.s32 %s44, 1
        // Predicated region
        $region13: #{tpu_custom_call.1} parent=11 // pred_check
          %p667 = pneg %p143
        $region14: #{tpu_custom_call.1} parent=11 // pred_check_branch
          %669 = sbr.rel (%p667) target = $region16
        $region15: #{tpu_custom_call.1} parent=11 // pred_region
          _
        $region16: #{tpu_custom_call.1} parent=11 // pred_fallthru
          _
        // Predicated region
        $region17: #{tpu_custom_call.1} parent=11 // pred_check
          %p670 = pneg %p164
        $region18: #{tpu_custom_call.1} parent=11 // pred_check_branch
          %672 = sbr.rel (%p670) target = $region20
        $region19: #{tpu_custom_call.1} parent=11 // pred_region
          _
        $region20: #{tpu_custom_call.1} parent=11 // pred_fallthru
          _
        // Predicated region
        $region21: #{tpu_custom_call.1} parent=11 // pred_check
          %p673 = pneg %p185
        $region22: #{tpu_custom_call.1} parent=11 // pred_check_branch
          %675 = sbr.rel (%p673) target = $region24
        $region23: #{tpu_custom_call.1} parent=11 // pred_region
          _
        $region24: #{tpu_custom_call.1} parent=11 // pred_fallthru
          _
        // Predicated region
        $region25: #{tpu_custom_call.1} parent=11 // pred_check
          %p676 = pneg %p206
        $region26: #{tpu_custom_call.1} parent=11 // pred_check_branch
          %678 = sbr.rel (%p676) target = $region28
        $region27: #{tpu_custom_call.1} parent=11 // pred_region
          %680 = vsyncadd [#allocation6], 0
          %s681 = sshll.u32 %s6, 4
          %s682 = int_to_ptr.hbm [resolvable:$true] %s681
          %s683 = sshll.u32 [#allocation5], 4
          %s684 = int_to_ptr.vmem [resolvable:$true] %s683
          %689 = dma.hbm_to_vmem [thread:$0]  %s682, 32, %s684, [#allocation6], 16, 16, 1
        $region28: #{tpu_custom_call.1} parent=11 // pred_fallthru
          _
        // Predicated region
        $region29: #{tpu_custom_call.1} parent=11 // pred_check
          %p690 = pneg %p227
        $region30: #{tpu_custom_call.1} parent=11 // pred_check_branch
          %692 = sbr.rel (%p690) target = $region32
        $region31: #{tpu_custom_call.1} parent=11 // pred_region
          %694 = vsyncadd [#allocation6], 0
          %s695 = sshll.u32 %s7, 4
          %s696 = int_to_ptr.hbm [resolvable:$true] %s695
          %s697 = sshll.u32 [#allocation7], 4
          %s698 = int_to_ptr.vmem [resolvable:$true] %s697
          %703 = dma.hbm_to_vmem [thread:$0]  %s696, 32, %s698, [#allocation6], 16, 16, 1
        $region32: #{tpu_custom_call.1} parent=11 // pred_fallthru
          _
        // Predicated region
        $region33: #{tpu_custom_call.1} parent=11 // pred_check
          %p704 = pneg %p248
        $region34: #{tpu_custom_call.1} parent=11 // pred_check_branch
          %706 = sbr.rel (%p704) target = $region36
        $region35: #{tpu_custom_call.1} parent=11 // pred_region
          %708 = vsyncadd [#allocation9], 0
          %s709 = sshll.u32 %s8, 4
          %s710 = int_to_ptr.hbm [resolvable:$true] %s709
          %s711 = sshll.u32 [#allocation8], 4
          %s712 = int_to_ptr.vmem [resolvable:$true] %s711
          %717 = dma.hbm_to_vmem [thread:$0]  %s710, 32, %s712, [#allocation9], 16, 16, 1
        $region36: #{tpu_custom_call.1} parent=11 // pred_fallthru
          _
        // Predicated region
        $region37: #{tpu_custom_call.1} parent=11 // pred_check
          %p718 = pneg %p269
        $region38: #{tpu_custom_call.1} parent=11 // pred_check_branch
          %720 = sbr.rel (%p718) target = $region40
        $region39: #{tpu_custom_call.1} parent=11 // pred_region
          %722 = vsyncadd [#allocation9], 0
          %s723 = sshll.u32 %s9, 4
          %s724 = int_to_ptr.hbm [resolvable:$true] %s723
          %s725 = sshll.u32 [#allocation10], 4
          %s726 = int_to_ptr.vmem [resolvable:$true] %s725
          %731 = dma.hbm_to_vmem [thread:$0]  %s724, 512, %s726, [#allocation9], 64, 64, 4
        $region40: #{tpu_custom_call.1} parent=11 // pred_fallthru
          _
        // Predicated region
        $region41: #{tpu_custom_call.1} parent=11 // pred_check
          %p732 = pneg %p290
        $region42: #{tpu_custom_call.1} parent=11 // pred_check_branch
          %734 = sbr.rel (%p732) target = $region44
        $region43: #{tpu_custom_call.1} parent=11 // pred_region
          _
        $region44: #{tpu_custom_call.1} parent=11 // pred_fallthru
          _
        // Predicated region
        $region45: #{tpu_custom_call.1} parent=11 // pred_check
          %p735 = pneg %p311
        $region46: #{tpu_custom_call.1} parent=11 // pred_check_branch
          %737 = sbr.rel (%p735) target = $region48
        $region47: #{tpu_custom_call.1} parent=11 // pred_region
          %739 = vsyncadd [#allocation12], 0
          %s740 = sshll.u32 %s11, 4
          %s741 = int_to_ptr.hbm [resolvable:$true] %s740
          %s742 = sshll.u32 [#allocation11], 4
          %s743 = int_to_ptr.vmem [resolvable:$true] %s742
          %748 = dma.hbm_to_vmem [thread:$0]  %s741, 512, %s743, [#allocation12], 64, 64, 4
        $region48: #{tpu_custom_call.1} parent=11 // pred_fallthru
          _
        // Predicated region
        $region49: #{tpu_custom_call.1} parent=11 // pred_check
          %p749 = pneg %p332
        $region50: #{tpu_custom_call.1} parent=11 // pred_check_branch
          %751 = sbr.rel (%p749) target = $region52
        $region51: #{tpu_custom_call.1} parent=11 // pred_region
          _
        $region52: #{tpu_custom_call.1} parent=11 // pred_fallthru
          _
        // Predicated region
        $region53: #{tpu_custom_call.1} parent=11 // pred_check
          %p752 = pneg %p353
        $region54: #{tpu_custom_call.1} parent=11 // pred_check_branch
          %754 = sbr.rel (%p752) target = $region56
        $region55: #{tpu_custom_call.1} parent=11 // pred_region
          %756 = vsyncadd [#allocation12], 0
          %s757 = sshll.u32 %s13, 4
          %s758 = int_to_ptr.hbm [resolvable:$true] %s757
          %s759 = sshll.u32 [#allocation13], 4
          %s760 = int_to_ptr.vmem [resolvable:$true] %s759
          %765 = dma.hbm_to_vmem [thread:$0]  %s758, 512, %s760, [#allocation12], 64, 64, 4
        $region56: #{tpu_custom_call.1} parent=11 // pred_fallthru
          _
        // Predicated region
        $region57: #{tpu_custom_call.1} parent=11 // pred_check
          %p766 = pneg %p374
        $region58: #{tpu_custom_call.1} parent=11 // pred_check_branch
          %768 = sbr.rel (%p766) target = $region60
        $region59: #{tpu_custom_call.1} parent=11 // pred_region
          _
        $region60: #{tpu_custom_call.1} parent=11 // pred_fallthru
          _
        // Predicated region
        $region61: #{tpu_custom_call.1} parent=11 // pred_check
          %p769 = pneg %p395
        $region62: #{tpu_custom_call.1} parent=11 // pred_check_branch
          %771 = sbr.rel (%p769) target = $region64
        $region63: #{tpu_custom_call.1} parent=11 // pred_region
          _
        $region64: #{tpu_custom_call.1} parent=11 // pred_fallthru
          _
        // Predicated region
        $region65: #{tpu_custom_call.1} parent=11 // pred_check
          %p772 = pneg %p416
        $region66: #{tpu_custom_call.1} parent=11 // pred_check_branch
          %774 = sbr.rel (%p772) target = $region68
        $region67: #{tpu_custom_call.1} parent=11 // pred_region
          %776 = vsyncadd [#allocation15], 0
          %s777 = sshll.u32 %s16, 4
          %s778 = int_to_ptr.hbm [resolvable:$true] %s777
          %s779 = sshll.u32 [#allocation14], 4
          %s780 = int_to_ptr.vmem [resolvable:$true] %s779
          %785 = dma.hbm_to_vmem [thread:$0]  %s778, 32, %s780, [#allocation15], 16, 16, 1
        $region68: #{tpu_custom_call.1} parent=11 // pred_fallthru
          _
        // Predicated region
        $region69: #{tpu_custom_call.1} parent=11 // pred_check
          %p786 = pneg %p437
        $region70: #{tpu_custom_call.1} parent=11 // pred_check_branch
          %788 = sbr.rel (%p786) target = $region72
        $region71: #{tpu_custom_call.1} parent=11 // pred_region
          %790 = vsyncadd [#allocation15], 0
          %s791 = sshll.u32 %s17, 4
          %s792 = int_to_ptr.hbm [resolvable:$true] %s791
          %s793 = sshll.u32 [#allocation16], 4
          %s794 = int_to_ptr.vmem [resolvable:$true] %s793
          %799 = dma.hbm_to_vmem [thread:$0]  %s792, 512, %s794, [#allocation15], 64, 64, 4
        $region72: #{tpu_custom_call.1} parent=11 // pred_fallthru
          _
        // Predicated region
        $region73: #{tpu_custom_call.1} parent=11 // pred_check
          %p800 = pneg %p458
        $region74: #{tpu_custom_call.1} parent=11 // pred_check_branch
          %802 = sbr.rel (%p800) target = $region76
        $region75: #{tpu_custom_call.1} parent=11 // pred_region
          _
        $region76: #{tpu_custom_call.1} parent=11 // pred_fallthru
          _
        // Predicated region
        $region77: #{tpu_custom_call.1} parent=11 // pred_check
          %p803 = pneg %p479
        $region78: #{tpu_custom_call.1} parent=11 // pred_check_branch
          %805 = sbr.rel (%p803) target = $region80
        $region79: #{tpu_custom_call.1} parent=11 // pred_region
          _
        $region80: #{tpu_custom_call.1} parent=11 // pred_fallthru
          _
        // Predicated region
        $region81: #{tpu_custom_call.1} parent=11 // pred_check
          %p806 = pneg %p500
        $region82: #{tpu_custom_call.1} parent=11 // pred_check_branch
          %808 = sbr.rel (%p806) target = $region84
        $region83: #{tpu_custom_call.1} parent=11 // pred_region
          _
        $region84: #{tpu_custom_call.1} parent=11 // pred_fallthru
          _
        // Predicated region
        $region85: #{tpu_custom_call.1} parent=11 // pred_check
          %p809 = pneg %p521
        $region86: #{tpu_custom_call.1} parent=11 // pred_check_branch
          %811 = sbr.rel (%p809) target = $region88
        $region87: #{tpu_custom_call.1} parent=11 // pred_region
          _
        $region88: #{tpu_custom_call.1} parent=11 // pred_fallthru
          _
        // Predicated region
        $region89: #{tpu_custom_call.1} parent=11 // pred_check
          %p812 = pneg %p542
        $region90: #{tpu_custom_call.1} parent=11 // pred_check_branch
          %814 = sbr.rel (%p812) target = $region92
        $region91: #{tpu_custom_call.1} parent=11 // pred_region
          %816 = vsyncadd [#allocation18], 0
          %s817 = sshll.u32 %s22, 4
          %s818 = int_to_ptr.hbm [resolvable:$true] %s817
          %s819 = sshll.u32 [#allocation17], 4
          %s820 = int_to_ptr.vmem [resolvable:$true] %s819
          %825 = dma.hbm_to_vmem [thread:$0]  %s818, 32, %s820, [#allocation18], 16, 16, 1
        $region92: #{tpu_custom_call.1} parent=11 // pred_fallthru
          _
        // Predicated region
        $region93: #{tpu_custom_call.1} parent=11 // pred_check
          %p826 = pneg %p563
        $region94: #{tpu_custom_call.1} parent=11 // pred_check_branch
          %828 = sbr.rel (%p826) target = $region96
        $region95: #{tpu_custom_call.1} parent=11 // pred_region
          _
        $region96: #{tpu_custom_call.1} parent=11 // pred_fallthru
          _
        // Predicated region
        $region97: #{tpu_custom_call.1} parent=11 // pred_check
          %p829 = pneg %p584
        $region98: #{tpu_custom_call.1} parent=11 // pred_check_branch
          %831 = sbr.rel (%p829) target = $region100
        $region99: #{tpu_custom_call.1} parent=11 // pred_region
          _
        $region100: #{tpu_custom_call.1} parent=11 // pred_fallthru
          _
        // Predicated region
        $region101: #{tpu_custom_call.1} parent=11 // pred_check
          %p832 = pneg %p605
        $region102: #{tpu_custom_call.1} parent=11 // pred_check_branch
          %834 = sbr.rel (%p832) target = $region104
        $region103: #{tpu_custom_call.1} parent=11 // pred_region
          _
        $region104: #{tpu_custom_call.1} parent=11 // pred_fallthru
          _
        // Predicated region
        $region105: #{tpu_custom_call.1} parent=11 // pred_check
          %p835 = pneg %p626
        $region106: #{tpu_custom_call.1} parent=11 // pred_check_branch
          %837 = sbr.rel (%p835) target = $region108
        $region107: #{tpu_custom_call.1} parent=11 // pred_region
          _
        $region108: #{tpu_custom_call.1} parent=11 // pred_fallthru
          _
      $region12: #{tpu_custom_call.1} parent=5 // pred_fallthru
        _
      %p838 = scmp.lt.s32.totalorder %s44, 2
      // Predicated region
      $region109: #{tpu_custom_call.1} parent=5 // pred_check
        %p839 = pneg %p838
      $region110: #{tpu_custom_call.1} parent=5 // pred_check_branch
        %841 = sbr.rel (%p839) target = $region112
      $region111: #{tpu_custom_call.1} parent=5 // pred_region
        // Predicated region
        $region113: #{tpu_custom_call.1} parent=111 // pred_check
          %p842 = pneg %p64
        $region114: #{tpu_custom_call.1} parent=111 // pred_check_branch
          %844 = sbr.rel (%p842) target = $region116
        $region115: #{tpu_custom_call.1} parent=111 // pred_region
          %p845 = scmp.lt.s32.totalorder %s44, 1
          %s846 = scalar_select %p845, %s44, 1
          %s847 = smul.addr %s846, 6
          %s848 = smul.addr %s847, 8
          %s849 = scalar_lea.vmem %s0, %s848
        $region116: #{tpu_custom_call.1} parent=111 // pred_fallthru
          _
        // Predicated region
        $region117: #{tpu_custom_call.1} parent=111 // pred_check
          %p850 = pneg %p90
        $region118: #{tpu_custom_call.1} parent=111 // pred_check_branch
          %852 = sbr.rel (%p850) target = $region120
        $region119: #{tpu_custom_call.1} parent=111 // pred_region
          %p853 = scmp.lt.s32.totalorder %s44, 1
          %s854 = scalar_select %p853, %s44, 1
          %s855 = smul.addr %s854, 2
          %s856 = smul.addr %s855, 8
          %s857 = scalar_lea.vmem %s1, %s856
        $region120: #{tpu_custom_call.1} parent=111 // pred_fallthru
          _
        // Predicated region
        $region121: #{tpu_custom_call.1} parent=111 // pred_check
          %p858 = pneg %p116
        $region122: #{tpu_custom_call.1} parent=111 // pred_check_branch
          %860 = sbr.rel (%p858) target = $region124
        $region123: #{tpu_custom_call.1} parent=111 // pred_region
          %s861 = sand.u32 %s106, 1
          %s862 = scalar_lea.sflag [#allocation3], %s861
          %s863 = sand.u32 %s106, 1
          %s864 = scalar_lea.vmem [#allocation2], %s863
          %866 = vsyncadd %s862, 0
          %s867 = scalar_lea.hbm %s2, %s44
          %s869 = sshll.u32 %s867, 4
          %s870 = int_to_ptr.hbm [resolvable:$true] %s869
          %s871 = sshll.u32 %s864, 4
          %s872 = int_to_ptr.vmem [resolvable:$true] %s871
          %874 = dma.hbm_to_vmem [thread:$0]  %s870, 16, %s872, %s862
        $region124: #{tpu_custom_call.1} parent=111 // pred_fallthru
          _
      $region112: #{tpu_custom_call.1} parent=5 // pred_fallthru
        _
      %p875 = scmp.le.s32.totalorder 1, %s44
      %p876 = scmp.lt.s32.totalorder %s44, 3
      %p877 = pnand %p875, %p876
      %p878 = pneg %p877
      // Predicated region
      $region125: #{tpu_custom_call.1} parent=5 // pred_check
        _
      $region126: #{tpu_custom_call.1} parent=5 // pred_check_branch
        %880 = sbr.rel (%p877) target = $region128
      $region127: #{tpu_custom_call.1} parent=5 // pred_region
        %s881 = ssub.s32 %s44, 1
        %s882 = sand.u32 %s109, 1
        %s883 = scalar_lea.sflag [#allocation3], %s882
        %s884 = sand.u32 %s109, 1
        %s885 = scalar_lea.vmem [#allocation2], %s884
        // Predicated region
        $region129: #{tpu_custom_call.1} parent=127 // pred_check
          %p886 = pneg %p122
        $region130: #{tpu_custom_call.1} parent=127 // pred_check_branch
          %888 = sbr.rel (%p886) target = $region132
        $region131: #{tpu_custom_call.1} parent=127 // pred_region
          %890 = dma.done %s883, 16
        $region132: #{tpu_custom_call.1} parent=127 // pred_fallthru
          _
        // Predicated region
        $region133: #{tpu_custom_call.1} parent=127 // pred_check
          %p891 = pneg %p206
        $region134: #{tpu_custom_call.1} parent=127 // pred_check_branch
          %893 = sbr.rel (%p891) target = $region136
        $region135: #{tpu_custom_call.1} parent=127 // pred_region
          %895 = dma.done [#allocation6], 32
        $region136: #{tpu_custom_call.1} parent=127 // pred_fallthru
          _
        // Predicated region
        $region137: #{tpu_custom_call.1} parent=127 // pred_check
          %p896 = pneg %p227
        $region138: #{tpu_custom_call.1} parent=127 // pred_check_branch
          %898 = sbr.rel (%p896) target = $region140
        $region139: #{tpu_custom_call.1} parent=127 // pred_region
          %900 = dma.done [#allocation6], 32
        $region140: #{tpu_custom_call.1} parent=127 // pred_fallthru
          _
        // Predicated region
        $region141: #{tpu_custom_call.1} parent=127 // pred_check
          %p901 = pneg %p248
        $region142: #{tpu_custom_call.1} parent=127 // pred_check_branch
          %903 = sbr.rel (%p901) target = $region144
        $region143: #{tpu_custom_call.1} parent=127 // pred_region
          %905 = dma.done [#allocation9], 32
        $region144: #{tpu_custom_call.1} parent=127 // pred_fallthru
          _
        // Predicated region
        $region145: #{tpu_custom_call.1} parent=127 // pred_check
          %p906 = pneg %p269
        $region146: #{tpu_custom_call.1} parent=127 // pred_check_branch
          %908 = sbr.rel (%p906) target = $region148
        $region147: #{tpu_custom_call.1} parent=127 // pred_region
          %910 = dma.done [#allocation9], 512
        $region148: #{tpu_custom_call.1} parent=127 // pred_fallthru
          _
        // Predicated region
        $region149: #{tpu_custom_call.1} parent=127 // pred_check
          %p911 = pneg %p311
        $region150: #{tpu_custom_call.1} parent=127 // pred_check_branch
          %913 = sbr.rel (%p911) target = $region152
        $region151: #{tpu_custom_call.1} parent=127 // pred_region
          %915 = dma.done [#allocation12], 512
        $region152: #{tpu_custom_call.1} parent=127 // pred_fallthru
          _
        // Predicated region
        $region153: #{tpu_custom_call.1} parent=127 // pred_check
          %p916 = pneg %p353
        $region154: #{tpu_custom_call.1} parent=127 // pred_check_branch
          %918 = sbr.rel (%p916) target = $region156
        $region155: #{tpu_custom_call.1} parent=127 // pred_region
          %920 = dma.done [#allocation12], 512
        $region156: #{tpu_custom_call.1} parent=127 // pred_fallthru
          _
        // Predicated region
        $region157: #{tpu_custom_call.1} parent=127 // pred_check
          %p921 = pneg %p416
        $region158: #{tpu_custom_call.1} parent=127 // pred_check_branch
          %923 = sbr.rel (%p921) target = $region160
        $region159: #{tpu_custom_call.1} parent=127 // pred_region
          %925 = dma.done [#allocation15], 32
        $region160: #{tpu_custom_call.1} parent=127 // pred_fallthru
          _
        // Predicated region
        $region161: #{tpu_custom_call.1} parent=127 // pred_check
          %p926 = pneg %p437
        $region162: #{tpu_custom_call.1} parent=127 // pred_check_branch
          %928 = sbr.rel (%p926) target = $region164
        $region163: #{tpu_custom_call.1} parent=127 // pred_region
          %930 = dma.done [#allocation15], 512
        $region164: #{tpu_custom_call.1} parent=127 // pred_fallthru
          _
        // Predicated region
        $region165: #{tpu_custom_call.1} parent=127 // pred_check
          %p931 = pneg %p542
        $region166: #{tpu_custom_call.1} parent=127 // pred_check_branch
          %933 = sbr.rel (%p931) target = $region168
        $region167: #{tpu_custom_call.1} parent=127 // pred_region
          %935 = dma.done [#allocation18], 32
        $region168: #{tpu_custom_call.1} parent=127 // pred_fallthru
          _
        %p936 = scmp.lt.s32.totalorder %s49, 1
        %s937 = scalar_select %p936, %s49, 1
        %s938 = smul.addr %s937, 6
        %s939 = smul.addr %s938, 8
        %s940 = scalar_lea.vmem %s0, %s939
        %p941 = pneg %p70
        %p942 = pneg %p67
        %p943 = scmp.lt.s32.totalorder %s49, 1
        %s944 = scalar_select %p943, %s49, 1
        %s945 = smul.addr %s944, 2
        %s946 = smul.addr %s945, 8
        %s947 = scalar_lea.vmem %s1, %s946
        %p948 = pneg %p96
        %p949 = pneg %p93
        %s950 = sand.u32 %s109, 1
        %s951 = scalar_lea.sflag [#allocation3], %s950
        %s952 = sand.u32 %s109, 1
        %s953 = scalar_lea.vmem [#allocation2], %s952
        %p954 = pneg %p122
        %p955 = pneg %p119
        %p956 = pneg %p143
        %p957 = pneg %p140
        %p958 = pneg %p164
        %p959 = pneg %p161
        %p960 = pneg %p185
        %p961 = pneg %p182
        %p962 = pneg %p206
        %p963 = pneg %p203
        %p964 = pneg %p227
        %p965 = pneg %p224
        %p966 = pneg %p248
        %p967 = pneg %p245
        %p968 = pneg %p269
        %p969 = pneg %p266
        %p970 = pneg %p290
        %p971 = pneg %p287
        %p972 = pneg %p311
        %p973 = pneg %p308
        %p974 = pneg %p332
        %p975 = pneg %p329
        %p976 = pneg %p353
        %p977 = pneg %p350
        %p978 = pneg %p374
        %p979 = pneg %p371
        %p980 = pneg %p395
        %p981 = pneg %p392
        %p982 = pneg %p416
        %p983 = pneg %p413
        %p984 = pneg %p437
        %p985 = pneg %p434
        %p986 = pneg %p458
        %p987 = pneg %p455
        %p988 = pneg %p479
        %p989 = pneg %p476
        %p990 = pneg %p500
        %p991 = pneg %p497
        %p992 = pneg %p521
        %p993 = pneg %p518
        %p994 = pneg %p542
        %p995 = pneg %p539
        %p996 = pneg %p563
        %p997 = pneg %p560
        %p998 = pneg %p584
        %p999 = pneg %p581
        %p1000 = pneg %p605
        %p1001 = pneg %p602
        %p1002 = pneg %p626
        %p1003 = pneg %p623
        %p1004 = pneg %p652
        %p1005 = pneg %p649
        %s1006 = sand.u32 %s639, 1
        %s1007 = scalar_lea.sflag [#allocation4], %s1006
        %s1008 = sand.u32 %s639, 1
        %s1009 = smul.addr %s1008, 48
        %s1010 = scalar_lea.vmem [#allocation19], %s1009
        %p1011 = scmp.lt.s32.totalorder %s49, 1
        %s1012 = scalar_select %p1011, %s49, 1
        %s1013 = smul.addr %s1012, 6
        %s1014 = smul.addr %s1013, 8
        %s1015 = scalar_lea.vmem %s0, %s1014
        %p1016 = scmp.lt.s32.totalorder %s49, 1
        %s1017 = scalar_select %p1016, %s49, 1
        %s1018 = smul.addr %s1017, 2
        %s1019 = smul.addr %s1018, 8
        %s1020 = scalar_lea.vmem %s1, %s1019
        %v1022 = vld [vmem:[%s1015] sm:$0xff]
        %v1023 = vld [vmem:[%s1015 + $0x8] sm:$0xff]
        %v1024 = vld [vmem:[%s1015 + $0x10] sm:$0xff]
        %v1025 = vld [vmem:[%s1015 + $0x18] sm:$0xff]
        %v1026 = vld [vmem:[%s1015 + $0x20] sm:$0xff]
        %v1027 = vld [vmem:[%s1015 + $0x28] sm:$0xff]
        %v1028 = vld [vmem:[%s1020] sm:$0xff]
        %v1029 = vld [vmem:[%s1020 + $0x8] sm:$0xff]
        %v1030 = vld [vmem:[%s885] sm:$0x1]
        %v1031 = vlaneseq
        %v1032 = vshrl.u32 %v1031, 7
        %v1033 = vadd.s32 %v1032, 8
        %v1034 = vadd.s32 %v1032, 16
        %v1035 = vadd.s32 %v1032, 24
        %v1036 = vadd.s32 %v1032, 32
        %v1037 = vadd.s32 %v1032, 40
        %v1038 = vlaneseq
        %v1039 = vand.u32 %v1038, 127
        %vm1040 = vcmp.gt.s32.totalorder %v1039, %v1032
        %vm1041 = vcmp.gt.s32.totalorder %v1039, %v1033
        %vm1042 = vcmp.gt.s32.totalorder %v1039, %v1034
        %vm1043 = vcmp.gt.s32.totalorder %v1039, %v1035
        %vm1044 = vcmp.gt.s32.totalorder %v1039, %v1036
        %vm1045 = vcmp.gt.s32.totalorder %v1039, %v1037
        %v1046 = vsel %vm1040, -1e+09, 0.0
        %v1047 = vsel %vm1041, -1e+09, 0.0
        %v1048 = vsel %vm1042, -1e+09, 0.0
        %v1049 = vsel %vm1043, -1e+09, 0.0
        %v1050 = vsel %vm1044, -1e+09, 0.0
        %v1051 = vsel %vm1045, -1e+09, 0.0
        %v1052 = vpack.c.bf16 %v1023, %v1022
        %v1053 = vpack.c.bf16 %v1025, %v1024
        %v1054 = vpack.c.bf16 %v1027, %v1026
        %v1055 = vld [vmem:[%s3] sm:$0xf]
        %v1056 = vld [vmem:[%s3 + $0x4] sm:$0xf]
        %v1057 = vld [vmem:[%s3 + $0x8] sm:$0xf]
        %v1058 = vld [vmem:[%s3 + $0xc] sm:$0xf]
        %v1059 = vld [vmem:[%s4] sm:$0x1]
        %v1061 = vperm.slane %v1059, 0
        %v1067 = vunpack.c.l.b16 %v1055
        %v1068 = vunpack.c.l.b16 %v1056
        %v1069 = vunpack.c.l.b16 %v1057
        %v1070 = vunpack.c.l.b16 %v1058
        %v1071 = vpack.c.b16 %v1068, %v1067
        %v1072 = vpack.c.b16 %v1070, %v1069
        %vm1075 = vcmask 261120
        %v1077 = vsel %vm1075, %v1052, 0
        %v1080 = vsel %vm1075, %v1053, 0
        %v1083 = vsel %vm1075, %v1054, 0
        %1085 = vmatpush.bf16.msra.mxu0 0
        %1086 = vmatpush.bf16.msra.mxu0 0
        %1087 = vmatpush.bf16.msra.mxu0 0
        %1088 = vmatpush.bf16.msra.mxu0 0
        %1089 = vmatpush.bf16.msra.mxu0 0
        %1090 = vmatpush.bf16.msra.mxu0 0
        %1091 = vmatpush.bf16.msra.mxu0 %v1072
        %1092 = vmatpush.bf16.msra.mxu0 %v1071
        %1093 = vmatmul.bf16.gmra.mxu0 %v1077
        %v1094 = vpop.f32.mrf.mxu0
        %v1095 = vadd.f32 %v1061, %v1094
        %v1096 = vpop.f32.mrf.mxu0
        %v1097 = vadd.f32 %v1061, %v1096
        %1098 = vmatmul.bf16.gmra.mxu0 %v1080
        %v1099 = vpop.f32.mrf.mxu0
        %v1100 = vadd.f32 %v1061, %v1099
        %v1101 = vpop.f32.mrf.mxu0
        %v1102 = vadd.f32 %v1061, %v1101
        %1103 = vmatmul.bf16.gmra.mxu0 %v1083
        %v1104 = vpop.f32.mrf.mxu0
        %v1105 = vadd.f32 %v1061, %v1104
        %v1106 = vpop.f32.mrf.mxu0
        %v1107 = vadd.f32 %v1061, %v1106
        %1108 = vdwg.mxu0
        %v1109 = vld [vmem:[%s5] sm:$0xf]
        %v1110 = vld [vmem:[%s5 + $0x4] sm:$0xf]
        %v1111 = vld [vmem:[%s5 + $0x8] sm:$0xf]
        %v1112 = vld [vmem:[%s5 + $0xc] sm:$0xf]
        %v1113 = vpack.c.bf16 %v1095, %v1095
        %v1114 = vpack.c.bf16 %v1097, %v1097
        %v1115 = vpack.c.bf16 %v1100, %v1100
        %v1116 = vpack.c.bf16 %v1102, %v1102
        %v1117 = vpack.c.bf16 %v1105, %v1105
        %v1118 = vpack.c.bf16 %v1107, %v1107
        %v1125 = vunpack.c.l.b16 %v1113
        %v1126 = vunpack.c.l.b16 %v1114
        %v1127 = vunpack.c.l.b16 %v1115
        %v1128 = vunpack.c.l.b16 %v1116
        %v1129 = vunpack.c.l.b16 %v1117
        %v1130 = vunpack.c.l.b16 %v1118
        %v1131 = vpack.c.b16 %v1126, %v1125
        %v1132 = vpack.c.b16 %v1128, %v1127
        %v1133 = vpack.c.b16 %v1130, %v1129
        %1134 = vrot.lane.b32.xlu0 %v1131, 96
        %v1135 = vpop.permute.xlu0 %1134
        %1136 = vrot.lane.b32.xlu0 %v1132, 96
        %v1137 = vpop.permute.xlu0 %1136
        %1138 = vrot.lane.b32.xlu0 %v1133, 96
        %v1139 = vpop.permute.xlu0 %1138
        %vm1140 = vcmask 64512
        %v1142 = vsel %vm1140, %v1131, 0
        %v1145 = vsel %vm1140, %v1132, 0
        %v1148 = vsel %vm1140, %v1133, 0
        %v1151 = vsel %vm1140, %v1135, 0
        %v1154 = vsel %vm1140, %v1137, 0
        %v1157 = vsel %vm1140, %v1139, 0
        %1159 = vmatpush.bf16.xpose.msra.mxu0 0
        %1160 = vmatpush.bf16.xpose.msra.mxu0 0
        %1161 = vmatpush.bf16.xpose.msra.mxu0 0
        %1162 = vmatpush.bf16.xpose.msra.mxu0 0
        %1163 = vmatpush.bf16.xpose.msra.mxu0 0
        %1164 = vmatpush.bf16.xpose.msra.mxu0 %v1157
        %1165 = vmatpush.bf16.xpose.msra.mxu0 %v1154
        %1166 = vmatpush.bf16.xpose.msra.mxu0 %v1151
        %1167 = vmatmul.bf16.gmra.mxu0 %v1142
        %v1168 = vpop.f32.mrf.mxu0
        %v1169 = vadd.f32 0.0, %v1168
        %v1170 = vpop.f32.mrf.mxu0
        %v1171 = vadd.f32 0.0, %v1170
        %1172 = vmatmul.bf16.gmra.mxu0 %v1145
        %v1173 = vpop.f32.mrf.mxu0
        %v1174 = vadd.f32 0.0, %v1173
        %v1175 = vpop.f32.mrf.mxu0
        %v1176 = vadd.f32 0.0, %v1175
        %1177 = vmatmul.bf16.gmra.mxu0 %v1148
        %v1178 = vpop.f32.mrf.mxu0
        %v1179 = vadd.f32 0.0, %v1178
        %v1180 = vpop.f32.mrf.mxu0
        %v1181 = vadd.f32 0.0, %v1180
        %1182 = vdwg.mxu0
        %v1183 = vmul.f32 %v1169, 0.35355338
        %v1184 = vmul.f32 %v1171, 0.35355338
        %v1185 = vmul.f32 %v1174, 0.35355338
        %v1186 = vmul.f32 %v1176, 0.35355338
        %v1187 = vmul.f32 %v1179, 0.35355338
        %v1188 = vmul.f32 %v1181, 0.35355338
        %v1189 = vadd.f32 %v1183, %v1046
        %v1190 = vadd.f32 %v1184, %v1047
        %v1191 = vadd.f32 %v1185, %v1048
        %v1192 = vadd.f32 %v1186, %v1049
        %v1193 = vadd.f32 %v1187, %v1050
        %v1194 = vadd.f32 %v1188, %v1051
        %vm1195 = vcmask 392192
        %v1196 = vsel %vm1195, %v1189, -inf
        %1197 = vmax.xlane.f32.xlu0 %v1196
        %v1198 = vpop.xlane.xlu0 %1197
        %v1199 = vsel %vm1195, %v1190, -inf
        %1200 = vmax.xlane.f32.xlu0 %v1199
        %v1201 = vpop.xlane.xlu0 %1200
        %v1202 = vsel %vm1195, %v1191, -inf
        %1203 = vmax.xlane.f32.xlu0 %v1202
        %v1204 = vpop.xlane.xlu0 %1203
        %v1205 = vsel %vm1195, %v1192, -inf
        %1206 = vmax.xlane.f32.xlu0 %v1205
        %v1207 = vpop.xlane.xlu0 %1206
        %v1208 = vsel %vm1195, %v1193, -inf
        %1209 = vmax.xlane.f32.xlu0 %v1208
        %v1210 = vpop.xlane.xlu0 %1209
        %v1211 = vsel %vm1195, %v1194, -inf
        %1212 = vmax.xlane.f32.xlu0 %v1211
        %v1213 = vpop.xlane.xlu0 %1212
        %v1214 = vsub.f32 %v1189, %v1198
        %v1215 = vsub.f32 %v1190, %v1201
        %v1216 = vsub.f32 %v1191, %v1204
        %v1217 = vsub.f32 %v1192, %v1207
        %v1218 = vsub.f32 %v1193, %v1210
        %v1219 = vsub.f32 %v1194, %v1213
        %v1220 = vmul.f32 %v1214, 1.442695
        %v1221 = vpow.pop %v1220
        %v1222 = vmul.f32 %v1215, 1.442695
        %v1223 = vpow.pop %v1222
        %v1224 = vmul.f32 %v1216, 1.442695
        %v1225 = vpow.pop %v1224
        %v1226 = vmul.f32 %v1217, 1.442695
        %v1227 = vpow.pop %v1226
        %v1228 = vmul.f32 %v1218, 1.442695
        %v1229 = vpow.pop %v1228
        %v1230 = vmul.f32 %v1219, 1.442695
        %v1231 = vpow.pop %v1230
        %v1232 = vsel %vm1195, %v1221, 0.0
        %1233 = vadd.xlane.f32.xlu0 %v1232
        %v1234 = vpop.xlane.xlu0 %1233
        %v1235 = vsel %vm1195, %v1223, 0.0
        %1236 = vadd.xlane.f32.xlu0 %v1235
        %v1237 = vpop.xlane.xlu0 %1236
        %v1238 = vsel %vm1195, %v1225, 0.0
        %1239 = vadd.xlane.f32.xlu0 %v1238
        %v1240 = vpop.xlane.xlu0 %1239
        %v1241 = vsel %vm1195, %v1227, 0.0
        %1242 = vadd.xlane.f32.xlu0 %v1241
        %v1243 = vpop.xlane.xlu0 %1242
        %v1244 = vsel %vm1195, %v1229, 0.0
        %1245 = vadd.xlane.f32.xlu0 %v1244
        %v1246 = vpop.xlane.xlu0 %1245
        %v1247 = vsel %vm1195, %v1231, 0.0
        %1248 = vadd.xlane.f32.xlu0 %v1247
        %v1249 = vpop.xlane.xlu0 %1248
        %v1250 = vrcp.pop %v1234
        %v1251 = vrcp.pop %v1237
        %v1252 = vrcp.pop %v1240
        %v1253 = vrcp.pop %v1243
        %v1254 = vrcp.pop %v1246
        %v1255 = vrcp.pop %v1249
        %v1256 = vmul.f32 %v1221, %v1250
        %v1257 = vmul.f32 %v1223, %v1251
        %v1258 = vmul.f32 %v1225, %v1252
        %v1259 = vmul.f32 %v1227, %v1253
        %v1260 = vmul.f32 %v1229, %v1254
        %v1261 = vmul.f32 %v1231, %v1255
        %v1262 = vpack.c.bf16 %v1257, %v1256
        %v1263 = vpack.c.bf16 %v1259, %v1258
        %v1264 = vpack.c.bf16 %v1261, %v1260
        %1265 = vrot.lane.b32.xlu0 %v1131, 64
        %v1266 = vpop.permute.xlu0 %1265
        %1267 = vrot.lane.b32.xlu0 %v1132, 64
        %v1268 = vpop.permute.xlu0 %1267
        %1269 = vrot.lane.b32.xlu0 %v1133, 64
        %v1270 = vpop.permute.xlu0 %1269
        %v1275 = vsel %vm1195, %v1262, 0
        %v1278 = vsel %vm1195, %v1263, 0
        %v1281 = vsel %vm1195, %v1264, 0
        %1283 = vmatpush.bf16.msra.mxu0 0
        %1284 = vmatpush.bf16.msra.mxu0 0
        %1285 = vmatpush.bf16.msra.mxu0 0
        %1286 = vmatpush.bf16.msra.mxu0 0
        %1287 = vmatpush.bf16.msra.mxu0 0
        %1288 = vmatpush.bf16.msra.mxu0 %v1270
        %1289 = vmatpush.bf16.msra.mxu0 %v1268
        %1290 = vmatpush.bf16.msra.mxu0 %v1266
        %1291 = vmatmul.bf16.gmra.mxu0 %v1275
        %v1292 = vpop.f32.mrf.mxu0
        %v1293 = vadd.f32 0.0, %v1292
        %v1294 = vpop.f32.mrf.mxu0
        %v1295 = vadd.f32 0.0, %v1294
        %1296 = vmatmul.bf16.gmra.mxu0 %v1278
        %v1297 = vpop.f32.mrf.mxu0
        %v1298 = vadd.f32 0.0, %v1297
        %v1299 = vpop.f32.mrf.mxu0
        %v1300 = vadd.f32 0.0, %v1299
        %1301 = vmatmul.bf16.gmra.mxu0 %v1281
        %v1302 = vpop.f32.mrf.mxu0
        %v1303 = vadd.f32 0.0, %v1302
        %v1304 = vpop.f32.mrf.mxu0
        %v1305 = vadd.f32 0.0, %v1304
        %1306 = vdwg.mxu0
        %1307 = vrot.lane.b32.xlu0 %v1131, 120
        %v1308 = vpop.permute.xlu0 %1307
        %1309 = vrot.lane.b32.xlu0 %v1132, 120
        %v1310 = vpop.permute.xlu0 %1309
        %1311 = vrot.lane.b32.xlu0 %v1133, 120
        %v1312 = vpop.permute.xlu0 %1311
        %1313 = vrot.lane.b32.xlu0 %v1131, 88
        %v1314 = vpop.permute.xlu0 %1313
        %1315 = vrot.lane.b32.xlu0 %v1132, 88
        %v1316 = vpop.permute.xlu0 %1315
        %1317 = vrot.lane.b32.xlu0 %v1133, 88
        %v1318 = vpop.permute.xlu0 %1317
        %v1320 = vsel %vm1140, %v1308, 0
        %v1323 = vsel %vm1140, %v1310, 0
        %v1326 = vsel %vm1140, %v1312, 0
        %v1329 = vsel %vm1140, %v1314, 0
        %v1332 = vsel %vm1140, %v1316, 0
        %v1335 = vsel %vm1140, %v1318, 0
        %1337 = vmatpush.bf16.xpose.msra.mxu0 0
        %1338 = vmatpush.bf16.xpose.msra.mxu0 0
        %1339 = vmatpush.bf16.xpose.msra.mxu0 0
        %1340 = vmatpush.bf16.xpose.msra.mxu0 0
        %1341 = vmatpush.bf16.xpose.msra.mxu0 0
        %1342 = vmatpush.bf16.xpose.msra.mxu0 %v1335
        %1343 = vmatpush.bf16.xpose.msra.mxu0 %v1332
        %1344 = vmatpush.bf16.xpose.msra.mxu0 %v1329
        %1345 = vmatmul.bf16.gmra.mxu0 %v1320
        %v1346 = vpop.f32.mrf.mxu0
        %v1347 = vadd.f32 0.0, %v1346
        %v1348 = vpop.f32.mrf.mxu0
        %v1349 = vadd.f32 0.0, %v1348
        %1350 = vmatmul.bf16.gmra.mxu0 %v1323
        %v1351 = vpop.f32.mrf.mxu0
        %v1352 = vadd.f32 0.0, %v1351
        %v1353 = vpop.f32.mrf.mxu0
        %v1354 = vadd.f32 0.0, %v1353
        %1355 = vmatmul.bf16.gmra.mxu0 %v1326
        %v1356 = vpop.f32.mrf.mxu0
        %v1357 = vadd.f32 0.0, %v1356
        %v1358 = vpop.f32.mrf.mxu0
        %v1359 = vadd.f32 0.0, %v1358
        %1360 = vdwg.mxu0
        %v1361 = vmul.f32 %v1347, 0.35355338
        %v1362 = vmul.f32 %v1349, 0.35355338
        %v1363 = vmul.f32 %v1352, 0.35355338
        %v1364 = vmul.f32 %v1354, 0.35355338
        %v1365 = vmul.f32 %v1357, 0.35355338
        %v1366 = vmul.f32 %v1359, 0.35355338
        %v1367 = vadd.f32 %v1361, %v1046
        %v1368 = vadd.f32 %v1362, %v1047
        %v1369 = vadd.f32 %v1363, %v1048
        %v1370 = vadd.f32 %v1364, %v1049
        %v1371 = vadd.f32 %v1365, %v1050
        %v1372 = vadd.f32 %v1366, %v1051
        %v1373 = vsel %vm1195, %v1367, -inf
        %1374 = vmax.xlane.f32.xlu0 %v1373
        %v1375 = vpop.xlane.xlu0 %1374
        %v1376 = vsel %vm1195, %v1368, -inf
        %1377 = vmax.xlane.f32.xlu0 %v1376
        %v1378 = vpop.xlane.xlu0 %1377
        %v1379 = vsel %vm1195, %v1369, -inf
        %1380 = vmax.xlane.f32.xlu0 %v1379
        %v1381 = vpop.xlane.xlu0 %1380
        %v1382 = vsel %vm1195, %v1370, -inf
        %1383 = vmax.xlane.f32.xlu0 %v1382
        %v1384 = vpop.xlane.xlu0 %1383
        %v1385 = vsel %vm1195, %v1371, -inf
        %1386 = vmax.xlane.f32.xlu0 %v1385
        %v1387 = vpop.xlane.xlu0 %1386
        %v1388 = vsel %vm1195, %v1372, -inf
        %1389 = vmax.xlane.f32.xlu0 %v1388
        %v1390 = vpop.xlane.xlu0 %1389
        %v1391 = vsub.f32 %v1367, %v1375
        %v1392 = vsub.f32 %v1368, %v1378
        %v1393 = vsub.f32 %v1369, %v1381
        %v1394 = vsub.f32 %v1370, %v1384
        %v1395 = vsub.f32 %v1371, %v1387
        %v1396 = vsub.f32 %v1372, %v1390
        %v1397 = vmul.f32 %v1391, 1.442695
        %v1398 = vpow.pop %v1397
        %v1399 = vmul.f32 %v1392, 1.442695
        %v1400 = vpow.pop %v1399
        %v1401 = vmul.f32 %v1393, 1.442695
        %v1402 = vpow.pop %v1401
        %v1403 = vmul.f32 %v1394, 1.442695
        %v1404 = vpow.pop %v1403
        %v1405 = vmul.f32 %v1395, 1.442695
        %v1406 = vpow.pop %v1405
        %v1407 = vmul.f32 %v1396, 1.442695
        %v1408 = vpow.pop %v1407
        %v1409 = vsel %vm1195, %v1398, 0.0
        %1410 = vadd.xlane.f32.xlu0 %v1409
        %v1411 = vpop.xlane.xlu0 %1410
        %v1412 = vsel %vm1195, %v1400, 0.0
        %1413 = vadd.xlane.f32.xlu0 %v1412
        %v1414 = vpop.xlane.xlu0 %1413
        %v1415 = vsel %vm1195, %v1402, 0.0
        %1416 = vadd.xlane.f32.xlu0 %v1415
        %v1417 = vpop.xlane.xlu0 %1416
        %v1418 = vsel %vm1195, %v1404, 0.0
        %1419 = vadd.xlane.f32.xlu0 %v1418
        %v1420 = vpop.xlane.xlu0 %1419
        %v1421 = vsel %vm1195, %v1406, 0.0
        %1422 = vadd.xlane.f32.xlu0 %v1421
        %v1423 = vpop.xlane.xlu0 %1422
        %v1424 = vsel %vm1195, %v1408, 0.0
        %1425 = vadd.xlane.f32.xlu0 %v1424
        %v1426 = vpop.xlane.xlu0 %1425
        %v1427 = vrcp.pop %v1411
        %v1428 = vrcp.pop %v1414
        %v1429 = vrcp.pop %v1417
        %v1430 = vrcp.pop %v1420
        %v1431 = vrcp.pop %v1423
        %v1432 = vrcp.pop %v1426
        %v1433 = vmul.f32 %v1398, %v1427
        %v1434 = vmul.f32 %v1400, %v1428
        %v1435 = vmul.f32 %v1402, %v1429
        %v1436 = vmul.f32 %v1404, %v1430
        %v1437 = vmul.f32 %v1406, %v1431
        %v1438 = vmul.f32 %v1408, %v1432
        %v1439 = vpack.c.bf16 %v1434, %v1433
        %v1440 = vpack.c.bf16 %v1436, %v1435
        %v1441 = vpack.c.bf16 %v1438, %v1437
        %1442 = vrot.lane.b32.xlu0 %v1131, 56
        %v1443 = vpop.permute.xlu0 %1442
        %1444 = vrot.lane.b32.xlu0 %v1132, 56
        %v1445 = vpop.permute.xlu0 %1444
        %1446 = vrot.lane.b32.xlu0 %v1133, 56
        %v1447 = vpop.permute.xlu0 %1446
        %v1452 = vsel %vm1195, %v1439, 0
        %v1455 = vsel %vm1195, %v1440, 0
        %v1458 = vsel %vm1195, %v1441, 0
        %1460 = vmatpush.bf16.msra.mxu0 0
        %1461 = vmatpush.bf16.msra.mxu0 0
        %1462 = vmatpush.bf16.msra.mxu0 0
        %1463 = vmatpush.bf16.msra.mxu0 0
        %1464 = vmatpush.bf16.msra.mxu0 0
        %1465 = vmatpush.bf16.msra.mxu0 %v1447
        %1466 = vmatpush.bf16.msra.mxu0 %v1445
        %1467 = vmatpush.bf16.msra.mxu0 %v1443
        %1468 = vmatmul.bf16.gmra.mxu0 %v1452
        %v1469 = vpop.f32.mrf.mxu0
        %v1470 = vadd.f32 0.0, %v1469
        %v1471 = vpop.f32.mrf.mxu0
        %v1472 = vadd.f32 0.0, %v1471
        %1473 = vmatmul.bf16.gmra.mxu0 %v1455
        %v1474 = vpop.f32.mrf.mxu0
        %v1475 = vadd.f32 0.0, %v1474
        %v1476 = vpop.f32.mrf.mxu0
        %v1477 = vadd.f32 0.0, %v1476
        %1478 = vmatmul.bf16.gmra.mxu0 %v1458
        %v1479 = vpop.f32.mrf.mxu0
        %v1480 = vadd.f32 0.0, %v1479
        %v1481 = vpop.f32.mrf.mxu0
        %v1482 = vadd.f32 0.0, %v1481
        %1483 = vdwg.mxu0
        %1484 = vrot.lane.b32.xlu0 %v1131, 112
        %v1485 = vpop.permute.xlu0 %1484
        %1486 = vrot.lane.b32.xlu0 %v1132, 112
        %v1487 = vpop.permute.xlu0 %1486
        %1488 = vrot.lane.b32.xlu0 %v1133, 112
        %v1489 = vpop.permute.xlu0 %1488
        %1490 = vrot.lane.b32.xlu0 %v1131, 80
        %v1491 = vpop.permute.xlu0 %1490
        %1492 = vrot.lane.b32.xlu0 %v1132, 80
        %v1493 = vpop.permute.xlu0 %1492
        %1494 = vrot.lane.b32.xlu0 %v1133, 80
        %v1495 = vpop.permute.xlu0 %1494
        %v1497 = vsel %vm1140, %v1485, 0
        %v1500 = vsel %vm1140, %v1487, 0
        %v1503 = vsel %vm1140, %v1489, 0
        %v1506 = vsel %vm1140, %v1491, 0
        %v1509 = vsel %vm1140, %v1493, 0
        %v1512 = vsel %vm1140, %v1495, 0
        %1514 = vmatpush.bf16.xpose.msra.mxu0 0
        %1515 = vmatpush.bf16.xpose.msra.mxu0 0
        %1516 = vmatpush.bf16.xpose.msra.mxu0 0
        %1517 = vmatpush.bf16.xpose.msra.mxu0 0
        %1518 = vmatpush.bf16.xpose.msra.mxu0 0
        %1519 = vmatpush.bf16.xpose.msra.mxu0 %v1512
        %1520 = vmatpush.bf16.xpose.msra.mxu0 %v1509
        %1521 = vmatpush.bf16.xpose.msra.mxu0 %v1506
        %1522 = vmatmul.bf16.gmra.mxu0 %v1497
        %v1523 = vpop.f32.mrf.mxu0
        %v1524 = vadd.f32 0.0, %v1523
        %v1525 = vpop.f32.mrf.mxu0
        %v1526 = vadd.f32 0.0, %v1525
        %1527 = vmatmul.bf16.gmra.mxu0 %v1500
        %v1528 = vpop.f32.mrf.mxu0
        %v1529 = vadd.f32 0.0, %v1528
        %v1530 = vpop.f32.mrf.mxu0
        %v1531 = vadd.f32 0.0, %v1530
        %1532 = vmatmul.bf16.gmra.mxu0 %v1503
        %v1533 = vpop.f32.mrf.mxu0
        %v1534 = vadd.f32 0.0, %v1533
        %v1535 = vpop.f32.mrf.mxu0
        %v1536 = vadd.f32 0.0, %v1535
        %1537 = vdwg.mxu0
        %v1538 = vmul.f32 %v1524, 0.35355338
        %v1539 = vmul.f32 %v1526, 0.35355338
        %v1540 = vmul.f32 %v1529, 0.35355338
        %v1541 = vmul.f32 %v1531, 0.35355338
        %v1542 = vmul.f32 %v1534, 0.35355338
        %v1543 = vmul.f32 %v1536, 0.35355338
        %v1544 = vadd.f32 %v1538, %v1046
        %v1545 = vadd.f32 %v1539, %v1047
        %v1546 = vadd.f32 %v1540, %v1048
        %v1547 = vadd.f32 %v1541, %v1049
        %v1548 = vadd.f32 %v1542, %v1050
        %v1549 = vadd.f32 %v1543, %v1051
        %v1550 = vsel %vm1195, %v1544, -inf
        %1551 = vmax.xlane.f32.xlu0 %v1550
        %v1552 = vpop.xlane.xlu0 %1551
        %v1553 = vsel %vm1195, %v1545, -inf
        %1554 = vmax.xlane.f32.xlu0 %v1553
        %v1555 = vpop.xlane.xlu0 %1554
        %v1556 = vsel %vm1195, %v1546, -inf
        %1557 = vmax.xlane.f32.xlu0 %v1556
        %v1558 = vpop.xlane.xlu0 %1557
        %v1559 = vsel %vm1195, %v1547, -inf
        %1560 = vmax.xlane.f32.xlu0 %v1559
        %v1561 = vpop.xlane.xlu0 %1560
        %v1562 = vsel %vm1195, %v1548, -inf
        %1563 = vmax.xlane.f32.xlu0 %v1562
        %v1564 = vpop.xlane.xlu0 %1563
        %v1565 = vsel %vm1195, %v1549, -inf
        %1566 = vmax.xlane.f32.xlu0 %v1565
        %v1567 = vpop.xlane.xlu0 %1566
        %v1568 = vsub.f32 %v1544, %v1552
        %v1569 = vsub.f32 %v1545, %v1555
        %v1570 = vsub.f32 %v1546, %v1558
        %v1571 = vsub.f32 %v1547, %v1561
        %v1572 = vsub.f32 %v1548, %v1564
        %v1573 = vsub.f32 %v1549, %v1567
        %v1574 = vmul.f32 %v1568, 1.442695
        %v1575 = vpow.pop %v1574
        %v1576 = vmul.f32 %v1569, 1.442695
        %v1577 = vpow.pop %v1576
        %v1578 = vmul.f32 %v1570, 1.442695
        %v1579 = vpow.pop %v1578
        %v1580 = vmul.f32 %v1571, 1.442695
        %v1581 = vpow.pop %v1580
        %v1582 = vmul.f32 %v1572, 1.442695
        %v1583 = vpow.pop %v1582
        %v1584 = vmul.f32 %v1573, 1.442695
        %v1585 = vpow.pop %v1584
        %v1586 = vsel %vm1195, %v1575, 0.0
        %1587 = vadd.xlane.f32.xlu0 %v1586
        %v1588 = vpop.xlane.xlu0 %1587
        %v1589 = vsel %vm1195, %v1577, 0.0
        %1590 = vadd.xlane.f32.xlu0 %v1589
        %v1591 = vpop.xlane.xlu0 %1590
        %v1592 = vsel %vm1195, %v1579, 0.0
        %1593 = vadd.xlane.f32.xlu0 %v1592
        %v1594 = vpop.xlane.xlu0 %1593
        %v1595 = vsel %vm1195, %v1581, 0.0
        %1596 = vadd.xlane.f32.xlu0 %v1595
        %v1597 = vpop.xlane.xlu0 %1596
        %v1598 = vsel %vm1195, %v1583, 0.0
        %1599 = vadd.xlane.f32.xlu0 %v1598
        %v1600 = vpop.xlane.xlu0 %1599
        %v1601 = vsel %vm1195, %v1585, 0.0
        %1602 = vadd.xlane.f32.xlu0 %v1601
        %v1603 = vpop.xlane.xlu0 %1602
        %v1604 = vrcp.pop %v1588
        %v1605 = vrcp.pop %v1591
        %v1606 = vrcp.pop %v1594
        %v1607 = vrcp.pop %v1597
        %v1608 = vrcp.pop %v1600
        %v1609 = vrcp.pop %v1603
        %v1610 = vmul.f32 %v1575, %v1604
        %v1611 = vmul.f32 %v1577, %v1605
        %v1612 = vmul.f32 %v1579, %v1606
        %v1613 = vmul.f32 %v1581, %v1607
        %v1614 = vmul.f32 %v1583, %v1608
        %v1615 = vmul.f32 %v1585, %v1609
        %v1616 = vpack.c.bf16 %v1611, %v1610
        %v1617 = vpack.c.bf16 %v1613, %v1612
        %v1618 = vpack.c.bf16 %v1615, %v1614
        %1619 = vrot.lane.b32.xlu0 %v1131, 48
        %v1620 = vpop.permute.xlu0 %1619
        %1621 = vrot.lane.b32.xlu0 %v1132, 48
        %v1622 = vpop.permute.xlu0 %1621
        %1623 = vrot.lane.b32.xlu0 %v1133, 48
        %v1624 = vpop.permute.xlu0 %1623
        %v1629 = vsel %vm1195, %v1616, 0
        %v1632 = vsel %vm1195, %v1617, 0
        %v1635 = vsel %vm1195, %v1618, 0
        %1637 = vmatpush.bf16.msra.mxu0 0
        %1638 = vmatpush.bf16.msra.mxu0 0
        %1639 = vmatpush.bf16.msra.mxu0 0
        %1640 = vmatpush.bf16.msra.mxu0 0
        %1641 = vmatpush.bf16.msra.mxu0 0
        %1642 = vmatpush.bf16.msra.mxu0 %v1624
        %1643 = vmatpush.bf16.msra.mxu0 %v1622
        %1644 = vmatpush.bf16.msra.mxu0 %v1620
        %1645 = vmatmul.bf16.gmra.mxu0 %v1629
        %v1646 = vpop.f32.mrf.mxu0
        %v1647 = vadd.f32 0.0, %v1646
        %v1648 = vpop.f32.mrf.mxu0
        %v1649 = vadd.f32 0.0, %v1648
        %1650 = vmatmul.bf16.gmra.mxu0 %v1632
        %v1651 = vpop.f32.mrf.mxu0
        %v1652 = vadd.f32 0.0, %v1651
        %v1653 = vpop.f32.mrf.mxu0
        %v1654 = vadd.f32 0.0, %v1653
        %1655 = vmatmul.bf16.gmra.mxu0 %v1635
        %v1656 = vpop.f32.mrf.mxu0
        %v1657 = vadd.f32 0.0, %v1656
        %v1658 = vpop.f32.mrf.mxu0
        %v1659 = vadd.f32 0.0, %v1658
        %1660 = vdwg.mxu0
        %1661 = vrot.lane.b32.xlu0 %v1131, 104
        %v1662 = vpop.permute.xlu0 %1661
        %1663 = vrot.lane.b32.xlu0 %v1132, 104
        %v1664 = vpop.permute.xlu0 %1663
        %1665 = vrot.lane.b32.xlu0 %v1133, 104
        %v1666 = vpop.permute.xlu0 %1665
        %1667 = vrot.lane.b32.xlu0 %v1131, 72
        %v1668 = vpop.permute.xlu0 %1667
        %1669 = vrot.lane.b32.xlu0 %v1132, 72
        %v1670 = vpop.permute.xlu0 %1669
        %1671 = vrot.lane.b32.xlu0 %v1133, 72
        %v1672 = vpop.permute.xlu0 %1671
        %v1674 = vsel %vm1140, %v1662, 0
        %v1677 = vsel %vm1140, %v1664, 0
        %v1680 = vsel %vm1140, %v1666, 0
        %v1683 = vsel %vm1140, %v1668, 0
        %v1686 = vsel %vm1140, %v1670, 0
        %v1689 = vsel %vm1140, %v1672, 0
        %1691 = vmatpush.bf16.xpose.msra.mxu0 0
        %1692 = vmatpush.bf16.xpose.msra.mxu0 0
        %1693 = vmatpush.bf16.xpose.msra.mxu0 0
        %1694 = vmatpush.bf16.xpose.msra.mxu0 0
        %1695 = vmatpush.bf16.xpose.msra.mxu0 0
        %1696 = vmatpush.bf16.xpose.msra.mxu0 %v1689
        %1697 = vmatpush.bf16.xpose.msra.mxu0 %v1686
        %1698 = vmatpush.bf16.xpose.msra.mxu0 %v1683
        %1699 = vmatmul.bf16.gmra.mxu0 %v1674
        %v1700 = vpop.f32.mrf.mxu0
        %v1701 = vadd.f32 0.0, %v1700
        %v1702 = vpop.f32.mrf.mxu0
        %v1703 = vadd.f32 0.0, %v1702
        %1704 = vmatmul.bf16.gmra.mxu0 %v1677
        %v1705 = vpop.f32.mrf.mxu0
        %v1706 = vadd.f32 0.0, %v1705
        %v1707 = vpop.f32.mrf.mxu0
        %v1708 = vadd.f32 0.0, %v1707
        %1709 = vmatmul.bf16.gmra.mxu0 %v1680
        %v1710 = vpop.f32.mrf.mxu0
        %v1711 = vadd.f32 0.0, %v1710
        %v1712 = vpop.f32.mrf.mxu0
        %v1713 = vadd.f32 0.0, %v1712
        %1714 = vdwg.mxu0
        %v1715 = vmul.f32 %v1701, 0.35355338
        %v1716 = vmul.f32 %v1703, 0.35355338
        %v1717 = vmul.f32 %v1706, 0.35355338
        %v1718 = vmul.f32 %v1708, 0.35355338
        %v1719 = vmul.f32 %v1711, 0.35355338
        %v1720 = vmul.f32 %v1713, 0.35355338
        %v1721 = vadd.f32 %v1715, %v1046
        %v1722 = vadd.f32 %v1716, %v1047
        %v1723 = vadd.f32 %v1717, %v1048
        %v1724 = vadd.f32 %v1718, %v1049
        %v1725 = vadd.f32 %v1719, %v1050
        %v1726 = vadd.f32 %v1720, %v1051
        %v1727 = vsel %vm1195, %v1721, -inf
        %1728 = vmax.xlane.f32.xlu0 %v1727
        %v1729 = vpop.xlane.xlu0 %1728
        %v1730 = vsel %vm1195, %v1722, -inf
        %1731 = vmax.xlane.f32.xlu0 %v1730
        %v1732 = vpop.xlane.xlu0 %1731
        %v1733 = vsel %vm1195, %v1723, -inf
        %1734 = vmax.xlane.f32.xlu0 %v1733
        %v1735 = vpop.xlane.xlu0 %1734
        %v1736 = vsel %vm1195, %v1724, -inf
        %1737 = vmax.xlane.f32.xlu0 %v1736
        %v1738 = vpop.xlane.xlu0 %1737
        %v1739 = vsel %vm1195, %v1725, -inf
        %1740 = vmax.xlane.f32.xlu0 %v1739
        %v1741 = vpop.xlane.xlu0 %1740
        %v1742 = vsel %vm1195, %v1726, -inf
        %1743 = vmax.xlane.f32.xlu0 %v1742
        %v1744 = vpop.xlane.xlu0 %1743
        %v1745 = vsub.f32 %v1721, %v1729
        %v1746 = vsub.f32 %v1722, %v1732
        %v1747 = vsub.f32 %v1723, %v1735
        %v1748 = vsub.f32 %v1724, %v1738
        %v1749 = vsub.f32 %v1725, %v1741
        %v1750 = vsub.f32 %v1726, %v1744
        %v1751 = vmul.f32 %v1745, 1.442695
        %v1752 = vpow.pop %v1751
        %v1753 = vmul.f32 %v1746, 1.442695
        %v1754 = vpow.pop %v1753
        %v1755 = vmul.f32 %v1747, 1.442695
        %v1756 = vpow.pop %v1755
        %v1757 = vmul.f32 %v1748, 1.442695
        %v1758 = vpow.pop %v1757
        %v1759 = vmul.f32 %v1749, 1.442695
        %v1760 = vpow.pop %v1759
        %v1761 = vmul.f32 %v1750, 1.442695
        %v1762 = vpow.pop %v1761
        %v1763 = vsel %vm1195, %v1752, 0.0
        %1764 = vadd.xlane.f32.xlu0 %v1763
        %v1765 = vpop.xlane.xlu0 %1764
        %v1766 = vsel %vm1195, %v1754, 0.0
        %1767 = vadd.xlane.f32.xlu0 %v1766
        %v1768 = vpop.xlane.xlu0 %1767
        %v1769 = vsel %vm1195, %v1756, 0.0
        %1770 = vadd.xlane.f32.xlu0 %v1769
        %v1771 = vpop.xlane.xlu0 %1770
        %v1772 = vsel %vm1195, %v1758, 0.0
        %1773 = vadd.xlane.f32.xlu0 %v1772
        %v1774 = vpop.xlane.xlu0 %1773
        %v1775 = vsel %vm1195, %v1760, 0.0
        %1776 = vadd.xlane.f32.xlu0 %v1775
        %v1777 = vpop.xlane.xlu0 %1776
        %v1778 = vsel %vm1195, %v1762, 0.0
        %1779 = vadd.xlane.f32.xlu0 %v1778
        %v1780 = vpop.xlane.xlu0 %1779
        %v1781 = vrcp.pop %v1765
        %v1782 = vrcp.pop %v1768
        %v1783 = vrcp.pop %v1771
        %v1784 = vrcp.pop %v1774
        %v1785 = vrcp.pop %v1777
        %v1786 = vrcp.pop %v1780
        %v1787 = vmul.f32 %v1752, %v1781
        %v1788 = vmul.f32 %v1754, %v1782
        %v1789 = vmul.f32 %v1756, %v1783
        %v1790 = vmul.f32 %v1758, %v1784
        %v1791 = vmul.f32 %v1760, %v1785
        %v1792 = vmul.f32 %v1762, %v1786
        %v1793 = vpack.c.bf16 %v1788, %v1787
        %v1794 = vpack.c.bf16 %v1790, %v1789
        %v1795 = vpack.c.bf16 %v1792, %v1791
        %1796 = vrot.lane.b32.xlu0 %v1131, 40
        %v1797 = vpop.permute.xlu0 %1796
        %1798 = vrot.lane.b32.xlu0 %v1132, 40
        %v1799 = vpop.permute.xlu0 %1798
        %1800 = vrot.lane.b32.xlu0 %v1133, 40
        %v1801 = vpop.permute.xlu0 %1800
        %v1806 = vsel %vm1195, %v1793, 0
        %v1809 = vsel %vm1195, %v1794, 0
        %v1812 = vsel %vm1195, %v1795, 0
        %1814 = vmatpush.bf16.msra.mxu0 0
        %1815 = vmatpush.bf16.msra.mxu0 0
        %1816 = vmatpush.bf16.msra.mxu0 0
        %1817 = vmatpush.bf16.msra.mxu0 0
        %1818 = vmatpush.bf16.msra.mxu0 0
        %1819 = vmatpush.bf16.msra.mxu0 %v1801
        %1820 = vmatpush.bf16.msra.mxu0 %v1799
        %1821 = vmatpush.bf16.msra.mxu0 %v1797
        %1822 = vmatmul.bf16.gmra.mxu0 %v1806
        %v1823 = vpop.f32.mrf.mxu0
        %v1824 = vadd.f32 0.0, %v1823
        %v1825 = vpop.f32.mrf.mxu0
        %v1826 = vadd.f32 0.0, %v1825
        %1827 = vmatmul.bf16.gmra.mxu0 %v1809
        %v1828 = vpop.f32.mrf.mxu0
        %v1829 = vadd.f32 0.0, %v1828
        %v1830 = vpop.f32.mrf.mxu0
        %v1831 = vadd.f32 0.0, %v1830
        %1832 = vmatmul.bf16.gmra.mxu0 %v1812
        %v1833 = vpop.f32.mrf.mxu0
        %v1834 = vadd.f32 0.0, %v1833
        %v1835 = vpop.f32.mrf.mxu0
        %v1836 = vadd.f32 0.0, %v1835
        %1837 = vdwg.mxu0
        %1844 = vrot.lane.b32.xlu0 %v1470, 8
        %v1845 = vpop.permute.xlu0 %1844
        %1846 = vrot.lane.b32.xlu0 %v1472, 8
        %v1847 = vpop.permute.xlu0 %1846
        %1848 = vrot.lane.b32.xlu0 %v1475, 8
        %v1849 = vpop.permute.xlu0 %1848
        %1850 = vrot.lane.b32.xlu0 %v1477, 8
        %v1851 = vpop.permute.xlu0 %1850
        %1852 = vrot.lane.b32.xlu0 %v1480, 8
        %v1853 = vpop.permute.xlu0 %1852
        %1854 = vrot.lane.b32.xlu0 %v1482, 8
        %v1855 = vpop.permute.xlu0 %1854
        %1868 = vrot.lane.b32.xlu0 %v1647, 16
        %v1869 = vpop.permute.xlu0 %1868
        %1870 = vrot.lane.b32.xlu0 %v1649, 16
        %v1871 = vpop.permute.xlu0 %1870
        %1872 = vrot.lane.b32.xlu0 %v1652, 16
        %v1873 = vpop.permute.xlu0 %1872
        %1874 = vrot.lane.b32.xlu0 %v1654, 16
        %v1875 = vpop.permute.xlu0 %1874
        %1876 = vrot.lane.b32.xlu0 %v1657, 16
        %v1877 = vpop.permute.xlu0 %1876
        %1878 = vrot.lane.b32.xlu0 %v1659, 16
        %v1879 = vpop.permute.xlu0 %1878
        %1892 = vrot.lane.b32.xlu0 %v1824, 24
        %v1893 = vpop.permute.xlu0 %1892
        %1894 = vrot.lane.b32.xlu0 %v1826, 24
        %v1895 = vpop.permute.xlu0 %1894
        %1896 = vrot.lane.b32.xlu0 %v1829, 24
        %v1897 = vpop.permute.xlu0 %1896
        %1898 = vrot.lane.b32.xlu0 %v1831, 24
        %v1899 = vpop.permute.xlu0 %1898
        %1900 = vrot.lane.b32.xlu0 %v1834, 24
        %v1901 = vpop.permute.xlu0 %1900
        %1902 = vrot.lane.b32.xlu0 %v1836, 24
        %v1903 = vpop.permute.xlu0 %1902
        %v1910 = vsel %vm1140, %v1293, %v1845
        %v1911 = vsel %vm1140, %v1295, %v1847
        %v1912 = vsel %vm1140, %v1298, %v1849
        %v1913 = vsel %vm1140, %v1300, %v1851
        %v1914 = vsel %vm1140, %v1303, %v1853
        %v1915 = vsel %vm1140, %v1305, %v1855
        %vm1916 = vcmask 130048
        %v1917 = vsel %vm1916, %v1910, %v1869
        %v1918 = vsel %vm1916, %v1911, %v1871
        %v1919 = vsel %vm1916, %v1912, %v1873
        %v1920 = vsel %vm1916, %v1913, %v1875
        %v1921 = vsel %vm1916, %v1914, %v1877
        %v1922 = vsel %vm1916, %v1915, %v1879
        %vm1923 = vcmask 195584
        %v1924 = vsel %vm1923, %v1917, %v1893
        %v1925 = vsel %vm1923, %v1918, %v1895
        %v1926 = vsel %vm1923, %v1919, %v1897
        %v1927 = vsel %vm1923, %v1920, %v1899
        %v1928 = vsel %vm1923, %v1921, %v1901
        %v1929 = vsel %vm1923, %v1922, %v1903
        %v1930 = vpack.c.bf16 %v1925, %v1924
        %v1931 = vpack.c.bf16 %v1927, %v1926
        %v1932 = vpack.c.bf16 %v1929, %v1928
        %v1937 = vunpack.c.l.b16 %v1109
        %v1938 = vunpack.c.l.b16 %v1110
        %v1939 = vunpack.c.l.b16 %v1111
        %v1940 = vunpack.c.l.b16 %v1112
        %v1941 = vpack.c.b16 %v1938, %v1937
        %v1942 = vpack.c.b16 %v1940, %v1939
        %v1946 = vsel %vm1075, %v1930, 0
        %v1949 = vsel %vm1075, %v1931, 0
        %v1952 = vsel %vm1075, %v1932, 0
        %1954 = vmatpush.bf16.msra.mxu0 0
        %1955 = vmatpush.bf16.msra.mxu0 0
        %1956 = vmatpush.bf16.msra.mxu0 0
        %1957 = vmatpush.bf16.msra.mxu0 0
        %1958 = vmatpush.bf16.msra.mxu0 0
        %1959 = vmatpush.bf16.msra.mxu0 0
        %1960 = vmatpush.bf16.msra.mxu0 %v1942
        %1961 = vmatpush.bf16.msra.mxu0 %v1941
        %1962 = vmatmul.bf16.gmra.mxu0 %v1946
        %v1963 = vpop.f32.mrf.mxu0
        %v1964 = vadd.f32 0.0, %v1963
        %v1965 = vpop.f32.mrf.mxu0
        %v1966 = vadd.f32 0.0, %v1965
        %1967 = vmatmul.bf16.gmra.mxu0 %v1949
        %v1968 = vpop.f32.mrf.mxu0
        %v1969 = vadd.f32 0.0, %v1968
        %v1970 = vpop.f32.mrf.mxu0
        %v1971 = vadd.f32 0.0, %v1970
        %1972 = vmatmul.bf16.gmra.mxu0 %v1952
        %v1973 = vpop.f32.mrf.mxu0
        %v1974 = vadd.f32 0.0, %v1973
        %v1975 = vpop.f32.mrf.mxu0
        %v1976 = vadd.f32 0.0, %v1975
        %1977 = vdwg.mxu0
        %v1978 = vadd.f32 %v1022, %v1964
        %v1979 = vadd.f32 %v1023, %v1966
        %v1980 = vadd.f32 %v1024, %v1969
        %v1981 = vadd.f32 %v1025, %v1971
        %v1982 = vadd.f32 %v1026, %v1974
        %v1983 = vadd.f32 %v1027, %v1976
        %v1984 = vld [vmem:[#allocation5] sm:$0x1]
        %v1986 = vperm.slane %v1984, 0
        %v1988 = vadd.f32 %v1978, %v1986
        %v1989 = vadd.f32 %v1979, %v1986
        %v1990 = vadd.f32 %v1980, %v1986
        %v1991 = vadd.f32 %v1981, %v1986
        %v1992 = vadd.f32 %v1982, %v1986
        %v1993 = vadd.f32 %v1983, %v1986
        %v1994 = vld [vmem:[#allocation7] sm:$0x1]
        %v1995 = vld [vmem:[#allocation8] sm:$0x1]
        %v1996 = vsel %vm1075, %v1988, 0.0
        %1997 = vadd.xlane.f32.xlu0 %v1996
        %v1998 = vpop.xlane.xlu0 %1997
        %v1999 = vsel %vm1075, %v1989, 0.0
        %2000 = vadd.xlane.f32.xlu0 %v1999
        %v2001 = vpop.xlane.xlu0 %2000
        %v2002 = vsel %vm1075, %v1990, 0.0
        %2003 = vadd.xlane.f32.xlu0 %v2002
        %v2004 = vpop.xlane.xlu0 %2003
        %v2005 = vsel %vm1075, %v1991, 0.0
        %2006 = vadd.xlane.f32.xlu0 %v2005
        %v2007 = vpop.xlane.xlu0 %2006
        %v2008 = vsel %vm1075, %v1992, 0.0
        %2009 = vadd.xlane.f32.xlu0 %v2008
        %v2010 = vpop.xlane.xlu0 %2009
        %v2011 = vsel %vm1075, %v1993, 0.0
        %2012 = vadd.xlane.f32.xlu0 %v2011
        %v2013 = vpop.xlane.xlu0 %2012
        %v2014 = vrcp.pop 32.0
        %v2015 = vmul.f32 32.0, %v2014
        %v2016 = vsub.f32 1.0, %v2015
        %v2017 = vmul.f32 %v2014, %v2016
        %v2018 = vadd.f32 %v2014, %v2017
        %vm2019 = vweird.f32 %v2014
        %v2020 = vsel %vm2019, %v2014, %v2018
        %v2021 = vmul.f32 %v1998, %v2020
        %v2022 = vmul.f32 %v2001, %v2020
        %v2023 = vmul.f32 %v2004, %v2020
        %v2024 = vmul.f32 %v2007, %v2020
        %v2025 = vmul.f32 %v2010, %v2020
        %v2026 = vmul.f32 %v2013, %v2020
        %v2027 = vsub.f32 %v1988, %v2021
        %v2028 = vsub.f32 %v1989, %v2022
        %v2029 = vsub.f32 %v1990, %v2023
        %v2030 = vsub.f32 %v1991, %v2024
        %v2031 = vsub.f32 %v1992, %v2025
        %v2032 = vsub.f32 %v1993, %v2026
        %v2033 = vmul.f32 %v2027, %v2027
        %v2034 = vmul.f32 %v2028, %v2028
        %v2035 = vmul.f32 %v2029, %v2029
        %v2036 = vmul.f32 %v2030, %v2030
        %v2037 = vmul.f32 %v2031, %v2031
        %v2038 = vmul.f32 %v2032, %v2032
        %v2039 = vsel %vm1075, %v2033, 0.0
        %2040 = vadd.xlane.f32.xlu0 %v2039
        %v2041 = vpop.xlane.xlu0 %2040
        %v2042 = vsel %vm1075, %v2034, 0.0
        %2043 = vadd.xlane.f32.xlu0 %v2042
        %v2044 = vpop.xlane.xlu0 %2043
        %v2045 = vsel %vm1075, %v2035, 0.0
        %2046 = vadd.xlane.f32.xlu0 %v2045
        %v2047 = vpop.xlane.xlu0 %2046
        %v2048 = vsel %vm1075, %v2036, 0.0
        %2049 = vadd.xlane.f32.xlu0 %v2048
        %v2050 = vpop.xlane.xlu0 %2049
        %v2051 = vsel %vm1075, %v2037, 0.0
        %2052 = vadd.xlane.f32.xlu0 %v2051
        %v2053 = vpop.xlane.xlu0 %2052
        %v2054 = vsel %vm1075, %v2038, 0.0
        %2055 = vadd.xlane.f32.xlu0 %v2054
        %v2056 = vpop.xlane.xlu0 %2055
        %v2057 = vmul.f32 %v2041, %v2020
        %v2058 = vmul.f32 %v2044, %v2020
        %v2059 = vmul.f32 %v2047, %v2020
        %v2060 = vmul.f32 %v2050, %v2020
        %v2061 = vmul.f32 %v2053, %v2020
        %v2062 = vmul.f32 %v2056, %v2020
        %v2063 = vadd.f32 %v2057, 1e-05
        %v2064 = vadd.f32 %v2058, 1e-05
        %v2065 = vadd.f32 %v2059, 1e-05
        %v2066 = vadd.f32 %v2060, 1e-05
        %v2067 = vadd.f32 %v2061, 1e-05
        %v2068 = vadd.f32 %v2062, 1e-05
        %v2069 = vrsqrt.pop %v2063
        %v2070 = vmul.f32 %v2069, %v2063
        %v2071 = vmul.f32 %v2070, %v2069
        %v2072 = vmul.f32 0.5, %v2071
        %v2073 = vsub.f32 1.5, %v2072
        %v2074 = vmul.f32 %v2069, %v2073
        %vm2075 = vweird.f32 %v2063
        %vm2076 = vweird.f32 %v2069
        %vm2077 = vmor %vm2075, %vm2076
        %v2078 = vsel %vm2077, %v2069, %v2074
        %v2079 = vrsqrt.pop %v2064
        %v2080 = vmul.f32 %v2079, %v2064
        %v2081 = vmul.f32 %v2080, %v2079
        %v2082 = vmul.f32 0.5, %v2081
        %v2083 = vsub.f32 1.5, %v2082
        %v2084 = vmul.f32 %v2079, %v2083
        %vm2085 = vweird.f32 %v2064
        %vm2086 = vweird.f32 %v2079
        %vm2087 = vmor %vm2085, %vm2086
        %v2088 = vsel %vm2087, %v2079, %v2084
        %v2089 = vrsqrt.pop %v2065
        %v2090 = vmul.f32 %v2089, %v2065
        %v2091 = vmul.f32 %v2090, %v2089
        %v2092 = vmul.f32 0.5, %v2091
        %v2093 = vsub.f32 1.5, %v2092
        %v2094 = vmul.f32 %v2089, %v2093
        %vm2095 = vweird.f32 %v2065
        %vm2096 = vweird.f32 %v2089
        %vm2097 = vmor %vm2095, %vm2096
        %v2098 = vsel %vm2097, %v2089, %v2094
        %v2099 = vrsqrt.pop %v2066
        %v2100 = vmul.f32 %v2099, %v2066
        %v2101 = vmul.f32 %v2100, %v2099
        %v2102 = vmul.f32 0.5, %v2101
        %v2103 = vsub.f32 1.5, %v2102
        %v2104 = vmul.f32 %v2099, %v2103
        %vm2105 = vweird.f32 %v2066
        %vm2106 = vweird.f32 %v2099
        %vm2107 = vmor %vm2105, %vm2106
        %v2108 = vsel %vm2107, %v2099, %v2104
        %v2109 = vrsqrt.pop %v2067
        %v2110 = vmul.f32 %v2109, %v2067
        %v2111 = vmul.f32 %v2110, %v2109
        %v2112 = vmul.f32 0.5, %v2111
        %v2113 = vsub.f32 1.5, %v2112
        %v2114 = vmul.f32 %v2109, %v2113
        %vm2115 = vweird.f32 %v2067
        %vm2116 = vweird.f32 %v2109
        %vm2117 = vmor %vm2115, %vm2116
        %v2118 = vsel %vm2117, %v2109, %v2114
        %v2119 = vrsqrt.pop %v2068
        %v2120 = vmul.f32 %v2119, %v2068
        %v2121 = vmul.f32 %v2120, %v2119
        %v2122 = vmul.f32 0.5, %v2121
        %v2123 = vsub.f32 1.5, %v2122
        %v2124 = vmul.f32 %v2119, %v2123
        %vm2125 = vweird.f32 %v2068
        %vm2126 = vweird.f32 %v2119
        %vm2127 = vmor %vm2125, %vm2126
        %v2128 = vsel %vm2127, %v2119, %v2124
        %v2129 = vmul.f32 %v2027, %v2078
        %v2130 = vmul.f32 %v2028, %v2088
        %v2131 = vmul.f32 %v2029, %v2098
        %v2132 = vmul.f32 %v2030, %v2108
        %v2133 = vmul.f32 %v2031, %v2118
        %v2134 = vmul.f32 %v2032, %v2128
        %v2136 = vperm.slane %v1994, 0
        %v2138 = vmul.f32 %v2129, %v2136
        %v2139 = vmul.f32 %v2130, %v2136
        %v2140 = vmul.f32 %v2131, %v2136
        %v2141 = vmul.f32 %v2132, %v2136
        %v2142 = vmul.f32 %v2133, %v2136
        %v2143 = vmul.f32 %v2134, %v2136
        %v2145 = vperm.slane %v1995, 0
        %v2147 = vadd.f32 %v2138, %v2145
        %v2148 = vadd.f32 %v2139, %v2145
        %v2149 = vadd.f32 %v2140, %v2145
        %v2150 = vadd.f32 %v2141, %v2145
        %v2151 = vadd.f32 %v2142, %v2145
        %v2152 = vadd.f32 %v2143, %v2145
        %v2153 = vpack.c.bf16 %v2148, %v2147
        %v2154 = vpack.c.bf16 %v2150, %v2149
        %v2155 = vpack.c.bf16 %v2152, %v2151
        %v2156 = vld [vmem:[#allocation10] sm:$0xf]
        %v2157 = vld [vmem:[#allocation10 + $0x4] sm:$0xf]
        %v2158 = vld [vmem:[#allocation10 + $0x8] sm:$0xf]
        %v2159 = vld [vmem:[#allocation10 + $0xc] sm:$0xf]
        %v2160 = vld [vmem:[%s10] sm:$0x1]
        %v2162 = vperm.slane %v2160, 0
        %v2168 = vunpack.c.l.b16 %v2156
        %v2169 = vunpack.c.l.b16 %v2157
        %v2170 = vunpack.c.l.b16 %v2158
        %v2171 = vunpack.c.l.b16 %v2159
        %v2172 = vpack.c.b16 %v2169, %v2168
        %v2173 = vpack.c.b16 %v2171, %v2170
        %v2177 = vsel %vm1075, %v2153, 0
        %v2180 = vsel %vm1075, %v2154, 0
        %v2183 = vsel %vm1075, %v2155, 0
        %2185 = vmatpush.bf16.msra.mxu0 0
        %2186 = vmatpush.bf16.msra.mxu0 0
        %2187 = vmatpush.bf16.msra.mxu0 0
        %2188 = vmatpush.bf16.msra.mxu0 0
        %2189 = vmatpush.bf16.msra.mxu0 0
        %2190 = vmatpush.bf16.msra.mxu0 0
        %2191 = vmatpush.bf16.msra.mxu0 %v2173
        %2192 = vmatpush.bf16.msra.mxu0 %v2172
        %2193 = vmatmul.bf16.gmra.mxu0 %v2177
        %v2194 = vpop.f32.mrf.mxu0
        %v2195 = vadd.f32 %v2162, %v2194
        %v2196 = vpop.f32.mrf.mxu0
        %v2197 = vadd.f32 %v2162, %v2196
        %2198 = vmatmul.bf16.gmra.mxu0 %v2180
        %v2199 = vpop.f32.mrf.mxu0
        %v2200 = vadd.f32 %v2162, %v2199
        %v2201 = vpop.f32.mrf.mxu0
        %v2202 = vadd.f32 %v2162, %v2201
        %2203 = vmatmul.bf16.gmra.mxu0 %v2183
        %v2204 = vpop.f32.mrf.mxu0
        %v2205 = vadd.f32 %v2162, %v2204
        %v2206 = vpop.f32.mrf.mxu0
        %v2207 = vadd.f32 %v2162, %v2206
        %2208 = vdwg.mxu0
        %v2209 = vpack.c.bf16 %v1029, %v1028
        %v2210 = vld [vmem:[#allocation11] sm:$0xf]
        %v2211 = vld [vmem:[#allocation11 + $0x4] sm:$0xf]
        %v2212 = vld [vmem:[#allocation11 + $0x8] sm:$0xf]
        %v2213 = vld [vmem:[#allocation11 + $0xc] sm:$0xf]
        %v2214 = vld [vmem:[%s12] sm:$0x1]
        %v2216 = vperm.slane %v2214, 0
        %v2222 = vunpack.c.l.b16 %v2210
        %v2223 = vunpack.c.l.b16 %v2211
        %v2224 = vunpack.c.l.b16 %v2212
        %v2225 = vunpack.c.l.b16 %v2213
        %v2226 = vpack.c.b16 %v2223, %v2222
        %v2227 = vpack.c.b16 %v2225, %v2224
        %v2231 = vsel %vm1075, %v2209, 0
        %2233 = vmatpush.bf16.msra.mxu0 0
        %2234 = vmatpush.bf16.msra.mxu0 0
        %2235 = vmatpush.bf16.msra.mxu0 0
        %2236 = vmatpush.bf16.msra.mxu0 0
        %2237 = vmatpush.bf16.msra.mxu0 0
        %2238 = vmatpush.bf16.msra.mxu0 0
        %2239 = vmatpush.bf16.msra.mxu0 %v2227
        %2240 = vmatpush.bf16.msra.mxu0 %v2226
        %2241 = vmatmul.bf16.gmra.mxu0 %v2231
        %v2242 = vpop.f32.mrf.mxu0
        %v2243 = vadd.f32 %v2216, %v2242
        %v2244 = vpop.f32.mrf.mxu0
        %v2245 = vadd.f32 %v2216, %v2244
        %2246 = vdwg.mxu0
        %v2247 = vld [vmem:[#allocation13] sm:$0xf]
        %v2248 = vld [vmem:[#allocation13 + $0x4] sm:$0xf]
        %v2249 = vld [vmem:[#allocation13 + $0x8] sm:$0xf]
        %v2250 = vld [vmem:[#allocation13 + $0xc] sm:$0xf]
        %v2251 = vpack.c.bf16 %v2195, %v2195
        %v2252 = vpack.c.bf16 %v2197, %v2197
        %v2253 = vpack.c.bf16 %v2200, %v2200
        %v2254 = vpack.c.bf16 %v2202, %v2202
        %v2255 = vpack.c.bf16 %v2205, %v2205
        %v2256 = vpack.c.bf16 %v2207, %v2207
        %v2257 = vpack.c.bf16 %v2243, %v2243
        %v2258 = vpack.c.bf16 %v2245, %v2245
        %v2265 = vunpack.c.l.b16 %v2251
        %v2266 = vunpack.c.l.b16 %v2252
        %v2267 = vunpack.c.l.b16 %v2253
        %v2268 = vunpack.c.l.b16 %v2254
        %v2269 = vunpack.c.l.b16 %v2255
        %v2270 = vunpack.c.l.b16 %v2256
        %v2271 = vpack.c.b16 %v2266, %v2265
        %v2272 = vpack.c.b16 %v2268, %v2267
        %v2273 = vpack.c.b16 %v2270, %v2269
        %v2276 = vunpack.c.l.b16 %v2257
        %v2277 = vunpack.c.l.b16 %v2258
        %v2278 = vpack.c.b16 %v2277, %v2276
        %v2280 = vsel %vm1140, %v2271, 0
        %v2283 = vsel %vm1140, %v2272, 0
        %v2286 = vsel %vm1140, %v2273, 0
        %v2289 = vsel %vm1140, %v2278, 0
        %2291 = vmatpush.bf16.xpose.msra.mxu0 0
        %2292 = vmatpush.bf16.xpose.msra.mxu0 0
        %2293 = vmatpush.bf16.xpose.msra.mxu0 0
        %2294 = vmatpush.bf16.xpose.msra.mxu0 0
        %2295 = vmatpush.bf16.xpose.msra.mxu0 0
        %2296 = vmatpush.bf16.xpose.msra.mxu0 0
        %2297 = vmatpush.bf16.xpose.msra.mxu0 0
        %2298 = vmatpush.bf16.xpose.msra.mxu0 %v2289
        %2299 = vmatmul.bf16.gmra.mxu0 %v2280
        %v2300 = vpop.f32.mrf.mxu0
        %v2301 = vadd.f32 0.0, %v2300
        %v2302 = vpop.f32.mrf.mxu0
        %v2303 = vadd.f32 0.0, %v2302
        %2304 = vmatmul.bf16.gmra.mxu0 %v2283
        %v2305 = vpop.f32.mrf.mxu0
        %v2306 = vadd.f32 0.0, %v2305
        %v2307 = vpop.f32.mrf.mxu0
        %v2308 = vadd.f32 0.0, %v2307
        %2309 = vmatmul.bf16.gmra.mxu0 %v2286
        %v2310 = vpop.f32.mrf.mxu0
        %v2311 = vadd.f32 0.0, %v2310
        %v2312 = vpop.f32.mrf.mxu0
        %v2313 = vadd.f32 0.0, %v2312
        %2314 = vdwg.mxu0
        %v2315 = vmul.f32 %v2301, 0.35355338
        %v2316 = vmul.f32 %v2303, 0.35355338
        %v2317 = vmul.f32 %v2306, 0.35355338
        %v2318 = vmul.f32 %v2308, 0.35355338
        %v2319 = vmul.f32 %v2311, 0.35355338
        %v2320 = vmul.f32 %v2313, 0.35355338
        %v2322 = vperm.slane %v1030, 0
        %v2324 = vadd.f32 %v2315, %v2322
        %v2325 = vadd.f32 %v2316, %v2322
        %v2326 = vadd.f32 %v2317, %v2322
        %v2327 = vadd.f32 %v2318, %v2322
        %v2328 = vadd.f32 %v2319, %v2322
        %v2329 = vadd.f32 %v2320, %v2322
        %v2330 = vsel %vm1916, %v2324, -inf
        %2331 = vmax.xlane.f32.xlu0 %v2330
        %v2332 = vpop.xlane.xlu0 %2331
        %v2333 = vsel %vm1916, %v2325, -inf
        %2334 = vmax.xlane.f32.xlu0 %v2333
        %v2335 = vpop.xlane.xlu0 %2334
        %v2336 = vsel %vm1916, %v2326, -inf
        %2337 = vmax.xlane.f32.xlu0 %v2336
        %v2338 = vpop.xlane.xlu0 %2337
        %v2339 = vsel %vm1916, %v2327, -inf
        %2340 = vmax.xlane.f32.xlu0 %v2339
        %v2341 = vpop.xlane.xlu0 %2340
        %v2342 = vsel %vm1916, %v2328, -inf
        %2343 = vmax.xlane.f32.xlu0 %v2342
        %v2344 = vpop.xlane.xlu0 %2343
        %v2345 = vsel %vm1916, %v2329, -inf
        %2346 = vmax.xlane.f32.xlu0 %v2345
        %v2347 = vpop.xlane.xlu0 %2346
        %v2348 = vsub.f32 %v2324, %v2332
        %v2349 = vsub.f32 %v2325, %v2335
        %v2350 = vsub.f32 %v2326, %v2338
        %v2351 = vsub.f32 %v2327, %v2341
        %v2352 = vsub.f32 %v2328, %v2344
        %v2353 = vsub.f32 %v2329, %v2347
        %v2354 = vmul.f32 %v2348, 1.442695
        %v2355 = vpow.pop %v2354
        %v2356 = vmul.f32 %v2349, 1.442695
        %v2357 = vpow.pop %v2356
        %v2358 = vmul.f32 %v2350, 1.442695
        %v2359 = vpow.pop %v2358
        %v2360 = vmul.f32 %v2351, 1.442695
        %v2361 = vpow.pop %v2360
        %v2362 = vmul.f32 %v2352, 1.442695
        %v2363 = vpow.pop %v2362
        %v2364 = vmul.f32 %v2353, 1.442695
        %v2365 = vpow.pop %v2364
        %v2366 = vsel %vm1916, %v2355, 0.0
        %2367 = vadd.xlane.f32.xlu0 %v2366
        %v2368 = vpop.xlane.xlu0 %2367
        %v2369 = vsel %vm1916, %v2357, 0.0
        %2370 = vadd.xlane.f32.xlu0 %v2369
        %v2371 = vpop.xlane.xlu0 %2370
        %v2372 = vsel %vm1916, %v2359, 0.0
        %2373 = vadd.xlane.f32.xlu0 %v2372
        %v2374 = vpop.xlane.xlu0 %2373
        %v2375 = vsel %vm1916, %v2361, 0.0
        %2376 = vadd.xlane.f32.xlu0 %v2375
        %v2377 = vpop.xlane.xlu0 %2376
        %v2378 = vsel %vm1916, %v2363, 0.0
        %2379 = vadd.xlane.f32.xlu0 %v2378
        %v2380 = vpop.xlane.xlu0 %2379
        %v2381 = vsel %vm1916, %v2365, 0.0
        %2382 = vadd.xlane.f32.xlu0 %v2381
        %v2383 = vpop.xlane.xlu0 %2382
        %v2384 = vrcp.pop %v2368
        %v2385 = vrcp.pop %v2371
        %v2386 = vrcp.pop %v2374
        %v2387 = vrcp.pop %v2377
        %v2388 = vrcp.pop %v2380
        %v2389 = vrcp.pop %v2383
        %v2390 = vmul.f32 %v2355, %v2384
        %v2391 = vmul.f32 %v2357, %v2385
        %v2392 = vmul.f32 %v2359, %v2386
        %v2393 = vmul.f32 %v2361, %v2387
        %v2394 = vmul.f32 %v2363, %v2388
        %v2395 = vmul.f32 %v2365, %v2389
        %v2396 = vpack.c.bf16 %v2391, %v2390
        %v2397 = vpack.c.bf16 %v2393, %v2392
        %v2398 = vpack.c.bf16 %v2395, %v2394
        %2399 = vrot.lane.b32.xlu0 %v2278, 96
        %v2400 = vpop.permute.xlu0 %2399
        %v2403 = vsel %vm1916, %v2396, 0
        %v2406 = vsel %vm1916, %v2397, 0
        %v2409 = vsel %vm1916, %v2398, 0
        %2411 = vmatpush.bf16.msra.mxu0 0
        %2412 = vmatpush.bf16.msra.mxu0 0
        %2413 = vmatpush.bf16.msra.mxu0 0
        %2414 = vmatpush.bf16.msra.mxu0 0
        %2415 = vmatpush.bf16.msra.mxu0 0
        %2416 = vmatpush.bf16.msra.mxu0 0
        %2417 = vmatpush.bf16.msra.mxu0 0
        %2418 = vmatpush.bf16.msra.mxu0 %v2400
        %2419 = vmatmul.bf16.gmra.mxu0 %v2403
        %v2420 = vpop.f32.mrf.mxu0
        %v2421 = vadd.f32 0.0, %v2420
        %v2422 = vpop.f32.mrf.mxu0
        %v2423 = vadd.f32 0.0, %v2422
        %2424 = vmatmul.bf16.gmra.mxu0 %v2406
        %v2425 = vpop.f32.mrf.mxu0
        %v2426 = vadd.f32 0.0, %v2425
        %v2427 = vpop.f32.mrf.mxu0
        %v2428 = vadd.f32 0.0, %v2427
        %2429 = vmatmul.bf16.gmra.mxu0 %v2409
        %v2430 = vpop.f32.mrf.mxu0
        %v2431 = vadd.f32 0.0, %v2430
        %v2432 = vpop.f32.mrf.mxu0
        %v2433 = vadd.f32 0.0, %v2432
        %2434 = vdwg.mxu0
        %2435 = vrot.lane.b32.xlu0 %v2271, 120
        %v2436 = vpop.permute.xlu0 %2435
        %2437 = vrot.lane.b32.xlu0 %v2272, 120
        %v2438 = vpop.permute.xlu0 %2437
        %2439 = vrot.lane.b32.xlu0 %v2273, 120
        %v2440 = vpop.permute.xlu0 %2439
        %2441 = vrot.lane.b32.xlu0 %v2278, 120
        %v2442 = vpop.permute.xlu0 %2441
        %v2444 = vsel %vm1140, %v2436, 0
        %v2447 = vsel %vm1140, %v2438, 0
        %v2450 = vsel %vm1140, %v2440, 0
        %v2453 = vsel %vm1140, %v2442, 0
        %2455 = vmatpush.bf16.xpose.msra.mxu0 0
        %2456 = vmatpush.bf16.xpose.msra.mxu0 0
        %2457 = vmatpush.bf16.xpose.msra.mxu0 0
        %2458 = vmatpush.bf16.xpose.msra.mxu0 0
        %2459 = vmatpush.bf16.xpose.msra.mxu0 0
        %2460 = vmatpush.bf16.xpose.msra.mxu0 0
        %2461 = vmatpush.bf16.xpose.msra.mxu0 0
        %2462 = vmatpush.bf16.xpose.msra.mxu0 %v2453
        %2463 = vmatmul.bf16.gmra.mxu0 %v2444
        %v2464 = vpop.f32.mrf.mxu0
        %v2465 = vadd.f32 0.0, %v2464
        %v2466 = vpop.f32.mrf.mxu0
        %v2467 = vadd.f32 0.0, %v2466
        %2468 = vmatmul.bf16.gmra.mxu0 %v2447
        %v2469 = vpop.f32.mrf.mxu0
        %v2470 = vadd.f32 0.0, %v2469
        %v2471 = vpop.f32.mrf.mxu0
        %v2472 = vadd.f32 0.0, %v2471
        %2473 = vmatmul.bf16.gmra.mxu0 %v2450
        %v2474 = vpop.f32.mrf.mxu0
        %v2475 = vadd.f32 0.0, %v2474
        %v2476 = vpop.f32.mrf.mxu0
        %v2477 = vadd.f32 0.0, %v2476
        %2478 = vdwg.mxu0
        %v2479 = vmul.f32 %v2465, 0.35355338
        %v2480 = vmul.f32 %v2467, 0.35355338
        %v2481 = vmul.f32 %v2470, 0.35355338
        %v2482 = vmul.f32 %v2472, 0.35355338
        %v2483 = vmul.f32 %v2475, 0.35355338
        %v2484 = vmul.f32 %v2477, 0.35355338
        %v2485 = vadd.f32 %v2479, %v2322
        %v2486 = vadd.f32 %v2480, %v2322
        %v2487 = vadd.f32 %v2481, %v2322
        %v2488 = vadd.f32 %v2482, %v2322
        %v2489 = vadd.f32 %v2483, %v2322
        %v2490 = vadd.f32 %v2484, %v2322
        %v2491 = vsel %vm1916, %v2485, -inf
        %2492 = vmax.xlane.f32.xlu0 %v2491
        %v2493 = vpop.xlane.xlu0 %2492
        %v2494 = vsel %vm1916, %v2486, -inf
        %2495 = vmax.xlane.f32.xlu0 %v2494
        %v2496 = vpop.xlane.xlu0 %2495
        %v2497 = vsel %vm1916, %v2487, -inf
        %2498 = vmax.xlane.f32.xlu0 %v2497
        %v2499 = vpop.xlane.xlu0 %2498
        %v2500 = vsel %vm1916, %v2488, -inf
        %2501 = vmax.xlane.f32.xlu0 %v2500
        %v2502 = vpop.xlane.xlu0 %2501
        %v2503 = vsel %vm1916, %v2489, -inf
        %2504 = vmax.xlane.f32.xlu0 %v2503
        %v2505 = vpop.xlane.xlu0 %2504
        %v2506 = vsel %vm1916, %v2490, -inf
        %2507 = vmax.xlane.f32.xlu0 %v2506
        %v2508 = vpop.xlane.xlu0 %2507
        %v2509 = vsub.f32 %v2485, %v2493
        %v2510 = vsub.f32 %v2486, %v2496
        %v2511 = vsub.f32 %v2487, %v2499
        %v2512 = vsub.f32 %v2488, %v2502
        %v2513 = vsub.f32 %v2489, %v2505
        %v2514 = vsub.f32 %v2490, %v2508
        %v2515 = vmul.f32 %v2509, 1.442695
        %v2516 = vpow.pop %v2515
        %v2517 = vmul.f32 %v2510, 1.442695
        %v2518 = vpow.pop %v2517
        %v2519 = vmul.f32 %v2511, 1.442695
        %v2520 = vpow.pop %v2519
        %v2521 = vmul.f32 %v2512, 1.442695
        %v2522 = vpow.pop %v2521
        %v2523 = vmul.f32 %v2513, 1.442695
        %v2524 = vpow.pop %v2523
        %v2525 = vmul.f32 %v2514, 1.442695
        %v2526 = vpow.pop %v2525
        %v2527 = vsel %vm1916, %v2516, 0.0
        %2528 = vadd.xlane.f32.xlu0 %v2527
        %v2529 = vpop.xlane.xlu0 %2528
        %v2530 = vsel %vm1916, %v2518, 0.0
        %2531 = vadd.xlane.f32.xlu0 %v2530
        %v2532 = vpop.xlane.xlu0 %2531
        %v2533 = vsel %vm1916, %v2520, 0.0
        %2534 = vadd.xlane.f32.xlu0 %v2533
        %v2535 = vpop.xlane.xlu0 %2534
        %v2536 = vsel %vm1916, %v2522, 0.0
        %2537 = vadd.xlane.f32.xlu0 %v2536
        %v2538 = vpop.xlane.xlu0 %2537
        %v2539 = vsel %vm1916, %v2524, 0.0
        %2540 = vadd.xlane.f32.xlu0 %v2539
        %v2541 = vpop.xlane.xlu0 %2540
        %v2542 = vsel %vm1916, %v2526, 0.0
        %2543 = vadd.xlane.f32.xlu0 %v2542
        %v2544 = vpop.xlane.xlu0 %2543
        %v2545 = vrcp.pop %v2529
        %v2546 = vrcp.pop %v2532
        %v2547 = vrcp.pop %v2535
        %v2548 = vrcp.pop %v2538
        %v2549 = vrcp.pop %v2541
        %v2550 = vrcp.pop %v2544
        %v2551 = vmul.f32 %v2516, %v2545
        %v2552 = vmul.f32 %v2518, %v2546
        %v2553 = vmul.f32 %v2520, %v2547
        %v2554 = vmul.f32 %v2522, %v2548
        %v2555 = vmul.f32 %v2524, %v2549
        %v2556 = vmul.f32 %v2526, %v2550
        %v2557 = vpack.c.bf16 %v2552, %v2551
        %v2558 = vpack.c.bf16 %v2554, %v2553
        %v2559 = vpack.c.bf16 %v2556, %v2555
        %2560 = vrot.lane.b32.xlu0 %v2278, 88
        %v2561 = vpop.permute.xlu0 %2560
        %v2564 = vsel %vm1916, %v2557, 0
        %v2567 = vsel %vm1916, %v2558, 0
        %v2570 = vsel %vm1916, %v2559, 0
        %2572 = vmatpush.bf16.msra.mxu0 0
        %2573 = vmatpush.bf16.msra.mxu0 0
        %2574 = vmatpush.bf16.msra.mxu0 0
        %2575 = vmatpush.bf16.msra.mxu0 0
        %2576 = vmatpush.bf16.msra.mxu0 0
        %2577 = vmatpush.bf16.msra.mxu0 0
        %2578 = vmatpush.bf16.msra.mxu0 0
        %2579 = vmatpush.bf16.msra.mxu0 %v2561
        %2580 = vmatmul.bf16.gmra.mxu0 %v2564
        %v2581 = vpop.f32.mrf.mxu0
        %v2582 = vadd.f32 0.0, %v2581
        %v2583 = vpop.f32.mrf.mxu0
        %v2584 = vadd.f32 0.0, %v2583
        %2585 = vmatmul.bf16.gmra.mxu0 %v2567
        %v2586 = vpop.f32.mrf.mxu0
        %v2587 = vadd.f32 0.0, %v2586
        %v2588 = vpop.f32.mrf.mxu0
        %v2589 = vadd.f32 0.0, %v2588
        %2590 = vmatmul.bf16.gmra.mxu0 %v2570
        %v2591 = vpop.f32.mrf.mxu0
        %v2592 = vadd.f32 0.0, %v2591
        %v2593 = vpop.f32.mrf.mxu0
        %v2594 = vadd.f32 0.0, %v2593
        %2595 = vdwg.mxu0
        %2596 = vrot.lane.b32.xlu0 %v2271, 112
        %v2597 = vpop.permute.xlu0 %2596
        %2598 = vrot.lane.b32.xlu0 %v2272, 112
        %v2599 = vpop.permute.xlu0 %2598
        %2600 = vrot.lane.b32.xlu0 %v2273, 112
        %v2601 = vpop.permute.xlu0 %2600
        %2602 = vrot.lane.b32.xlu0 %v2278, 112
        %v2603 = vpop.permute.xlu0 %2602
        %v2605 = vsel %vm1140, %v2597, 0
        %v2608 = vsel %vm1140, %v2599, 0
        %v2611 = vsel %vm1140, %v2601, 0
        %v2614 = vsel %vm1140, %v2603, 0
        %2616 = vmatpush.bf16.xpose.msra.mxu0 0
        %2617 = vmatpush.bf16.xpose.msra.mxu0 0
        %2618 = vmatpush.bf16.xpose.msra.mxu0 0
        %2619 = vmatpush.bf16.xpose.msra.mxu0 0
        %2620 = vmatpush.bf16.xpose.msra.mxu0 0
        %2621 = vmatpush.bf16.xpose.msra.mxu0 0
        %2622 = vmatpush.bf16.xpose.msra.mxu0 0
        %2623 = vmatpush.bf16.xpose.msra.mxu0 %v2614
        %2624 = vmatmul.bf16.gmra.mxu0 %v2605
        %v2625 = vpop.f32.mrf.mxu0
        %v2626 = vadd.f32 0.0, %v2625
        %v2627 = vpop.f32.mrf.mxu0
        %v2628 = vadd.f32 0.0, %v2627
        %2629 = vmatmul.bf16.gmra.mxu0 %v2608
        %v2630 = vpop.f32.mrf.mxu0
        %v2631 = vadd.f32 0.0, %v2630
        %v2632 = vpop.f32.mrf.mxu0
        %v2633 = vadd.f32 0.0, %v2632
        %2634 = vmatmul.bf16.gmra.mxu0 %v2611
        %v2635 = vpop.f32.mrf.mxu0
        %v2636 = vadd.f32 0.0, %v2635
        %v2637 = vpop.f32.mrf.mxu0
        %v2638 = vadd.f32 0.0, %v2637
        %2639 = vdwg.mxu0
        %v2640 = vmul.f32 %v2626, 0.35355338
        %v2641 = vmul.f32 %v2628, 0.35355338
        %v2642 = vmul.f32 %v2631, 0.35355338
        %v2643 = vmul.f32 %v2633, 0.35355338
        %v2644 = vmul.f32 %v2636, 0.35355338
        %v2645 = vmul.f32 %v2638, 0.35355338
        %v2646 = vadd.f32 %v2640, %v2322
        %v2647 = vadd.f32 %v2641, %v2322
        %v2648 = vadd.f32 %v2642, %v2322
        %v2649 = vadd.f32 %v2643, %v2322
        %v2650 = vadd.f32 %v2644, %v2322
        %v2651 = vadd.f32 %v2645, %v2322
        %v2652 = vsel %vm1916, %v2646, -inf
        %2653 = vmax.xlane.f32.xlu0 %v2652
        %v2654 = vpop.xlane.xlu0 %2653
        %v2655 = vsel %vm1916, %v2647, -inf
        %2656 = vmax.xlane.f32.xlu0 %v2655
        %v2657 = vpop.xlane.xlu0 %2656
        %v2658 = vsel %vm1916, %v2648, -inf
        %2659 = vmax.xlane.f32.xlu0 %v2658
        %v2660 = vpop.xlane.xlu0 %2659
        %v2661 = vsel %vm1916, %v2649, -inf
        %2662 = vmax.xlane.f32.xlu0 %v2661
        %v2663 = vpop.xlane.xlu0 %2662
        %v2664 = vsel %vm1916, %v2650, -inf
        %2665 = vmax.xlane.f32.xlu0 %v2664
        %v2666 = vpop.xlane.xlu0 %2665
        %v2667 = vsel %vm1916, %v2651, -inf
        %2668 = vmax.xlane.f32.xlu0 %v2667
        %v2669 = vpop.xlane.xlu0 %2668
        %v2670 = vsub.f32 %v2646, %v2654
        %v2671 = vsub.f32 %v2647, %v2657
        %v2672 = vsub.f32 %v2648, %v2660
        %v2673 = vsub.f32 %v2649, %v2663
        %v2674 = vsub.f32 %v2650, %v2666
        %v2675 = vsub.f32 %v2651, %v2669
        %v2676 = vmul.f32 %v2670, 1.442695
        %v2677 = vpow.pop %v2676
        %v2678 = vmul.f32 %v2671, 1.442695
        %v2679 = vpow.pop %v2678
        %v2680 = vmul.f32 %v2672, 1.442695
        %v2681 = vpow.pop %v2680
        %v2682 = vmul.f32 %v2673, 1.442695
        %v2683 = vpow.pop %v2682
        %v2684 = vmul.f32 %v2674, 1.442695
        %v2685 = vpow.pop %v2684
        %v2686 = vmul.f32 %v2675, 1.442695
        %v2687 = vpow.pop %v2686
        %v2688 = vsel %vm1916, %v2677, 0.0
        %2689 = vadd.xlane.f32.xlu0 %v2688
        %v2690 = vpop.xlane.xlu0 %2689
        %v2691 = vsel %vm1916, %v2679, 0.0
        %2692 = vadd.xlane.f32.xlu0 %v2691
        %v2693 = vpop.xlane.xlu0 %2692
        %v2694 = vsel %vm1916, %v2681, 0.0
        %2695 = vadd.xlane.f32.xlu0 %v2694
        %v2696 = vpop.xlane.xlu0 %2695
        %v2697 = vsel %vm1916, %v2683, 0.0
        %2698 = vadd.xlane.f32.xlu0 %v2697
        %v2699 = vpop.xlane.xlu0 %2698
        %v2700 = vsel %vm1916, %v2685, 0.0
        %2701 = vadd.xlane.f32.xlu0 %v2700
        %v2702 = vpop.xlane.xlu0 %2701
        %v2703 = vsel %vm1916, %v2687, 0.0
        %2704 = vadd.xlane.f32.xlu0 %v2703
        %v2705 = vpop.xlane.xlu0 %2704
        %v2706 = vrcp.pop %v2690
        %v2707 = vrcp.pop %v2693
        %v2708 = vrcp.pop %v2696
        %v2709 = vrcp.pop %v2699
        %v2710 = vrcp.pop %v2702
        %v2711 = vrcp.pop %v2705
        %v2712 = vmul.f32 %v2677, %v2706
        %v2713 = vmul.f32 %v2679, %v2707
        %v2714 = vmul.f32 %v2681, %v2708
        %v2715 = vmul.f32 %v2683, %v2709
        %v2716 = vmul.f32 %v2685, %v2710
        %v2717 = vmul.f32 %v2687, %v2711
        %v2718 = vpack.c.bf16 %v2713, %v2712
        %v2719 = vpack.c.bf16 %v2715, %v2714
        %v2720 = vpack.c.bf16 %v2717, %v2716
        %2721 = vrot.lane.b32.xlu0 %v2278, 80
        %v2722 = vpop.permute.xlu0 %2721
        %v2725 = vsel %vm1916, %v2718, 0
        %v2728 = vsel %vm1916, %v2719, 0
        %v2731 = vsel %vm1916, %v2720, 0
        %2733 = vmatpush.bf16.msra.mxu0 0
        %2734 = vmatpush.bf16.msra.mxu0 0
        %2735 = vmatpush.bf16.msra.mxu0 0
        %2736 = vmatpush.bf16.msra.mxu0 0
        %2737 = vmatpush.bf16.msra.mxu0 0
        %2738 = vmatpush.bf16.msra.mxu0 0
        %2739 = vmatpush.bf16.msra.mxu0 0
        %2740 = vmatpush.bf16.msra.mxu0 %v2722
        %2741 = vmatmul.bf16.gmra.mxu0 %v2725
        %v2742 = vpop.f32.mrf.mxu0
        %v2743 = vadd.f32 0.0, %v2742
        %v2744 = vpop.f32.mrf.mxu0
        %v2745 = vadd.f32 0.0, %v2744
        %2746 = vmatmul.bf16.gmra.mxu0 %v2728
        %v2747 = vpop.f32.mrf.mxu0
        %v2748 = vadd.f32 0.0, %v2747
        %v2749 = vpop.f32.mrf.mxu0
        %v2750 = vadd.f32 0.0, %v2749
        %2751 = vmatmul.bf16.gmra.mxu0 %v2731
        %v2752 = vpop.f32.mrf.mxu0
        %v2753 = vadd.f32 0.0, %v2752
        %v2754 = vpop.f32.mrf.mxu0
        %v2755 = vadd.f32 0.0, %v2754
        %2756 = vdwg.mxu0
        %2757 = vrot.lane.b32.xlu0 %v2271, 104
        %v2758 = vpop.permute.xlu0 %2757
        %2759 = vrot.lane.b32.xlu0 %v2272, 104
        %v2760 = vpop.permute.xlu0 %2759
        %2761 = vrot.lane.b32.xlu0 %v2273, 104
        %v2762 = vpop.permute.xlu0 %2761
        %2763 = vrot.lane.b32.xlu0 %v2278, 104
        %v2764 = vpop.permute.xlu0 %2763
        %v2766 = vsel %vm1140, %v2758, 0
        %v2769 = vsel %vm1140, %v2760, 0
        %v2772 = vsel %vm1140, %v2762, 0
        %v2775 = vsel %vm1140, %v2764, 0
        %2777 = vmatpush.bf16.xpose.msra.mxu0 0
        %2778 = vmatpush.bf16.xpose.msra.mxu0 0
        %2779 = vmatpush.bf16.xpose.msra.mxu0 0
        %2780 = vmatpush.bf16.xpose.msra.mxu0 0
        %2781 = vmatpush.bf16.xpose.msra.mxu0 0
        %2782 = vmatpush.bf16.xpose.msra.mxu0 0
        %2783 = vmatpush.bf16.xpose.msra.mxu0 0
        %2784 = vmatpush.bf16.xpose.msra.mxu0 %v2775
        %2785 = vmatmul.bf16.gmra.mxu0 %v2766
        %v2786 = vpop.f32.mrf.mxu0
        %v2787 = vadd.f32 0.0, %v2786
        %v2788 = vpop.f32.mrf.mxu0
        %v2789 = vadd.f32 0.0, %v2788
        %2790 = vmatmul.bf16.gmra.mxu0 %v2769
        %v2791 = vpop.f32.mrf.mxu0
        %v2792 = vadd.f32 0.0, %v2791
        %v2793 = vpop.f32.mrf.mxu0
        %v2794 = vadd.f32 0.0, %v2793
        %2795 = vmatmul.bf16.gmra.mxu0 %v2772
        %v2796 = vpop.f32.mrf.mxu0
        %v2797 = vadd.f32 0.0, %v2796
        %v2798 = vpop.f32.mrf.mxu0
        %v2799 = vadd.f32 0.0, %v2798
        %2800 = vdwg.mxu0
        %v2801 = vmul.f32 %v2787, 0.35355338
        %v2802 = vmul.f32 %v2789, 0.35355338
        %v2803 = vmul.f32 %v2792, 0.35355338
        %v2804 = vmul.f32 %v2794, 0.35355338
        %v2805 = vmul.f32 %v2797, 0.35355338
        %v2806 = vmul.f32 %v2799, 0.35355338
        %v2807 = vadd.f32 %v2801, %v2322
        %v2808 = vadd.f32 %v2802, %v2322
        %v2809 = vadd.f32 %v2803, %v2322
        %v2810 = vadd.f32 %v2804, %v2322
        %v2811 = vadd.f32 %v2805, %v2322
        %v2812 = vadd.f32 %v2806, %v2322
        %v2813 = vsel %vm1916, %v2807, -inf
        %2814 = vmax.xlane.f32.xlu0 %v2813
        %v2815 = vpop.xlane.xlu0 %2814
        %v2816 = vsel %vm1916, %v2808, -inf
        %2817 = vmax.xlane.f32.xlu0 %v2816
        %v2818 = vpop.xlane.xlu0 %2817
        %v2819 = vsel %vm1916, %v2809, -inf
        %2820 = vmax.xlane.f32.xlu0 %v2819
        %v2821 = vpop.xlane.xlu0 %2820
        %v2822 = vsel %vm1916, %v2810, -inf
        %2823 = vmax.xlane.f32.xlu0 %v2822
        %v2824 = vpop.xlane.xlu0 %2823
        %v2825 = vsel %vm1916, %v2811, -inf
        %2826 = vmax.xlane.f32.xlu0 %v2825
        %v2827 = vpop.xlane.xlu0 %2826
        %v2828 = vsel %vm1916, %v2812, -inf
        %2829 = vmax.xlane.f32.xlu0 %v2828
        %v2830 = vpop.xlane.xlu0 %2829
        %v2831 = vsub.f32 %v2807, %v2815
        %v2832 = vsub.f32 %v2808, %v2818
        %v2833 = vsub.f32 %v2809, %v2821
        %v2834 = vsub.f32 %v2810, %v2824
        %v2835 = vsub.f32 %v2811, %v2827
        %v2836 = vsub.f32 %v2812, %v2830
        %v2837 = vmul.f32 %v2831, 1.442695
        %v2838 = vpow.pop %v2837
        %v2839 = vmul.f32 %v2832, 1.442695
        %v2840 = vpow.pop %v2839
        %v2841 = vmul.f32 %v2833, 1.442695
        %v2842 = vpow.pop %v2841
        %v2843 = vmul.f32 %v2834, 1.442695
        %v2844 = vpow.pop %v2843
        %v2845 = vmul.f32 %v2835, 1.442695
        %v2846 = vpow.pop %v2845
        %v2847 = vmul.f32 %v2836, 1.442695
        %v2848 = vpow.pop %v2847
        %v2849 = vsel %vm1916, %v2838, 0.0
        %2850 = vadd.xlane.f32.xlu0 %v2849
        %v2851 = vpop.xlane.xlu0 %2850
        %v2852 = vsel %vm1916, %v2840, 0.0
        %2853 = vadd.xlane.f32.xlu0 %v2852
        %v2854 = vpop.xlane.xlu0 %2853
        %v2855 = vsel %vm1916, %v2842, 0.0
        %2856 = vadd.xlane.f32.xlu0 %v2855
        %v2857 = vpop.xlane.xlu0 %2856
        %v2858 = vsel %vm1916, %v2844, 0.0
        %2859 = vadd.xlane.f32.xlu0 %v2858
        %v2860 = vpop.xlane.xlu0 %2859
        %v2861 = vsel %vm1916, %v2846, 0.0
        %2862 = vadd.xlane.f32.xlu0 %v2861
        %v2863 = vpop.xlane.xlu0 %2862
        %v2864 = vsel %vm1916, %v2848, 0.0
        %2865 = vadd.xlane.f32.xlu0 %v2864
        %v2866 = vpop.xlane.xlu0 %2865
        %v2867 = vrcp.pop %v2851
        %v2868 = vrcp.pop %v2854
        %v2869 = vrcp.pop %v2857
        %v2870 = vrcp.pop %v2860
        %v2871 = vrcp.pop %v2863
        %v2872 = vrcp.pop %v2866
        %v2873 = vmul.f32 %v2838, %v2867
        %v2874 = vmul.f32 %v2840, %v2868
        %v2875 = vmul.f32 %v2842, %v2869
        %v2876 = vmul.f32 %v2844, %v2870
        %v2877 = vmul.f32 %v2846, %v2871
        %v2878 = vmul.f32 %v2848, %v2872
        %v2879 = vpack.c.bf16 %v2874, %v2873
        %v2880 = vpack.c.bf16 %v2876, %v2875
        %v2881 = vpack.c.bf16 %v2878, %v2877
        %2882 = vrot.lane.b32.xlu0 %v2278, 72
        %v2883 = vpop.permute.xlu0 %2882
        %v2886 = vsel %vm1916, %v2879, 0
        %v2889 = vsel %vm1916, %v2880, 0
        %v2892 = vsel %vm1916, %v2881, 0
        %2894 = vmatpush.bf16.msra.mxu0 0
        %2895 = vmatpush.bf16.msra.mxu0 0
        %2896 = vmatpush.bf16.msra.mxu0 0
        %2897 = vmatpush.bf16.msra.mxu0 0
        %2898 = vmatpush.bf16.msra.mxu0 0
        %2899 = vmatpush.bf16.msra.mxu0 0
        %2900 = vmatpush.bf16.msra.mxu0 0
        %2901 = vmatpush.bf16.msra.mxu0 %v2883
        %2902 = vmatmul.bf16.gmra.mxu0 %v2886
        %v2903 = vpop.f32.mrf.mxu0
        %v2904 = vadd.f32 0.0, %v2903
        %v2905 = vpop.f32.mrf.mxu0
        %v2906 = vadd.f32 0.0, %v2905
        %2907 = vmatmul.bf16.gmra.mxu0 %v2889
        %v2908 = vpop.f32.mrf.mxu0
        %v2909 = vadd.f32 0.0, %v2908
        %v2910 = vpop.f32.mrf.mxu0
        %v2911 = vadd.f32 0.0, %v2910
        %2912 = vmatmul.bf16.gmra.mxu0 %v2892
        %v2913 = vpop.f32.mrf.mxu0
        %v2914 = vadd.f32 0.0, %v2913
        %v2915 = vpop.f32.mrf.mxu0
        %v2916 = vadd.f32 0.0, %v2915
        %2917 = vdwg.mxu0
        %2924 = vrot.lane.b32.xlu0 %v2582, 8
        %v2925 = vpop.permute.xlu0 %2924
        %2926 = vrot.lane.b32.xlu0 %v2584, 8
        %v2927 = vpop.permute.xlu0 %2926
        %2928 = vrot.lane.b32.xlu0 %v2587, 8
        %v2929 = vpop.permute.xlu0 %2928
        %2930 = vrot.lane.b32.xlu0 %v2589, 8
        %v2931 = vpop.permute.xlu0 %2930
        %2932 = vrot.lane.b32.xlu0 %v2592, 8
        %v2933 = vpop.permute.xlu0 %2932
        %2934 = vrot.lane.b32.xlu0 %v2594, 8
        %v2935 = vpop.permute.xlu0 %2934
        %2948 = vrot.lane.b32.xlu0 %v2743, 16
        %v2949 = vpop.permute.xlu0 %2948
        %2950 = vrot.lane.b32.xlu0 %v2745, 16
        %v2951 = vpop.permute.xlu0 %2950
        %2952 = vrot.lane.b32.xlu0 %v2748, 16
        %v2953 = vpop.permute.xlu0 %2952
        %2954 = vrot.lane.b32.xlu0 %v2750, 16
        %v2955 = vpop.permute.xlu0 %2954
        %2956 = vrot.lane.b32.xlu0 %v2753, 16
        %v2957 = vpop.permute.xlu0 %2956
        %2958 = vrot.lane.b32.xlu0 %v2755, 16
        %v2959 = vpop.permute.xlu0 %2958
        %2972 = vrot.lane.b32.xlu0 %v2904, 24
        %v2973 = vpop.permute.xlu0 %2972
        %2974 = vrot.lane.b32.xlu0 %v2906, 24
        %v2975 = vpop.permute.xlu0 %2974
        %2976 = vrot.lane.b32.xlu0 %v2909, 24
        %v2977 = vpop.permute.xlu0 %2976
        %2978 = vrot.lane.b32.xlu0 %v2911, 24
        %v2979 = vpop.permute.xlu0 %2978
        %2980 = vrot.lane.b32.xlu0 %v2914, 24
        %v2981 = vpop.permute.xlu0 %2980
        %2982 = vrot.lane.b32.xlu0 %v2916, 24
        %v2983 = vpop.permute.xlu0 %2982
        %v2990 = vsel %vm1140, %v2421, %v2925
        %v2991 = vsel %vm1140, %v2423, %v2927
        %v2992 = vsel %vm1140, %v2426, %v2929
        %v2993 = vsel %vm1140, %v2428, %v2931
        %v2994 = vsel %vm1140, %v2431, %v2933
        %v2995 = vsel %vm1140, %v2433, %v2935
        %v2996 = vsel %vm1916, %v2990, %v2949
        %v2997 = vsel %vm1916, %v2991, %v2951
        %v2998 = vsel %vm1916, %v2992, %v2953
        %v2999 = vsel %vm1916, %v2993, %v2955
        %v3000 = vsel %vm1916, %v2994, %v2957
        %v3001 = vsel %vm1916, %v2995, %v2959
        %v3002 = vsel %vm1923, %v2996, %v2973
        %v3003 = vsel %vm1923, %v2997, %v2975
        %v3004 = vsel %vm1923, %v2998, %v2977
        %v3005 = vsel %vm1923, %v2999, %v2979
        %v3006 = vsel %vm1923, %v3000, %v2981
        %v3007 = vsel %vm1923, %v3001, %v2983
        %v3008 = vpack.c.bf16 %v3003, %v3002
        %v3009 = vpack.c.bf16 %v3005, %v3004
        %v3010 = vpack.c.bf16 %v3007, %v3006
        %v3015 = vunpack.c.l.b16 %v2247
        %v3016 = vunpack.c.l.b16 %v2248
        %v3017 = vunpack.c.l.b16 %v2249
        %v3018 = vunpack.c.l.b16 %v2250
        %v3019 = vpack.c.b16 %v3016, %v3015
        %v3020 = vpack.c.b16 %v3018, %v3017
        %v3024 = vsel %vm1075, %v3008, 0
        %v3027 = vsel %vm1075, %v3009, 0
        %v3030 = vsel %vm1075, %v3010, 0
        %3032 = vmatpush.bf16.msra.mxu0 0
        %3033 = vmatpush.bf16.msra.mxu0 0
        %3034 = vmatpush.bf16.msra.mxu0 0
        %3035 = vmatpush.bf16.msra.mxu0 0
        %3036 = vmatpush.bf16.msra.mxu0 0
        %3037 = vmatpush.bf16.msra.mxu0 0
        %3038 = vmatpush.bf16.msra.mxu0 %v3020
        %3039 = vmatpush.bf16.msra.mxu0 %v3019
        %3040 = vmatmul.bf16.gmra.mxu0 %v3024
        %v3041 = vpop.f32.mrf.mxu0
        %v3042 = vadd.f32 0.0, %v3041
        %v3043 = vpop.f32.mrf.mxu0
        %v3044 = vadd.f32 0.0, %v3043
        %3045 = vmatmul.bf16.gmra.mxu0 %v3027
        %v3046 = vpop.f32.mrf.mxu0
        %v3047 = vadd.f32 0.0, %v3046
        %v3048 = vpop.f32.mrf.mxu0
        %v3049 = vadd.f32 0.0, %v3048
        %3050 = vmatmul.bf16.gmra.mxu0 %v3030
        %v3051 = vpop.f32.mrf.mxu0
        %v3052 = vadd.f32 0.0, %v3051
        %v3053 = vpop.f32.mrf.mxu0
        %v3054 = vadd.f32 0.0, %v3053
        %3055 = vdwg.mxu0
        %v3056 = vadd.f32 %v2147, %v3042
        %v3057 = vadd.f32 %v2148, %v3044
        %v3058 = vadd.f32 %v2149, %v3047
        %v3059 = vadd.f32 %v2150, %v3049
        %v3060 = vadd.f32 %v2151, %v3052
        %v3061 = vadd.f32 %v2152, %v3054
        %v3062 = vld [vmem:[%s14] sm:$0x1]
        %v3064 = vperm.slane %v3062, 0
        %v3066 = vadd.f32 %v3056, %v3064
        %v3067 = vadd.f32 %v3057, %v3064
        %v3068 = vadd.f32 %v3058, %v3064
        %v3069 = vadd.f32 %v3059, %v3064
        %v3070 = vadd.f32 %v3060, %v3064
        %v3071 = vadd.f32 %v3061, %v3064
        %v3072 = vld [vmem:[%s15] sm:$0x1]
        %v3073 = vld [vmem:[#allocation14] sm:$0x1]
        %v3074 = vsel %vm1075, %v3066, 0.0
        %3075 = vadd.xlane.f32.xlu0 %v3074
        %v3076 = vpop.xlane.xlu0 %3075
        %v3077 = vsel %vm1075, %v3067, 0.0
        %3078 = vadd.xlane.f32.xlu0 %v3077
        %v3079 = vpop.xlane.xlu0 %3078
        %v3080 = vsel %vm1075, %v3068, 0.0
        %3081 = vadd.xlane.f32.xlu0 %v3080
        %v3082 = vpop.xlane.xlu0 %3081
        %v3083 = vsel %vm1075, %v3069, 0.0
        %3084 = vadd.xlane.f32.xlu0 %v3083
        %v3085 = vpop.xlane.xlu0 %3084
        %v3086 = vsel %vm1075, %v3070, 0.0
        %3087 = vadd.xlane.f32.xlu0 %v3086
        %v3088 = vpop.xlane.xlu0 %3087
        %v3089 = vsel %vm1075, %v3071, 0.0
        %3090 = vadd.xlane.f32.xlu0 %v3089
        %v3091 = vpop.xlane.xlu0 %3090
        %v3092 = vmul.f32 %v3076, %v2020
        %v3093 = vmul.f32 %v3079, %v2020
        %v3094 = vmul.f32 %v3082, %v2020
        %v3095 = vmul.f32 %v3085, %v2020
        %v3096 = vmul.f32 %v3088, %v2020
        %v3097 = vmul.f32 %v3091, %v2020
        %v3098 = vsub.f32 %v3066, %v3092
        %v3099 = vsub.f32 %v3067, %v3093
        %v3100 = vsub.f32 %v3068, %v3094
        %v3101 = vsub.f32 %v3069, %v3095
        %v3102 = vsub.f32 %v3070, %v3096
        %v3103 = vsub.f32 %v3071, %v3097
        %v3104 = vmul.f32 %v3098, %v3098
        %v3105 = vmul.f32 %v3099, %v3099
        %v3106 = vmul.f32 %v3100, %v3100
        %v3107 = vmul.f32 %v3101, %v3101
        %v3108 = vmul.f32 %v3102, %v3102
        %v3109 = vmul.f32 %v3103, %v3103
        %v3110 = vsel %vm1075, %v3104, 0.0
        %3111 = vadd.xlane.f32.xlu0 %v3110
        %v3112 = vpop.xlane.xlu0 %3111
        %v3113 = vsel %vm1075, %v3105, 0.0
        %3114 = vadd.xlane.f32.xlu0 %v3113
        %v3115 = vpop.xlane.xlu0 %3114
        %v3116 = vsel %vm1075, %v3106, 0.0
        %3117 = vadd.xlane.f32.xlu0 %v3116
        %v3118 = vpop.xlane.xlu0 %3117
        %v3119 = vsel %vm1075, %v3107, 0.0
        %3120 = vadd.xlane.f32.xlu0 %v3119
        %v3121 = vpop.xlane.xlu0 %3120
        %v3122 = vsel %vm1075, %v3108, 0.0
        %3123 = vadd.xlane.f32.xlu0 %v3122
        %v3124 = vpop.xlane.xlu0 %3123
        %v3125 = vsel %vm1075, %v3109, 0.0
        %3126 = vadd.xlane.f32.xlu0 %v3125
        %v3127 = vpop.xlane.xlu0 %3126
        %v3128 = vmul.f32 %v3112, %v2020
        %v3129 = vmul.f32 %v3115, %v2020
        %v3130 = vmul.f32 %v3118, %v2020
        %v3131 = vmul.f32 %v3121, %v2020
        %v3132 = vmul.f32 %v3124, %v2020
        %v3133 = vmul.f32 %v3127, %v2020
        %v3134 = vadd.f32 %v3128, 1e-05
        %v3135 = vadd.f32 %v3129, 1e-05
        %v3136 = vadd.f32 %v3130, 1e-05
        %v3137 = vadd.f32 %v3131, 1e-05
        %v3138 = vadd.f32 %v3132, 1e-05
        %v3139 = vadd.f32 %v3133, 1e-05
        %v3140 = vrsqrt.pop %v3134
        %v3141 = vmul.f32 %v3140, %v3134
        %v3142 = vmul.f32 %v3141, %v3140
        %v3143 = vmul.f32 0.5, %v3142
        %v3144 = vsub.f32 1.5, %v3143
        %v3145 = vmul.f32 %v3140, %v3144
        %vm3146 = vweird.f32 %v3134
        %vm3147 = vweird.f32 %v3140
        %vm3148 = vmor %vm3146, %vm3147
        %v3149 = vsel %vm3148, %v3140, %v3145
        %v3150 = vrsqrt.pop %v3135
        %v3151 = vmul.f32 %v3150, %v3135
        %v3152 = vmul.f32 %v3151, %v3150
        %v3153 = vmul.f32 0.5, %v3152
        %v3154 = vsub.f32 1.5, %v3153
        %v3155 = vmul.f32 %v3150, %v3154
        %vm3156 = vweird.f32 %v3135
        %vm3157 = vweird.f32 %v3150
        %vm3158 = vmor %vm3156, %vm3157
        %v3159 = vsel %vm3158, %v3150, %v3155
        %v3160 = vrsqrt.pop %v3136
        %v3161 = vmul.f32 %v3160, %v3136
        %v3162 = vmul.f32 %v3161, %v3160
        %v3163 = vmul.f32 0.5, %v3162
        %v3164 = vsub.f32 1.5, %v3163
        %v3165 = vmul.f32 %v3160, %v3164
        %vm3166 = vweird.f32 %v3136
        %vm3167 = vweird.f32 %v3160
        %vm3168 = vmor %vm3166, %vm3167
        %v3169 = vsel %vm3168, %v3160, %v3165
        %v3170 = vrsqrt.pop %v3137
        %v3171 = vmul.f32 %v3170, %v3137
        %v3172 = vmul.f32 %v3171, %v3170
        %v3173 = vmul.f32 0.5, %v3172
        %v3174 = vsub.f32 1.5, %v3173
        %v3175 = vmul.f32 %v3170, %v3174
        %vm3176 = vweird.f32 %v3137
        %vm3177 = vweird.f32 %v3170
        %vm3178 = vmor %vm3176, %vm3177
        %v3179 = vsel %vm3178, %v3170, %v3175
        %v3180 = vrsqrt.pop %v3138
        %v3181 = vmul.f32 %v3180, %v3138
        %v3182 = vmul.f32 %v3181, %v3180
        %v3183 = vmul.f32 0.5, %v3182
        %v3184 = vsub.f32 1.5, %v3183
        %v3185 = vmul.f32 %v3180, %v3184
        %vm3186 = vweird.f32 %v3138
        %vm3187 = vweird.f32 %v3180
        %vm3188 = vmor %vm3186, %vm3187
        %v3189 = vsel %vm3188, %v3180, %v3185
        %v3190 = vrsqrt.pop %v3139
        %v3191 = vmul.f32 %v3190, %v3139
        %v3192 = vmul.f32 %v3191, %v3190
        %v3193 = vmul.f32 0.5, %v3192
        %v3194 = vsub.f32 1.5, %v3193
        %v3195 = vmul.f32 %v3190, %v3194
        %vm3196 = vweird.f32 %v3139
        %vm3197 = vweird.f32 %v3190
        %vm3198 = vmor %vm3196, %vm3197
        %v3199 = vsel %vm3198, %v3190, %v3195
        %v3200 = vmul.f32 %v3098, %v3149
        %v3201 = vmul.f32 %v3099, %v3159
        %v3202 = vmul.f32 %v3100, %v3169
        %v3203 = vmul.f32 %v3101, %v3179
        %v3204 = vmul.f32 %v3102, %v3189
        %v3205 = vmul.f32 %v3103, %v3199
        %v3207 = vperm.slane %v3072, 0
        %v3209 = vmul.f32 %v3200, %v3207
        %v3210 = vmul.f32 %v3201, %v3207
        %v3211 = vmul.f32 %v3202, %v3207
        %v3212 = vmul.f32 %v3203, %v3207
        %v3213 = vmul.f32 %v3204, %v3207
        %v3214 = vmul.f32 %v3205, %v3207
        %v3216 = vperm.slane %v3073, 0
        %v3218 = vadd.f32 %v3209, %v3216
        %v3219 = vadd.f32 %v3210, %v3216
        %v3220 = vadd.f32 %v3211, %v3216
        %v3221 = vadd.f32 %v3212, %v3216
        %v3222 = vadd.f32 %v3213, %v3216
        %v3223 = vadd.f32 %v3214, %v3216
        %v3224 = vpack.c.bf16 %v3219, %v3218
        %v3225 = vpack.c.bf16 %v3221, %v3220
        %v3226 = vpack.c.bf16 %v3223, %v3222
        %v3227 = vld [vmem:[#allocation16] sm:$0xf]
        %v3228 = vld [vmem:[#allocation16 + $0x4] sm:$0xf]
        %v3229 = vld [vmem:[#allocation16 + $0x8] sm:$0xf]
        %v3230 = vld [vmem:[#allocation16 + $0xc] sm:$0xf]
        %v3231 = vld [vmem:[%s18] sm:$0x1]
        %v3233 = vperm.slane %v3231, 0
        %v3239 = vunpack.c.l.b16 %v3227
        %v3240 = vunpack.c.l.b16 %v3228
        %v3241 = vunpack.c.l.b16 %v3229
        %v3242 = vunpack.c.l.b16 %v3230
        %v3243 = vpack.c.b16 %v3240, %v3239
        %v3244 = vpack.c.b16 %v3242, %v3241
        %v3248 = vsel %vm1075, %v3224, 0
        %v3251 = vsel %vm1075, %v3225, 0
        %v3254 = vsel %vm1075, %v3226, 0
        %3256 = vmatpush.bf16.msra.mxu0 0
        %3257 = vmatpush.bf16.msra.mxu0 0
        %3258 = vmatpush.bf16.msra.mxu0 0
        %3259 = vmatpush.bf16.msra.mxu0 0
        %3260 = vmatpush.bf16.msra.mxu0 0
        %3261 = vmatpush.bf16.msra.mxu0 0
        %3262 = vmatpush.bf16.msra.mxu0 %v3244
        %3263 = vmatpush.bf16.msra.mxu0 %v3243
        %3264 = vmatmul.bf16.gmra.mxu0 %v3248
        %v3265 = vpop.f32.mrf.mxu0
        %v3266 = vadd.f32 %v3233, %v3265
        %v3267 = vpop.f32.mrf.mxu0
        %v3268 = vadd.f32 %v3233, %v3267
        %3269 = vmatmul.bf16.gmra.mxu0 %v3251
        %v3270 = vpop.f32.mrf.mxu0
        %v3271 = vadd.f32 %v3233, %v3270
        %v3272 = vpop.f32.mrf.mxu0
        %v3273 = vadd.f32 %v3233, %v3272
        %3274 = vmatmul.bf16.gmra.mxu0 %v3254
        %v3275 = vpop.f32.mrf.mxu0
        %v3276 = vadd.f32 %v3233, %v3275
        %v3277 = vpop.f32.mrf.mxu0
        %v3278 = vadd.f32 %v3233, %v3277
        %3279 = vdwg.mxu0
        %v3280 = vmax.f32 %v3266, 0.0
        %v3281 = vmax.f32 %v3268, 0.0
        %v3282 = vmax.f32 %v3271, 0.0
        %v3283 = vmax.f32 %v3273, 0.0
        %v3284 = vmax.f32 %v3276, 0.0
        %v3285 = vmax.f32 %v3278, 0.0
        %v3286 = vpack.c.bf16 %v3281, %v3280
        %v3287 = vpack.c.bf16 %v3283, %v3282
        %v3288 = vpack.c.bf16 %v3285, %v3284
        %v3289 = vld [vmem:[%s19] sm:$0xf]
        %v3290 = vld [vmem:[%s19 + $0x4] sm:$0xf]
        %v3291 = vld [vmem:[%s19 + $0x8] sm:$0xf]
        %v3292 = vld [vmem:[%s19 + $0xc] sm:$0xf]
        %v3293 = vld [vmem:[%s19 + $0x10] sm:$0xf]
        %v3294 = vld [vmem:[%s19 + $0x14] sm:$0xf]
        %v3295 = vld [vmem:[%s19 + $0x18] sm:$0xf]
        %v3296 = vld [vmem:[%s19 + $0x1c] sm:$0xf]
        %v3297 = vld [vmem:[%s20] sm:$0x1]
        %v3299 = vperm.slane %v3297, 0
        %v3309 = vunpack.c.l.b16 %v3289
        %v3310 = vunpack.c.l.b16 %v3290
        %v3311 = vunpack.c.l.b16 %v3291
        %v3312 = vunpack.c.l.b16 %v3292
        %v3313 = vunpack.c.l.b16 %v3293
        %v3314 = vunpack.c.l.b16 %v3294
        %v3315 = vunpack.c.l.b16 %v3295
        %v3316 = vunpack.c.l.b16 %v3296
        %v3317 = vpack.c.b16 %v3310, %v3309
        %v3318 = vpack.c.b16 %v3312, %v3311
        %v3319 = vpack.c.b16 %v3314, %v3313
        %v3320 = vpack.c.b16 %v3316, %v3315
        %vm3325 = vcmask 523264
        %v3327 = vsel %vm3325, %v3286, 0
        %v3330 = vsel %vm3325, %v3287, 0
        %v3333 = vsel %vm3325, %v3288, 0
        %3335 = vmatpush.bf16.msra.mxu0 0
        %3336 = vmatpush.bf16.msra.mxu0 0
        %3337 = vmatpush.bf16.msra.mxu0 0
        %3338 = vmatpush.bf16.msra.mxu0 0
        %3339 = vmatpush.bf16.msra.mxu0 %v3320
        %3340 = vmatpush.bf16.msra.mxu0 %v3319
        %3341 = vmatpush.bf16.msra.mxu0 %v3318
        %3342 = vmatpush.bf16.msra.mxu0 %v3317
        %3343 = vmatmul.bf16.gmra.mxu0 %v3327
        %v3344 = vpop.f32.mrf.mxu0
        %v3345 = vadd.f32 %v3299, %v3344
        %v3346 = vpop.f32.mrf.mxu0
        %v3347 = vadd.f32 %v3299, %v3346
        %3348 = vmatmul.bf16.gmra.mxu0 %v3330
        %v3349 = vpop.f32.mrf.mxu0
        %v3350 = vadd.f32 %v3299, %v3349
        %v3351 = vpop.f32.mrf.mxu0
        %v3352 = vadd.f32 %v3299, %v3351
        %3353 = vmatmul.bf16.gmra.mxu0 %v3333
        %v3354 = vpop.f32.mrf.mxu0
        %v3355 = vadd.f32 %v3299, %v3354
        %v3356 = vpop.f32.mrf.mxu0
        %v3357 = vadd.f32 %v3299, %v3356
        %3358 = vdwg.mxu0
        %v3359 = vadd.f32 %v3218, %v3345
        %v3360 = vadd.f32 %v3219, %v3347
        %v3361 = vadd.f32 %v3220, %v3350
        %v3362 = vadd.f32 %v3221, %v3352
        %v3363 = vadd.f32 %v3222, %v3355
        %v3364 = vadd.f32 %v3223, %v3357
        %v3365 = vld [vmem:[%s21] sm:$0x1]
        %v3366 = vld [vmem:[#allocation17] sm:$0x1]
        %v3367 = vsel %vm1075, %v3359, 0.0
        %3368 = vadd.xlane.f32.xlu0 %v3367
        %v3369 = vpop.xlane.xlu0 %3368
        %v3370 = vsel %vm1075, %v3360, 0.0
        %3371 = vadd.xlane.f32.xlu0 %v3370
        %v3372 = vpop.xlane.xlu0 %3371
        %v3373 = vsel %vm1075, %v3361, 0.0
        %3374 = vadd.xlane.f32.xlu0 %v3373
        %v3375 = vpop.xlane.xlu0 %3374
        %v3376 = vsel %vm1075, %v3362, 0.0
        %3377 = vadd.xlane.f32.xlu0 %v3376
        %v3378 = vpop.xlane.xlu0 %3377
        %v3379 = vsel %vm1075, %v3363, 0.0
        %3380 = vadd.xlane.f32.xlu0 %v3379
        %v3381 = vpop.xlane.xlu0 %3380
        %v3382 = vsel %vm1075, %v3364, 0.0
        %3383 = vadd.xlane.f32.xlu0 %v3382
        %v3384 = vpop.xlane.xlu0 %3383
        %v3385 = vmul.f32 %v3369, %v2020
        %v3386 = vmul.f32 %v3372, %v2020
        %v3387 = vmul.f32 %v3375, %v2020
        %v3388 = vmul.f32 %v3378, %v2020
        %v3389 = vmul.f32 %v3381, %v2020
        %v3390 = vmul.f32 %v3384, %v2020
        %v3391 = vsub.f32 %v3359, %v3385
        %v3392 = vsub.f32 %v3360, %v3386
        %v3393 = vsub.f32 %v3361, %v3387
        %v3394 = vsub.f32 %v3362, %v3388
        %v3395 = vsub.f32 %v3363, %v3389
        %v3396 = vsub.f32 %v3364, %v3390
        %v3397 = vmul.f32 %v3391, %v3391
        %v3398 = vmul.f32 %v3392, %v3392
        %v3399 = vmul.f32 %v3393, %v3393
        %v3400 = vmul.f32 %v3394, %v3394
        %v3401 = vmul.f32 %v3395, %v3395
        %v3402 = vmul.f32 %v3396, %v3396
        %v3403 = vsel %vm1075, %v3397, 0.0
        %3404 = vadd.xlane.f32.xlu0 %v3403
        %v3405 = vpop.xlane.xlu0 %3404
        %v3406 = vsel %vm1075, %v3398, 0.0
        %3407 = vadd.xlane.f32.xlu0 %v3406
        %v3408 = vpop.xlane.xlu0 %3407
        %v3409 = vsel %vm1075, %v3399, 0.0
        %3410 = vadd.xlane.f32.xlu0 %v3409
        %v3411 = vpop.xlane.xlu0 %3410
        %v3412 = vsel %vm1075, %v3400, 0.0
        %3413 = vadd.xlane.f32.xlu0 %v3412
        %v3414 = vpop.xlane.xlu0 %3413
        %v3415 = vsel %vm1075, %v3401, 0.0
        %3416 = vadd.xlane.f32.xlu0 %v3415
        %v3417 = vpop.xlane.xlu0 %3416
        %v3418 = vsel %vm1075, %v3402, 0.0
        %3419 = vadd.xlane.f32.xlu0 %v3418
        %v3420 = vpop.xlane.xlu0 %3419
        %v3421 = vmul.f32 %v3405, %v2020
        %v3422 = vmul.f32 %v3408, %v2020
        %v3423 = vmul.f32 %v3411, %v2020
        %v3424 = vmul.f32 %v3414, %v2020
        %v3425 = vmul.f32 %v3417, %v2020
        %v3426 = vmul.f32 %v3420, %v2020
        %v3427 = vadd.f32 %v3421, 1e-05
        %v3428 = vadd.f32 %v3422, 1e-05
        %v3429 = vadd.f32 %v3423, 1e-05
        %v3430 = vadd.f32 %v3424, 1e-05
        %v3431 = vadd.f32 %v3425, 1e-05
        %v3432 = vadd.f32 %v3426, 1e-05
        %v3433 = vrsqrt.pop %v3427
        %v3434 = vmul.f32 %v3433, %v3427
        %v3435 = vmul.f32 %v3434, %v3433
        %v3436 = vmul.f32 0.5, %v3435
        %v3437 = vsub.f32 1.5, %v3436
        %v3438 = vmul.f32 %v3433, %v3437
        %vm3439 = vweird.f32 %v3427
        %vm3440 = vweird.f32 %v3433
        %vm3441 = vmor %vm3439, %vm3440
        %v3442 = vsel %vm3441, %v3433, %v3438
        %v3443 = vrsqrt.pop %v3428
        %v3444 = vmul.f32 %v3443, %v3428
        %v3445 = vmul.f32 %v3444, %v3443
        %v3446 = vmul.f32 0.5, %v3445
        %v3447 = vsub.f32 1.5, %v3446
        %v3448 = vmul.f32 %v3443, %v3447
        %vm3449 = vweird.f32 %v3428
        %vm3450 = vweird.f32 %v3443
        %vm3451 = vmor %vm3449, %vm3450
        %v3452 = vsel %vm3451, %v3443, %v3448
        %v3453 = vrsqrt.pop %v3429
        %v3454 = vmul.f32 %v3453, %v3429
        %v3455 = vmul.f32 %v3454, %v3453
        %v3456 = vmul.f32 0.5, %v3455
        %v3457 = vsub.f32 1.5, %v3456
        %v3458 = vmul.f32 %v3453, %v3457
        %vm3459 = vweird.f32 %v3429
        %vm3460 = vweird.f32 %v3453
        %vm3461 = vmor %vm3459, %vm3460
        %v3462 = vsel %vm3461, %v3453, %v3458
        %v3463 = vrsqrt.pop %v3430
        %v3464 = vmul.f32 %v3463, %v3430
        %v3465 = vmul.f32 %v3464, %v3463
        %v3466 = vmul.f32 0.5, %v3465
        %v3467 = vsub.f32 1.5, %v3466
        %v3468 = vmul.f32 %v3463, %v3467
        %vm3469 = vweird.f32 %v3430
        %vm3470 = vweird.f32 %v3463
        %vm3471 = vmor %vm3469, %vm3470
        %v3472 = vsel %vm3471, %v3463, %v3468
        %v3473 = vrsqrt.pop %v3431
        %v3474 = vmul.f32 %v3473, %v3431
        %v3475 = vmul.f32 %v3474, %v3473
        %v3476 = vmul.f32 0.5, %v3475
        %v3477 = vsub.f32 1.5, %v3476
        %v3478 = vmul.f32 %v3473, %v3477
        %vm3479 = vweird.f32 %v3431
        %vm3480 = vweird.f32 %v3473
        %vm3481 = vmor %vm3479, %vm3480
        %v3482 = vsel %vm3481, %v3473, %v3478
        %v3483 = vrsqrt.pop %v3432
        %v3484 = vmul.f32 %v3483, %v3432
        %v3485 = vmul.f32 %v3484, %v3483
        %v3486 = vmul.f32 0.5, %v3485
        %v3487 = vsub.f32 1.5, %v3486
        %v3488 = vmul.f32 %v3483, %v3487
        %vm3489 = vweird.f32 %v3432
        %vm3490 = vweird.f32 %v3483
        %vm3491 = vmor %vm3489, %vm3490
        %v3492 = vsel %vm3491, %v3483, %v3488
        %v3493 = vmul.f32 %v3391, %v3442
        %v3494 = vmul.f32 %v3392, %v3452
        %v3495 = vmul.f32 %v3393, %v3462
        %v3496 = vmul.f32 %v3394, %v3472
        %v3497 = vmul.f32 %v3395, %v3482
        %v3498 = vmul.f32 %v3396, %v3492
        %v3500 = vperm.slane %v3365, 0
        %v3502 = vmul.f32 %v3493, %v3500
        %v3503 = vmul.f32 %v3494, %v3500
        %v3504 = vmul.f32 %v3495, %v3500
        %v3505 = vmul.f32 %v3496, %v3500
        %v3506 = vmul.f32 %v3497, %v3500
        %v3507 = vmul.f32 %v3498, %v3500
        %v3509 = vperm.slane %v3366, 0
        %v3511 = vadd.f32 %v3502, %v3509
        %v3512 = vadd.f32 %v3503, %v3509
        %v3513 = vadd.f32 %v3504, %v3509
        %v3514 = vadd.f32 %v3505, %v3509
        %v3515 = vadd.f32 %v3506, %v3509
        %v3516 = vadd.f32 %v3507, %v3509
        %v3517 = vpack.c.bf16 %v3512, %v3511
        %v3518 = vpack.c.bf16 %v3514, %v3513
        %v3519 = vpack.c.bf16 %v3516, %v3515
        %s3520 = scalar_lea.vmem %s3, 16
        %v3521 = vld [vmem:[%s3520] sm:$0xf]
        %v3522 = vld [vmem:[%s3520 + $0x4] sm:$0xf]
        %v3523 = vld [vmem:[%s3520 + $0x8] sm:$0xf]
        %v3524 = vld [vmem:[%s3520 + $0xc] sm:$0xf]
        %s3525 = scalar_lea.vmem %s4, 1
        %v3526 = vld [vmem:[%s3525] sm:$0x1]
        %v3528 = vperm.slane %v3526, 0
        %v3534 = vunpack.c.l.b16 %v3521
        %v3535 = vunpack.c.l.b16 %v3522
        %v3536 = vunpack.c.l.b16 %v3523
        %v3537 = vunpack.c.l.b16 %v3524
        %v3538 = vpack.c.b16 %v3535, %v3534
        %v3539 = vpack.c.b16 %v3537, %v3536
        %v3543 = vsel %vm1075, %v3517, 0
        %v3546 = vsel %vm1075, %v3518, 0
        %v3549 = vsel %vm1075, %v3519, 0
        %3551 = vmatpush.bf16.msra.mxu0 0
        %3552 = vmatpush.bf16.msra.mxu0 0
        %3553 = vmatpush.bf16.msra.mxu0 0
        %3554 = vmatpush.bf16.msra.mxu0 0
        %3555 = vmatpush.bf16.msra.mxu0 0
        %3556 = vmatpush.bf16.msra.mxu0 0
        %3557 = vmatpush.bf16.msra.mxu0 %v3539
        %3558 = vmatpush.bf16.msra.mxu0 %v3538
        %3559 = vmatmul.bf16.gmra.mxu0 %v3543
        %v3560 = vpop.f32.mrf.mxu0
        %v3561 = vadd.f32 %v3528, %v3560
        %v3562 = vpop.f32.mrf.mxu0
        %v3563 = vadd.f32 %v3528, %v3562
        %3564 = vmatmul.bf16.gmra.mxu0 %v3546
        %v3565 = vpop.f32.mrf.mxu0
        %v3566 = vadd.f32 %v3528, %v3565
        %v3567 = vpop.f32.mrf.mxu0
        %v3568 = vadd.f32 %v3528, %v3567
        %3569 = vmatmul.bf16.gmra.mxu0 %v3549
        %v3570 = vpop.f32.mrf.mxu0
        %v3571 = vadd.f32 %v3528, %v3570
        %v3572 = vpop.f32.mrf.mxu0
        %v3573 = vadd.f32 %v3528, %v3572
        %3574 = vdwg.mxu0
        %s3575 = scalar_lea.vmem %s5, 16
        %v3576 = vld [vmem:[%s3575] sm:$0xf]
        %v3577 = vld [vmem:[%s3575 + $0x4] sm:$0xf]
        %v3578 = vld [vmem:[%s3575 + $0x8] sm:$0xf]
        %v3579 = vld [vmem:[%s3575 + $0xc] sm:$0xf]
        %v3580 = vpack.c.bf16 %v3561, %v3561
        %v3581 = vpack.c.bf16 %v3563, %v3563
        %v3582 = vpack.c.bf16 %v3566, %v3566
        %v3583 = vpack.c.bf16 %v3568, %v3568
        %v3584 = vpack.c.bf16 %v3571, %v3571
        %v3585 = vpack.c.bf16 %v3573, %v3573
        %v3592 = vunpack.c.l.b16 %v3580
        %v3593 = vunpack.c.l.b16 %v3581
        %v3594 = vunpack.c.l.b16 %v3582
        %v3595 = vunpack.c.l.b16 %v3583
        %v3596 = vunpack.c.l.b16 %v3584
        %v3597 = vunpack.c.l.b16 %v3585
        %v3598 = vpack.c.b16 %v3593, %v3592
        %v3599 = vpack.c.b16 %v3595, %v3594
        %v3600 = vpack.c.b16 %v3597, %v3596
        %3601 = vrot.lane.b32.xlu0 %v3598, 96
        %v3602 = vpop.permute.xlu0 %3601
        %3603 = vrot.lane.b32.xlu0 %v3599, 96
        %v3604 = vpop.permute.xlu0 %3603
        %3605 = vrot.lane.b32.xlu0 %v3600, 96
        %v3606 = vpop.permute.xlu0 %3605
        %v3608 = vsel %vm1140, %v3598, 0
        %v3611 = vsel %vm1140, %v3599, 0
        %v3614 = vsel %vm1140, %v3600, 0
        %v3617 = vsel %vm1140, %v3602, 0
        %v3620 = vsel %vm1140, %v3604, 0
        %v3623 = vsel %vm1140, %v3606, 0
        %3625 = vmatpush.bf16.xpose.msra.mxu0 0
        %3626 = vmatpush.bf16.xpose.msra.mxu0 0
        %3627 = vmatpush.bf16.xpose.msra.mxu0 0
        %3628 = vmatpush.bf16.xpose.msra.mxu0 0
        %3629 = vmatpush.bf16.xpose.msra.mxu0 0
        %3630 = vmatpush.bf16.xpose.msra.mxu0 %v3623
        %3631 = vmatpush.bf16.xpose.msra.mxu0 %v3620
        %3632 = vmatpush.bf16.xpose.msra.mxu0 %v3617
        %3633 = vmatmul.bf16.gmra.mxu0 %v3608
        %v3634 = vpop.f32.mrf.mxu0
        %v3635 = vadd.f32 0.0, %v3634
        %v3636 = vpop.f32.mrf.mxu0
        %v3637 = vadd.f32 0.0, %v3636
        %3638 = vmatmul.bf16.gmra.mxu0 %v3611
        %v3639 = vpop.f32.mrf.mxu0
        %v3640 = vadd.f32 0.0, %v3639
        %v3641 = vpop.f32.mrf.mxu0
        %v3642 = vadd.f32 0.0, %v3641
        %3643 = vmatmul.bf16.gmra.mxu0 %v3614
        %v3644 = vpop.f32.mrf.mxu0
        %v3645 = vadd.f32 0.0, %v3644
        %v3646 = vpop.f32.mrf.mxu0
        %v3647 = vadd.f32 0.0, %v3646
        %3648 = vdwg.mxu0
        %v3649 = vmul.f32 %v3635, 0.35355338
        %v3650 = vmul.f32 %v3637, 0.35355338
        %v3651 = vmul.f32 %v3640, 0.35355338
        %v3652 = vmul.f32 %v3642, 0.35355338
        %v3653 = vmul.f32 %v3645, 0.35355338
        %v3654 = vmul.f32 %v3647, 0.35355338
        %v3655 = vadd.f32 %v3649, %v1046
        %v3656 = vadd.f32 %v3650, %v1047
        %v3657 = vadd.f32 %v3651, %v1048
        %v3658 = vadd.f32 %v3652, %v1049
        %v3659 = vadd.f32 %v3653, %v1050
        %v3660 = vadd.f32 %v3654, %v1051
        %v3661 = vsel %vm1195, %v3655, -inf
        %3662 = vmax.xlane.f32.xlu0 %v3661
        %v3663 = vpop.xlane.xlu0 %3662
        %v3664 = vsel %vm1195, %v3656, -inf
        %3665 = vmax.xlane.f32.xlu0 %v3664
        %v3666 = vpop.xlane.xlu0 %3665
        %v3667 = vsel %vm1195, %v3657, -inf
        %3668 = vmax.xlane.f32.xlu0 %v3667
        %v3669 = vpop.xlane.xlu0 %3668
        %v3670 = vsel %vm1195, %v3658, -inf
        %3671 = vmax.xlane.f32.xlu0 %v3670
        %v3672 = vpop.xlane.xlu0 %3671
        %v3673 = vsel %vm1195, %v3659, -inf
        %3674 = vmax.xlane.f32.xlu0 %v3673
        %v3675 = vpop.xlane.xlu0 %3674
        %v3676 = vsel %vm1195, %v3660, -inf
        %3677 = vmax.xlane.f32.xlu0 %v3676
        %v3678 = vpop.xlane.xlu0 %3677
        %v3679 = vsub.f32 %v3655, %v3663
        %v3680 = vsub.f32 %v3656, %v3666
        %v3681 = vsub.f32 %v3657, %v3669
        %v3682 = vsub.f32 %v3658, %v3672
        %v3683 = vsub.f32 %v3659, %v3675
        %v3684 = vsub.f32 %v3660, %v3678
        %v3685 = vmul.f32 %v3679, 1.442695
        %v3686 = vpow.pop %v3685
        %v3687 = vmul.f32 %v3680, 1.442695
        %v3688 = vpow.pop %v3687
        %v3689 = vmul.f32 %v3681, 1.442695
        %v3690 = vpow.pop %v3689
        %v3691 = vmul.f32 %v3682, 1.442695
        %v3692 = vpow.pop %v3691
        %v3693 = vmul.f32 %v3683, 1.442695
        %v3694 = vpow.pop %v3693
        %v3695 = vmul.f32 %v3684, 1.442695
        %v3696 = vpow.pop %v3695
        %v3697 = vsel %vm1195, %v3686, 0.0
        %3698 = vadd.xlane.f32.xlu0 %v3697
        %v3699 = vpop.xlane.xlu0 %3698
        %v3700 = vsel %vm1195, %v3688, 0.0
        %3701 = vadd.xlane.f32.xlu0 %v3700
        %v3702 = vpop.xlane.xlu0 %3701
        %v3703 = vsel %vm1195, %v3690, 0.0
        %3704 = vadd.xlane.f32.xlu0 %v3703
        %v3705 = vpop.xlane.xlu0 %3704
        %v3706 = vsel %vm1195, %v3692, 0.0
        %3707 = vadd.xlane.f32.xlu0 %v3706
        %v3708 = vpop.xlane.xlu0 %3707
        %v3709 = vsel %vm1195, %v3694, 0.0
        %3710 = vadd.xlane.f32.xlu0 %v3709
        %v3711 = vpop.xlane.xlu0 %3710
        %v3712 = vsel %vm1195, %v3696, 0.0
        %3713 = vadd.xlane.f32.xlu0 %v3712
        %v3714 = vpop.xlane.xlu0 %3713
        %v3715 = vrcp.pop %v3699
        %v3716 = vrcp.pop %v3702
        %v3717 = vrcp.pop %v3705
        %v3718 = vrcp.pop %v3708
        %v3719 = vrcp.pop %v3711
        %v3720 = vrcp.pop %v3714
        %v3721 = vmul.f32 %v3686, %v3715
        %v3722 = vmul.f32 %v3688, %v3716
        %v3723 = vmul.f32 %v3690, %v3717
        %v3724 = vmul.f32 %v3692, %v3718
        %v3725 = vmul.f32 %v3694, %v3719
        %v3726 = vmul.f32 %v3696, %v3720
        %v3727 = vpack.c.bf16 %v3722, %v3721
        %v3728 = vpack.c.bf16 %v3724, %v3723
        %v3729 = vpack.c.bf16 %v3726, %v3725
        %3730 = vrot.lane.b32.xlu0 %v3598, 64
        %v3731 = vpop.permute.xlu0 %3730
        %3732 = vrot.lane.b32.xlu0 %v3599, 64
        %v3733 = vpop.permute.xlu0 %3732
        %3734 = vrot.lane.b32.xlu0 %v3600, 64
        %v3735 = vpop.permute.xlu0 %3734
        %v3740 = vsel %vm1195, %v3727, 0
        %v3743 = vsel %vm1195, %v3728, 0
        %v3746 = vsel %vm1195, %v3729, 0
        %3748 = vmatpush.bf16.msra.mxu0 0
        %3749 = vmatpush.bf16.msra.mxu0 0
        %3750 = vmatpush.bf16.msra.mxu0 0
        %3751 = vmatpush.bf16.msra.mxu0 0
        %3752 = vmatpush.bf16.msra.mxu0 0
        %3753 = vmatpush.bf16.msra.mxu0 %v3735
        %3754 = vmatpush.bf16.msra.mxu0 %v3733
        %3755 = vmatpush.bf16.msra.mxu0 %v3731
        %3756 = vmatmul.bf16.gmra.mxu0 %v3740
        %v3757 = vpop.f32.mrf.mxu0
        %v3758 = vadd.f32 0.0, %v3757
        %v3759 = vpop.f32.mrf.mxu0
        %v3760 = vadd.f32 0.0, %v3759
        %3761 = vmatmul.bf16.gmra.mxu0 %v3743
        %v3762 = vpop.f32.mrf.mxu0
        %v3763 = vadd.f32 0.0, %v3762
        %v3764 = vpop.f32.mrf.mxu0
        %v3765 = vadd.f32 0.0, %v3764
        %3766 = vmatmul.bf16.gmra.mxu0 %v3746
        %v3767 = vpop.f32.mrf.mxu0
        %v3768 = vadd.f32 0.0, %v3767
        %v3769 = vpop.f32.mrf.mxu0
        %v3770 = vadd.f32 0.0, %v3769
        %3771 = vdwg.mxu0
        %3772 = vrot.lane.b32.xlu0 %v3598, 120
        %v3773 = vpop.permute.xlu0 %3772
        %3774 = vrot.lane.b32.xlu0 %v3599, 120
        %v3775 = vpop.permute.xlu0 %3774
        %3776 = vrot.lane.b32.xlu0 %v3600, 120
        %v3777 = vpop.permute.xlu0 %3776
        %3778 = vrot.lane.b32.xlu0 %v3598, 88
        %v3779 = vpop.permute.xlu0 %3778
        %3780 = vrot.lane.b32.xlu0 %v3599, 88
        %v3781 = vpop.permute.xlu0 %3780
        %3782 = vrot.lane.b32.xlu0 %v3600, 88
        %v3783 = vpop.permute.xlu0 %3782
        %v3785 = vsel %vm1140, %v3773, 0
        %v3788 = vsel %vm1140, %v3775, 0
        %v3791 = vsel %vm1140, %v3777, 0
        %v3794 = vsel %vm1140, %v3779, 0
        %v3797 = vsel %vm1140, %v3781, 0
        %v3800 = vsel %vm1140, %v3783, 0
        %3802 = vmatpush.bf16.xpose.msra.mxu0 0
        %3803 = vmatpush.bf16.xpose.msra.mxu0 0
        %3804 = vmatpush.bf16.xpose.msra.mxu0 0
        %3805 = vmatpush.bf16.xpose.msra.mxu0 0
        %3806 = vmatpush.bf16.xpose.msra.mxu0 0
        %3807 = vmatpush.bf16.xpose.msra.mxu0 %v3800
        %3808 = vmatpush.bf16.xpose.msra.mxu0 %v3797
        %3809 = vmatpush.bf16.xpose.msra.mxu0 %v3794
        %3810 = vmatmul.bf16.gmra.mxu0 %v3785
        %v3811 = vpop.f32.mrf.mxu0
        %v3812 = vadd.f32 0.0, %v3811
        %v3813 = vpop.f32.mrf.mxu0
        %v3814 = vadd.f32 0.0, %v3813
        %3815 = vmatmul.bf16.gmra.mxu0 %v3788
        %v3816 = vpop.f32.mrf.mxu0
        %v3817 = vadd.f32 0.0, %v3816
        %v3818 = vpop.f32.mrf.mxu0
        %v3819 = vadd.f32 0.0, %v3818
        %3820 = vmatmul.bf16.gmra.mxu0 %v3791
        %v3821 = vpop.f32.mrf.mxu0
        %v3822 = vadd.f32 0.0, %v3821
        %v3823 = vpop.f32.mrf.mxu0
        %v3824 = vadd.f32 0.0, %v3823
        %3825 = vdwg.mxu0
        %v3826 = vmul.f32 %v3812, 0.35355338
        %v3827 = vmul.f32 %v3814, 0.35355338
        %v3828 = vmul.f32 %v3817, 0.35355338
        %v3829 = vmul.f32 %v3819, 0.35355338
        %v3830 = vmul.f32 %v3822, 0.35355338
        %v3831 = vmul.f32 %v3824, 0.35355338
        %v3832 = vadd.f32 %v3826, %v1046
        %v3833 = vadd.f32 %v3827, %v1047
        %v3834 = vadd.f32 %v3828, %v1048
        %v3835 = vadd.f32 %v3829, %v1049
        %v3836 = vadd.f32 %v3830, %v1050
        %v3837 = vadd.f32 %v3831, %v1051
        %v3838 = vsel %vm1195, %v3832, -inf
        %3839 = vmax.xlane.f32.xlu0 %v3838
        %v3840 = vpop.xlane.xlu0 %3839
        %v3841 = vsel %vm1195, %v3833, -inf
        %3842 = vmax.xlane.f32.xlu0 %v3841
        %v3843 = vpop.xlane.xlu0 %3842
        %v3844 = vsel %vm1195, %v3834, -inf
        %3845 = vmax.xlane.f32.xlu0 %v3844
        %v3846 = vpop.xlane.xlu0 %3845
        %v3847 = vsel %vm1195, %v3835, -inf
        %3848 = vmax.xlane.f32.xlu0 %v3847
        %v3849 = vpop.xlane.xlu0 %3848
        %v3850 = vsel %vm1195, %v3836, -inf
        %3851 = vmax.xlane.f32.xlu0 %v3850
        %v3852 = vpop.xlane.xlu0 %3851
        %v3853 = vsel %vm1195, %v3837, -inf
        %3854 = vmax.xlane.f32.xlu0 %v3853
        %v3855 = vpop.xlane.xlu0 %3854
        %v3856 = vsub.f32 %v3832, %v3840
        %v3857 = vsub.f32 %v3833, %v3843
        %v3858 = vsub.f32 %v3834, %v3846
        %v3859 = vsub.f32 %v3835, %v3849
        %v3860 = vsub.f32 %v3836, %v3852
        %v3861 = vsub.f32 %v3837, %v3855
        %v3862 = vmul.f32 %v3856, 1.442695
        %v3863 = vpow.pop %v3862
        %v3864 = vmul.f32 %v3857, 1.442695
        %v3865 = vpow.pop %v3864
        %v3866 = vmul.f32 %v3858, 1.442695
        %v3867 = vpow.pop %v3866
        %v3868 = vmul.f32 %v3859, 1.442695
        %v3869 = vpow.pop %v3868
        %v3870 = vmul.f32 %v3860, 1.442695
        %v3871 = vpow.pop %v3870
        %v3872 = vmul.f32 %v3861, 1.442695
        %v3873 = vpow.pop %v3872
        %v3874 = vsel %vm1195, %v3863, 0.0
        %3875 = vadd.xlane.f32.xlu0 %v3874
        %v3876 = vpop.xlane.xlu0 %3875
        %v3877 = vsel %vm1195, %v3865, 0.0
        %3878 = vadd.xlane.f32.xlu0 %v3877
        %v3879 = vpop.xlane.xlu0 %3878
        %v3880 = vsel %vm1195, %v3867, 0.0
        %3881 = vadd.xlane.f32.xlu0 %v3880
        %v3882 = vpop.xlane.xlu0 %3881
        %v3883 = vsel %vm1195, %v3869, 0.0
        %3884 = vadd.xlane.f32.xlu0 %v3883
        %v3885 = vpop.xlane.xlu0 %3884
        %v3886 = vsel %vm1195, %v3871, 0.0
        %3887 = vadd.xlane.f32.xlu0 %v3886
        %v3888 = vpop.xlane.xlu0 %3887
        %v3889 = vsel %vm1195, %v3873, 0.0
        %3890 = vadd.xlane.f32.xlu0 %v3889
        %v3891 = vpop.xlane.xlu0 %3890
        %v3892 = vrcp.pop %v3876
        %v3893 = vrcp.pop %v3879
        %v3894 = vrcp.pop %v3882
        %v3895 = vrcp.pop %v3885
        %v3896 = vrcp.pop %v3888
        %v3897 = vrcp.pop %v3891
        %v3898 = vmul.f32 %v3863, %v3892
        %v3899 = vmul.f32 %v3865, %v3893
        %v3900 = vmul.f32 %v3867, %v3894
        %v3901 = vmul.f32 %v3869, %v3895
        %v3902 = vmul.f32 %v3871, %v3896
        %v3903 = vmul.f32 %v3873, %v3897
        %v3904 = vpack.c.bf16 %v3899, %v3898
        %v3905 = vpack.c.bf16 %v3901, %v3900
        %v3906 = vpack.c.bf16 %v3903, %v3902
        %3907 = vrot.lane.b32.xlu0 %v3598, 56
        %v3908 = vpop.permute.xlu0 %3907
        %3909 = vrot.lane.b32.xlu0 %v3599, 56
        %v3910 = vpop.permute.xlu0 %3909
        %3911 = vrot.lane.b32.xlu0 %v3600, 56
        %v3912 = vpop.permute.xlu0 %3911
        %v3917 = vsel %vm1195, %v3904, 0
        %v3920 = vsel %vm1195, %v3905, 0
        %v3923 = vsel %vm1195, %v3906, 0
        %3925 = vmatpush.bf16.msra.mxu0 0
        %3926 = vmatpush.bf16.msra.mxu0 0
        %3927 = vmatpush.bf16.msra.mxu0 0
        %3928 = vmatpush.bf16.msra.mxu0 0
        %3929 = vmatpush.bf16.msra.mxu0 0
        %3930 = vmatpush.bf16.msra.mxu0 %v3912
        %3931 = vmatpush.bf16.msra.mxu0 %v3910
        %3932 = vmatpush.bf16.msra.mxu0 %v3908
        %3933 = vmatmul.bf16.gmra.mxu0 %v3917
        %v3934 = vpop.f32.mrf.mxu0
        %v3935 = vadd.f32 0.0, %v3934
        %v3936 = vpop.f32.mrf.mxu0
        %v3937 = vadd.f32 0.0, %v3936
        %3938 = vmatmul.bf16.gmra.mxu0 %v3920
        %v3939 = vpop.f32.mrf.mxu0
        %v3940 = vadd.f32 0.0, %v3939
        %v3941 = vpop.f32.mrf.mxu0
        %v3942 = vadd.f32 0.0, %v3941
        %3943 = vmatmul.bf16.gmra.mxu0 %v3923
        %v3944 = vpop.f32.mrf.mxu0
        %v3945 = vadd.f32 0.0, %v3944
        %v3946 = vpop.f32.mrf.mxu0
        %v3947 = vadd.f32 0.0, %v3946
        %3948 = vdwg.mxu0
        %3949 = vrot.lane.b32.xlu0 %v3598, 112
        %v3950 = vpop.permute.xlu0 %3949
        %3951 = vrot.lane.b32.xlu0 %v3599, 112
        %v3952 = vpop.permute.xlu0 %3951
        %3953 = vrot.lane.b32.xlu0 %v3600, 112
        %v3954 = vpop.permute.xlu0 %3953
        %3955 = vrot.lane.b32.xlu0 %v3598, 80
        %v3956 = vpop.permute.xlu0 %3955
        %3957 = vrot.lane.b32.xlu0 %v3599, 80
        %v3958 = vpop.permute.xlu0 %3957
        %3959 = vrot.lane.b32.xlu0 %v3600, 80
        %v3960 = vpop.permute.xlu0 %3959
        %v3962 = vsel %vm1140, %v3950, 0
        %v3965 = vsel %vm1140, %v3952, 0
        %v3968 = vsel %vm1140, %v3954, 0
        %v3971 = vsel %vm1140, %v3956, 0
        %v3974 = vsel %vm1140, %v3958, 0
        %v3977 = vsel %vm1140, %v3960, 0
        %3979 = vmatpush.bf16.xpose.msra.mxu0 0
        %3980 = vmatpush.bf16.xpose.msra.mxu0 0
        %3981 = vmatpush.bf16.xpose.msra.mxu0 0
        %3982 = vmatpush.bf16.xpose.msra.mxu0 0
        %3983 = vmatpush.bf16.xpose.msra.mxu0 0
        %3984 = vmatpush.bf16.xpose.msra.mxu0 %v3977
        %3985 = vmatpush.bf16.xpose.msra.mxu0 %v3974
        %3986 = vmatpush.bf16.xpose.msra.mxu0 %v3971
        %3987 = vmatmul.bf16.gmra.mxu0 %v3962
        %v3988 = vpop.f32.mrf.mxu0
        %v3989 = vadd.f32 0.0, %v3988
        %v3990 = vpop.f32.mrf.mxu0
        %v3991 = vadd.f32 0.0, %v3990
        %3992 = vmatmul.bf16.gmra.mxu0 %v3965
        %v3993 = vpop.f32.mrf.mxu0
        %v3994 = vadd.f32 0.0, %v3993
        %v3995 = vpop.f32.mrf.mxu0
        %v3996 = vadd.f32 0.0, %v3995
        %3997 = vmatmul.bf16.gmra.mxu0 %v3968
        %v3998 = vpop.f32.mrf.mxu0
        %v3999 = vadd.f32 0.0, %v3998
        %v4000 = vpop.f32.mrf.mxu0
        %v4001 = vadd.f32 0.0, %v4000
        %4002 = vdwg.mxu0
        %v4003 = vmul.f32 %v3989, 0.35355338
        %v4004 = vmul.f32 %v3991, 0.35355338
        %v4005 = vmul.f32 %v3994, 0.35355338
        %v4006 = vmul.f32 %v3996, 0.35355338
        %v4007 = vmul.f32 %v3999, 0.35355338
        %v4008 = vmul.f32 %v4001, 0.35355338
        %v4009 = vadd.f32 %v4003, %v1046
        %v4010 = vadd.f32 %v4004, %v1047
        %v4011 = vadd.f32 %v4005, %v1048
        %v4012 = vadd.f32 %v4006, %v1049
        %v4013 = vadd.f32 %v4007, %v1050
        %v4014 = vadd.f32 %v4008, %v1051
        %v4015 = vsel %vm1195, %v4009, -inf
        %4016 = vmax.xlane.f32.xlu0 %v4015
        %v4017 = vpop.xlane.xlu0 %4016
        %v4018 = vsel %vm1195, %v4010, -inf
        %4019 = vmax.xlane.f32.xlu0 %v4018
        %v4020 = vpop.xlane.xlu0 %4019
        %v4021 = vsel %vm1195, %v4011, -inf
        %4022 = vmax.xlane.f32.xlu0 %v4021
        %v4023 = vpop.xlane.xlu0 %4022
        %v4024 = vsel %vm1195, %v4012, -inf
        %4025 = vmax.xlane.f32.xlu0 %v4024
        %v4026 = vpop.xlane.xlu0 %4025
        %v4027 = vsel %vm1195, %v4013, -inf
        %4028 = vmax.xlane.f32.xlu0 %v4027
        %v4029 = vpop.xlane.xlu0 %4028
        %v4030 = vsel %vm1195, %v4014, -inf
        %4031 = vmax.xlane.f32.xlu0 %v4030
        %v4032 = vpop.xlane.xlu0 %4031
        %v4033 = vsub.f32 %v4009, %v4017
        %v4034 = vsub.f32 %v4010, %v4020
        %v4035 = vsub.f32 %v4011, %v4023
        %v4036 = vsub.f32 %v4012, %v4026
        %v4037 = vsub.f32 %v4013, %v4029
        %v4038 = vsub.f32 %v4014, %v4032
        %v4039 = vmul.f32 %v4033, 1.442695
        %v4040 = vpow.pop %v4039
        %v4041 = vmul.f32 %v4034, 1.442695
        %v4042 = vpow.pop %v4041
        %v4043 = vmul.f32 %v4035, 1.442695
        %v4044 = vpow.pop %v4043
        %v4045 = vmul.f32 %v4036, 1.442695
        %v4046 = vpow.pop %v4045
        %v4047 = vmul.f32 %v4037, 1.442695
        %v4048 = vpow.pop %v4047
        %v4049 = vmul.f32 %v4038, 1.442695
        %v4050 = vpow.pop %v4049
        %v4051 = vsel %vm1195, %v4040, 0.0
        %4052 = vadd.xlane.f32.xlu0 %v4051
        %v4053 = vpop.xlane.xlu0 %4052
        %v4054 = vsel %vm1195, %v4042, 0.0
        %4055 = vadd.xlane.f32.xlu0 %v4054
        %v4056 = vpop.xlane.xlu0 %4055
        %v4057 = vsel %vm1195, %v4044, 0.0
        %4058 = vadd.xlane.f32.xlu0 %v4057
        %v4059 = vpop.xlane.xlu0 %4058
        %v4060 = vsel %vm1195, %v4046, 0.0
        %4061 = vadd.xlane.f32.xlu0 %v4060
        %v4062 = vpop.xlane.xlu0 %4061
        %v4063 = vsel %vm1195, %v4048, 0.0
        %4064 = vadd.xlane.f32.xlu0 %v4063
        %v4065 = vpop.xlane.xlu0 %4064
        %v4066 = vsel %vm1195, %v4050, 0.0
        %4067 = vadd.xlane.f32.xlu0 %v4066
        %v4068 = vpop.xlane.xlu0 %4067
        %v4069 = vrcp.pop %v4053
        %v4070 = vrcp.pop %v4056
        %v4071 = vrcp.pop %v4059
        %v4072 = vrcp.pop %v4062
        %v4073 = vrcp.pop %v4065
        %v4074 = vrcp.pop %v4068
        %v4075 = vmul.f32 %v4040, %v4069
        %v4076 = vmul.f32 %v4042, %v4070
        %v4077 = vmul.f32 %v4044, %v4071
        %v4078 = vmul.f32 %v4046, %v4072
        %v4079 = vmul.f32 %v4048, %v4073
        %v4080 = vmul.f32 %v4050, %v4074
        %v4081 = vpack.c.bf16 %v4076, %v4075
        %v4082 = vpack.c.bf16 %v4078, %v4077
        %v4083 = vpack.c.bf16 %v4080, %v4079
        %4084 = vrot.lane.b32.xlu0 %v3598, 48
        %v4085 = vpop.permute.xlu0 %4084
        %4086 = vrot.lane.b32.xlu0 %v3599, 48
        %v4087 = vpop.permute.xlu0 %4086
        %4088 = vrot.lane.b32.xlu0 %v3600, 48
        %v4089 = vpop.permute.xlu0 %4088
        %v4094 = vsel %vm1195, %v4081, 0
        %v4097 = vsel %vm1195, %v4082, 0
        %v4100 = vsel %vm1195, %v4083, 0
        %4102 = vmatpush.bf16.msra.mxu0 0
        %4103 = vmatpush.bf16.msra.mxu0 0
        %4104 = vmatpush.bf16.msra.mxu0 0
        %4105 = vmatpush.bf16.msra.mxu0 0
        %4106 = vmatpush.bf16.msra.mxu0 0
        %4107 = vmatpush.bf16.msra.mxu0 %v4089
        %4108 = vmatpush.bf16.msra.mxu0 %v4087
        %4109 = vmatpush.bf16.msra.mxu0 %v4085
        %4110 = vmatmul.bf16.gmra.mxu0 %v4094
        %v4111 = vpop.f32.mrf.mxu0
        %v4112 = vadd.f32 0.0, %v4111
        %v4113 = vpop.f32.mrf.mxu0
        %v4114 = vadd.f32 0.0, %v4113
        %4115 = vmatmul.bf16.gmra.mxu0 %v4097
        %v4116 = vpop.f32.mrf.mxu0
        %v4117 = vadd.f32 0.0, %v4116
        %v4118 = vpop.f32.mrf.mxu0
        %v4119 = vadd.f32 0.0, %v4118
        %4120 = vmatmul.bf16.gmra.mxu0 %v4100
        %v4121 = vpop.f32.mrf.mxu0
        %v4122 = vadd.f32 0.0, %v4121
        %v4123 = vpop.f32.mrf.mxu0
        %v4124 = vadd.f32 0.0, %v4123
        %4125 = vdwg.mxu0
        %4126 = vrot.lane.b32.xlu0 %v3598, 104
        %v4127 = vpop.permute.xlu0 %4126
        %4128 = vrot.lane.b32.xlu0 %v3599, 104
        %v4129 = vpop.permute.xlu0 %4128
        %4130 = vrot.lane.b32.xlu0 %v3600, 104
        %v4131 = vpop.permute.xlu0 %4130
        %4132 = vrot.lane.b32.xlu0 %v3598, 72
        %v4133 = vpop.permute.xlu0 %4132
        %4134 = vrot.lane.b32.xlu0 %v3599, 72
        %v4135 = vpop.permute.xlu0 %4134
        %4136 = vrot.lane.b32.xlu0 %v3600, 72
        %v4137 = vpop.permute.xlu0 %4136
        %v4139 = vsel %vm1140, %v4127, 0
        %v4142 = vsel %vm1140, %v4129, 0
        %v4145 = vsel %vm1140, %v4131, 0
        %v4148 = vsel %vm1140, %v4133, 0
        %v4151 = vsel %vm1140, %v4135, 0
        %v4154 = vsel %vm1140, %v4137, 0
        %4156 = vmatpush.bf16.xpose.msra.mxu0 0
        %4157 = vmatpush.bf16.xpose.msra.mxu0 0
        %4158 = vmatpush.bf16.xpose.msra.mxu0 0
        %4159 = vmatpush.bf16.xpose.msra.mxu0 0
        %4160 = vmatpush.bf16.xpose.msra.mxu0 0
        %4161 = vmatpush.bf16.xpose.msra.mxu0 %v4154
        %4162 = vmatpush.bf16.xpose.msra.mxu0 %v4151
        %4163 = vmatpush.bf16.xpose.msra.mxu0 %v4148
        %4164 = vmatmul.bf16.gmra.mxu0 %v4139
        %v4165 = vpop.f32.mrf.mxu0
        %v4166 = vadd.f32 0.0, %v4165
        %v4167 = vpop.f32.mrf.mxu0
        %v4168 = vadd.f32 0.0, %v4167
        %4169 = vmatmul.bf16.gmra.mxu0 %v4142
        %v4170 = vpop.f32.mrf.mxu0
        %v4171 = vadd.f32 0.0, %v4170
        %v4172 = vpop.f32.mrf.mxu0
        %v4173 = vadd.f32 0.0, %v4172
        %4174 = vmatmul.bf16.gmra.mxu0 %v4145
        %v4175 = vpop.f32.mrf.mxu0
        %v4176 = vadd.f32 0.0, %v4175
        %v4177 = vpop.f32.mrf.mxu0
        %v4178 = vadd.f32 0.0, %v4177
        %4179 = vdwg.mxu0
        %v4180 = vmul.f32 %v4166, 0.35355338
        %v4181 = vmul.f32 %v4168, 0.35355338
        %v4182 = vmul.f32 %v4171, 0.35355338
        %v4183 = vmul.f32 %v4173, 0.35355338
        %v4184 = vmul.f32 %v4176, 0.35355338
        %v4185 = vmul.f32 %v4178, 0.35355338
        %v4186 = vadd.f32 %v4180, %v1046
        %v4187 = vadd.f32 %v4181, %v1047
        %v4188 = vadd.f32 %v4182, %v1048
        %v4189 = vadd.f32 %v4183, %v1049
        %v4190 = vadd.f32 %v4184, %v1050
        %v4191 = vadd.f32 %v4185, %v1051
        %v4192 = vsel %vm1195, %v4186, -inf
        %4193 = vmax.xlane.f32.xlu0 %v4192
        %v4194 = vpop.xlane.xlu0 %4193
        %v4195 = vsel %vm1195, %v4187, -inf
        %4196 = vmax.xlane.f32.xlu0 %v4195
        %v4197 = vpop.xlane.xlu0 %4196
        %v4198 = vsel %vm1195, %v4188, -inf
        %4199 = vmax.xlane.f32.xlu0 %v4198
        %v4200 = vpop.xlane.xlu0 %4199
        %v4201 = vsel %vm1195, %v4189, -inf
        %4202 = vmax.xlane.f32.xlu0 %v4201
        %v4203 = vpop.xlane.xlu0 %4202
        %v4204 = vsel %vm1195, %v4190, -inf
        %4205 = vmax.xlane.f32.xlu0 %v4204
        %v4206 = vpop.xlane.xlu0 %4205
        %v4207 = vsel %vm1195, %v4191, -inf
        %4208 = vmax.xlane.f32.xlu0 %v4207
        %v4209 = vpop.xlane.xlu0 %4208
        %v4210 = vsub.f32 %v4186, %v4194
        %v4211 = vsub.f32 %v4187, %v4197
        %v4212 = vsub.f32 %v4188, %v4200
        %v4213 = vsub.f32 %v4189, %v4203
        %v4214 = vsub.f32 %v4190, %v4206
        %v4215 = vsub.f32 %v4191, %v4209
        %v4216 = vmul.f32 %v4210, 1.442695
        %v4217 = vpow.pop %v4216
        %v4218 = vmul.f32 %v4211, 1.442695
        %v4219 = vpow.pop %v4218
        %v4220 = vmul.f32 %v4212, 1.442695
        %v4221 = vpow.pop %v4220
        %v4222 = vmul.f32 %v4213, 1.442695
        %v4223 = vpow.pop %v4222
        %v4224 = vmul.f32 %v4214, 1.442695
        %v4225 = vpow.pop %v4224
        %v4226 = vmul.f32 %v4215, 1.442695
        %v4227 = vpow.pop %v4226
        %v4228 = vsel %vm1195, %v4217, 0.0
        %4229 = vadd.xlane.f32.xlu0 %v4228
        %v4230 = vpop.xlane.xlu0 %4229
        %v4231 = vsel %vm1195, %v4219, 0.0
        %4232 = vadd.xlane.f32.xlu0 %v4231
        %v4233 = vpop.xlane.xlu0 %4232
        %v4234 = vsel %vm1195, %v4221, 0.0
        %4235 = vadd.xlane.f32.xlu0 %v4234
        %v4236 = vpop.xlane.xlu0 %4235
        %v4237 = vsel %vm1195, %v4223, 0.0
        %4238 = vadd.xlane.f32.xlu0 %v4237
        %v4239 = vpop.xlane.xlu0 %4238
        %v4240 = vsel %vm1195, %v4225, 0.0
        %4241 = vadd.xlane.f32.xlu0 %v4240
        %v4242 = vpop.xlane.xlu0 %4241
        %v4243 = vsel %vm1195, %v4227, 0.0
        %4244 = vadd.xlane.f32.xlu0 %v4243
        %v4245 = vpop.xlane.xlu0 %4244
        %v4246 = vrcp.pop %v4230
        %v4247 = vrcp.pop %v4233
        %v4248 = vrcp.pop %v4236
        %v4249 = vrcp.pop %v4239
        %v4250 = vrcp.pop %v4242
        %v4251 = vrcp.pop %v4245
        %v4252 = vmul.f32 %v4217, %v4246
        %v4253 = vmul.f32 %v4219, %v4247
        %v4254 = vmul.f32 %v4221, %v4248
        %v4255 = vmul.f32 %v4223, %v4249
        %v4256 = vmul.f32 %v4225, %v4250
        %v4257 = vmul.f32 %v4227, %v4251
        %v4258 = vpack.c.bf16 %v4253, %v4252
        %v4259 = vpack.c.bf16 %v4255, %v4254
        %v4260 = vpack.c.bf16 %v4257, %v4256
        %4261 = vrot.lane.b32.xlu0 %v3598, 40
        %v4262 = vpop.permute.xlu0 %4261
        %4263 = vrot.lane.b32.xlu0 %v3599, 40
        %v4264 = vpop.permute.xlu0 %4263
        %4265 = vrot.lane.b32.xlu0 %v3600, 40
        %v4266 = vpop.permute.xlu0 %4265
        %v4271 = vsel %vm1195, %v4258, 0
        %v4274 = vsel %vm1195, %v4259, 0
        %v4277 = vsel %vm1195, %v4260, 0
        %4279 = vmatpush.bf16.msra.mxu0 0
        %4280 = vmatpush.bf16.msra.mxu0 0
        %4281 = vmatpush.bf16.msra.mxu0 0
        %4282 = vmatpush.bf16.msra.mxu0 0
        %4283 = vmatpush.bf16.msra.mxu0 0
        %4284 = vmatpush.bf16.msra.mxu0 %v4266
        %4285 = vmatpush.bf16.msra.mxu0 %v4264
        %4286 = vmatpush.bf16.msra.mxu0 %v4262
        %4287 = vmatmul.bf16.gmra.mxu0 %v4271
        %v4288 = vpop.f32.mrf.mxu0
        %v4289 = vadd.f32 0.0, %v4288
        %v4290 = vpop.f32.mrf.mxu0
        %v4291 = vadd.f32 0.0, %v4290
        %4292 = vmatmul.bf16.gmra.mxu0 %v4274
        %v4293 = vpop.f32.mrf.mxu0
        %v4294 = vadd.f32 0.0, %v4293
        %v4295 = vpop.f32.mrf.mxu0
        %v4296 = vadd.f32 0.0, %v4295
        %4297 = vmatmul.bf16.gmra.mxu0 %v4277
        %v4298 = vpop.f32.mrf.mxu0
        %v4299 = vadd.f32 0.0, %v4298
        %v4300 = vpop.f32.mrf.mxu0
        %v4301 = vadd.f32 0.0, %v4300
        %4302 = vdwg.mxu0
        %4309 = vrot.lane.b32.xlu0 %v3935, 8
        %v4310 = vpop.permute.xlu0 %4309
        %4311 = vrot.lane.b32.xlu0 %v3937, 8
        %v4312 = vpop.permute.xlu0 %4311
        %4313 = vrot.lane.b32.xlu0 %v3940, 8
        %v4314 = vpop.permute.xlu0 %4313
        %4315 = vrot.lane.b32.xlu0 %v3942, 8
        %v4316 = vpop.permute.xlu0 %4315
        %4317 = vrot.lane.b32.xlu0 %v3945, 8
        %v4318 = vpop.permute.xlu0 %4317
        %4319 = vrot.lane.b32.xlu0 %v3947, 8
        %v4320 = vpop.permute.xlu0 %4319
        %4333 = vrot.lane.b32.xlu0 %v4112, 16
        %v4334 = vpop.permute.xlu0 %4333
        %4335 = vrot.lane.b32.xlu0 %v4114, 16
        %v4336 = vpop.permute.xlu0 %4335
        %4337 = vrot.lane.b32.xlu0 %v4117, 16
        %v4338 = vpop.permute.xlu0 %4337
        %4339 = vrot.lane.b32.xlu0 %v4119, 16
        %v4340 = vpop.permute.xlu0 %4339
        %4341 = vrot.lane.b32.xlu0 %v4122, 16
        %v4342 = vpop.permute.xlu0 %4341
        %4343 = vrot.lane.b32.xlu0 %v4124, 16
        %v4344 = vpop.permute.xlu0 %4343
        %4357 = vrot.lane.b32.xlu0 %v4289, 24
        %v4358 = vpop.permute.xlu0 %4357
        %4359 = vrot.lane.b32.xlu0 %v4291, 24
        %v4360 = vpop.permute.xlu0 %4359
        %4361 = vrot.lane.b32.xlu0 %v4294, 24
        %v4362 = vpop.permute.xlu0 %4361
        %4363 = vrot.lane.b32.xlu0 %v4296, 24
        %v4364 = vpop.permute.xlu0 %4363
        %4365 = vrot.lane.b32.xlu0 %v4299, 24
        %v4366 = vpop.permute.xlu0 %4365
        %4367 = vrot.lane.b32.xlu0 %v4301, 24
        %v4368 = vpop.permute.xlu0 %4367
        %v4375 = vsel %vm1140, %v3758, %v4310
        %v4376 = vsel %vm1140, %v3760, %v4312
        %v4377 = vsel %vm1140, %v3763, %v4314
        %v4378 = vsel %vm1140, %v3765, %v4316
        %v4379 = vsel %vm1140, %v3768, %v4318
        %v4380 = vsel %vm1140, %v3770, %v4320
        %v4381 = vsel %vm1916, %v4375, %v4334
        %v4382 = vsel %vm1916, %v4376, %v4336
        %v4383 = vsel %vm1916, %v4377, %v4338
        %v4384 = vsel %vm1916, %v4378, %v4340
        %v4385 = vsel %vm1916, %v4379, %v4342
        %v4386 = vsel %vm1916, %v4380, %v4344
        %v4387 = vsel %vm1923, %v4381, %v4358
        %v4388 = vsel %vm1923, %v4382, %v4360
        %v4389 = vsel %vm1923, %v4383, %v4362
        %v4390 = vsel %vm1923, %v4384, %v4364
        %v4391 = vsel %vm1923, %v4385, %v4366
        %v4392 = vsel %vm1923, %v4386, %v4368
        %v4393 = vpack.c.bf16 %v4388, %v4387
        %v4394 = vpack.c.bf16 %v4390, %v4389
        %v4395 = vpack.c.bf16 %v4392, %v4391
        %v4400 = vunpack.c.l.b16 %v3576
        %v4401 = vunpack.c.l.b16 %v3577
        %v4402 = vunpack.c.l.b16 %v3578
        %v4403 = vunpack.c.l.b16 %v3579
        %v4404 = vpack.c.b16 %v4401, %v4400
        %v4405 = vpack.c.b16 %v4403, %v4402
        %v4409 = vsel %vm1075, %v4393, 0
        %v4412 = vsel %vm1075, %v4394, 0
        %v4415 = vsel %vm1075, %v4395, 0
        %4417 = vmatpush.bf16.msra.mxu0 0
        %4418 = vmatpush.bf16.msra.mxu0 0
        %4419 = vmatpush.bf16.msra.mxu0 0
        %4420 = vmatpush.bf16.msra.mxu0 0
        %4421 = vmatpush.bf16.msra.mxu0 0
        %4422 = vmatpush.bf16.msra.mxu0 0
        %4423 = vmatpush.bf16.msra.mxu0 %v4405
        %4424 = vmatpush.bf16.msra.mxu0 %v4404
        %4425 = vmatmul.bf16.gmra.mxu0 %v4409
        %v4426 = vpop.f32.mrf.mxu0
        %v4427 = vadd.f32 0.0, %v4426
        %v4428 = vpop.f32.mrf.mxu0
        %v4429 = vadd.f32 0.0, %v4428
        %4430 = vmatmul.bf16.gmra.mxu0 %v4412
        %v4431 = vpop.f32.mrf.mxu0
        %v4432 = vadd.f32 0.0, %v4431
        %v4433 = vpop.f32.mrf.mxu0
        %v4434 = vadd.f32 0.0, %v4433
        %4435 = vmatmul.bf16.gmra.mxu0 %v4415
        %v4436 = vpop.f32.mrf.mxu0
        %v4437 = vadd.f32 0.0, %v4436
        %v4438 = vpop.f32.mrf.mxu0
        %v4439 = vadd.f32 0.0, %v4438
        %4440 = vdwg.mxu0
        %v4441 = vadd.f32 %v3511, %v4427
        %v4442 = vadd.f32 %v3512, %v4429
        %v4443 = vadd.f32 %v3513, %v4432
        %v4444 = vadd.f32 %v3514, %v4434
        %v4445 = vadd.f32 %v3515, %v4437
        %v4446 = vadd.f32 %v3516, %v4439
        %s4447 = scalar_lea.vmem [#allocation5], 1
        %v4448 = vld [vmem:[%s4447] sm:$0x1]
        %v4450 = vperm.slane %v4448, 0
        %v4452 = vadd.f32 %v4441, %v4450
        %v4453 = vadd.f32 %v4442, %v4450
        %v4454 = vadd.f32 %v4443, %v4450
        %v4455 = vadd.f32 %v4444, %v4450
        %v4456 = vadd.f32 %v4445, %v4450
        %v4457 = vadd.f32 %v4446, %v4450
        %s4458 = scalar_lea.vmem [#allocation7], 1
        %v4459 = vld [vmem:[%s4458] sm:$0x1]
        %s4460 = scalar_lea.vmem [#allocation8], 1
        %v4461 = vld [vmem:[%s4460] sm:$0x1]
        %v4462 = vsel %vm1075, %v4452, 0.0
        %4463 = vadd.xlane.f32.xlu0 %v4462
        %v4464 = vpop.xlane.xlu0 %4463
        %v4465 = vsel %vm1075, %v4453, 0.0
        %4466 = vadd.xlane.f32.xlu0 %v4465
        %v4467 = vpop.xlane.xlu0 %4466
        %v4468 = vsel %vm1075, %v4454, 0.0
        %4469 = vadd.xlane.f32.xlu0 %v4468
        %v4470 = vpop.xlane.xlu0 %4469
        %v4471 = vsel %vm1075, %v4455, 0.0
        %4472 = vadd.xlane.f32.xlu0 %v4471
        %v4473 = vpop.xlane.xlu0 %4472
        %v4474 = vsel %vm1075, %v4456, 0.0
        %4475 = vadd.xlane.f32.xlu0 %v4474
        %v4476 = vpop.xlane.xlu0 %4475
        %v4477 = vsel %vm1075, %v4457, 0.0
        %4478 = vadd.xlane.f32.xlu0 %v4477
        %v4479 = vpop.xlane.xlu0 %4478
        %v4480 = vmul.f32 %v4464, %v2020
        %v4481 = vmul.f32 %v4467, %v2020
        %v4482 = vmul.f32 %v4470, %v2020
        %v4483 = vmul.f32 %v4473, %v2020
        %v4484 = vmul.f32 %v4476, %v2020
        %v4485 = vmul.f32 %v4479, %v2020
        %v4486 = vsub.f32 %v4452, %v4480
        %v4487 = vsub.f32 %v4453, %v4481
        %v4488 = vsub.f32 %v4454, %v4482
        %v4489 = vsub.f32 %v4455, %v4483
        %v4490 = vsub.f32 %v4456, %v4484
        %v4491 = vsub.f32 %v4457, %v4485
        %v4492 = vmul.f32 %v4486, %v4486
        %v4493 = vmul.f32 %v4487, %v4487
        %v4494 = vmul.f32 %v4488, %v4488
        %v4495 = vmul.f32 %v4489, %v4489
        %v4496 = vmul.f32 %v4490, %v4490
        %v4497 = vmul.f32 %v4491, %v4491
        %v4498 = vsel %vm1075, %v4492, 0.0
        %4499 = vadd.xlane.f32.xlu0 %v4498
        %v4500 = vpop.xlane.xlu0 %4499
        %v4501 = vsel %vm1075, %v4493, 0.0
        %4502 = vadd.xlane.f32.xlu0 %v4501
        %v4503 = vpop.xlane.xlu0 %4502
        %v4504 = vsel %vm1075, %v4494, 0.0
        %4505 = vadd.xlane.f32.xlu0 %v4504
        %v4506 = vpop.xlane.xlu0 %4505
        %v4507 = vsel %vm1075, %v4495, 0.0
        %4508 = vadd.xlane.f32.xlu0 %v4507
        %v4509 = vpop.xlane.xlu0 %4508
        %v4510 = vsel %vm1075, %v4496, 0.0
        %4511 = vadd.xlane.f32.xlu0 %v4510
        %v4512 = vpop.xlane.xlu0 %4511
        %v4513 = vsel %vm1075, %v4497, 0.0
        %4514 = vadd.xlane.f32.xlu0 %v4513
        %v4515 = vpop.xlane.xlu0 %4514
        %v4516 = vmul.f32 %v4500, %v2020
        %v4517 = vmul.f32 %v4503, %v2020
        %v4518 = vmul.f32 %v4506, %v2020
        %v4519 = vmul.f32 %v4509, %v2020
        %v4520 = vmul.f32 %v4512, %v2020
        %v4521 = vmul.f32 %v4515, %v2020
        %v4522 = vadd.f32 %v4516, 1e-05
        %v4523 = vadd.f32 %v4517, 1e-05
        %v4524 = vadd.f32 %v4518, 1e-05
        %v4525 = vadd.f32 %v4519, 1e-05
        %v4526 = vadd.f32 %v4520, 1e-05
        %v4527 = vadd.f32 %v4521, 1e-05
        %v4528 = vrsqrt.pop %v4522
        %v4529 = vmul.f32 %v4528, %v4522
        %v4530 = vmul.f32 %v4529, %v4528
        %v4531 = vmul.f32 0.5, %v4530
        %v4532 = vsub.f32 1.5, %v4531
        %v4533 = vmul.f32 %v4528, %v4532
        %vm4534 = vweird.f32 %v4522
        %vm4535 = vweird.f32 %v4528
        %vm4536 = vmor %vm4534, %vm4535
        %v4537 = vsel %vm4536, %v4528, %v4533
        %v4538 = vrsqrt.pop %v4523
        %v4539 = vmul.f32 %v4538, %v4523
        %v4540 = vmul.f32 %v4539, %v4538
        %v4541 = vmul.f32 0.5, %v4540
        %v4542 = vsub.f32 1.5, %v4541
        %v4543 = vmul.f32 %v4538, %v4542
        %vm4544 = vweird.f32 %v4523
        %vm4545 = vweird.f32 %v4538
        %vm4546 = vmor %vm4544, %vm4545
        %v4547 = vsel %vm4546, %v4538, %v4543
        %v4548 = vrsqrt.pop %v4524
        %v4549 = vmul.f32 %v4548, %v4524
        %v4550 = vmul.f32 %v4549, %v4548
        %v4551 = vmul.f32 0.5, %v4550
        %v4552 = vsub.f32 1.5, %v4551
        %v4553 = vmul.f32 %v4548, %v4552
        %vm4554 = vweird.f32 %v4524
        %vm4555 = vweird.f32 %v4548
        %vm4556 = vmor %vm4554, %vm4555
        %v4557 = vsel %vm4556, %v4548, %v4553
        %v4558 = vrsqrt.pop %v4525
        %v4559 = vmul.f32 %v4558, %v4525
        %v4560 = vmul.f32 %v4559, %v4558
        %v4561 = vmul.f32 0.5, %v4560
        %v4562 = vsub.f32 1.5, %v4561
        %v4563 = vmul.f32 %v4558, %v4562
        %vm4564 = vweird.f32 %v4525
        %vm4565 = vweird.f32 %v4558
        %vm4566 = vmor %vm4564, %vm4565
        %v4567 = vsel %vm4566, %v4558, %v4563
        %v4568 = vrsqrt.pop %v4526
        %v4569 = vmul.f32 %v4568, %v4526
        %v4570 = vmul.f32 %v4569, %v4568
        %v4571 = vmul.f32 0.5, %v4570
        %v4572 = vsub.f32 1.5, %v4571
        %v4573 = vmul.f32 %v4568, %v4572
        %vm4574 = vweird.f32 %v4526
        %vm4575 = vweird.f32 %v4568
        %vm4576 = vmor %vm4574, %vm4575
        %v4577 = vsel %vm4576, %v4568, %v4573
        %v4578 = vrsqrt.pop %v4527
        %v4579 = vmul.f32 %v4578, %v4527
        %v4580 = vmul.f32 %v4579, %v4578
        %v4581 = vmul.f32 0.5, %v4580
        %v4582 = vsub.f32 1.5, %v4581
        %v4583 = vmul.f32 %v4578, %v4582
        %vm4584 = vweird.f32 %v4527
        %vm4585 = vweird.f32 %v4578
        %vm4586 = vmor %vm4584, %vm4585
        %v4587 = vsel %vm4586, %v4578, %v4583
        %v4588 = vmul.f32 %v4486, %v4537
        %v4589 = vmul.f32 %v4487, %v4547
        %v4590 = vmul.f32 %v4488, %v4557
        %v4591 = vmul.f32 %v4489, %v4567
        %v4592 = vmul.f32 %v4490, %v4577
        %v4593 = vmul.f32 %v4491, %v4587
        %v4595 = vperm.slane %v4459, 0
        %v4597 = vmul.f32 %v4588, %v4595
        %v4598 = vmul.f32 %v4589, %v4595
        %v4599 = vmul.f32 %v4590, %v4595
        %v4600 = vmul.f32 %v4591, %v4595
        %v4601 = vmul.f32 %v4592, %v4595
        %v4602 = vmul.f32 %v4593, %v4595
        %v4604 = vperm.slane %v4461, 0
        %v4606 = vadd.f32 %v4597, %v4604
        %v4607 = vadd.f32 %v4598, %v4604
        %v4608 = vadd.f32 %v4599, %v4604
        %v4609 = vadd.f32 %v4600, %v4604
        %v4610 = vadd.f32 %v4601, %v4604
        %v4611 = vadd.f32 %v4602, %v4604
        %v4612 = vpack.c.bf16 %v4607, %v4606
        %v4613 = vpack.c.bf16 %v4609, %v4608
        %v4614 = vpack.c.bf16 %v4611, %v4610
        %s4615 = scalar_lea.vmem [#allocation10], 16
        %v4616 = vld [vmem:[%s4615] sm:$0xf]
        %v4617 = vld [vmem:[%s4615 + $0x4] sm:$0xf]
        %v4618 = vld [vmem:[%s4615 + $0x8] sm:$0xf]
        %v4619 = vld [vmem:[%s4615 + $0xc] sm:$0xf]
        %s4620 = scalar_lea.vmem %s10, 1
        %v4621 = vld [vmem:[%s4620] sm:$0x1]
        %v4623 = vperm.slane %v4621, 0
        %v4629 = vunpack.c.l.b16 %v4616
        %v4630 = vunpack.c.l.b16 %v4617
        %v4631 = vunpack.c.l.b16 %v4618
        %v4632 = vunpack.c.l.b16 %v4619
        %v4633 = vpack.c.b16 %v4630, %v4629
        %v4634 = vpack.c.b16 %v4632, %v4631
        %v4638 = vsel %vm1075, %v4612, 0
        %v4641 = vsel %vm1075, %v4613, 0
        %v4644 = vsel %vm1075, %v4614, 0
        %4646 = vmatpush.bf16.msra.mxu0 0
        %4647 = vmatpush.bf16.msra.mxu0 0
        %4648 = vmatpush.bf16.msra.mxu0 0
        %4649 = vmatpush.bf16.msra.mxu0 0
        %4650 = vmatpush.bf16.msra.mxu0 0
        %4651 = vmatpush.bf16.msra.mxu0 0
        %4652 = vmatpush.bf16.msra.mxu0 %v4634
        %4653 = vmatpush.bf16.msra.mxu0 %v4633
        %4654 = vmatmul.bf16.gmra.mxu0 %v4638
        %v4655 = vpop.f32.mrf.mxu0
        %v4656 = vadd.f32 %v4623, %v4655
        %v4657 = vpop.f32.mrf.mxu0
        %v4658 = vadd.f32 %v4623, %v4657
        %4659 = vmatmul.bf16.gmra.mxu0 %v4641
        %v4660 = vpop.f32.mrf.mxu0
        %v4661 = vadd.f32 %v4623, %v4660
        %v4662 = vpop.f32.mrf.mxu0
        %v4663 = vadd.f32 %v4623, %v4662
        %4664 = vmatmul.bf16.gmra.mxu0 %v4644
        %v4665 = vpop.f32.mrf.mxu0
        %v4666 = vadd.f32 %v4623, %v4665
        %v4667 = vpop.f32.mrf.mxu0
        %v4668 = vadd.f32 %v4623, %v4667
        %4669 = vdwg.mxu0
        %s4670 = scalar_lea.vmem [#allocation11], 16
        %v4671 = vld [vmem:[%s4670] sm:$0xf]
        %v4672 = vld [vmem:[%s4670 + $0x4] sm:$0xf]
        %v4673 = vld [vmem:[%s4670 + $0x8] sm:$0xf]
        %v4674 = vld [vmem:[%s4670 + $0xc] sm:$0xf]
        %s4675 = scalar_lea.vmem %s12, 1
        %v4676 = vld [vmem:[%s4675] sm:$0x1]
        %v4678 = vperm.slane %v4676, 0
        %v4684 = vunpack.c.l.b16 %v4671
        %v4685 = vunpack.c.l.b16 %v4672
        %v4686 = vunpack.c.l.b16 %v4673
        %v4687 = vunpack.c.l.b16 %v4674
        %v4688 = vpack.c.b16 %v4685, %v4684
        %v4689 = vpack.c.b16 %v4687, %v4686
        %4692 = vmatpush.bf16.msra.mxu0 0
        %4693 = vmatpush.bf16.msra.mxu0 0
        %4694 = vmatpush.bf16.msra.mxu0 0
        %4695 = vmatpush.bf16.msra.mxu0 0
        %4696 = vmatpush.bf16.msra.mxu0 0
        %4697 = vmatpush.bf16.msra.mxu0 0
        %4698 = vmatpush.bf16.msra.mxu0 %v4689
        %4699 = vmatpush.bf16.msra.mxu0 %v4688
        %4700 = vmatmul.bf16.gmra.mxu0 %v2231
        %v4701 = vpop.f32.mrf.mxu0
        %v4702 = vadd.f32 %v4678, %v4701
        %v4703 = vpop.f32.mrf.mxu0
        %v4704 = vadd.f32 %v4678, %v4703
        %4705 = vdwg.mxu0
        %s4706 = scalar_lea.vmem [#allocation13], 16
        %v4707 = vld [vmem:[%s4706] sm:$0xf]
        %v4708 = vld [vmem:[%s4706 + $0x4] sm:$0xf]
        %v4709 = vld [vmem:[%s4706 + $0x8] sm:$0xf]
        %v4710 = vld [vmem:[%s4706 + $0xc] sm:$0xf]
        %v4711 = vpack.c.bf16 %v4656, %v4656
        %v4712 = vpack.c.bf16 %v4658, %v4658
        %v4713 = vpack.c.bf16 %v4661, %v4661
        %v4714 = vpack.c.bf16 %v4663, %v4663
        %v4715 = vpack.c.bf16 %v4666, %v4666
        %v4716 = vpack.c.bf16 %v4668, %v4668
        %v4717 = vpack.c.bf16 %v4702, %v4702
        %v4718 = vpack.c.bf16 %v4704, %v4704
        %v4725 = vunpack.c.l.b16 %v4711
        %v4726 = vunpack.c.l.b16 %v4712
        %v4727 = vunpack.c.l.b16 %v4713
        %v4728 = vunpack.c.l.b16 %v4714
        %v4729 = vunpack.c.l.b16 %v4715
        %v4730 = vunpack.c.l.b16 %v4716
        %v4731 = vpack.c.b16 %v4726, %v4725
        %v4732 = vpack.c.b16 %v4728, %v4727
        %v4733 = vpack.c.b16 %v4730, %v4729
        %v4736 = vunpack.c.l.b16 %v4717
        %v4737 = vunpack.c.l.b16 %v4718
        %v4738 = vpack.c.b16 %v4737, %v4736
        %v4740 = vsel %vm1140, %v4731, 0
        %v4743 = vsel %vm1140, %v4732, 0
        %v4746 = vsel %vm1140, %v4733, 0
        %v4749 = vsel %vm1140, %v4738, 0
        %4751 = vmatpush.bf16.xpose.msra.mxu0 0
        %4752 = vmatpush.bf16.xpose.msra.mxu0 0
        %4753 = vmatpush.bf16.xpose.msra.mxu0 0
        %4754 = vmatpush.bf16.xpose.msra.mxu0 0
        %4755 = vmatpush.bf16.xpose.msra.mxu0 0
        %4756 = vmatpush.bf16.xpose.msra.mxu0 0
        %4757 = vmatpush.bf16.xpose.msra.mxu0 0
        %4758 = vmatpush.bf16.xpose.msra.mxu0 %v4749
        %4759 = vmatmul.bf16.gmra.mxu0 %v4740
        %v4760 = vpop.f32.mrf.mxu0
        %v4761 = vadd.f32 0.0, %v4760
        %v4762 = vpop.f32.mrf.mxu0
        %v4763 = vadd.f32 0.0, %v4762
        %4764 = vmatmul.bf16.gmra.mxu0 %v4743
        %v4765 = vpop.f32.mrf.mxu0
        %v4766 = vadd.f32 0.0, %v4765
        %v4767 = vpop.f32.mrf.mxu0
        %v4768 = vadd.f32 0.0, %v4767
        %4769 = vmatmul.bf16.gmra.mxu0 %v4746
        %v4770 = vpop.f32.mrf.mxu0
        %v4771 = vadd.f32 0.0, %v4770
        %v4772 = vpop.f32.mrf.mxu0
        %v4773 = vadd.f32 0.0, %v4772
        %4774 = vdwg.mxu0
        %v4775 = vmul.f32 %v4761, 0.35355338
        %v4776 = vmul.f32 %v4763, 0.35355338
        %v4777 = vmul.f32 %v4766, 0.35355338
        %v4778 = vmul.f32 %v4768, 0.35355338
        %v4779 = vmul.f32 %v4771, 0.35355338
        %v4780 = vmul.f32 %v4773, 0.35355338
        %v4781 = vadd.f32 %v4775, %v2322
        %v4782 = vadd.f32 %v4776, %v2322
        %v4783 = vadd.f32 %v4777, %v2322
        %v4784 = vadd.f32 %v4778, %v2322
        %v4785 = vadd.f32 %v4779, %v2322
        %v4786 = vadd.f32 %v4780, %v2322
        %v4787 = vsel %vm1916, %v4781, -inf
        %4788 = vmax.xlane.f32.xlu0 %v4787
        %v4789 = vpop.xlane.xlu0 %4788
        %v4790 = vsel %vm1916, %v4782, -inf
        %4791 = vmax.xlane.f32.xlu0 %v4790
        %v4792 = vpop.xlane.xlu0 %4791
        %v4793 = vsel %vm1916, %v4783, -inf
        %4794 = vmax.xlane.f32.xlu0 %v4793
        %v4795 = vpop.xlane.xlu0 %4794
        %v4796 = vsel %vm1916, %v4784, -inf
        %4797 = vmax.xlane.f32.xlu0 %v4796
        %v4798 = vpop.xlane.xlu0 %4797
        %v4799 = vsel %vm1916, %v4785, -inf
        %4800 = vmax.xlane.f32.xlu0 %v4799
        %v4801 = vpop.xlane.xlu0 %4800
        %v4802 = vsel %vm1916, %v4786, -inf
        %4803 = vmax.xlane.f32.xlu0 %v4802
        %v4804 = vpop.xlane.xlu0 %4803
        %v4805 = vsub.f32 %v4781, %v4789
        %v4806 = vsub.f32 %v4782, %v4792
        %v4807 = vsub.f32 %v4783, %v4795
        %v4808 = vsub.f32 %v4784, %v4798
        %v4809 = vsub.f32 %v4785, %v4801
        %v4810 = vsub.f32 %v4786, %v4804
        %v4811 = vmul.f32 %v4805, 1.442695
        %v4812 = vpow.pop %v4811
        %v4813 = vmul.f32 %v4806, 1.442695
        %v4814 = vpow.pop %v4813
        %v4815 = vmul.f32 %v4807, 1.442695
        %v4816 = vpow.pop %v4815
        %v4817 = vmul.f32 %v4808, 1.442695
        %v4818 = vpow.pop %v4817
        %v4819 = vmul.f32 %v4809, 1.442695
        %v4820 = vpow.pop %v4819
        %v4821 = vmul.f32 %v4810, 1.442695
        %v4822 = vpow.pop %v4821
        %v4823 = vsel %vm1916, %v4812, 0.0
        %4824 = vadd.xlane.f32.xlu0 %v4823
        %v4825 = vpop.xlane.xlu0 %4824
        %v4826 = vsel %vm1916, %v4814, 0.0
        %4827 = vadd.xlane.f32.xlu0 %v4826
        %v4828 = vpop.xlane.xlu0 %4827
        %v4829 = vsel %vm1916, %v4816, 0.0
        %4830 = vadd.xlane.f32.xlu0 %v4829
        %v4831 = vpop.xlane.xlu0 %4830
        %v4832 = vsel %vm1916, %v4818, 0.0
        %4833 = vadd.xlane.f32.xlu0 %v4832
        %v4834 = vpop.xlane.xlu0 %4833
        %v4835 = vsel %vm1916, %v4820, 0.0
        %4836 = vadd.xlane.f32.xlu0 %v4835
        %v4837 = vpop.xlane.xlu0 %4836
        %v4838 = vsel %vm1916, %v4822, 0.0
        %4839 = vadd.xlane.f32.xlu0 %v4838
        %v4840 = vpop.xlane.xlu0 %4839
        %v4841 = vrcp.pop %v4825
        %v4842 = vrcp.pop %v4828
        %v4843 = vrcp.pop %v4831
        %v4844 = vrcp.pop %v4834
        %v4845 = vrcp.pop %v4837
        %v4846 = vrcp.pop %v4840
        %v4847 = vmul.f32 %v4812, %v4841
        %v4848 = vmul.f32 %v4814, %v4842
        %v4849 = vmul.f32 %v4816, %v4843
        %v4850 = vmul.f32 %v4818, %v4844
        %v4851 = vmul.f32 %v4820, %v4845
        %v4852 = vmul.f32 %v4822, %v4846
        %v4853 = vpack.c.bf16 %v4848, %v4847
        %v4854 = vpack.c.bf16 %v4850, %v4849
        %v4855 = vpack.c.bf16 %v4852, %v4851
        %4856 = vrot.lane.b32.xlu0 %v4738, 96
        %v4857 = vpop.permute.xlu0 %4856
        %v4860 = vsel %vm1916, %v4853, 0
        %v4863 = vsel %vm1916, %v4854, 0
        %v4866 = vsel %vm1916, %v4855, 0
        %4868 = vmatpush.bf16.msra.mxu0 0
        %4869 = vmatpush.bf16.msra.mxu0 0
        %4870 = vmatpush.bf16.msra.mxu0 0
        %4871 = vmatpush.bf16.msra.mxu0 0
        %4872 = vmatpush.bf16.msra.mxu0 0
        %4873 = vmatpush.bf16.msra.mxu0 0
        %4874 = vmatpush.bf16.msra.mxu0 0
        %4875 = vmatpush.bf16.msra.mxu0 %v4857
        %4876 = vmatmul.bf16.gmra.mxu0 %v4860
        %v4877 = vpop.f32.mrf.mxu0
        %v4878 = vadd.f32 0.0, %v4877
        %v4879 = vpop.f32.mrf.mxu0
        %v4880 = vadd.f32 0.0, %v4879
        %4881 = vmatmul.bf16.gmra.mxu0 %v4863
        %v4882 = vpop.f32.mrf.mxu0
        %v4883 = vadd.f32 0.0, %v4882
        %v4884 = vpop.f32.mrf.mxu0
        %v4885 = vadd.f32 0.0, %v4884
        %4886 = vmatmul.bf16.gmra.mxu0 %v4866
        %v4887 = vpop.f32.mrf.mxu0
        %v4888 = vadd.f32 0.0, %v4887
        %v4889 = vpop.f32.mrf.mxu0
        %v4890 = vadd.f32 0.0, %v4889
        %4891 = vdwg.mxu0
        %4892 = vrot.lane.b32.xlu0 %v4731, 120
        %v4893 = vpop.permute.xlu0 %4892
        %4894 = vrot.lane.b32.xlu0 %v4732, 120
        %v4895 = vpop.permute.xlu0 %4894
        %4896 = vrot.lane.b32.xlu0 %v4733, 120
        %v4897 = vpop.permute.xlu0 %4896
        %4898 = vrot.lane.b32.xlu0 %v4738, 120
        %v4899 = vpop.permute.xlu0 %4898
        %v4901 = vsel %vm1140, %v4893, 0
        %v4904 = vsel %vm1140, %v4895, 0
        %v4907 = vsel %vm1140, %v4897, 0
        %v4910 = vsel %vm1140, %v4899, 0
        %4912 = vmatpush.bf16.xpose.msra.mxu0 0
        %4913 = vmatpush.bf16.xpose.msra.mxu0 0
        %4914 = vmatpush.bf16.xpose.msra.mxu0 0
        %4915 = vmatpush.bf16.xpose.msra.mxu0 0
        %4916 = vmatpush.bf16.xpose.msra.mxu0 0
        %4917 = vmatpush.bf16.xpose.msra.mxu0 0
        %4918 = vmatpush.bf16.xpose.msra.mxu0 0
        %4919 = vmatpush.bf16.xpose.msra.mxu0 %v4910
        %4920 = vmatmul.bf16.gmra.mxu0 %v4901
        %v4921 = vpop.f32.mrf.mxu0
        %v4922 = vadd.f32 0.0, %v4921
        %v4923 = vpop.f32.mrf.mxu0
        %v4924 = vadd.f32 0.0, %v4923
        %4925 = vmatmul.bf16.gmra.mxu0 %v4904
        %v4926 = vpop.f32.mrf.mxu0
        %v4927 = vadd.f32 0.0, %v4926
        %v4928 = vpop.f32.mrf.mxu0
        %v4929 = vadd.f32 0.0, %v4928
        %4930 = vmatmul.bf16.gmra.mxu0 %v4907
        %v4931 = vpop.f32.mrf.mxu0
        %v4932 = vadd.f32 0.0, %v4931
        %v4933 = vpop.f32.mrf.mxu0
        %v4934 = vadd.f32 0.0, %v4933
        %4935 = vdwg.mxu0
        %v4936 = vmul.f32 %v4922, 0.35355338
        %v4937 = vmul.f32 %v4924, 0.35355338
        %v4938 = vmul.f32 %v4927, 0.35355338
        %v4939 = vmul.f32 %v4929, 0.35355338
        %v4940 = vmul.f32 %v4932, 0.35355338
        %v4941 = vmul.f32 %v4934, 0.35355338
        %v4942 = vadd.f32 %v4936, %v2322
        %v4943 = vadd.f32 %v4937, %v2322
        %v4944 = vadd.f32 %v4938, %v2322
        %v4945 = vadd.f32 %v4939, %v2322
        %v4946 = vadd.f32 %v4940, %v2322
        %v4947 = vadd.f32 %v4941, %v2322
        %v4948 = vsel %vm1916, %v4942, -inf
        %4949 = vmax.xlane.f32.xlu0 %v4948
        %v4950 = vpop.xlane.xlu0 %4949
        %v4951 = vsel %vm1916, %v4943, -inf
        %4952 = vmax.xlane.f32.xlu0 %v4951
        %v4953 = vpop.xlane.xlu0 %4952
        %v4954 = vsel %vm1916, %v4944, -inf
        %4955 = vmax.xlane.f32.xlu0 %v4954
        %v4956 = vpop.xlane.xlu0 %4955
        %v4957 = vsel %vm1916, %v4945, -inf
        %4958 = vmax.xlane.f32.xlu0 %v4957
        %v4959 = vpop.xlane.xlu0 %4958
        %v4960 = vsel %vm1916, %v4946, -inf
        %4961 = vmax.xlane.f32.xlu0 %v4960
        %v4962 = vpop.xlane.xlu0 %4961
        %v4963 = vsel %vm1916, %v4947, -inf
        %4964 = vmax.xlane.f32.xlu0 %v4963
        %v4965 = vpop.xlane.xlu0 %4964
        %v4966 = vsub.f32 %v4942, %v4950
        %v4967 = vsub.f32 %v4943, %v4953
        %v4968 = vsub.f32 %v4944, %v4956
        %v4969 = vsub.f32 %v4945, %v4959
        %v4970 = vsub.f32 %v4946, %v4962
        %v4971 = vsub.f32 %v4947, %v4965
        %v4972 = vmul.f32 %v4966, 1.442695
        %v4973 = vpow.pop %v4972
        %v4974 = vmul.f32 %v4967, 1.442695
        %v4975 = vpow.pop %v4974
        %v4976 = vmul.f32 %v4968, 1.442695
        %v4977 = vpow.pop %v4976
        %v4978 = vmul.f32 %v4969, 1.442695
        %v4979 = vpow.pop %v4978
        %v4980 = vmul.f32 %v4970, 1.442695
        %v4981 = vpow.pop %v4980
        %v4982 = vmul.f32 %v4971, 1.442695
        %v4983 = vpow.pop %v4982
        %v4984 = vsel %vm1916, %v4973, 0.0
        %4985 = vadd.xlane.f32.xlu0 %v4984
        %v4986 = vpop.xlane.xlu0 %4985
        %v4987 = vsel %vm1916, %v4975, 0.0
        %4988 = vadd.xlane.f32.xlu0 %v4987
        %v4989 = vpop.xlane.xlu0 %4988
        %v4990 = vsel %vm1916, %v4977, 0.0
        %4991 = vadd.xlane.f32.xlu0 %v4990
        %v4992 = vpop.xlane.xlu0 %4991
        %v4993 = vsel %vm1916, %v4979, 0.0
        %4994 = vadd.xlane.f32.xlu0 %v4993
        %v4995 = vpop.xlane.xlu0 %4994
        %v4996 = vsel %vm1916, %v4981, 0.0
        %4997 = vadd.xlane.f32.xlu0 %v4996
        %v4998 = vpop.xlane.xlu0 %4997
        %v4999 = vsel %vm1916, %v4983, 0.0
        %5000 = vadd.xlane.f32.xlu0 %v4999
        %v5001 = vpop.xlane.xlu0 %5000
        %v5002 = vrcp.pop %v4986
        %v5003 = vrcp.pop %v4989
        %v5004 = vrcp.pop %v4992
        %v5005 = vrcp.pop %v4995
        %v5006 = vrcp.pop %v4998
        %v5007 = vrcp.pop %v5001
        %v5008 = vmul.f32 %v4973, %v5002
        %v5009 = vmul.f32 %v4975, %v5003
        %v5010 = vmul.f32 %v4977, %v5004
        %v5011 = vmul.f32 %v4979, %v5005
        %v5012 = vmul.f32 %v4981, %v5006
        %v5013 = vmul.f32 %v4983, %v5007
        %v5014 = vpack.c.bf16 %v5009, %v5008
        %v5015 = vpack.c.bf16 %v5011, %v5010
        %v5016 = vpack.c.bf16 %v5013, %v5012
        %5017 = vrot.lane.b32.xlu0 %v4738, 88
        %v5018 = vpop.permute.xlu0 %5017
        %v5021 = vsel %vm1916, %v5014, 0
        %v5024 = vsel %vm1916, %v5015, 0
        %v5027 = vsel %vm1916, %v5016, 0
        %5029 = vmatpush.bf16.msra.mxu0 0
        %5030 = vmatpush.bf16.msra.mxu0 0
        %5031 = vmatpush.bf16.msra.mxu0 0
        %5032 = vmatpush.bf16.msra.mxu0 0
        %5033 = vmatpush.bf16.msra.mxu0 0
        %5034 = vmatpush.bf16.msra.mxu0 0
        %5035 = vmatpush.bf16.msra.mxu0 0
        %5036 = vmatpush.bf16.msra.mxu0 %v5018
        %5037 = vmatmul.bf16.gmra.mxu0 %v5021
        %v5038 = vpop.f32.mrf.mxu0
        %v5039 = vadd.f32 0.0, %v5038
        %v5040 = vpop.f32.mrf.mxu0
        %v5041 = vadd.f32 0.0, %v5040
        %5042 = vmatmul.bf16.gmra.mxu0 %v5024
        %v5043 = vpop.f32.mrf.mxu0
        %v5044 = vadd.f32 0.0, %v5043
        %v5045 = vpop.f32.mrf.mxu0
        %v5046 = vadd.f32 0.0, %v5045
        %5047 = vmatmul.bf16.gmra.mxu0 %v5027
        %v5048 = vpop.f32.mrf.mxu0
        %v5049 = vadd.f32 0.0, %v5048
        %v5050 = vpop.f32.mrf.mxu0
        %v5051 = vadd.f32 0.0, %v5050
        %5052 = vdwg.mxu0
        %5053 = vrot.lane.b32.xlu0 %v4731, 112
        %v5054 = vpop.permute.xlu0 %5053
        %5055 = vrot.lane.b32.xlu0 %v4732, 112
        %v5056 = vpop.permute.xlu0 %5055
        %5057 = vrot.lane.b32.xlu0 %v4733, 112
        %v5058 = vpop.permute.xlu0 %5057
        %5059 = vrot.lane.b32.xlu0 %v4738, 112
        %v5060 = vpop.permute.xlu0 %5059
        %v5062 = vsel %vm1140, %v5054, 0
        %v5065 = vsel %vm1140, %v5056, 0
        %v5068 = vsel %vm1140, %v5058, 0
        %v5071 = vsel %vm1140, %v5060, 0
        %5073 = vmatpush.bf16.xpose.msra.mxu0 0
        %5074 = vmatpush.bf16.xpose.msra.mxu0 0
        %5075 = vmatpush.bf16.xpose.msra.mxu0 0
        %5076 = vmatpush.bf16.xpose.msra.mxu0 0
        %5077 = vmatpush.bf16.xpose.msra.mxu0 0
        %5078 = vmatpush.bf16.xpose.msra.mxu0 0
        %5079 = vmatpush.bf16.xpose.msra.mxu0 0
        %5080 = vmatpush.bf16.xpose.msra.mxu0 %v5071
        %5081 = vmatmul.bf16.gmra.mxu0 %v5062
        %v5082 = vpop.f32.mrf.mxu0
        %v5083 = vadd.f32 0.0, %v5082
        %v5084 = vpop.f32.mrf.mxu0
        %v5085 = vadd.f32 0.0, %v5084
        %5086 = vmatmul.bf16.gmra.mxu0 %v5065
        %v5087 = vpop.f32.mrf.mxu0
        %v5088 = vadd.f32 0.0, %v5087
        %v5089 = vpop.f32.mrf.mxu0
        %v5090 = vadd.f32 0.0, %v5089
        %5091 = vmatmul.bf16.gmra.mxu0 %v5068
        %v5092 = vpop.f32.mrf.mxu0
        %v5093 = vadd.f32 0.0, %v5092
        %v5094 = vpop.f32.mrf.mxu0
        %v5095 = vadd.f32 0.0, %v5094
        %5096 = vdwg.mxu0
        %v5097 = vmul.f32 %v5083, 0.35355338
        %v5098 = vmul.f32 %v5085, 0.35355338
        %v5099 = vmul.f32 %v5088, 0.35355338
        %v5100 = vmul.f32 %v5090, 0.35355338
        %v5101 = vmul.f32 %v5093, 0.35355338
        %v5102 = vmul.f32 %v5095, 0.35355338
        %v5103 = vadd.f32 %v5097, %v2322
        %v5104 = vadd.f32 %v5098, %v2322
        %v5105 = vadd.f32 %v5099, %v2322
        %v5106 = vadd.f32 %v5100, %v2322
        %v5107 = vadd.f32 %v5101, %v2322
        %v5108 = vadd.f32 %v5102, %v2322
        %v5109 = vsel %vm1916, %v5103, -inf
        %5110 = vmax.xlane.f32.xlu0 %v5109
        %v5111 = vpop.xlane.xlu0 %5110
        %v5112 = vsel %vm1916, %v5104, -inf
        %5113 = vmax.xlane.f32.xlu0 %v5112
        %v5114 = vpop.xlane.xlu0 %5113
        %v5115 = vsel %vm1916, %v5105, -inf
        %5116 = vmax.xlane.f32.xlu0 %v5115
        %v5117 = vpop.xlane.xlu0 %5116
        %v5118 = vsel %vm1916, %v5106, -inf
        %5119 = vmax.xlane.f32.xlu0 %v5118
        %v5120 = vpop.xlane.xlu0 %5119
        %v5121 = vsel %vm1916, %v5107, -inf
        %5122 = vmax.xlane.f32.xlu0 %v5121
        %v5123 = vpop.xlane.xlu0 %5122
        %v5124 = vsel %vm1916, %v5108, -inf
        %5125 = vmax.xlane.f32.xlu0 %v5124
        %v5126 = vpop.xlane.xlu0 %5125
        %v5127 = vsub.f32 %v5103, %v5111
        %v5128 = vsub.f32 %v5104, %v5114
        %v5129 = vsub.f32 %v5105, %v5117
        %v5130 = vsub.f32 %v5106, %v5120
        %v5131 = vsub.f32 %v5107, %v5123
        %v5132 = vsub.f32 %v5108, %v5126
        %v5133 = vmul.f32 %v5127, 1.442695
        %v5134 = vpow.pop %v5133
        %v5135 = vmul.f32 %v5128, 1.442695
        %v5136 = vpow.pop %v5135
        %v5137 = vmul.f32 %v5129, 1.442695
        %v5138 = vpow.pop %v5137
        %v5139 = vmul.f32 %v5130, 1.442695
        %v5140 = vpow.pop %v5139
        %v5141 = vmul.f32 %v5131, 1.442695
        %v5142 = vpow.pop %v5141
        %v5143 = vmul.f32 %v5132, 1.442695
        %v5144 = vpow.pop %v5143
        %v5145 = vsel %vm1916, %v5134, 0.0
        %5146 = vadd.xlane.f32.xlu0 %v5145
        %v5147 = vpop.xlane.xlu0 %5146
        %v5148 = vsel %vm1916, %v5136, 0.0
        %5149 = vadd.xlane.f32.xlu0 %v5148
        %v5150 = vpop.xlane.xlu0 %5149
        %v5151 = vsel %vm1916, %v5138, 0.0
        %5152 = vadd.xlane.f32.xlu0 %v5151
        %v5153 = vpop.xlane.xlu0 %5152
        %v5154 = vsel %vm1916, %v5140, 0.0
        %5155 = vadd.xlane.f32.xlu0 %v5154
        %v5156 = vpop.xlane.xlu0 %5155
        %v5157 = vsel %vm1916, %v5142, 0.0
        %5158 = vadd.xlane.f32.xlu0 %v5157
        %v5159 = vpop.xlane.xlu0 %5158
        %v5160 = vsel %vm1916, %v5144, 0.0
        %5161 = vadd.xlane.f32.xlu0 %v5160
        %v5162 = vpop.xlane.xlu0 %5161
        %v5163 = vrcp.pop %v5147
        %v5164 = vrcp.pop %v5150
        %v5165 = vrcp.pop %v5153
        %v5166 = vrcp.pop %v5156
        %v5167 = vrcp.pop %v5159
        %v5168 = vrcp.pop %v5162
        %v5169 = vmul.f32 %v5134, %v5163
        %v5170 = vmul.f32 %v5136, %v5164
        %v5171 = vmul.f32 %v5138, %v5165
        %v5172 = vmul.f32 %v5140, %v5166
        %v5173 = vmul.f32 %v5142, %v5167
        %v5174 = vmul.f32 %v5144, %v5168
        %v5175 = vpack.c.bf16 %v5170, %v5169
        %v5176 = vpack.c.bf16 %v5172, %v5171
        %v5177 = vpack.c.bf16 %v5174, %v5173
        %5178 = vrot.lane.b32.xlu0 %v4738, 80
        %v5179 = vpop.permute.xlu0 %5178
        %v5182 = vsel %vm1916, %v5175, 0
        %v5185 = vsel %vm1916, %v5176, 0
        %v5188 = vsel %vm1916, %v5177, 0
        %5190 = vmatpush.bf16.msra.mxu0 0
        %5191 = vmatpush.bf16.msra.mxu0 0
        %5192 = vmatpush.bf16.msra.mxu0 0
        %5193 = vmatpush.bf16.msra.mxu0 0
        %5194 = vmatpush.bf16.msra.mxu0 0
        %5195 = vmatpush.bf16.msra.mxu0 0
        %5196 = vmatpush.bf16.msra.mxu0 0
        %5197 = vmatpush.bf16.msra.mxu0 %v5179
        %5198 = vmatmul.bf16.gmra.mxu0 %v5182
        %v5199 = vpop.f32.mrf.mxu0
        %v5200 = vadd.f32 0.0, %v5199
        %v5201 = vpop.f32.mrf.mxu0
        %v5202 = vadd.f32 0.0, %v5201
        %5203 = vmatmul.bf16.gmra.mxu0 %v5185
        %v5204 = vpop.f32.mrf.mxu0
        %v5205 = vadd.f32 0.0, %v5204
        %v5206 = vpop.f32.mrf.mxu0
        %v5207 = vadd.f32 0.0, %v5206
        %5208 = vmatmul.bf16.gmra.mxu0 %v5188
        %v5209 = vpop.f32.mrf.mxu0
        %v5210 = vadd.f32 0.0, %v5209
        %v5211 = vpop.f32.mrf.mxu0
        %v5212 = vadd.f32 0.0, %v5211
        %5213 = vdwg.mxu0
        %5214 = vrot.lane.b32.xlu0 %v4731, 104
        %v5215 = vpop.permute.xlu0 %5214
        %5216 = vrot.lane.b32.xlu0 %v4732, 104
        %v5217 = vpop.permute.xlu0 %5216
        %5218 = vrot.lane.b32.xlu0 %v4733, 104
        %v5219 = vpop.permute.xlu0 %5218
        %5220 = vrot.lane.b32.xlu0 %v4738, 104
        %v5221 = vpop.permute.xlu0 %5220
        %v5223 = vsel %vm1140, %v5215, 0
        %v5226 = vsel %vm1140, %v5217, 0
        %v5229 = vsel %vm1140, %v5219, 0
        %v5232 = vsel %vm1140, %v5221, 0
        %5234 = vmatpush.bf16.xpose.msra.mxu0 0
        %5235 = vmatpush.bf16.xpose.msra.mxu0 0
        %5236 = vmatpush.bf16.xpose.msra.mxu0 0
        %5237 = vmatpush.bf16.xpose.msra.mxu0 0
        %5238 = vmatpush.bf16.xpose.msra.mxu0 0
        %5239 = vmatpush.bf16.xpose.msra.mxu0 0
        %5240 = vmatpush.bf16.xpose.msra.mxu0 0
        %5241 = vmatpush.bf16.xpose.msra.mxu0 %v5232
        %5242 = vmatmul.bf16.gmra.mxu0 %v5223
        %v5243 = vpop.f32.mrf.mxu0
        %v5244 = vadd.f32 0.0, %v5243
        %v5245 = vpop.f32.mrf.mxu0
        %v5246 = vadd.f32 0.0, %v5245
        %5247 = vmatmul.bf16.gmra.mxu0 %v5226
        %v5248 = vpop.f32.mrf.mxu0
        %v5249 = vadd.f32 0.0, %v5248
        %v5250 = vpop.f32.mrf.mxu0
        %v5251 = vadd.f32 0.0, %v5250
        %5252 = vmatmul.bf16.gmra.mxu0 %v5229
        %v5253 = vpop.f32.mrf.mxu0
        %v5254 = vadd.f32 0.0, %v5253
        %v5255 = vpop.f32.mrf.mxu0
        %v5256 = vadd.f32 0.0, %v5255
        %5257 = vdwg.mxu0
        %v5258 = vmul.f32 %v5244, 0.35355338
        %v5259 = vmul.f32 %v5246, 0.35355338
        %v5260 = vmul.f32 %v5249, 0.35355338
        %v5261 = vmul.f32 %v5251, 0.35355338
        %v5262 = vmul.f32 %v5254, 0.35355338
        %v5263 = vmul.f32 %v5256, 0.35355338
        %v5264 = vadd.f32 %v5258, %v2322
        %v5265 = vadd.f32 %v5259, %v2322
        %v5266 = vadd.f32 %v5260, %v2322
        %v5267 = vadd.f32 %v5261, %v2322
        %v5268 = vadd.f32 %v5262, %v2322
        %v5269 = vadd.f32 %v5263, %v2322
        %v5270 = vsel %vm1916, %v5264, -inf
        %5271 = vmax.xlane.f32.xlu0 %v5270
        %v5272 = vpop.xlane.xlu0 %5271
        %v5273 = vsel %vm1916, %v5265, -inf
        %5274 = vmax.xlane.f32.xlu0 %v5273
        %v5275 = vpop.xlane.xlu0 %5274
        %v5276 = vsel %vm1916, %v5266, -inf
        %5277 = vmax.xlane.f32.xlu0 %v5276
        %v5278 = vpop.xlane.xlu0 %5277
        %v5279 = vsel %vm1916, %v5267, -inf
        %5280 = vmax.xlane.f32.xlu0 %v5279
        %v5281 = vpop.xlane.xlu0 %5280
        %v5282 = vsel %vm1916, %v5268, -inf
        %5283 = vmax.xlane.f32.xlu0 %v5282
        %v5284 = vpop.xlane.xlu0 %5283
        %v5285 = vsel %vm1916, %v5269, -inf
        %5286 = vmax.xlane.f32.xlu0 %v5285
        %v5287 = vpop.xlane.xlu0 %5286
        %v5288 = vsub.f32 %v5264, %v5272
        %v5289 = vsub.f32 %v5265, %v5275
        %v5290 = vsub.f32 %v5266, %v5278
        %v5291 = vsub.f32 %v5267, %v5281
        %v5292 = vsub.f32 %v5268, %v5284
        %v5293 = vsub.f32 %v5269, %v5287
        %v5294 = vmul.f32 %v5288, 1.442695
        %v5295 = vpow.pop %v5294
        %v5296 = vmul.f32 %v5289, 1.442695
        %v5297 = vpow.pop %v5296
        %v5298 = vmul.f32 %v5290, 1.442695
        %v5299 = vpow.pop %v5298
        %v5300 = vmul.f32 %v5291, 1.442695
        %v5301 = vpow.pop %v5300
        %v5302 = vmul.f32 %v5292, 1.442695
        %v5303 = vpow.pop %v5302
        %v5304 = vmul.f32 %v5293, 1.442695
        %v5305 = vpow.pop %v5304
        %v5306 = vsel %vm1916, %v5295, 0.0
        %5307 = vadd.xlane.f32.xlu0 %v5306
        %v5308 = vpop.xlane.xlu0 %5307
        %v5309 = vsel %vm1916, %v5297, 0.0
        %5310 = vadd.xlane.f32.xlu0 %v5309
        %v5311 = vpop.xlane.xlu0 %5310
        %v5312 = vsel %vm1916, %v5299, 0.0
        %5313 = vadd.xlane.f32.xlu0 %v5312
        %v5314 = vpop.xlane.xlu0 %5313
        %v5315 = vsel %vm1916, %v5301, 0.0
        %5316 = vadd.xlane.f32.xlu0 %v5315
        %v5317 = vpop.xlane.xlu0 %5316
        %v5318 = vsel %vm1916, %v5303, 0.0
        %5319 = vadd.xlane.f32.xlu0 %v5318
        %v5320 = vpop.xlane.xlu0 %5319
        %v5321 = vsel %vm1916, %v5305, 0.0
        %5322 = vadd.xlane.f32.xlu0 %v5321
        %v5323 = vpop.xlane.xlu0 %5322
        %v5324 = vrcp.pop %v5308
        %v5325 = vrcp.pop %v5311
        %v5326 = vrcp.pop %v5314
        %v5327 = vrcp.pop %v5317
        %v5328 = vrcp.pop %v5320
        %v5329 = vrcp.pop %v5323
        %v5330 = vmul.f32 %v5295, %v5324
        %v5331 = vmul.f32 %v5297, %v5325
        %v5332 = vmul.f32 %v5299, %v5326
        %v5333 = vmul.f32 %v5301, %v5327
        %v5334 = vmul.f32 %v5303, %v5328
        %v5335 = vmul.f32 %v5305, %v5329
        %v5336 = vpack.c.bf16 %v5331, %v5330
        %v5337 = vpack.c.bf16 %v5333, %v5332
        %v5338 = vpack.c.bf16 %v5335, %v5334
        %5339 = vrot.lane.b32.xlu0 %v4738, 72
        %v5340 = vpop.permute.xlu0 %5339
        %v5343 = vsel %vm1916, %v5336, 0
        %v5346 = vsel %vm1916, %v5337, 0
        %v5349 = vsel %vm1916, %v5338, 0
        %5351 = vmatpush.bf16.msra.mxu0 0
        %5352 = vmatpush.bf16.msra.mxu0 0
        %5353 = vmatpush.bf16.msra.mxu0 0
        %5354 = vmatpush.bf16.msra.mxu0 0
        %5355 = vmatpush.bf16.msra.mxu0 0
        %5356 = vmatpush.bf16.msra.mxu0 0
        %5357 = vmatpush.bf16.msra.mxu0 0
        %5358 = vmatpush.bf16.msra.mxu0 %v5340
        %5359 = vmatmul.bf16.gmra.mxu0 %v5343
        %v5360 = vpop.f32.mrf.mxu0
        %v5361 = vadd.f32 0.0, %v5360
        %v5362 = vpop.f32.mrf.mxu0
        %v5363 = vadd.f32 0.0, %v5362
        %5364 = vmatmul.bf16.gmra.mxu0 %v5346
        %v5365 = vpop.f32.mrf.mxu0
        %v5366 = vadd.f32 0.0, %v5365
        %v5367 = vpop.f32.mrf.mxu0
        %v5368 = vadd.f32 0.0, %v5367
        %5369 = vmatmul.bf16.gmra.mxu0 %v5349
        %v5370 = vpop.f32.mrf.mxu0
        %v5371 = vadd.f32 0.0, %v5370
        %v5372 = vpop.f32.mrf.mxu0
        %v5373 = vadd.f32 0.0, %v5372
        %5374 = vdwg.mxu0
        %5381 = vrot.lane.b32.xlu0 %v5039, 8
        %v5382 = vpop.permute.xlu0 %5381
        %5383 = vrot.lane.b32.xlu0 %v5041, 8
        %v5384 = vpop.permute.xlu0 %5383
        %5385 = vrot.lane.b32.xlu0 %v5044, 8
        %v5386 = vpop.permute.xlu0 %5385
        %5387 = vrot.lane.b32.xlu0 %v5046, 8
        %v5388 = vpop.permute.xlu0 %5387
        %5389 = vrot.lane.b32.xlu0 %v5049, 8
        %v5390 = vpop.permute.xlu0 %5389
        %5391 = vrot.lane.b32.xlu0 %v5051, 8
        %v5392 = vpop.permute.xlu0 %5391
        %5405 = vrot.lane.b32.xlu0 %v5200, 16
        %v5406 = vpop.permute.xlu0 %5405
        %5407 = vrot.lane.b32.xlu0 %v5202, 16
        %v5408 = vpop.permute.xlu0 %5407
        %5409 = vrot.lane.b32.xlu0 %v5205, 16
        %v5410 = vpop.permute.xlu0 %5409
        %5411 = vrot.lane.b32.xlu0 %v5207, 16
        %v5412 = vpop.permute.xlu0 %5411
        %5413 = vrot.lane.b32.xlu0 %v5210, 16
        %v5414 = vpop.permute.xlu0 %5413
        %5415 = vrot.lane.b32.xlu0 %v5212, 16
        %v5416 = vpop.permute.xlu0 %5415
        %5429 = vrot.lane.b32.xlu0 %v5361, 24
        %v5430 = vpop.permute.xlu0 %5429
        %5431 = vrot.lane.b32.xlu0 %v5363, 24
        %v5432 = vpop.permute.xlu0 %5431
        %5433 = vrot.lane.b32.xlu0 %v5366, 24
        %v5434 = vpop.permute.xlu0 %5433
        %5435 = vrot.lane.b32.xlu0 %v5368, 24
        %v5436 = vpop.permute.xlu0 %5435
        %5437 = vrot.lane.b32.xlu0 %v5371, 24
        %v5438 = vpop.permute.xlu0 %5437
        %5439 = vrot.lane.b32.xlu0 %v5373, 24
        %v5440 = vpop.permute.xlu0 %5439
        %v5447 = vsel %vm1140, %v4878, %v5382
        %v5448 = vsel %vm1140, %v4880, %v5384
        %v5449 = vsel %vm1140, %v4883, %v5386
        %v5450 = vsel %vm1140, %v4885, %v5388
        %v5451 = vsel %vm1140, %v4888, %v5390
        %v5452 = vsel %vm1140, %v4890, %v5392
        %v5453 = vsel %vm1916, %v5447, %v5406
        %v5454 = vsel %vm1916, %v5448, %v5408
        %v5455 = vsel %vm1916, %v5449, %v5410
        %v5456 = vsel %vm1916, %v5450, %v5412
        %v5457 = vsel %vm1916, %v5451, %v5414
        %v5458 = vsel %vm1916, %v5452, %v5416
        %v5459 = vsel %vm1923, %v5453, %v5430
        %v5460 = vsel %vm1923, %v5454, %v5432
        %v5461 = vsel %vm1923, %v5455, %v5434
        %v5462 = vsel %vm1923, %v5456, %v5436
        %v5463 = vsel %vm1923, %v5457, %v5438
        %v5464 = vsel %vm1923, %v5458, %v5440
        %v5465 = vpack.c.bf16 %v5460, %v5459
        %v5466 = vpack.c.bf16 %v5462, %v5461
        %v5467 = vpack.c.bf16 %v5464, %v5463
        %v5472 = vunpack.c.l.b16 %v4707
        %v5473 = vunpack.c.l.b16 %v4708
        %v5474 = vunpack.c.l.b16 %v4709
        %v5475 = vunpack.c.l.b16 %v4710
        %v5476 = vpack.c.b16 %v5473, %v5472
        %v5477 = vpack.c.b16 %v5475, %v5474
        %v5481 = vsel %vm1075, %v5465, 0
        %v5484 = vsel %vm1075, %v5466, 0
        %v5487 = vsel %vm1075, %v5467, 0
        %5489 = vmatpush.bf16.msra.mxu0 0
        %5490 = vmatpush.bf16.msra.mxu0 0
        %5491 = vmatpush.bf16.msra.mxu0 0
        %5492 = vmatpush.bf16.msra.mxu0 0
        %5493 = vmatpush.bf16.msra.mxu0 0
        %5494 = vmatpush.bf16.msra.mxu0 0
        %5495 = vmatpush.bf16.msra.mxu0 %v5477
        %5496 = vmatpush.bf16.msra.mxu0 %v5476
        %5497 = vmatmul.bf16.gmra.mxu0 %v5481
        %v5498 = vpop.f32.mrf.mxu0
        %v5499 = vadd.f32 0.0, %v5498
        %v5500 = vpop.f32.mrf.mxu0
        %v5501 = vadd.f32 0.0, %v5500
        %5502 = vmatmul.bf16.gmra.mxu0 %v5484
        %v5503 = vpop.f32.mrf.mxu0
        %v5504 = vadd.f32 0.0, %v5503
        %v5505 = vpop.f32.mrf.mxu0
        %v5506 = vadd.f32 0.0, %v5505
        %5507 = vmatmul.bf16.gmra.mxu0 %v5487
        %v5508 = vpop.f32.mrf.mxu0
        %v5509 = vadd.f32 0.0, %v5508
        %v5510 = vpop.f32.mrf.mxu0
        %v5511 = vadd.f32 0.0, %v5510
        %5512 = vdwg.mxu0
        %v5513 = vadd.f32 %v4606, %v5499
        %v5514 = vadd.f32 %v4607, %v5501
        %v5515 = vadd.f32 %v4608, %v5504
        %v5516 = vadd.f32 %v4609, %v5506
        %v5517 = vadd.f32 %v4610, %v5509
        %v5518 = vadd.f32 %v4611, %v5511
        %s5519 = scalar_lea.vmem %s14, 1
        %v5520 = vld [vmem:[%s5519] sm:$0x1]
        %v5522 = vperm.slane %v5520, 0
        %v5524 = vadd.f32 %v5513, %v5522
        %v5525 = vadd.f32 %v5514, %v5522
        %v5526 = vadd.f32 %v5515, %v5522
        %v5527 = vadd.f32 %v5516, %v5522
        %v5528 = vadd.f32 %v5517, %v5522
        %v5529 = vadd.f32 %v5518, %v5522
        %s5530 = scalar_lea.vmem %s15, 1
        %v5531 = vld [vmem:[%s5530] sm:$0x1]
        %s5532 = scalar_lea.vmem [#allocation14], 1
        %v5533 = vld [vmem:[%s5532] sm:$0x1]
        %v5534 = vsel %vm1075, %v5524, 0.0
        %5535 = vadd.xlane.f32.xlu0 %v5534
        %v5536 = vpop.xlane.xlu0 %5535
        %v5537 = vsel %vm1075, %v5525, 0.0
        %5538 = vadd.xlane.f32.xlu0 %v5537
        %v5539 = vpop.xlane.xlu0 %5538
        %v5540 = vsel %vm1075, %v5526, 0.0
        %5541 = vadd.xlane.f32.xlu0 %v5540
        %v5542 = vpop.xlane.xlu0 %5541
        %v5543 = vsel %vm1075, %v5527, 0.0
        %5544 = vadd.xlane.f32.xlu0 %v5543
        %v5545 = vpop.xlane.xlu0 %5544
        %v5546 = vsel %vm1075, %v5528, 0.0
        %5547 = vadd.xlane.f32.xlu0 %v5546
        %v5548 = vpop.xlane.xlu0 %5547
        %v5549 = vsel %vm1075, %v5529, 0.0
        %5550 = vadd.xlane.f32.xlu0 %v5549
        %v5551 = vpop.xlane.xlu0 %5550
        %v5552 = vmul.f32 %v5536, %v2020
        %v5553 = vmul.f32 %v5539, %v2020
        %v5554 = vmul.f32 %v5542, %v2020
        %v5555 = vmul.f32 %v5545, %v2020
        %v5556 = vmul.f32 %v5548, %v2020
        %v5557 = vmul.f32 %v5551, %v2020
        %v5558 = vsub.f32 %v5524, %v5552
        %v5559 = vsub.f32 %v5525, %v5553
        %v5560 = vsub.f32 %v5526, %v5554
        %v5561 = vsub.f32 %v5527, %v5555
        %v5562 = vsub.f32 %v5528, %v5556
        %v5563 = vsub.f32 %v5529, %v5557
        %v5564 = vmul.f32 %v5558, %v5558
        %v5565 = vmul.f32 %v5559, %v5559
        %v5566 = vmul.f32 %v5560, %v5560
        %v5567 = vmul.f32 %v5561, %v5561
        %v5568 = vmul.f32 %v5562, %v5562
        %v5569 = vmul.f32 %v5563, %v5563
        %v5570 = vsel %vm1075, %v5564, 0.0
        %5571 = vadd.xlane.f32.xlu0 %v5570
        %v5572 = vpop.xlane.xlu0 %5571
        %v5573 = vsel %vm1075, %v5565, 0.0
        %5574 = vadd.xlane.f32.xlu0 %v5573
        %v5575 = vpop.xlane.xlu0 %5574
        %v5576 = vsel %vm1075, %v5566, 0.0
        %5577 = vadd.xlane.f32.xlu0 %v5576
        %v5578 = vpop.xlane.xlu0 %5577
        %v5579 = vsel %vm1075, %v5567, 0.0
        %5580 = vadd.xlane.f32.xlu0 %v5579
        %v5581 = vpop.xlane.xlu0 %5580
        %v5582 = vsel %vm1075, %v5568, 0.0
        %5583 = vadd.xlane.f32.xlu0 %v5582
        %v5584 = vpop.xlane.xlu0 %5583
        %v5585 = vsel %vm1075, %v5569, 0.0
        %5586 = vadd.xlane.f32.xlu0 %v5585
        %v5587 = vpop.xlane.xlu0 %5586
        %v5588 = vmul.f32 %v5572, %v2020
        %v5589 = vmul.f32 %v5575, %v2020
        %v5590 = vmul.f32 %v5578, %v2020
        %v5591 = vmul.f32 %v5581, %v2020
        %v5592 = vmul.f32 %v5584, %v2020
        %v5593 = vmul.f32 %v5587, %v2020
        %v5594 = vadd.f32 %v5588, 1e-05
        %v5595 = vadd.f32 %v5589, 1e-05
        %v5596 = vadd.f32 %v5590, 1e-05
        %v5597 = vadd.f32 %v5591, 1e-05
        %v5598 = vadd.f32 %v5592, 1e-05
        %v5599 = vadd.f32 %v5593, 1e-05
        %v5600 = vrsqrt.pop %v5594
        %v5601 = vmul.f32 %v5600, %v5594
        %v5602 = vmul.f32 %v5601, %v5600
        %v5603 = vmul.f32 0.5, %v5602
        %v5604 = vsub.f32 1.5, %v5603
        %v5605 = vmul.f32 %v5600, %v5604
        %vm5606 = vweird.f32 %v5594
        %vm5607 = vweird.f32 %v5600
        %vm5608 = vmor %vm5606, %vm5607
        %v5609 = vsel %vm5608, %v5600, %v5605
        %v5610 = vrsqrt.pop %v5595
        %v5611 = vmul.f32 %v5610, %v5595
        %v5612 = vmul.f32 %v5611, %v5610
        %v5613 = vmul.f32 0.5, %v5612
        %v5614 = vsub.f32 1.5, %v5613
        %v5615 = vmul.f32 %v5610, %v5614
        %vm5616 = vweird.f32 %v5595
        %vm5617 = vweird.f32 %v5610
        %vm5618 = vmor %vm5616, %vm5617
        %v5619 = vsel %vm5618, %v5610, %v5615
        %v5620 = vrsqrt.pop %v5596
        %v5621 = vmul.f32 %v5620, %v5596
        %v5622 = vmul.f32 %v5621, %v5620
        %v5623 = vmul.f32 0.5, %v5622
        %v5624 = vsub.f32 1.5, %v5623
        %v5625 = vmul.f32 %v5620, %v5624
        %vm5626 = vweird.f32 %v5596
        %vm5627 = vweird.f32 %v5620
        %vm5628 = vmor %vm5626, %vm5627
        %v5629 = vsel %vm5628, %v5620, %v5625
        %v5630 = vrsqrt.pop %v5597
        %v5631 = vmul.f32 %v5630, %v5597
        %v5632 = vmul.f32 %v5631, %v5630
        %v5633 = vmul.f32 0.5, %v5632
        %v5634 = vsub.f32 1.5, %v5633
        %v5635 = vmul.f32 %v5630, %v5634
        %vm5636 = vweird.f32 %v5597
        %vm5637 = vweird.f32 %v5630
        %vm5638 = vmor %vm5636, %vm5637
        %v5639 = vsel %vm5638, %v5630, %v5635
        %v5640 = vrsqrt.pop %v5598
        %v5641 = vmul.f32 %v5640, %v5598
        %v5642 = vmul.f32 %v5641, %v5640
        %v5643 = vmul.f32 0.5, %v5642
        %v5644 = vsub.f32 1.5, %v5643
        %v5645 = vmul.f32 %v5640, %v5644
        %vm5646 = vweird.f32 %v5598
        %vm5647 = vweird.f32 %v5640
        %vm5648 = vmor %vm5646, %vm5647
        %v5649 = vsel %vm5648, %v5640, %v5645
        %v5650 = vrsqrt.pop %v5599
        %v5651 = vmul.f32 %v5650, %v5599
        %v5652 = vmul.f32 %v5651, %v5650
        %v5653 = vmul.f32 0.5, %v5652
        %v5654 = vsub.f32 1.5, %v5653
        %v5655 = vmul.f32 %v5650, %v5654
        %vm5656 = vweird.f32 %v5599
        %vm5657 = vweird.f32 %v5650
        %vm5658 = vmor %vm5656, %vm5657
        %v5659 = vsel %vm5658, %v5650, %v5655
        %v5660 = vmul.f32 %v5558, %v5609
        %v5661 = vmul.f32 %v5559, %v5619
        %v5662 = vmul.f32 %v5560, %v5629
        %v5663 = vmul.f32 %v5561, %v5639
        %v5664 = vmul.f32 %v5562, %v5649
        %v5665 = vmul.f32 %v5563, %v5659
        %v5667 = vperm.slane %v5531, 0
        %v5669 = vmul.f32 %v5660, %v5667
        %v5670 = vmul.f32 %v5661, %v5667
        %v5671 = vmul.f32 %v5662, %v5667
        %v5672 = vmul.f32 %v5663, %v5667
        %v5673 = vmul.f32 %v5664, %v5667
        %v5674 = vmul.f32 %v5665, %v5667
        %v5676 = vperm.slane %v5533, 0
        %v5678 = vadd.f32 %v5669, %v5676
        %v5679 = vadd.f32 %v5670, %v5676
        %v5680 = vadd.f32 %v5671, %v5676
        %v5681 = vadd.f32 %v5672, %v5676
        %v5682 = vadd.f32 %v5673, %v5676
        %v5683 = vadd.f32 %v5674, %v5676
        %v5684 = vpack.c.bf16 %v5679, %v5678
        %v5685 = vpack.c.bf16 %v5681, %v5680
        %v5686 = vpack.c.bf16 %v5683, %v5682
        %s5687 = scalar_lea.vmem [#allocation16], 16
        %v5688 = vld [vmem:[%s5687] sm:$0xf]
        %v5689 = vld [vmem:[%s5687 + $0x4] sm:$0xf]
        %v5690 = vld [vmem:[%s5687 + $0x8] sm:$0xf]
        %v5691 = vld [vmem:[%s5687 + $0xc] sm:$0xf]
        %s5692 = scalar_lea.vmem %s18, 1
        %v5693 = vld [vmem:[%s5692] sm:$0x1]
        %v5695 = vperm.slane %v5693, 0
        %v5701 = vunpack.c.l.b16 %v5688
        %v5702 = vunpack.c.l.b16 %v5689
        %v5703 = vunpack.c.l.b16 %v5690
        %v5704 = vunpack.c.l.b16 %v5691
        %v5705 = vpack.c.b16 %v5702, %v5701
        %v5706 = vpack.c.b16 %v5704, %v5703
        %v5710 = vsel %vm1075, %v5684, 0
        %v5713 = vsel %vm1075, %v5685, 0
        %v5716 = vsel %vm1075, %v5686, 0
        %5718 = vmatpush.bf16.msra.mxu0 0
        %5719 = vmatpush.bf16.msra.mxu0 0
        %5720 = vmatpush.bf16.msra.mxu0 0
        %5721 = vmatpush.bf16.msra.mxu0 0
        %5722 = vmatpush.bf16.msra.mxu0 0
        %5723 = vmatpush.bf16.msra.mxu0 0
        %5724 = vmatpush.bf16.msra.mxu0 %v5706
        %5725 = vmatpush.bf16.msra.mxu0 %v5705
        %5726 = vmatmul.bf16.gmra.mxu0 %v5710
        %v5727 = vpop.f32.mrf.mxu0
        %v5728 = vadd.f32 %v5695, %v5727
        %v5729 = vpop.f32.mrf.mxu0
        %v5730 = vadd.f32 %v5695, %v5729
        %5731 = vmatmul.bf16.gmra.mxu0 %v5713
        %v5732 = vpop.f32.mrf.mxu0
        %v5733 = vadd.f32 %v5695, %v5732
        %v5734 = vpop.f32.mrf.mxu0
        %v5735 = vadd.f32 %v5695, %v5734
        %5736 = vmatmul.bf16.gmra.mxu0 %v5716
        %v5737 = vpop.f32.mrf.mxu0
        %v5738 = vadd.f32 %v5695, %v5737
        %v5739 = vpop.f32.mrf.mxu0
        %v5740 = vadd.f32 %v5695, %v5739
        %5741 = vdwg.mxu0
        %v5742 = vmax.f32 %v5728, 0.0
        %v5743 = vmax.f32 %v5730, 0.0
        %v5744 = vmax.f32 %v5733, 0.0
        %v5745 = vmax.f32 %v5735, 0.0
        %v5746 = vmax.f32 %v5738, 0.0
        %v5747 = vmax.f32 %v5740, 0.0
        %v5748 = vpack.c.bf16 %v5743, %v5742
        %v5749 = vpack.c.bf16 %v5745, %v5744
        %v5750 = vpack.c.bf16 %v5747, %v5746
        %s5751 = scalar_lea.vmem %s19, 32
        %v5752 = vld [vmem:[%s5751] sm:$0xf]
        %v5753 = vld [vmem:[%s5751 + $0x4] sm:$0xf]
        %v5754 = vld [vmem:[%s5751 + $0x8] sm:$0xf]
        %v5755 = vld [vmem:[%s5751 + $0xc] sm:$0xf]
        %v5756 = vld [vmem:[%s5751 + $0x10] sm:$0xf]
        %v5757 = vld [vmem:[%s5751 + $0x14] sm:$0xf]
        %v5758 = vld [vmem:[%s5751 + $0x18] sm:$0xf]
        %v5759 = vld [vmem:[%s5751 + $0x1c] sm:$0xf]
        %s5760 = scalar_lea.vmem %s20, 1
        %v5761 = vld [vmem:[%s5760] sm:$0x1]
        %v5763 = vperm.slane %v5761, 0
        %v5773 = vunpack.c.l.b16 %v5752
        %v5774 = vunpack.c.l.b16 %v5753
        %v5775 = vunpack.c.l.b16 %v5754
        %v5776 = vunpack.c.l.b16 %v5755
        %v5777 = vunpack.c.l.b16 %v5756
        %v5778 = vunpack.c.l.b16 %v5757
        %v5779 = vunpack.c.l.b16 %v5758
        %v5780 = vunpack.c.l.b16 %v5759
        %v5781 = vpack.c.b16 %v5774, %v5773
        %v5782 = vpack.c.b16 %v5776, %v5775
        %v5783 = vpack.c.b16 %v5778, %v5777
        %v5784 = vpack.c.b16 %v5780, %v5779
        %v5790 = vsel %vm3325, %v5748, 0
        %v5793 = vsel %vm3325, %v5749, 0
        %v5796 = vsel %vm3325, %v5750, 0
        %5798 = vmatpush.bf16.msra.mxu0 0
        %5799 = vmatpush.bf16.msra.mxu0 0
        %5800 = vmatpush.bf16.msra.mxu0 0
        %5801 = vmatpush.bf16.msra.mxu0 0
        %5802 = vmatpush.bf16.msra.mxu0 %v5784
        %5803 = vmatpush.bf16.msra.mxu0 %v5783
        %5804 = vmatpush.bf16.msra.mxu0 %v5782
        %5805 = vmatpush.bf16.msra.mxu0 %v5781
        %5806 = vmatmul.bf16.gmra.mxu0 %v5790
        %v5807 = vpop.f32.mrf.mxu0
        %v5808 = vadd.f32 %v5763, %v5807
        %v5809 = vpop.f32.mrf.mxu0
        %v5810 = vadd.f32 %v5763, %v5809
        %5811 = vmatmul.bf16.gmra.mxu0 %v5793
        %v5812 = vpop.f32.mrf.mxu0
        %v5813 = vadd.f32 %v5763, %v5812
        %v5814 = vpop.f32.mrf.mxu0
        %v5815 = vadd.f32 %v5763, %v5814
        %5816 = vmatmul.bf16.gmra.mxu0 %v5796
        %v5817 = vpop.f32.mrf.mxu0
        %v5818 = vadd.f32 %v5763, %v5817
        %v5819 = vpop.f32.mrf.mxu0
        %v5820 = vadd.f32 %v5763, %v5819
        %5821 = vdwg.mxu0
        %v5822 = vadd.f32 %v5678, %v5808
        %v5823 = vadd.f32 %v5679, %v5810
        %v5824 = vadd.f32 %v5680, %v5813
        %v5825 = vadd.f32 %v5681, %v5815
        %v5826 = vadd.f32 %v5682, %v5818
        %v5827 = vadd.f32 %v5683, %v5820
        %s5828 = scalar_lea.vmem %s21, 1
        %v5829 = vld [vmem:[%s5828] sm:$0x1]
        %s5830 = scalar_lea.vmem [#allocation17], 1
        %v5831 = vld [vmem:[%s5830] sm:$0x1]
        %v5832 = vsel %vm1075, %v5822, 0.0
        %5833 = vadd.xlane.f32.xlu0 %v5832
        %v5834 = vpop.xlane.xlu0 %5833
        %v5835 = vsel %vm1075, %v5823, 0.0
        %5836 = vadd.xlane.f32.xlu0 %v5835
        %v5837 = vpop.xlane.xlu0 %5836
        %v5838 = vsel %vm1075, %v5824, 0.0
        %5839 = vadd.xlane.f32.xlu0 %v5838
        %v5840 = vpop.xlane.xlu0 %5839
        %v5841 = vsel %vm1075, %v5825, 0.0
        %5842 = vadd.xlane.f32.xlu0 %v5841
        %v5843 = vpop.xlane.xlu0 %5842
        %v5844 = vsel %vm1075, %v5826, 0.0
        %5845 = vadd.xlane.f32.xlu0 %v5844
        %v5846 = vpop.xlane.xlu0 %5845
        %v5847 = vsel %vm1075, %v5827, 0.0
        %5848 = vadd.xlane.f32.xlu0 %v5847
        %v5849 = vpop.xlane.xlu0 %5848
        %v5850 = vmul.f32 %v5834, %v2020
        %v5851 = vmul.f32 %v5837, %v2020
        %v5852 = vmul.f32 %v5840, %v2020
        %v5853 = vmul.f32 %v5843, %v2020
        %v5854 = vmul.f32 %v5846, %v2020
        %v5855 = vmul.f32 %v5849, %v2020
        %v5856 = vsub.f32 %v5822, %v5850
        %v5857 = vsub.f32 %v5823, %v5851
        %v5858 = vsub.f32 %v5824, %v5852
        %v5859 = vsub.f32 %v5825, %v5853
        %v5860 = vsub.f32 %v5826, %v5854
        %v5861 = vsub.f32 %v5827, %v5855
        %v5862 = vmul.f32 %v5856, %v5856
        %v5863 = vmul.f32 %v5857, %v5857
        %v5864 = vmul.f32 %v5858, %v5858
        %v5865 = vmul.f32 %v5859, %v5859
        %v5866 = vmul.f32 %v5860, %v5860
        %v5867 = vmul.f32 %v5861, %v5861
        %v5868 = vsel %vm1075, %v5862, 0.0
        %5869 = vadd.xlane.f32.xlu0 %v5868
        %v5870 = vpop.xlane.xlu0 %5869
        %v5871 = vsel %vm1075, %v5863, 0.0
        %5872 = vadd.xlane.f32.xlu0 %v5871
        %v5873 = vpop.xlane.xlu0 %5872
        %v5874 = vsel %vm1075, %v5864, 0.0
        %5875 = vadd.xlane.f32.xlu0 %v5874
        %v5876 = vpop.xlane.xlu0 %5875
        %v5877 = vsel %vm1075, %v5865, 0.0
        %5878 = vadd.xlane.f32.xlu0 %v5877
        %v5879 = vpop.xlane.xlu0 %5878
        %v5880 = vsel %vm1075, %v5866, 0.0
        %5881 = vadd.xlane.f32.xlu0 %v5880
        %v5882 = vpop.xlane.xlu0 %5881
        %v5883 = vsel %vm1075, %v5867, 0.0
        %5884 = vadd.xlane.f32.xlu0 %v5883
        %v5885 = vpop.xlane.xlu0 %5884
        %v5886 = vmul.f32 %v5870, %v2020
        %v5887 = vmul.f32 %v5873, %v2020
        %v5888 = vmul.f32 %v5876, %v2020
        %v5889 = vmul.f32 %v5879, %v2020
        %v5890 = vmul.f32 %v5882, %v2020
        %v5891 = vmul.f32 %v5885, %v2020
        %v5892 = vadd.f32 %v5886, 1e-05
        %v5893 = vadd.f32 %v5887, 1e-05
        %v5894 = vadd.f32 %v5888, 1e-05
        %v5895 = vadd.f32 %v5889, 1e-05
        %v5896 = vadd.f32 %v5890, 1e-05
        %v5897 = vadd.f32 %v5891, 1e-05
        %v5898 = vrsqrt.pop %v5892
        %v5899 = vmul.f32 %v5898, %v5892
        %v5900 = vmul.f32 %v5899, %v5898
        %v5901 = vmul.f32 0.5, %v5900
        %v5902 = vsub.f32 1.5, %v5901
        %v5903 = vmul.f32 %v5898, %v5902
        %vm5904 = vweird.f32 %v5892
        %vm5905 = vweird.f32 %v5898
        %vm5906 = vmor %vm5904, %vm5905
        %v5907 = vsel %vm5906, %v5898, %v5903
        %v5908 = vrsqrt.pop %v5893
        %v5909 = vmul.f32 %v5908, %v5893
        %v5910 = vmul.f32 %v5909, %v5908
        %v5911 = vmul.f32 0.5, %v5910
        %v5912 = vsub.f32 1.5, %v5911
        %v5913 = vmul.f32 %v5908, %v5912
        %vm5914 = vweird.f32 %v5893
        %vm5915 = vweird.f32 %v5908
        %vm5916 = vmor %vm5914, %vm5915
        %v5917 = vsel %vm5916, %v5908, %v5913
        %v5918 = vrsqrt.pop %v5894
        %v5919 = vmul.f32 %v5918, %v5894
        %v5920 = vmul.f32 %v5919, %v5918
        %v5921 = vmul.f32 0.5, %v5920
        %v5922 = vsub.f32 1.5, %v5921
        %v5923 = vmul.f32 %v5918, %v5922
        %vm5924 = vweird.f32 %v5894
        %vm5925 = vweird.f32 %v5918
        %vm5926 = vmor %vm5924, %vm5925
        %v5927 = vsel %vm5926, %v5918, %v5923
        %v5928 = vrsqrt.pop %v5895
        %v5929 = vmul.f32 %v5928, %v5895
        %v5930 = vmul.f32 %v5929, %v5928
        %v5931 = vmul.f32 0.5, %v5930
        %v5932 = vsub.f32 1.5, %v5931
        %v5933 = vmul.f32 %v5928, %v5932
        %vm5934 = vweird.f32 %v5895
        %vm5935 = vweird.f32 %v5928
        %vm5936 = vmor %vm5934, %vm5935
        %v5937 = vsel %vm5936, %v5928, %v5933
        %v5938 = vrsqrt.pop %v5896
        %v5939 = vmul.f32 %v5938, %v5896
        %v5940 = vmul.f32 %v5939, %v5938
        %v5941 = vmul.f32 0.5, %v5940
        %v5942 = vsub.f32 1.5, %v5941
        %v5943 = vmul.f32 %v5938, %v5942
        %vm5944 = vweird.f32 %v5896
        %vm5945 = vweird.f32 %v5938
        %vm5946 = vmor %vm5944, %vm5945
        %v5947 = vsel %vm5946, %v5938, %v5943
        %v5948 = vrsqrt.pop %v5897
        %v5949 = vmul.f32 %v5948, %v5897
        %v5950 = vmul.f32 %v5949, %v5948
        %v5951 = vmul.f32 0.5, %v5950
        %v5952 = vsub.f32 1.5, %v5951
        %v5953 = vmul.f32 %v5948, %v5952
        %vm5954 = vweird.f32 %v5897
        %vm5955 = vweird.f32 %v5948
        %vm5956 = vmor %vm5954, %vm5955
        %v5957 = vsel %vm5956, %v5948, %v5953
        %v5958 = vmul.f32 %v5856, %v5907
        %v5959 = vmul.f32 %v5857, %v5917
        %v5960 = vmul.f32 %v5858, %v5927
        %v5961 = vmul.f32 %v5859, %v5937
        %v5962 = vmul.f32 %v5860, %v5947
        %v5963 = vmul.f32 %v5861, %v5957
        %v5965 = vperm.slane %v5829, 0
        %v5967 = vmul.f32 %v5958, %v5965
        %v5968 = vmul.f32 %v5959, %v5965
        %v5969 = vmul.f32 %v5960, %v5965
        %v5970 = vmul.f32 %v5961, %v5965
        %v5971 = vmul.f32 %v5962, %v5965
        %v5972 = vmul.f32 %v5963, %v5965
        %v5974 = vperm.slane %v5831, 0
        %v5976 = vadd.f32 %v5967, %v5974
        %v5977 = vadd.f32 %v5968, %v5974
        %v5978 = vadd.f32 %v5969, %v5974
        %v5979 = vadd.f32 %v5970, %v5974
        %v5980 = vadd.f32 %v5971, %v5974
        %v5981 = vadd.f32 %v5972, %v5974
        %v5982 = vpack.c.bf16 %v5977, %v5976
        %v5983 = vpack.c.bf16 %v5979, %v5978
        %v5984 = vpack.c.bf16 %v5981, %v5980
        %v5985 = vld [vmem:[%s23] sm:$0xf]
        %v5986 = vld [vmem:[%s23 + $0x4] sm:$0xf]
        %v5987 = vld [vmem:[%s23 + $0x8] sm:$0xf]
        %v5988 = vld [vmem:[%s23 + $0xc] sm:$0xf]
        %v5989 = vld [vmem:[%s24] sm:$0x1]
        %v5991 = vperm.slane %v5989, 0
        %v5997 = vunpack.c.l.b16 %v5985
        %v5998 = vunpack.c.l.b16 %v5986
        %v5999 = vunpack.c.l.b16 %v5987
        %v6000 = vunpack.c.l.b16 %v5988
        %v6001 = vpack.c.b16 %v5998, %v5997
        %v6002 = vpack.c.b16 %v6000, %v5999
        %v6006 = vsel %vm1075, %v5982, 0
        %v6009 = vsel %vm1075, %v5983, 0
        %v6012 = vsel %vm1075, %v5984, 0
        %6014 = vmatpush.bf16.msra.mxu0 0
        %6015 = vmatpush.bf16.msra.mxu0 0
        %6016 = vmatpush.bf16.msra.mxu0 0
        %6017 = vmatpush.bf16.msra.mxu0 0
        %6018 = vmatpush.bf16.msra.mxu0 0
        %6019 = vmatpush.bf16.msra.mxu0 0
        %6020 = vmatpush.bf16.msra.mxu0 %v6002
        %6021 = vmatpush.bf16.msra.mxu0 %v6001
        %6022 = vmatmul.bf16.gmra.mxu0 %v6006
        %v6023 = vpop.f32.mrf.mxu0
        %v6024 = vadd.f32 %v5991, %v6023
        %v6025 = vpop.f32.mrf.mxu0
        %v6026 = vadd.f32 %v5991, %v6025
        %6027 = vmatmul.bf16.gmra.mxu0 %v6009
        %v6028 = vpop.f32.mrf.mxu0
        %v6029 = vadd.f32 %v5991, %v6028
        %v6030 = vpop.f32.mrf.mxu0
        %v6031 = vadd.f32 %v5991, %v6030
        %6032 = vmatmul.bf16.gmra.mxu0 %v6012
        %v6033 = vpop.f32.mrf.mxu0
        %v6034 = vadd.f32 %v5991, %v6033
        %v6035 = vpop.f32.mrf.mxu0
        %v6036 = vadd.f32 %v5991, %v6035
        %6037 = vdwg.mxu0
        %v6038 = vmax.f32 %v6024, 0.0
        %v6039 = vmax.f32 %v6026, 0.0
        %v6040 = vmax.f32 %v6029, 0.0
        %v6041 = vmax.f32 %v6031, 0.0
        %v6042 = vmax.f32 %v6034, 0.0
        %v6043 = vmax.f32 %v6036, 0.0
        %s6044 = scalar_lea.vmem %s23, 16
        %v6045 = vld [vmem:[%s6044] sm:$0xf]
        %v6046 = vld [vmem:[%s6044 + $0x4] sm:$0xf]
        %v6047 = vld [vmem:[%s6044 + $0x8] sm:$0xf]
        %v6048 = vld [vmem:[%s6044 + $0xc] sm:$0xf]
        %s6049 = scalar_lea.vmem %s24, 1
        %v6050 = vld [vmem:[%s6049] sm:$0x1]
        %v6052 = vperm.slane %v6050, 0
        %v6058 = vunpack.c.l.b16 %v6045
        %v6059 = vunpack.c.l.b16 %v6046
        %v6060 = vunpack.c.l.b16 %v6047
        %v6061 = vunpack.c.l.b16 %v6048
        %v6062 = vpack.c.b16 %v6059, %v6058
        %v6063 = vpack.c.b16 %v6061, %v6060
        %6066 = vmatpush.bf16.msra.mxu0 0
        %6067 = vmatpush.bf16.msra.mxu0 0
        %6068 = vmatpush.bf16.msra.mxu0 0
        %6069 = vmatpush.bf16.msra.mxu0 0
        %6070 = vmatpush.bf16.msra.mxu0 0
        %6071 = vmatpush.bf16.msra.mxu0 0
        %6072 = vmatpush.bf16.msra.mxu0 %v6063
        %6073 = vmatpush.bf16.msra.mxu0 %v6062
        %6074 = vmatmul.bf16.gmra.mxu0 %v6006
        %v6075 = vpop.f32.mrf.mxu0
        %v6076 = vadd.f32 %v6052, %v6075
        %v6077 = vpop.f32.mrf.mxu0
        %v6078 = vadd.f32 %v6052, %v6077
        %6079 = vmatmul.bf16.gmra.mxu0 %v6009
        %v6080 = vpop.f32.mrf.mxu0
        %v6081 = vadd.f32 %v6052, %v6080
        %v6082 = vpop.f32.mrf.mxu0
        %v6083 = vadd.f32 %v6052, %v6082
        %6084 = vmatmul.bf16.gmra.mxu0 %v6012
        %v6085 = vpop.f32.mrf.mxu0
        %v6086 = vadd.f32 %v6052, %v6085
        %v6087 = vpop.f32.mrf.mxu0
        %v6088 = vadd.f32 %v6052, %v6087
        %6089 = vdwg.mxu0
        %v6090 = vmax.f32 %v6076, 0.0
        %v6091 = vmax.f32 %v6078, 0.0
        %v6092 = vmax.f32 %v6081, 0.0
        %v6093 = vmax.f32 %v6083, 0.0
        %v6094 = vmax.f32 %v6086, 0.0
        %v6095 = vmax.f32 %v6088, 0.0
        %s6096 = scalar_lea.vmem %s23, 32
        %v6097 = vld [vmem:[%s6096] sm:$0xf]
        %v6098 = vld [vmem:[%s6096 + $0x4] sm:$0xf]
        %v6099 = vld [vmem:[%s6096 + $0x8] sm:$0xf]
        %v6100 = vld [vmem:[%s6096 + $0xc] sm:$0xf]
        %s6101 = scalar_lea.vmem %s24, 2
        %v6102 = vld [vmem:[%s6101] sm:$0x1]
        %v6104 = vperm.slane %v6102, 0
        %v6110 = vunpack.c.l.b16 %v6097
        %v6111 = vunpack.c.l.b16 %v6098
        %v6112 = vunpack.c.l.b16 %v6099
        %v6113 = vunpack.c.l.b16 %v6100
        %v6114 = vpack.c.b16 %v6111, %v6110
        %v6115 = vpack.c.b16 %v6113, %v6112
        %6118 = vmatpush.bf16.msra.mxu0 0
        %6119 = vmatpush.bf16.msra.mxu0 0
        %6120 = vmatpush.bf16.msra.mxu0 0
        %6121 = vmatpush.bf16.msra.mxu0 0
        %6122 = vmatpush.bf16.msra.mxu0 0
        %6123 = vmatpush.bf16.msra.mxu0 0
        %6124 = vmatpush.bf16.msra.mxu0 %v6115
        %6125 = vmatpush.bf16.msra.mxu0 %v6114
        %6126 = vmatmul.bf16.gmra.mxu0 %v6006
        %v6127 = vpop.f32.mrf.mxu0
        %v6128 = vadd.f32 %v6104, %v6127
        %v6129 = vpop.f32.mrf.mxu0
        %v6130 = vadd.f32 %v6104, %v6129
        %6131 = vmatmul.bf16.gmra.mxu0 %v6009
        %v6132 = vpop.f32.mrf.mxu0
        %v6133 = vadd.f32 %v6104, %v6132
        %v6134 = vpop.f32.mrf.mxu0
        %v6135 = vadd.f32 %v6104, %v6134
        %6136 = vmatmul.bf16.gmra.mxu0 %v6012
        %v6137 = vpop.f32.mrf.mxu0
        %v6138 = vadd.f32 %v6104, %v6137
        %v6139 = vpop.f32.mrf.mxu0
        %v6140 = vadd.f32 %v6104, %v6139
        %6141 = vdwg.mxu0
        %v6142 = vmax.f32 %v6128, 0.0
        %v6143 = vmax.f32 %v6130, 0.0
        %v6144 = vmax.f32 %v6133, 0.0
        %v6145 = vmax.f32 %v6135, 0.0
        %v6146 = vmax.f32 %v6138, 0.0
        %v6147 = vmax.f32 %v6140, 0.0
        %6154 = vrot.lane.b32.xlu0 %v6090, 32
        %v6155 = vpop.permute.xlu0 %6154
        %6156 = vrot.lane.b32.xlu0 %v6091, 32
        %v6157 = vpop.permute.xlu0 %6156
        %6158 = vrot.lane.b32.xlu0 %v6092, 32
        %v6159 = vpop.permute.xlu0 %6158
        %6160 = vrot.lane.b32.xlu0 %v6093, 32
        %v6161 = vpop.permute.xlu0 %6160
        %6162 = vrot.lane.b32.xlu0 %v6094, 32
        %v6163 = vpop.permute.xlu0 %6162
        %6164 = vrot.lane.b32.xlu0 %v6095, 32
        %v6165 = vpop.permute.xlu0 %6164
        %6178 = vrot.lane.b32.xlu0 %v6142, 64
        %v6179 = vpop.permute.xlu0 %6178
        %6180 = vrot.lane.b32.xlu0 %v6143, 64
        %v6181 = vpop.permute.xlu0 %6180
        %6182 = vrot.lane.b32.xlu0 %v6144, 64
        %v6183 = vpop.permute.xlu0 %6182
        %6184 = vrot.lane.b32.xlu0 %v6145, 64
        %v6185 = vpop.permute.xlu0 %6184
        %6186 = vrot.lane.b32.xlu0 %v6146, 64
        %v6187 = vpop.permute.xlu0 %6186
        %6188 = vrot.lane.b32.xlu0 %v6147, 64
        %v6189 = vpop.permute.xlu0 %6188
        %v6196 = vsel %vm1075, %v6038, %v6155
        %v6197 = vsel %vm1075, %v6039, %v6157
        %v6198 = vsel %vm1075, %v6040, %v6159
        %v6199 = vsel %vm1075, %v6041, %v6161
        %v6200 = vsel %vm1075, %v6042, %v6163
        %v6201 = vsel %vm1075, %v6043, %v6165
        %v6202 = vsel %vm3325, %v6196, %v6179
        %v6203 = vsel %vm3325, %v6197, %v6181
        %v6204 = vsel %vm3325, %v6198, %v6183
        %v6205 = vsel %vm3325, %v6199, %v6185
        %v6206 = vsel %vm3325, %v6200, %v6187
        %v6207 = vsel %vm3325, %v6201, %v6189
        %v6208 = vpack.c.bf16 %v6203, %v6202
        %v6209 = vpack.c.bf16 %v6205, %v6204
        %v6210 = vpack.c.bf16 %v6207, %v6206
        %v6211 = vld [vmem:[%s25] sm:$0xf]
        %v6212 = vld [vmem:[%s25 + $0x4] sm:$0xf]
        %v6213 = vld [vmem:[%s25 + $0x8] sm:$0xf]
        %v6214 = vld [vmem:[%s25 + $0xc] sm:$0xf]
        %v6215 = vld [vmem:[%s25 + $0x10] sm:$0xf]
        %v6216 = vld [vmem:[%s25 + $0x14] sm:$0xf]
        %v6217 = vld [vmem:[%s25 + $0x18] sm:$0xf]
        %v6218 = vld [vmem:[%s25 + $0x1c] sm:$0xf]
        %v6219 = vld [vmem:[%s25 + $0x20] sm:$0xf]
        %v6220 = vld [vmem:[%s25 + $0x24] sm:$0xf]
        %v6221 = vld [vmem:[%s25 + $0x28] sm:$0xf]
        %v6222 = vld [vmem:[%s25 + $0x2c] sm:$0xf]
        %v6223 = vld [vmem:[%s26] sm:$0x1]
        %v6225 = vperm.slane %v6223, 0
        %v6239 = vunpack.c.l.b16 %v6211
        %v6240 = vunpack.c.l.b16 %v6212
        %v6241 = vunpack.c.l.b16 %v6213
        %v6242 = vunpack.c.l.b16 %v6214
        %v6243 = vunpack.c.l.b16 %v6215
        %v6244 = vunpack.c.l.b16 %v6216
        %v6245 = vunpack.c.l.b16 %v6217
        %v6246 = vunpack.c.l.b16 %v6218
        %v6247 = vunpack.c.l.b16 %v6219
        %v6248 = vunpack.c.l.b16 %v6220
        %v6249 = vunpack.c.l.b16 %v6221
        %v6250 = vunpack.c.l.b16 %v6222
        %v6251 = vpack.c.b16 %v6240, %v6239
        %v6252 = vpack.c.b16 %v6242, %v6241
        %v6253 = vpack.c.b16 %v6244, %v6243
        %v6254 = vpack.c.b16 %v6246, %v6245
        %v6255 = vpack.c.b16 %v6248, %v6247
        %v6256 = vpack.c.b16 %v6250, %v6249
        %vm6263 = vcmask 785408
        %v6265 = vsel %vm6263, %v6208, 0
        %v6268 = vsel %vm6263, %v6209, 0
        %v6271 = vsel %vm6263, %v6210, 0
        %6273 = vmatpush.bf16.msra.mxu0 0
        %6274 = vmatpush.bf16.msra.mxu0 0
        %6275 = vmatpush.bf16.msra.mxu0 %v6256
        %6276 = vmatpush.bf16.msra.mxu0 %v6255
        %6277 = vmatpush.bf16.msra.mxu0 %v6254
        %6278 = vmatpush.bf16.msra.mxu0 %v6253
        %6279 = vmatpush.bf16.msra.mxu0 %v6252
        %6280 = vmatpush.bf16.msra.mxu0 %v6251
        %6281 = vmatmul.bf16.gmra.mxu0 %v6265
        %v6282 = vpop.f32.mrf.mxu0
        %v6283 = vadd.f32 %v6225, %v6282
        %v6284 = vpop.f32.mrf.mxu0
        %v6285 = vadd.f32 %v6225, %v6284
        %6286 = vmatmul.bf16.gmra.mxu0 %v6268
        %v6287 = vpop.f32.mrf.mxu0
        %v6288 = vadd.f32 %v6225, %v6287
        %v6289 = vpop.f32.mrf.mxu0
        %v6290 = vadd.f32 %v6225, %v6289
        %6291 = vmatmul.bf16.gmra.mxu0 %v6271
        %v6292 = vpop.f32.mrf.mxu0
        %v6293 = vadd.f32 %v6225, %v6292
        %v6294 = vpop.f32.mrf.mxu0
        %v6295 = vadd.f32 %v6225, %v6294
        %6296 = vdwg.mxu0
        %6297 = vst [vmem:[%s1010] sm:$0xff] %v6283
        %6298 = vst [vmem:[%s1010 + $0x8] sm:$0xff] %v6285
        %6299 = vst [vmem:[%s1010 + $0x10] sm:$0xff] %v6288
        %6300 = vst [vmem:[%s1010 + $0x18] sm:$0xff] %v6290
        %6301 = vst [vmem:[%s1010 + $0x20] sm:$0xff] %v6293
        %6302 = vst [vmem:[%s1010 + $0x28] sm:$0xff] %v6295
        %s6303 = sand.u32 %s639, 1
        %s6304 = scalar_lea.sflag [#allocation4], %s6303
        %s6305 = sand.u32 %s639, 1
        %s6306 = smul.addr %s6305, 48
        %s6307 = scalar_lea.vmem [#allocation19], %s6306
        // Predicated region
        $region169: #{tpu_custom_call.1} parent=127 // pred_check
          %p6308 = pneg %p649
        $region170: #{tpu_custom_call.1} parent=127 // pred_check_branch
          %6310 = sbr.rel (%p6308) target = $region172
        $region171: #{tpu_custom_call.1} parent=127 // pred_region
          %6312 = vsyncadd %s6304, 0
          %s6313 = smul.addr %s49, 6
          %s6314 = smul.addr %s6313, 8
          %s6315 = scalar_lea.hbm %s27, %s6314
          %s6316 = sshll.u32 %s6307, 4
          %s6317 = int_to_ptr.vmem [resolvable:$true] %s6316
          %s6318 = sshll.u32 %s6315, 4
          %s6319 = int_to_ptr.hbm [resolvable:$true] %s6318
          %6324 = dma.vmem_to_hbm [thread:$0]  %s6317, 768, %s6319, %s6304, 128, 128, 8
        $region172: #{tpu_custom_call.1} parent=127 // pred_fallthru
          _
      $region128: #{tpu_custom_call.1} parent=5 // pred_fallthru
        _
      %p6325 = scmp.le.s32.totalorder 2, %s44
      // Predicated region
      $region173: #{tpu_custom_call.1} parent=5 // pred_check
        %p6326 = pneg %p6325
      $region174: #{tpu_custom_call.1} parent=5 // pred_check_branch
        %6328 = sbr.rel (%p6326) target = $region176
      $region175: #{tpu_custom_call.1} parent=5 // pred_region
        %s6329 = ssub.s32 %s44, 2
        // Predicated region
        $region177: #{tpu_custom_call.1} parent=175 // pred_check
          %p6330 = pneg %p655
        $region178: #{tpu_custom_call.1} parent=175 // pred_check_branch
          %6332 = sbr.rel (%p6330) target = $region180
        $region179: #{tpu_custom_call.1} parent=175 // pred_region
          %s6333 = sand.u32 %s640, 1
          %s6334 = scalar_lea.sflag [#allocation4], %s6333
          %s6335 = sand.u32 %s640, 1
          %s6336 = smul.addr %s6335, 48
          %s6337 = scalar_lea.vmem [#allocation19], %s6336
          %6339 = dma.done %s6334, 768
        $region180: #{tpu_custom_call.1} parent=175 // pred_fallthru
          _
      $region176: #{tpu_custom_call.1} parent=5 // pred_fallthru
        _
    $region6: #{tpu_custom_call.1} parent=1 // loop_footer
      %s48 = sadd.s32 1, %s44
    $region7: #{tpu_custom_call.1} parent=1 // loop_footer_branch
      %43 = sbr.rel target = $region3
    $region8: #{tpu_custom_call.1} parent=1 // loop_exit
      _
    %6340 = vsyncpa [#allocation3], 1
    %s6341 = scalar_lea.sflag [#allocation3], 1
    %6342 = vsyncpa %s6341, 1
    %6343 = vsyncpa [#allocation6], 1
    %6344 = vsyncpa [#allocation9], 1
    %6345 = vsyncpa [#allocation12], 1
    %6346 = vsyncpa [#allocation15], 1
    %6347 = vsyncpa [#allocation18], 1
    %6348 = vsyncpa [#allocation4], 1
    %s6349 = scalar_lea.sflag [#allocation4], 1
    %6350 = vsyncpa %s6349, 1

</llo_original>
